<compile_context>
chip_gen: v7x
topology: tpu7x:2x2x1
jax: 0.10.0
libtpu: 0.0.40
codegen_flags: <defaults>
</compile_context>

<pallas_src>
import functools

import numpy as np
import jax
import jax.numpy as jnp
from jax.experimental import pallas as pl
from jax.experimental.pallas import tpu as pltpu


_TILE_M_CAP = 2048                      # lane-tile cap (sweep 512/1024/2048)
_VMEM_LIMIT = 48 * 1024 * 1024          # < 64 MiB physical VMEM on v7x


def _pick_tile_m(dhw, cap=_TILE_M_CAP):
    """Largest tile that divides DHW, is <= cap, and (if possible) >= 128."""
    if dhw <= cap:
        return dhw
    t = cap
    while t >= 128 and dhw % t != 0:
        t //= 2
    return t if (t >= 128 and dhw % t == 0) else dhw


# ---------------------------------------------------------------------------
# Pallas kernel: fused conv-as-matmul + BN affine + residual + ReLU epilogue.
#   x_ref : (1, 27*Cin, TILE_M) bf16     (im2col taps folded into K)
#   w_ref : (Cout, 27*Cin)      bf16     (BN scale folded in, VMEM resident)
#   b_ref : (Cout, 1)           f32
#   res   : (1, Cout, TILE_M)   bf16     (optional residual)
#   o_ref : (1, Cout, TILE_M)   bf16/f32 (lane-dense store)
# ---------------------------------------------------------------------------
def _conv_bn_act_kernel(x_ref, w_ref, b_ref, *rest, apply_relu, has_res):
    if has_res:
        res_ref, o_ref = rest
    else:
        (o_ref,) = rest

    # (Cout, K) @ (K, TILE_M) on the MXU, f32 accumulation.
    acc = jnp.dot(w_ref[...], x_ref[0], preferred_element_type=jnp.float32)
    y = acc + b_ref[...]                       # (Cout, 1) broadcast over lanes
    if has_res:
        y = y + res_ref[0].astype(jnp.float32)
    if apply_relu:
        y = jnp.maximum(y, 0.0)
    o_ref[0] = y.astype(o_ref.dtype)


def _im2col_cf(x):
    """x: (N, C, D, H, W) -> (N, 27*C, D*H*W), zero padding=1 (conv3d k=3, p=1)."""
    N, C, D, H, W = x.shape
    xp = jnp.pad(x, ((0, 0), (0, 0), (1, 1), (1, 1), (1, 1)))
    taps = []
    for kd in range(3):
        for kh in range(3):
            for kw in range(3):
                taps.append(xp[:, :, kd:kd + D, kh:kh + H, kw:kw + W]
                            .reshape(N, C, D * H * W))
    return jnp.concatenate(taps, axis=1)


def conv3d_bn_act(x, w_mat, bias, *, residual=None, apply_relu=True,
                  out_dtype=jnp.bfloat16):
    """Fused Conv3d(k=3, pad=1, no bias) + folded-BN affine + residual + ReLU.

    x        : (N, Cin, D, H, W) bf16
    w_mat    : (Cout, 27*Cin)    bf16  (BN scale pre-folded)
    bias     : (Cout, 1)         f32
    residual : optional (N, Cout, D, H, W)
    returns  : (N, Cout, D, H, W) out_dtype
    """
    N, Cin, D, H, W = x.shape
    Cout, K = w_mat.shape
    assert K == 27 * Cin
    DHW = D * H * W

    # Pad Cout up to a sublane multiple (only relevant for the final Cout=1 conv).
    cpad = (-Cout) % 8
    if cpad:
        w_mat = jnp.pad(w_mat, ((0, cpad), (0, 0)))
        bias = jnp.pad(bias, ((0, cpad), (0, 0)))
    cout_p = Cout + cpad

    xcol = _im2col_cf(x.astype(jnp.bfloat16))            # (N, 27*Cin, DHW) bf16
    tile_m = _pick_tile_m(DHW)
    grid = (N, DHW // tile_m)

    in_specs = [
        pl.BlockSpec((1, K, tile_m), lambda n, m: (n, 0, m)),    # activations
        pl.BlockSpec((cout_p, K), lambda n, m: (0, 0)),          # weights (resident)
        pl.BlockSpec((cout_p, 1), lambda n, m: (0, 0)),          # bias
    ]
    args = [xcol, w_mat, bias]

    has_res = residual is not None
    if has_res:
        res = residual.reshape(N, Cout, DHW).astype(jnp.bfloat16)
        if cpad:
            res = jnp.pad(res, ((0, 0), (0, cpad), (0, 0)))
        in_specs.append(pl.BlockSpec((1, cout_p, tile_m), lambda n, m: (n, 0, m)))
        args.append(res)

    kernel = functools.partial(_conv_bn_act_kernel,
                               apply_relu=apply_relu, has_res=has_res)

    out = pl.pallas_call(
        kernel,
        out_shape=jax.ShapeDtypeStruct((N, cout_p, DHW), out_dtype),
        grid=grid,
        in_specs=in_specs,
        out_specs=pl.BlockSpec((1, cout_p, tile_m), lambda n, m: (n, 0, m)),
        compiler_params=pltpu.CompilerParams(
            dimension_semantics=("parallel", "parallel"),
            vmem_limit_bytes=_VMEM_LIMIT,
        ),
    )(*args)

    if cpad:
        out = out[:, :Cout, :]
    return out.reshape(N, Cout, D, H, W)


# ---------------------------------------------------------------------------
# Plain-JAX glue: nearest upsample (single pass), resnet block, full decoder.
# ---------------------------------------------------------------------------
def upsample_nearest_2x(x):
    """nn.Upsample(scale_factor=2, mode='nearest') on (N, C, D, H, W) in one pass."""
    N, C, D, H, W = x.shape
    x = x[:, :, :, None, :, None, :, None]
    x = jnp.broadcast_to(x, (N, C, D, 2, H, 2, W, 2))
    return x.reshape(N, C, 2 * D, 2 * H, 2 * W)


def resnet_block(x, p1, p2):
    # TODO(synk): Resnet_3DBlock assumed as (Conv-BN-ReLU-Conv-BN) + skip,
    # no post-add ReLU.
    h = conv3d_bn_act(x, p1["w"], p1["b"], apply_relu=True)
    return conv3d_bn_act(h, p2["w"], p2["b"], residual=x, apply_relu=False)


def init_decoder_params(key, input_shape, input_nc, output_shape, output_nc, n_blocks):
    assert n_blocks >= 0
    assert input_shape[0] == input_shape[1] == input_shape[2]
    assert output_shape[0] == output_shape[1] == output_shape[2]
    max_up = int(np.max(np.log2(np.asarray(output_shape) / np.asarray(input_shape))))
    max_down = int(np.log2(input_nc / output_nc))
    assert max_up < max_down, 'upsampling overstep border'

    keys = iter(jax.random.split(key, 512))
    eps = 1e-5

    def conv_params(cin, cout, with_bn=True):
        # Conv3d(k=3, pad=1, bias=False) He-init weights; eval-mode BN folded
        # into a per-channel affine and then into the weight matrix / bias.
        std = (2.0 / (27 * cin)) ** 0.5
        w = jax.random.normal(next(keys), (3, 3, 3, cin, cout), jnp.float32) * std
        if with_bn:
            gamma = jnp.ones((cout,), jnp.float32)
            beta = jnp.zeros((cout,), jnp.float32)
            mean = jnp.zeros((cout,), jnp.float32)
            var = jnp.ones((cout,), jnp.float32)
            scale = gamma / jnp.sqrt(var + eps)
            bias = beta - mean * scale
        else:
            scale = jnp.ones((cout,), jnp.float32)
            bias = jnp.zeros((cout,), jnp.float32)
        # (3,3,3,Cin,Cout) -> (Cout, 27*Cin); K-order = (kd, kh, kw, ci) matches
        # the tap concatenation order in _im2col_cf.
        w_mat = jnp.transpose(w, (4, 0, 1, 2, 3)).reshape(cout, 27 * cin)
        w_mat = (w_mat * scale[:, None]).astype(jnp.bfloat16)
        return {"w": w_mat, "b": bias.reshape(cout, 1).astype(jnp.float32)}

    stages = [dict(up=False, conv=None,
                   res=[(conv_params(input_nc, input_nc),
                         conv_params(input_nc, input_nc)) for _ in range(n_blocks)])]
    out_c = input_nc
    for _ in range(max_up - 1):
        in_c, out_c = out_c, out_c // 2
        stages.append(dict(up=True, conv=conv_params(in_c, out_c),
                           res=[(conv_params(out_c, out_c),
                                 conv_params(out_c, out_c)) for _ in range(n_blocks)]))
    in_c, out_c = out_c, out_c // 2
    stages.append(dict(up=True, conv=conv_params(in_c, out_c), res=[]))  # up_conv=False
    # Final Conv3d(out_c, output_nc, 3, pad=1, bias=False) + ReLU (out_activation).
    final = conv_params(out_c, output_nc, with_bn=False)
    return dict(stages=stages, final=final)


def decoder_forward(params, x_ncdhw):
    """x_ncdhw: (N, C, D, H, W) -> (N, output_nc, D_out, H_out, W_out) f32."""
    x = x_ncdhw.astype(jnp.bfloat16)
    for st in params["stages"]:
        if st["up"]:
            x = upsample_nearest_2x(x)
            c = st["conv"]
            x = conv3d_bn_act(x, c["w"], c["b"], apply_relu=True)
        for p1, p2 in st["res"]:
            x = resnet_block(x, p1, p2)
    f = params["final"]
    return conv3d_bn_act(x, f["w"], f["b"], apply_relu=True, out_dtype=jnp.float32)


# ---------------------------------------------------------------------------
if __name__ == "__main__":
    key = jax.random.PRNGKey(0)
    k_params, k_x = jax.random.split(key)

    # Small, self-consistent configuration of the module.
    input_shape = (4, 4, 4)
    input_nc = 32
    output_shape = (16, 16, 16)
    output_nc = 1
    n_blocks = 2
    N = 2

    params = init_decoder_params(k_params, input_shape, input_nc,
                                 output_shape, output_nc, n_blocks)
    x = jax.random.normal(k_x, (N, input_nc) + input_shape, jnp.float32)

    fwd = jax.jit(functools.partial(decoder_forward, params))
    y = jax.block_until_ready(fwd(x))

    assert y.shape == (N, output_nc) + output_shape, y.shape
    assert bool(jnp.all(jnp.isfinite(y)))
    assert bool(jnp.all(y >= 0.0))  # final ReLU

    print("KERNEL_OK")
</pallas_src>

<mosaic_0001>
module attributes {stable_mosaic.version = 11 : i64} {
  func.func @_conv_bn_act_kernel(%arg0: i32, %arg1: i32, %arg2: memref<1x864x64xbf16, #tpu.memory_space<vmem>>, %arg3: memref<32x864xbf16, #tpu.memory_space<vmem>>, %arg4: memref<32x1xf32, #tpu.memory_space<vmem>>, %arg5: memref<1x32x64xbf16, #tpu.memory_space<vmem>>, %arg6: memref<1x32x64xbf16, #tpu.memory_space<vmem>>) attributes {dimension_semantics = [#tpu.dimension_semantics<parallel>, #tpu.dimension_semantics<parallel>], iteration_bounds = array<i64: 2, 1>, scalar_prefetch = 0 : i64, scratch_operands = 0 : i64, tpu.core_type = #tpu.core_type<tc>, window_params = [{transform_indices = @transform_0, window_bounds = array<i64: 1, 864, 64>}, {pipeline_mode = #tpu.pipeline_mode<synchronous>, transform_indices = @transform_1, window_bounds = array<i64: 32, 864>}, {pipeline_mode = #tpu.pipeline_mode<synchronous>, transform_indices = @transform_2, window_bounds = array<i64: 32, 1>}, {transform_indices = @transform_3, window_bounds = array<i64: 1, 32, 64>}, {transform_indices = @transform_4, window_bounds = array<i64: 1, 32, 64>}]} {
    %c0 = arith.constant 0 : index
    %c0_0 = arith.constant 0 : index
    %0 = vector.load %arg3[%c0, %c0_0] : memref<32x864xbf16, #tpu.memory_space<vmem>>, vector<32x864xbf16>
    %c0_1 = arith.constant 0 : index
    %c0_2 = arith.constant 0 : index
    %c0_3 = arith.constant 0 : index
    %1 = vector.load %arg2[%c0_1, %c0_2, %c0_3] : memref<1x864x64xbf16, #tpu.memory_space<vmem>>, vector<1x864x64xbf16>
    %2 = vector.shape_cast %1 : vector<1x864x64xbf16> to vector<864x64xbf16>
    %cst = arith.constant dense<0.000000e+00> : vector<32x64xf32>
    %3 = tpu.matmul %0, %2, %cst {dimension_numbers = #tpu.dot_dimension_numbers<[1], [0], [0], [1], [0, 0, 1, 1], [], []>} : vector<32x864xbf16>, vector<864x64xbf16>, vector<32x64xf32> -> vector<32x64xf32>
    %c0_4 = arith.constant 0 : index
    %c0_5 = arith.constant 0 : index
    %4 = vector.load %arg4[%c0_4, %c0_5] : memref<32x1xf32, #tpu.memory_space<vmem>>, vector<32x1xf32>
    %5 = vector.broadcast %4 : vector<32x1xf32> to vector<32x64xf32>
    %6 = arith.addf %3, %5 : vector<32x64xf32>
    %c0_6 = arith.constant 0 : index
    %c0_7 = arith.constant 0 : index
    %c0_8 = arith.constant 0 : index
    %7 = vector.load %arg5[%c0_6, %c0_7, %c0_8] : memref<1x32x64xbf16, #tpu.memory_space<vmem>>, vector<1x32x64xbf16>
    %8 = vector.shape_cast %7 : vector<1x32x64xbf16> to vector<32x64xbf16>
    %9 = arith.extf %8 : vector<32x64xbf16> to vector<32x64xf32>
    %10 = arith.addf %6, %9 : vector<32x64xf32>
    %11 = arith.truncf %10 : vector<32x64xf32> to vector<32x64xbf16>
    %c0_9 = arith.constant 0 : index
    %c0_10 = arith.constant 0 : index
    %c0_11 = arith.constant 0 : index
    %12 = vector.load %arg6[%c0_9, %c0_10, %c0_11] : memref<1x32x64xbf16, #tpu.memory_space<vmem>>, vector<1x32x64xbf16>
    %13 = vector.shape_cast %12 : vector<1x32x64xbf16> to vector<32x64xbf16>
    %14 = vector.shape_cast %11 : vector<32x64xbf16> to vector<1x32x64xbf16>
    tpu.vector_store %arg6[%c0_9, %c0_10, %c0_11], %14 {strides = array<i32>} : memref<1x32x64xbf16, #tpu.memory_space<vmem>>, vector<1x32x64xbf16>,
    return
  }
  func.func @transform_0(%arg0: i32, %arg1: i32) -> (i32, i32, i32) {
    %c0_i32 = arith.constant 0 : i32
    %c0_i32_0 = arith.constant 0 : i32
    return %arg0, %c0_i32, %arg1 : i32, i32, i32
  }
  func.func @transform_1(%arg0: i32, %arg1: i32) -> (i32, i32) {
    %c0_i32 = arith.constant 0 : i32
    %c0_i32_0 = arith.constant 0 : i32
    %c0_i32_1 = arith.constant 0 : i32
    return %c0_i32, %c0_i32_0 : i32, i32
  }
  func.func @transform_2(%arg0: i32, %arg1: i32) -> (i32, i32) {
    %c0_i32 = arith.constant 0 : i32
    %c0_i32_0 = arith.constant 0 : i32
    %c0_i32_1 = arith.constant 0 : i32
    return %c0_i32, %c0_i32_0 : i32, i32
  }
  func.func @transform_3(%arg0: i32, %arg1: i32) -> (i32, i32, i32) {
    %c0_i32 = arith.constant 0 : i32
    %c0_i32_0 = arith.constant 0 : i32
    return %arg0, %c0_i32, %arg1 : i32, i32, i32
  }
  func.func @transform_4(%arg0: i32, %arg1: i32) -> (i32, i32, i32) {
    %c0_i32 = arith.constant 0 : i32
    %c0_i32_0 = arith.constant 0 : i32
    return %arg0, %c0_i32, %arg1 : i32, i32, i32
  }
}

module attributes {stable_mosaic.version = 11 : i64} {
  func.func @_conv_bn_act_kernel(%arg0: i32, %arg1: i32, %arg2: memref<1x864x64xbf16, #tpu.memory_space<vmem>>, %arg3: memref<32x864xbf16, #tpu.memory_space<vmem>>, %arg4: memref<32x1xf32, #tpu.memory_space<vmem>>, %arg5: memref<1x32x64xbf16, #tpu.memory_space<vmem>>) attributes {dimension_semantics = [#tpu.dimension_semantics<parallel>, #tpu.dimension_semantics<parallel>], iteration_bounds = array<i64: 2, 1>, scalar_prefetch = 0 : i64, scratch_operands = 0 : i64, tpu.core_type = #tpu.core_type<tc>, window_params = [{transform_indices = @transform_0, window_bounds = array<i64: 1, 864, 64>}, {pipeline_mode = #tpu.pipeline_mode<synchronous>, transform_indices = @transform_1, window_bounds = array<i64: 32, 864>}, {pipeline_mode = #tpu.pipeline_mode<synchronous>, transform_indices = @transform_2, window_bounds = array<i64: 32, 1>}, {transform_indices = @transform_3, window_bounds = array<i64: 1, 32, 64>}]} {
    %c0 = arith.constant 0 : index
    %c0_0 = arith.constant 0 : index
    %0 = vector.load %arg3[%c0, %c0_0] : memref<32x864xbf16, #tpu.memory_space<vmem>>, vector<32x864xbf16>
    %c0_1 = arith.constant 0 : index
    %c0_2 = arith.constant 0 : index
    %c0_3 = arith.constant 0 : index
    %1 = vector.load %arg2[%c0_1, %c0_2, %c0_3] : memref<1x864x64xbf16, #tpu.memory_space<vmem>>, vector<1x864x64xbf16>
    %2 = vector.shape_cast %1 : vector<1x864x64xbf16> to vector<864x64xbf16>
    %cst = arith.constant dense<0.000000e+00> : vector<32x64xf32>
    %3 = tpu.matmul %0, %2, %cst {dimension_numbers = #tpu.dot_dimension_numbers<[1], [0], [0], [1], [0, 0, 1, 1], [], []>} : vector<32x864xbf16>, vector<864x64xbf16>, vector<32x64xf32> -> vector<32x64xf32>
    %c0_4 = arith.constant 0 : index
    %c0_5 = arith.constant 0 : index
    %4 = vector.load %arg4[%c0_4, %c0_5] : memref<32x1xf32, #tpu.memory_space<vmem>>, vector<32x1xf32>
    %5 = vector.broadcast %4 : vector<32x1xf32> to vector<32x64xf32>
    %6 = arith.addf %3, %5 : vector<32x64xf32>
    %cst_6 = arith.constant 0.000000e+00 : f32
    %7 = vector.broadcast %cst_6 : f32 to vector<32x64xf32>
    %8 = arith.maximumf %6, %7 : vector<32x64xf32>
    %9 = arith.truncf %8 : vector<32x64xf32> to vector<32x64xbf16>
    %c0_7 = arith.constant 0 : index
    %c0_8 = arith.constant 0 : index
    %c0_9 = arith.constant 0 : index
    %10 = vector.load %arg5[%c0_7, %c0_8, %c0_9] : memref<1x32x64xbf16, #tpu.memory_space<vmem>>, vector<1x32x64xbf16>
    %11 = vector.shape_cast %10 : vector<1x32x64xbf16> to vector<32x64xbf16>
    %12 = vector.shape_cast %9 : vector<32x64xbf16> to vector<1x32x64xbf16>
    tpu.vector_store %arg5[%c0_7, %c0_8, %c0_9], %12 {strides = array<i32>} : memref<1x32x64xbf16, #tpu.memory_space<vmem>>, vector<1x32x64xbf16>,
    return
  }
  func.func @transform_0(%arg0: i32, %arg1: i32) -> (i32, i32, i32) {
    %c0_i32 = arith.constant 0 : i32
    %c0_i32_0 = arith.constant 0 : i32
    return %arg0, %c0_i32, %arg1 : i32, i32, i32
  }
  func.func @transform_1(%arg0: i32, %arg1: i32) -> (i32, i32) {
    %c0_i32 = arith.constant 0 : i32
    %c0_i32_0 = arith.constant 0 : i32
    %c0_i32_1 = arith.constant 0 : i32
    return %c0_i32, %c0_i32_0 : i32, i32
  }
  func.func @transform_2(%arg0: i32, %arg1: i32) -> (i32, i32) {
    %c0_i32 = arith.constant 0 : i32
    %c0_i32_0 = arith.constant 0 : i32
    %c0_i32_1 = arith.constant 0 : i32
    return %c0_i32, %c0_i32_0 : i32, i32
  }
  func.func @transform_3(%arg0: i32, %arg1: i32) -> (i32, i32, i32) {
    %c0_i32 = arith.constant 0 : i32
    %c0_i32_0 = arith.constant 0 : i32
    return %arg0, %c0_i32, %arg1 : i32, i32, i32
  }
}

module attributes {stable_mosaic.version = 11 : i64} {
  func.func @_conv_bn_act_kernel(%arg0: i32, %arg1: i32, %arg2: memref<1x864x512xbf16, #tpu.memory_space<vmem>>, %arg3: memref<16x864xbf16, #tpu.memory_space<vmem>>, %arg4: memref<16x1xf32, #tpu.memory_space<vmem>>, %arg5: memref<1x16x512xbf16, #tpu.memory_space<vmem>>) attributes {dimension_semantics = [#tpu.dimension_semantics<parallel>, #tpu.dimension_semantics<parallel>], iteration_bounds = array<i64: 2, 1>, scalar_prefetch = 0 : i64, scratch_operands = 0 : i64, tpu.core_type = #tpu.core_type<tc>, window_params = [{transform_indices = @transform_0, window_bounds = array<i64: 1, 864, 512>}, {pipeline_mode = #tpu.pipeline_mode<synchronous>, transform_indices = @transform_1, window_bounds = array<i64: 16, 864>}, {pipeline_mode = #tpu.pipeline_mode<synchronous>, transform_indices = @transform_2, window_bounds = array<i64: 16, 1>}, {transform_indices = @transform_3, window_bounds = array<i64: 1, 16, 512>}]} {
    %c0 = arith.constant 0 : index
    %c0_0 = arith.constant 0 : index
    %0 = vector.load %arg3[%c0, %c0_0] : memref<16x864xbf16, #tpu.memory_space<vmem>>, vector<16x864xbf16>
    %c0_1 = arith.constant 0 : index
    %c0_2 = arith.constant 0 : index
    %c0_3 = arith.constant 0 : index
    %1 = vector.load %arg2[%c0_1, %c0_2, %c0_3] : memref<1x864x512xbf16, #tpu.memory_space<vmem>>, vector<1x864x512xbf16>
    %2 = vector.shape_cast %1 : vector<1x864x512xbf16> to vector<864x512xbf16>
    %cst = arith.constant dense<0.000000e+00> : vector<16x512xf32>
    %3 = tpu.matmul %0, %2, %cst {dimension_numbers = #tpu.dot_dimension_numbers<[1], [0], [0], [1], [0, 0, 1, 1], [], []>} : vector<16x864xbf16>, vector<864x512xbf16>, vector<16x512xf32> -> vector<16x512xf32>
    %c0_4 = arith.constant 0 : index
    %c0_5 = arith.constant 0 : index
    %4 = vector.load %arg4[%c0_4, %c0_5] : memref<16x1xf32, #tpu.memory_space<vmem>>, vector<16x1xf32>
    %5 = vector.broadcast %4 : vector<16x1xf32> to vector<16x512xf32>
    %6 = arith.addf %3, %5 : vector<16x512xf32>
    %cst_6 = arith.constant 0.000000e+00 : f32
    %7 = vector.broadcast %cst_6 : f32 to vector<16x512xf32>
    %8 = arith.maximumf %6, %7 : vector<16x512xf32>
    %9 = arith.truncf %8 : vector<16x512xf32> to vector<16x512xbf16>
    %c0_7 = arith.constant 0 : index
    %c0_8 = arith.constant 0 : index
    %c0_9 = arith.constant 0 : index
    %10 = vector.load %arg5[%c0_7, %c0_8, %c0_9] : memref<1x16x512xbf16, #tpu.memory_space<vmem>>, vector<1x16x512xbf16>
    %11 = vector.shape_cast %10 : vector<1x16x512xbf16> to vector<16x512xbf16>
    %12 = vector.shape_cast %9 : vector<16x512xbf16> to vector<1x16x512xbf16>
    tpu.vector_store %arg5[%c0_7, %c0_8, %c0_9], %12 {strides = array<i32>} : memref<1x16x512xbf16, #tpu.memory_space<vmem>>, vector<1x16x512xbf16>,
    return
  }
  func.func @transform_0(%arg0: i32, %arg1: i32) -> (i32, i32, i32) {
    %c0_i32 = arith.constant 0 : i32
    %c0_i32_0 = arith.constant 0 : i32
    return %arg0, %c0_i32, %arg1 : i32, i32, i32
  }
  func.func @transform_1(%arg0: i32, %arg1: i32) -> (i32, i32) {
    %c0_i32 = arith.constant 0 : i32
    %c0_i32_0 = arith.constant 0 : i32
    %c0_i32_1 = arith.constant 0 : i32
    return %c0_i32, %c0_i32_0 : i32, i32
  }
  func.func @transform_2(%arg0: i32, %arg1: i32) -> (i32, i32) {
    %c0_i32 = arith.constant 0 : i32
    %c0_i32_0 = arith.constant 0 : i32
    %c0_i32_1 = arith.constant 0 : i32
    return %c0_i32, %c0_i32_0 : i32, i32
  }
  func.func @transform_3(%arg0: i32, %arg1: i32) -> (i32, i32, i32) {
    %c0_i32 = arith.constant 0 : i32
    %c0_i32_0 = arith.constant 0 : i32
    return %arg0, %c0_i32, %arg1 : i32, i32, i32
  }
}

module attributes {stable_mosaic.version = 11 : i64} {
  func.func @_conv_bn_act_kernel(%arg0: i32, %arg1: i32, %arg2: memref<1x432x512xbf16, #tpu.memory_space<vmem>>, %arg3: memref<16x432xbf16, #tpu.memory_space<vmem>>, %arg4: memref<16x1xf32, #tpu.memory_space<vmem>>, %arg5: memref<1x16x512xbf16, #tpu.memory_space<vmem>>) attributes {dimension_semantics = [#tpu.dimension_semantics<parallel>, #tpu.dimension_semantics<parallel>], iteration_bounds = array<i64: 2, 1>, scalar_prefetch = 0 : i64, scratch_operands = 0 : i64, tpu.core_type = #tpu.core_type<tc>, window_params = [{transform_indices = @transform_0, window_bounds = array<i64: 1, 432, 512>}, {pipeline_mode = #tpu.pipeline_mode<synchronous>, transform_indices = @transform_1, window_bounds = array<i64: 16, 432>}, {pipeline_mode = #tpu.pipeline_mode<synchronous>, transform_indices = @transform_2, window_bounds = array<i64: 16, 1>}, {transform_indices = @transform_3, window_bounds = array<i64: 1, 16, 512>}]} {
    %c0 = arith.constant 0 : index
    %c0_0 = arith.constant 0 : index
    %0 = vector.load %arg3[%c0, %c0_0] : memref<16x432xbf16, #tpu.memory_space<vmem>>, vector<16x432xbf16>
    %c0_1 = arith.constant 0 : index
    %c0_2 = arith.constant 0 : index
    %c0_3 = arith.constant 0 : index
    %1 = vector.load %arg2[%c0_1, %c0_2, %c0_3] : memref<1x432x512xbf16, #tpu.memory_space<vmem>>, vector<1x432x512xbf16>
    %2 = vector.shape_cast %1 : vector<1x432x512xbf16> to vector<432x512xbf16>
    %cst = arith.constant dense<0.000000e+00> : vector<16x512xf32>
    %3 = tpu.matmul %0, %2, %cst {dimension_numbers = #tpu.dot_dimension_numbers<[1], [0], [0], [1], [0, 0, 1, 1], [], []>} : vector<16x432xbf16>, vector<432x512xbf16>, vector<16x512xf32> -> vector<16x512xf32>
    %c0_4 = arith.constant 0 : index
    %c0_5 = arith.constant 0 : index
    %4 = vector.load %arg4[%c0_4, %c0_5] : memref<16x1xf32, #tpu.memory_space<vmem>>, vector<16x1xf32>
    %5 = vector.broadcast %4 : vector<16x1xf32> to vector<16x512xf32>
    %6 = arith.addf %3, %5 : vector<16x512xf32>
    %cst_6 = arith.constant 0.000000e+00 : f32
    %7 = vector.broadcast %cst_6 : f32 to vector<16x512xf32>
    %8 = arith.maximumf %6, %7 : vector<16x512xf32>
    %9 = arith.truncf %8 : vector<16x512xf32> to vector<16x512xbf16>
    %c0_7 = arith.constant 0 : index
    %c0_8 = arith.constant 0 : index
    %c0_9 = arith.constant 0 : index
    %10 = vector.load %arg5[%c0_7, %c0_8, %c0_9] : memref<1x16x512xbf16, #tpu.memory_space<vmem>>, vector<1x16x512xbf16>
    %11 = vector.shape_cast %10 : vector<1x16x512xbf16> to vector<16x512xbf16>
    %12 = vector.shape_cast %9 : vector<16x512xbf16> to vector<1x16x512xbf16>
    tpu.vector_store %arg5[%c0_7, %c0_8, %c0_9], %12 {strides = array<i32>} : memref<1x16x512xbf16, #tpu.memory_space<vmem>>, vector<1x16x512xbf16>,
    return
  }
  func.func @transform_0(%arg0: i32, %arg1: i32) -> (i32, i32, i32) {
    %c0_i32 = arith.constant 0 : i32
    %c0_i32_0 = arith.constant 0 : i32
    return %arg0, %c0_i32, %arg1 : i32, i32, i32
  }
  func.func @transform_1(%arg0: i32, %arg1: i32) -> (i32, i32) {
    %c0_i32 = arith.constant 0 : i32
    %c0_i32_0 = arith.constant 0 : i32
    %c0_i32_1 = arith.constant 0 : i32
    return %c0_i32, %c0_i32_0 : i32, i32
  }
  func.func @transform_2(%arg0: i32, %arg1: i32) -> (i32, i32) {
    %c0_i32 = arith.constant 0 : i32
    %c0_i32_0 = arith.constant 0 : i32
    %c0_i32_1 = arith.constant 0 : i32
    return %c0_i32, %c0_i32_0 : i32, i32
  }
  func.func @transform_3(%arg0: i32, %arg1: i32) -> (i32, i32, i32) {
    %c0_i32 = arith.constant 0 : i32
    %c0_i32_0 = arith.constant 0 : i32
    return %arg0, %c0_i32, %arg1 : i32, i32, i32
  }
}

module attributes {stable_mosaic.version = 11 : i64} {
  func.func @_conv_bn_act_kernel(%arg0: i32, %arg1: i32, %arg2: memref<1x432x512xbf16, #tpu.memory_space<vmem>>, %arg3: memref<16x432xbf16, #tpu.memory_space<vmem>>, %arg4: memref<16x1xf32, #tpu.memory_space<vmem>>, %arg5: memref<1x16x512xbf16, #tpu.memory_space<vmem>>, %arg6: memref<1x16x512xbf16, #tpu.memory_space<vmem>>) attributes {dimension_semantics = [#tpu.dimension_semantics<parallel>, #tpu.dimension_semantics<parallel>], iteration_bounds = array<i64: 2, 1>, scalar_prefetch = 0 : i64, scratch_operands = 0 : i64, tpu.core_type = #tpu.core_type<tc>, window_params = [{transform_indices = @transform_0, window_bounds = array<i64: 1, 432, 512>}, {pipeline_mode = #tpu.pipeline_mode<synchronous>, transform_indices = @transform_1, window_bounds = array<i64: 16, 432>}, {pipeline_mode = #tpu.pipeline_mode<synchronous>, transform_indices = @transform_2, window_bounds = array<i64: 16, 1>}, {transform_indices = @transform_3, window_bounds = array<i64: 1, 16, 512>}, {transform_indices = @transform_4, window_bounds = array<i64: 1, 16, 512>}]} {
    %c0 = arith.constant 0 : index
    %c0_0 = arith.constant 0 : index
    %0 = vector.load %arg3[%c0, %c0_0] : memref<16x432xbf16, #tpu.memory_space<vmem>>, vector<16x432xbf16>
    %c0_1 = arith.constant 0 : index
    %c0_2 = arith.constant 0 : index
    %c0_3 = arith.constant 0 : index
    %1 = vector.load %arg2[%c0_1, %c0_2, %c0_3] : memref<1x432x512xbf16, #tpu.memory_space<vmem>>, vector<1x432x512xbf16>
    %2 = vector.shape_cast %1 : vector<1x432x512xbf16> to vector<432x512xbf16>
    %cst = arith.constant dense<0.000000e+00> : vector<16x512xf32>
    %3 = tpu.matmul %0, %2, %cst {dimension_numbers = #tpu.dot_dimension_numbers<[1], [0], [0], [1], [0, 0, 1, 1], [], []>} : vector<16x432xbf16>, vector<432x512xbf16>, vector<16x512xf32> -> vector<16x512xf32>
    %c0_4 = arith.constant 0 : index
    %c0_5 = arith.constant 0 : index
    %4 = vector.load %arg4[%c0_4, %c0_5] : memref<16x1xf32, #tpu.memory_space<vmem>>, vector<16x1xf32>
    %5 = vector.broadcast %4 : vector<16x1xf32> to vector<16x512xf32>
    %6 = arith.addf %3, %5 : vector<16x512xf32>
    %c0_6 = arith.constant 0 : index
    %c0_7 = arith.constant 0 : index
    %c0_8 = arith.constant 0 : index
    %7 = vector.load %arg5[%c0_6, %c0_7, %c0_8] : memref<1x16x512xbf16, #tpu.memory_space<vmem>>, vector<1x16x512xbf16>
    %8 = vector.shape_cast %7 : vector<1x16x512xbf16> to vector<16x512xbf16>
    %9 = arith.extf %8 : vector<16x512xbf16> to vector<16x512xf32>
    %10 = arith.addf %6, %9 : vector<16x512xf32>
    %11 = arith.truncf %10 : vector<16x512xf32> to vector<16x512xbf16>
    %c0_9 = arith.constant 0 : index
    %c0_10 = arith.constant 0 : index
    %c0_11 = arith.constant 0 : index
    %12 = vector.load %arg6[%c0_9, %c0_10, %c0_11] : memref<1x16x512xbf16, #tpu.memory_space<vmem>>, vector<1x16x512xbf16>
    %13 = vector.shape_cast %12 : vector<1x16x512xbf16> to vector<16x512xbf16>
    %14 = vector.shape_cast %11 : vector<16x512xbf16> to vector<1x16x512xbf16>
    tpu.vector_store %arg6[%c0_9, %c0_10, %c0_11], %14 {strides = array<i32>} : memref<1x16x512xbf16, #tpu.memory_space<vmem>>, vector<1x16x512xbf16>,
    return
  }
  func.func @transform_0(%arg0: i32, %arg1: i32) -> (i32, i32, i32) {
    %c0_i32 = arith.constant 0 : i32
    %c0_i32_0 = arith.constant 0 : i32
    return %arg0, %c0_i32, %arg1 : i32, i32, i32
  }
  func.func @transform_1(%arg0: i32, %arg1: i32) -> (i32, i32) {
    %c0_i32 = arith.constant 0 : i32
    %c0_i32_0 = arith.constant 0 : i32
    %c0_i32_1 = arith.constant 0 : i32
    return %c0_i32, %c0_i32_0 : i32, i32
  }
  func.func @transform_2(%arg0: i32, %arg1: i32) -> (i32, i32) {
    %c0_i32 = arith.constant 0 : i32
    %c0_i32_0 = arith.constant 0 : i32
    %c0_i32_1 = arith.constant 0 : i32
    return %c0_i32, %c0_i32_0 : i32, i32
  }
  func.func @transform_3(%arg0: i32, %arg1: i32) -> (i32, i32, i32) {
    %c0_i32 = arith.constant 0 : i32
    %c0_i32_0 = arith.constant 0 : i32
    return %arg0, %c0_i32, %arg1 : i32, i32, i32
  }
  func.func @transform_4(%arg0: i32, %arg1: i32) -> (i32, i32, i32) {
    %c0_i32 = arith.constant 0 : i32
    %c0_i32_0 = arith.constant 0 : i32
    return %arg0, %c0_i32, %arg1 : i32, i32, i32
  }
}

module attributes {stable_mosaic.version = 11 : i64} {
  func.func @_conv_bn_act_kernel(%arg0: i32, %arg1: i32, %arg2: memref<1x432x2048xbf16, #tpu.memory_space<vmem>>, %arg3: memref<8x432xbf16, #tpu.memory_space<vmem>>, %arg4: memref<8x1xf32, #tpu.memory_space<vmem>>, %arg5: memref<1x8x2048xbf16, #tpu.memory_space<vmem>>) attributes {dimension_semantics = [#tpu.dimension_semantics<parallel>, #tpu.dimension_semantics<parallel>], iteration_bounds = array<i64: 2, 2>, scalar_prefetch = 0 : i64, scratch_operands = 0 : i64, tpu.core_type = #tpu.core_type<tc>, window_params = [{transform_indices = @transform_0, window_bounds = array<i64: 1, 432, 2048>}, {pipeline_mode = #tpu.pipeline_mode<synchronous>, transform_indices = @transform_1, window_bounds = array<i64: 8, 432>}, {pipeline_mode = #tpu.pipeline_mode<synchronous>, transform_indices = @transform_2, window_bounds = array<i64: 8, 1>}, {transform_indices = @transform_3, window_bounds = array<i64: 1, 8, 2048>}]} {
    %c0 = arith.constant 0 : index
    %c0_0 = arith.constant 0 : index
    %0 = vector.load %arg3[%c0, %c0_0] : memref<8x432xbf16, #tpu.memory_space<vmem>>, vector<8x432xbf16>
    %c0_1 = arith.constant 0 : index
    %c0_2 = arith.constant 0 : index
    %c0_3 = arith.constant 0 : index
    %1 = vector.load %arg2[%c0_1, %c0_2, %c0_3] : memref<1x432x2048xbf16, #tpu.memory_space<vmem>>, vector<1x432x2048xbf16>
    %2 = vector.shape_cast %1 : vector<1x432x2048xbf16> to vector<432x2048xbf16>
    %cst = arith.constant dense<0.000000e+00> : vector<8x2048xf32>
    %3 = tpu.matmul %0, %2, %cst {dimension_numbers = #tpu.dot_dimension_numbers<[1], [0], [0], [1], [0, 0, 1, 1], [], []>} : vector<8x432xbf16>, vector<432x2048xbf16>, vector<8x2048xf32> -> vector<8x2048xf32>
    %c0_4 = arith.constant 0 : index
    %c0_5 = arith.constant 0 : index
    %4 = vector.load %arg4[%c0_4, %c0_5] : memref<8x1xf32, #tpu.memory_space<vmem>>, vector<8x1xf32>
    %5 = vector.broadcast %4 : vector<8x1xf32> to vector<8x2048xf32>
    %6 = arith.addf %3, %5 : vector<8x2048xf32>
    %cst_6 = arith.constant 0.000000e+00 : f32
    %7 = vector.broadcast %cst_6 : f32 to vector<8x2048xf32>
    %8 = arith.maximumf %6, %7 : vector<8x2048xf32>
    %9 = arith.truncf %8 : vector<8x2048xf32> to vector<8x2048xbf16>
    %c0_7 = arith.constant 0 : index
    %c0_8 = arith.constant 0 : index
    %c0_9 = arith.constant 0 : index
    %10 = vector.load %arg5[%c0_7, %c0_8, %c0_9] : memref<1x8x2048xbf16, #tpu.memory_space<vmem>>, vector<1x8x2048xbf16>
    %11 = vector.shape_cast %10 : vector<1x8x2048xbf16> to vector<8x2048xbf16>
    %12 = vector.shape_cast %9 : vector<8x2048xbf16> to vector<1x8x2048xbf16>
    tpu.vector_store %arg5[%c0_7, %c0_8, %c0_9], %12 {strides = array<i32>} : memref<1x8x2048xbf16, #tpu.memory_space<vmem>>, vector<1x8x2048xbf16>,
    return
  }
  func.func @transform_0(%arg0: i32, %arg1: i32) -> (i32, i32, i32) {
    %c0_i32 = arith.constant 0 : i32
    %c0_i32_0 = arith.constant 0 : i32
    return %arg0, %c0_i32, %arg1 : i32, i32, i32
  }
  func.func @transform_1(%arg0: i32, %arg1: i32) -> (i32, i32) {
    %c0_i32 = arith.constant 0 : i32
    %c0_i32_0 = arith.constant 0 : i32
    %c0_i32_1 = arith.constant 0 : i32
    return %c0_i32, %c0_i32_0 : i32, i32
  }
  func.func @transform_2(%arg0: i32, %arg1: i32) -> (i32, i32) {
    %c0_i32 = arith.constant 0 : i32
    %c0_i32_0 = arith.constant 0 : i32
    %c0_i32_1 = arith.constant 0 : i32
    return %c0_i32, %c0_i32_0 : i32, i32
  }
  func.func @transform_3(%arg0: i32, %arg1: i32) -> (i32, i32, i32) {
    %c0_i32 = arith.constant 0 : i32
    %c0_i32_0 = arith.constant 0 : i32
    return %arg0, %c0_i32, %arg1 : i32, i32, i32
  }
}

module attributes {stable_mosaic.version = 11 : i64} {
  func.func @_conv_bn_act_kernel(%arg0: i32, %arg1: i32, %arg2: memref<1x216x2048xbf16, #tpu.memory_space<vmem>>, %arg3: memref<8x216xbf16, #tpu.memory_space<vmem>>, %arg4: memref<8x1xf32, #tpu.memory_space<vmem>>, %arg5: memref<1x8x2048xf32, #tpu.memory_space<vmem>>) attributes {dimension_semantics = [#tpu.dimension_semantics<parallel>, #tpu.dimension_semantics<parallel>], iteration_bounds = array<i64: 2, 2>, scalar_prefetch = 0 : i64, scratch_operands = 0 : i64, tpu.core_type = #tpu.core_type<tc>, window_params = [{transform_indices = @transform_0, window_bounds = array<i64: 1, 216, 2048>}, {pipeline_mode = #tpu.pipeline_mode<synchronous>, transform_indices = @transform_1, window_bounds = array<i64: 8, 216>}, {pipeline_mode = #tpu.pipeline_mode<synchronous>, transform_indices = @transform_2, window_bounds = array<i64: 8, 1>}, {transform_indices = @transform_3, window_bounds = array<i64: 1, 8, 2048>}]} {
    %c0 = arith.constant 0 : index
    %c0_0 = arith.constant 0 : index
    %0 = vector.load %arg3[%c0, %c0_0] : memref<8x216xbf16, #tpu.memory_space<vmem>>, vector<8x216xbf16>
    %c0_1 = arith.constant 0 : index
    %c0_2 = arith.constant 0 : index
    %c0_3 = arith.constant 0 : index
    %1 = vector.load %arg2[%c0_1, %c0_2, %c0_3] : memref<1x216x2048xbf16, #tpu.memory_space<vmem>>, vector<1x216x2048xbf16>
    %2 = vector.shape_cast %1 : vector<1x216x2048xbf16> to vector<216x2048xbf16>
    %cst = arith.constant dense<0.000000e+00> : vector<8x2048xf32>
    %3 = tpu.matmul %0, %2, %cst {dimension_numbers = #tpu.dot_dimension_numbers<[1], [0], [0], [1], [0, 0, 1, 1], [], []>} : vector<8x216xbf16>, vector<216x2048xbf16>, vector<8x2048xf32> -> vector<8x2048xf32>
    %c0_4 = arith.constant 0 : index
    %c0_5 = arith.constant 0 : index
    %4 = vector.load %arg4[%c0_4, %c0_5] : memref<8x1xf32, #tpu.memory_space<vmem>>, vector<8x1xf32>
    %5 = vector.broadcast %4 : vector<8x1xf32> to vector<8x2048xf32>
    %6 = arith.addf %3, %5 : vector<8x2048xf32>
    %cst_6 = arith.constant 0.000000e+00 : f32
    %7 = vector.broadcast %cst_6 : f32 to vector<8x2048xf32>
    %8 = arith.maximumf %6, %7 : vector<8x2048xf32>
    %c0_7 = arith.constant 0 : index
    %c0_8 = arith.constant 0 : index
    %c0_9 = arith.constant 0 : index
    %9 = vector.load %arg5[%c0_7, %c0_8, %c0_9] : memref<1x8x2048xf32, #tpu.memory_space<vmem>>, vector<1x8x2048xf32>
    %10 = vector.shape_cast %9 : vector<1x8x2048xf32> to vector<8x2048xf32>
    %11 = vector.shape_cast %8 : vector<8x2048xf32> to vector<1x8x2048xf32>
    tpu.vector_store %arg5[%c0_7, %c0_8, %c0_9], %11 {strides = array<i32>} : memref<1x8x2048xf32, #tpu.memory_space<vmem>>, vector<1x8x2048xf32>,
    return
  }
  func.func @transform_0(%arg0: i32, %arg1: i32) -> (i32, i32, i32) {
    %c0_i32 = arith.constant 0 : i32
    %c0_i32_0 = arith.constant 0 : i32
    return %arg0, %c0_i32, %arg1 : i32, i32, i32
  }
  func.func @transform_1(%arg0: i32, %arg1: i32) -> (i32, i32) {
    %c0_i32 = arith.constant 0 : i32
    %c0_i32_0 = arith.constant 0 : i32
    %c0_i32_1 = arith.constant 0 : i32
    return %c0_i32, %c0_i32_0 : i32, i32
  }
  func.func @transform_2(%arg0: i32, %arg1: i32) -> (i32, i32) {
    %c0_i32 = arith.constant 0 : i32
    %c0_i32_0 = arith.constant 0 : i32
    %c0_i32_1 = arith.constant 0 : i32
    return %c0_i32, %c0_i32_0 : i32, i32
  }
  func.func @transform_3(%arg0: i32, %arg1: i32) -> (i32, i32, i32) {
    %c0_i32 = arith.constant 0 : i32
    %c0_i32_0 = arith.constant 0 : i32
    return %arg0, %c0_i32, %arg1 : i32, i32, i32
  }
}

</mosaic_0001>

<llo_original>
// kernel: decoder_forward.11
$region0: #{decoder_forward.11}
  #allocation0 [shape = 'u32[]', space=smem, size = 0x4, offset = 0x4, fixed_abs, tag = 'smem constant byte address 0x4 - core index']
  #allocation1 [shape = 'u32[144,128]{1,0:T(1,128)}', space=vmem, size = 0x12000, scoped, tag = 'internal scratch']
  %s0 = inlined_call_operand.vmem [shape: bf16[2,864,64], index: 0, kind: input, shape index: {}]
  %s1 = inlined_call_operand.vmem [shape: bf16[32,864], index: 1, kind: input, shape index: {}]
  %s2 = inlined_call_operand.vmem [shape: f32[32,1], index: 2, kind: input, shape index: {}]
  %s3 = inlined_call_operand.vmem [shape: bf16[2,32,64], index: 3, kind: output, shape index: {}]
  %s4 = sld [smem:[#allocation0]]
  $region45: #{decoder_forward.11} parent=0
    _
  %s6 = ssub.s32 1, %s4
  %s7 = scalar_select 0, %s6, %s4
  loop: start=0, step=1, limit=4
  $region2: #{decoder_forward.11} parent=0 // loop_pre_header
    _
  $region3: #{decoder_forward.11} parent=0 // loop_header
    %s9 = sphi 0, %s13
    %p10 = scmp.ge.s32.totalorder %s9, 4
    %s16 = sphi 0, %s28
    %s17 = sphi 0, %s24
    %s18 = sphi 0, %s16
    %s19 = sphi 0, %s17
    %s20 = sphi 0, %s18
    %s21 = sphi 0, %s19
    %s33 = sphi 0, %s35
    %s36 = sphi 0, %s33
    %s37 = sphi 0, %s36
    %s53 = sphi 0, %s37
    %s57 = sphi 0, %s57
    %s59 = sphi 0, %s57
    %s60 = sphi 0, %s59
    %s74 = sphi 0, %s60
    %s78 = sphi 0, %s78
    %s80 = sphi 0, %s78
    %s81 = sphi 0, %s80
    %s95 = sphi 0, %s81
    %s103 = sphi 0, %s105
    %s106 = sphi 0, %s103
    %s107 = sphi 0, %s106
    %s123 = sphi 0, %s107
  $region4: #{decoder_forward.11} parent=0 // loop_header_branch
    %12 = sbr.rel (%p10) target = $region8
  $region5: #{decoder_forward.11} parent=0 // loop_body
    %s14 = ssub.s32 %s9, 1
    %s15 = ssub.s32 %s9, 2
    %s22 = sadd.s32 1, %s17
    %p23 = scmp.ge.s32.totalorder %s22, 1
    %s24 = scalar_select %p23, 0, %s22
    %s25 = sadd.s32 1, %s16
    %s26 = scalar_select %p23, %s25, %s16
    %p27 = scmp.ge.s32.totalorder %s26, 2
    %s28 = scalar_select %p27, 0, %s26
    %s29 = ssub.s32 %s16, %s28
    %s30 = ssub.s32 %s17, %s24
    %s31 = sor.u32 %s29, %s30
    %p32 = scmp.eq.s32.totalorder %s31, 0
    %s34 = sadd.s32 %s33, 1
    %s35 = scalar_select %p32, %s33, %s34
    %p38 = pneg %p32
    %p39 = scmp.eq.s32.totalorder %s9, 1
    %p40 = por %p38, %p39
    %p41 = scmp.ne.s32.totalorder %s33, %s36
    %p42 = scmp.eq.s32.totalorder %s9, 0
    %p43 = por %p41, %p42
    %p44 = scmp.ne.s32.totalorder %s33, %s36
    %p45 = scmp.eq.s32.totalorder %s14, 1
    %p46 = por %p44, %p45
    %p47 = scmp.ne.s32.totalorder %s36, %s37
    %p48 = scmp.eq.s32.totalorder %s14, 0
    %p49 = por %p47, %p48
    %p50 = scmp.ne.s32.totalorder %s36, %s37
    %p51 = scmp.eq.s32.totalorder %s15, 1
    %p52 = por %p50, %p51
    %p54 = scmp.ne.s32.totalorder %s37, %s53
    %p55 = scmp.eq.s32.totalorder %s15, 0
    %p56 = por %p54, %p55
    %s58 = sadd.s32 %s57, 1
    %p61 = scmp.eq.s32.totalorder %s9, 1
    %p62 = scmp.ne.s32.totalorder %s57, %s59
    %p63 = scmp.eq.s32.totalorder %s9, 0
    %p64 = por %p62, %p63
    %p65 = scmp.ne.s32.totalorder %s57, %s59
    %p66 = scmp.eq.s32.totalorder %s14, 1
    %p67 = por %p65, %p66
    %p68 = scmp.ne.s32.totalorder %s59, %s60
    %p69 = scmp.eq.s32.totalorder %s14, 0
    %p70 = por %p68, %p69
    %p71 = scmp.ne.s32.totalorder %s59, %s60
    %p72 = scmp.eq.s32.totalorder %s15, 1
    %p73 = por %p71, %p72
    %p75 = scmp.ne.s32.totalorder %s60, %s74
    %p76 = scmp.eq.s32.totalorder %s15, 0
    %p77 = por %p75, %p76
    %s79 = sadd.s32 %s78, 1
    %p82 = scmp.eq.s32.totalorder %s9, 1
    %p83 = scmp.ne.s32.totalorder %s78, %s80
    %p84 = scmp.eq.s32.totalorder %s9, 0
    %p85 = por %p83, %p84
    %p86 = scmp.ne.s32.totalorder %s78, %s80
    %p87 = scmp.eq.s32.totalorder %s14, 1
    %p88 = por %p86, %p87
    %p89 = scmp.ne.s32.totalorder %s80, %s81
    %p90 = scmp.eq.s32.totalorder %s14, 0
    %p91 = por %p89, %p90
    %p92 = scmp.ne.s32.totalorder %s80, %s81
    %p93 = scmp.eq.s32.totalorder %s15, 1
    %p94 = por %p92, %p93
    %p96 = scmp.ne.s32.totalorder %s81, %s95
    %p97 = scmp.eq.s32.totalorder %s15, 0
    %p98 = por %p96, %p97
    %s99 = ssub.s32 %s16, %s28
    %s100 = ssub.s32 %s17, %s24
    %s101 = sor.u32 %s99, %s100
    %p102 = scmp.eq.s32.totalorder %s101, 0
    %s104 = sadd.s32 %s103, 1
    %s105 = scalar_select %p102, %s103, %s104
    %p108 = pneg %p102
    %p109 = scmp.eq.s32.totalorder %s9, 1
    %p110 = por %p108, %p109
    %p111 = scmp.ne.s32.totalorder %s103, %s106
    %p112 = scmp.eq.s32.totalorder %s9, 0
    %p113 = por %p111, %p112
    %p114 = scmp.ne.s32.totalorder %s103, %s106
    %p115 = scmp.eq.s32.totalorder %s14, 1
    %p116 = por %p114, %p115
    %p117 = scmp.ne.s32.totalorder %s106, %s107
    %p118 = scmp.eq.s32.totalorder %s14, 0
    %p119 = por %p117, %p118
    %p120 = scmp.ne.s32.totalorder %s106, %s107
    %p121 = scmp.eq.s32.totalorder %s15, 1
    %p122 = por %p120, %p121
    %p124 = scmp.ne.s32.totalorder %s107, %s123
    %p125 = scmp.eq.s32.totalorder %s15, 0
    %p126 = por %p124, %p125
    %p127 = scmp.le.s32.totalorder 1, %s9
    %p128 = scmp.lt.s32.totalorder %s9, 3
    %p129 = pnand %p127, %p128
    %p130 = pneg %p129
    // Predicated region
    $region9: #{decoder_forward.11} parent=5 // pred_check
      _
    $region10: #{decoder_forward.11} parent=5 // pred_check_branch
      %132 = sbr.rel (%p129) target = $region12
    $region11: #{decoder_forward.11} parent=5 // pred_region
      %s133 = ssub.s32 %s9, 1
      // Predicated region
      $region13: #{decoder_forward.11} parent=11 // pred_check
        %p134 = pneg %p70
      $region14: #{decoder_forward.11} parent=11 // pred_check_branch
        %136 = sbr.rel (%p134) target = $region16
      $region15: #{decoder_forward.11} parent=11 // pred_region
        _
      $region16: #{decoder_forward.11} parent=11 // pred_fallthru
        _
      // Predicated region
      $region17: #{decoder_forward.11} parent=11 // pred_check
        %p137 = pneg %p91
      $region18: #{decoder_forward.11} parent=11 // pred_check_branch
        %139 = sbr.rel (%p137) target = $region20
      $region19: #{decoder_forward.11} parent=11 // pred_region
        _
      $region20: #{decoder_forward.11} parent=11 // pred_fallthru
        _
    $region12: #{decoder_forward.11} parent=5 // pred_fallthru
      _
    %p140 = scmp.lt.s32.totalorder %s9, 2
    // Predicated region
    $region21: #{decoder_forward.11} parent=5 // pred_check
      %p141 = pneg %p140
    $region22: #{decoder_forward.11} parent=5 // pred_check_branch
      %143 = sbr.rel (%p141) target = $region24
    $region23: #{decoder_forward.11} parent=5 // pred_region
      // Predicated region
      $region25: #{decoder_forward.11} parent=23 // pred_check
        %p144 = pneg %p43
      $region26: #{decoder_forward.11} parent=23 // pred_check_branch
        %146 = sbr.rel (%p144) target = $region28
      $region27: #{decoder_forward.11} parent=23 // pred_region
        %p147 = scmp.lt.s32.totalorder %s16, 1
        %s148 = scalar_select %p147, %s16, 1
        %p149 = scmp.lt.s32.totalorder %s17, 0
        %s150 = scalar_select %p149, %s17, 0
        %s151 = smul.addr %s148, 108
        %s152 = sadd.s32 %s150, %s151
        %s153 = smul.addr %s152, 4
        %s154 = scalar_lea.vmem %s0, %s153
      $region28: #{decoder_forward.11} parent=23 // pred_fallthru
        _
    $region24: #{decoder_forward.11} parent=5 // pred_fallthru
      _
    %p155 = scmp.le.s32.totalorder 1, %s9
    %p156 = scmp.lt.s32.totalorder %s9, 3
    %p157 = pnand %p155, %p156
    %p158 = pneg %p157
    // Predicated region
    $region29: #{decoder_forward.11} parent=5 // pred_check
      _
    $region30: #{decoder_forward.11} parent=5 // pred_check_branch
      %160 = sbr.rel (%p157) target = $region32
    $region31: #{decoder_forward.11} parent=5 // pred_region
      %s161 = ssub.s32 %s9, 1
      %p162 = scmp.lt.s32.totalorder %s18, 1
      %s163 = scalar_select %p162, %s18, 1
      %p164 = scmp.lt.s32.totalorder %s19, 0
      %s165 = scalar_select %p164, %s19, 0
      %s166 = smul.addr %s163, 108
      %s167 = sadd.s32 %s165, %s166
      %s168 = smul.addr %s167, 4
      %s169 = scalar_lea.vmem %s0, %s168
      %p170 = pneg %p49
      %p171 = pneg %p46
      %p172 = pneg %p70
      %p173 = pneg %p67
      %p174 = pneg %p91
      %p175 = pneg %p88
      %p176 = pneg %p119
      %p177 = pneg %p116
      %p178 = scmp.lt.s32.totalorder %s18, 1
      %s179 = scalar_select %p178, %s18, 1
      %p180 = scmp.lt.s32.totalorder %s19, 0
      %s181 = scalar_select %p180, %s19, 0
      %s182 = smul.addr %s179, 4
      %s183 = sadd.s32 %s181, %s182
      %s184 = smul.addr %s183, 4
      %s185 = scalar_lea.vmem %s3, %s184
      %p186 = scmp.lt.s32.totalorder %s18, 1
      %s187 = scalar_select %p186, %s18, 1
      %p188 = scmp.lt.s32.totalorder %s19, 0
      %s189 = scalar_select %p188, %s19, 0
      %s190 = smul.addr %s187, 108
      %s191 = sadd.s32 %s189, %s190
      %s192 = smul.addr %s191, 4
      %s193 = scalar_lea.vmem %s0, %s192
      %p194 = scmp.lt.s32.totalorder %s18, 1
      %s195 = scalar_select %p194, %s18, 1
      %p196 = scmp.lt.s32.totalorder %s19, 0
      %s197 = scalar_select %p196, %s19, 0
      %s198 = smul.addr %s195, 4
      %s199 = sadd.s32 %s197, %s198
      %s200 = smul.addr %s199, 4
      %s201 = scalar_lea.vmem %s3, %s200
      %v203 = vld [vmem:[%s1] sm:$0xff]
      %v204 = vld [vmem:[%s1 + $0x8] sm:$0xff]
      %v205 = vld [vmem:[%s1 + $0x10] sm:$0xff]
      %v206 = vld [vmem:[%s1 + $0x18] sm:$0xf]
      %v207 = vld [vmem:[%s1 + $0x1c] sm:$0xff]
      %v208 = vld [vmem:[%s1 + $0x24] sm:$0xff]
      %v209 = vld [vmem:[%s1 + $0x2c] sm:$0xff]
      %v210 = vld [vmem:[%s1 + $0x34] sm:$0xf]
      %v211 = vld [vmem:[%s1 + $0x38] sm:$0xff]
      %v212 = vld [vmem:[%s1 + $0x40] sm:$0xff]
      %v213 = vld [vmem:[%s1 + $0x48] sm:$0xff]
      %v214 = vld [vmem:[%s1 + $0x50] sm:$0xf]
      %v215 = vld [vmem:[%s1 + $0x54] sm:$0xff]
      %v216 = vld [vmem:[%s1 + $0x5c] sm:$0xff]
      %v217 = vld [vmem:[%s1 + $0x64] sm:$0xff]
      %v218 = vld [vmem:[%s1 + $0x6c] sm:$0xf]
      %v219 = vld [vmem:[%s193] sm:$0xf]
      %v220 = vld [vmem:[%s193 + $0x4] sm:$0xf]
      %v221 = vld [vmem:[%s193 + $0x8] sm:$0xf]
      %v222 = vld [vmem:[%s193 + $0xc] sm:$0xf]
      %v223 = vld [vmem:[%s193 + $0x10] sm:$0xf]
      %v224 = vld [vmem:[%s193 + $0x14] sm:$0xf]
      %v225 = vld [vmem:[%s193 + $0x18] sm:$0xf]
      %v226 = vld [vmem:[%s193 + $0x1c] sm:$0xf]
      %v227 = vld [vmem:[%s193 + $0x20] sm:$0xf]
      %v228 = vld [vmem:[%s193 + $0x24] sm:$0xf]
      %v229 = vld [vmem:[%s193 + $0x28] sm:$0xf]
      %v230 = vld [vmem:[%s193 + $0x2c] sm:$0xf]
      %v231 = vld [vmem:[%s193 + $0x30] sm:$0xf]
      %v232 = vld [vmem:[%s193 + $0x34] sm:$0xf]
      %v233 = vld [vmem:[%s193 + $0x38] sm:$0xf]
      %v234 = vld [vmem:[%s193 + $0x3c] sm:$0xf]
      %v235 = vld [vmem:[%s193 + $0x40] sm:$0xf]
      %v236 = vld [vmem:[%s193 + $0x44] sm:$0xf]
      %v237 = vld [vmem:[%s193 + $0x48] sm:$0xf]
      %v238 = vld [vmem:[%s193 + $0x4c] sm:$0xf]
      %v239 = vld [vmem:[%s193 + $0x50] sm:$0xf]
      %v240 = vld [vmem:[%s193 + $0x54] sm:$0xf]
      %v241 = vld [vmem:[%s193 + $0x58] sm:$0xf]
      %v242 = vld [vmem:[%s193 + $0x5c] sm:$0xf]
      %v243 = vld [vmem:[%s193 + $0x60] sm:$0xf]
      %v244 = vld [vmem:[%s193 + $0x64] sm:$0xf]
      %v245 = vld [vmem:[%s193 + $0x68] sm:$0xf]
      %v246 = vld [vmem:[%s193 + $0x6c] sm:$0xf]
      %v247 = vld [vmem:[%s193 + $0x70] sm:$0xf]
      %v248 = vld [vmem:[%s193 + $0x74] sm:$0xf]
      %v249 = vld [vmem:[%s193 + $0x78] sm:$0xf]
      %v250 = vld [vmem:[%s193 + $0x7c] sm:$0xf]
      %v251 = vld [vmem:[%s193 + $0x80] sm:$0xf]
      %v252 = vld [vmem:[%s193 + $0x84] sm:$0xf]
      %v253 = vld [vmem:[%s193 + $0x88] sm:$0xf]
      %v254 = vld [vmem:[%s193 + $0x8c] sm:$0xf]
      %v255 = vld [vmem:[%s193 + $0x90] sm:$0xf]
      %v256 = vld [vmem:[%s193 + $0x94] sm:$0xf]
      %v257 = vld [vmem:[%s193 + $0x98] sm:$0xf]
      %v258 = vld [vmem:[%s193 + $0x9c] sm:$0xf]
      %v259 = vld [vmem:[%s193 + $0xa0] sm:$0xf]
      %v260 = vld [vmem:[%s193 + $0xa4] sm:$0xf]
      %v261 = vld [vmem:[%s193 + $0xa8] sm:$0xf]
      %v262 = vld [vmem:[%s193 + $0xac] sm:$0xf]
      %v263 = vld [vmem:[%s193 + $0xb0] sm:$0xf]
      %v264 = vld [vmem:[%s193 + $0xb4] sm:$0xf]
      %v265 = vld [vmem:[%s193 + $0xb8] sm:$0xf]
      %v266 = vld [vmem:[%s193 + $0xbc] sm:$0xf]
      %v267 = vld [vmem:[%s193 + $0xc0] sm:$0xf]
      %v268 = vld [vmem:[%s193 + $0xc4] sm:$0xf]
      %v269 = vld [vmem:[%s193 + $0xc8] sm:$0xf]
      %v270 = vld [vmem:[%s193 + $0xcc] sm:$0xf]
      %v271 = vld [vmem:[%s193 + $0xd0] sm:$0xf]
      %v272 = vld [vmem:[%s193 + $0xd4] sm:$0xf]
      %v273 = vld [vmem:[%s193 + $0xd8] sm:$0xf]
      %v274 = vld [vmem:[%s193 + $0xdc] sm:$0xf]
      %v275 = vld [vmem:[%s193 + $0xe0] sm:$0xf]
      %v276 = vld [vmem:[%s193 + $0xe4] sm:$0xf]
      %v277 = vld [vmem:[%s193 + $0xe8] sm:$0xf]
      %v278 = vld [vmem:[%s193 + $0xec] sm:$0xf]
      %v279 = vld [vmem:[%s193 + $0xf0] sm:$0xf]
      %v280 = vld [vmem:[%s193 + $0xf4] sm:$0xf]
      %v281 = vld [vmem:[%s193 + $0xf8] sm:$0xf]
      %v282 = vld [vmem:[%s193 + $0xfc] sm:$0xf]
      %v283 = vld [vmem:[%s193 + $0x100] sm:$0xf]
      %v284 = vld [vmem:[%s193 + $0x104] sm:$0xf]
      %v285 = vld [vmem:[%s193 + $0x108] sm:$0xf]
      %v286 = vld [vmem:[%s193 + $0x10c] sm:$0xf]
      %v287 = vld [vmem:[%s193 + $0x110] sm:$0xf]
      %v288 = vld [vmem:[%s193 + $0x114] sm:$0xf]
      %v289 = vld [vmem:[%s193 + $0x118] sm:$0xf]
      %v290 = vld [vmem:[%s193 + $0x11c] sm:$0xf]
      %v291 = vld [vmem:[%s193 + $0x120] sm:$0xf]
      %v292 = vld [vmem:[%s193 + $0x124] sm:$0xf]
      %v293 = vld [vmem:[%s193 + $0x128] sm:$0xf]
      %v294 = vld [vmem:[%s193 + $0x12c] sm:$0xf]
      %v295 = vld [vmem:[%s193 + $0x130] sm:$0xf]
      %v296 = vld [vmem:[%s193 + $0x134] sm:$0xf]
      %v297 = vld [vmem:[%s193 + $0x138] sm:$0xf]
      %v298 = vld [vmem:[%s193 + $0x13c] sm:$0xf]
      %v299 = vld [vmem:[%s193 + $0x140] sm:$0xf]
      %v300 = vld [vmem:[%s193 + $0x144] sm:$0xf]
      %v301 = vld [vmem:[%s193 + $0x148] sm:$0xf]
      %v302 = vld [vmem:[%s193 + $0x14c] sm:$0xf]
      %v303 = vld [vmem:[%s193 + $0x150] sm:$0xf]
      %v304 = vld [vmem:[%s193 + $0x154] sm:$0xf]
      %v305 = vld [vmem:[%s193 + $0x158] sm:$0xf]
      %v306 = vld [vmem:[%s193 + $0x15c] sm:$0xf]
      %v307 = vld [vmem:[%s193 + $0x160] sm:$0xf]
      %v308 = vld [vmem:[%s193 + $0x164] sm:$0xf]
      %v309 = vld [vmem:[%s193 + $0x168] sm:$0xf]
      %v310 = vld [vmem:[%s193 + $0x16c] sm:$0xf]
      %v311 = vld [vmem:[%s193 + $0x170] sm:$0xf]
      %v312 = vld [vmem:[%s193 + $0x174] sm:$0xf]
      %v313 = vld [vmem:[%s193 + $0x178] sm:$0xf]
      %v314 = vld [vmem:[%s193 + $0x17c] sm:$0xf]
      %v315 = vld [vmem:[%s193 + $0x180] sm:$0xf]
      %v316 = vld [vmem:[%s193 + $0x184] sm:$0xf]
      %v317 = vld [vmem:[%s193 + $0x188] sm:$0xf]
      %v318 = vld [vmem:[%s193 + $0x18c] sm:$0xf]
      %v319 = vld [vmem:[%s193 + $0x190] sm:$0xf]
      %v320 = vld [vmem:[%s193 + $0x194] sm:$0xf]
      %v321 = vld [vmem:[%s193 + $0x198] sm:$0xf]
      %v322 = vld [vmem:[%s193 + $0x19c] sm:$0xf]
      %v323 = vld [vmem:[%s193 + $0x1a0] sm:$0xf]
      %v324 = vld [vmem:[%s193 + $0x1a4] sm:$0xf]
      %v325 = vld [vmem:[%s193 + $0x1a8] sm:$0xf]
      %v326 = vld [vmem:[%s193 + $0x1ac] sm:$0xf]
      %v327 = vld [vmem:[%s2] sm:$0xff]
      %v328 = vld [vmem:[%s2 + $0x8] sm:$0xff]
      %v329 = vld [vmem:[%s2 + $0x10] sm:$0xff]
      %v330 = vld [vmem:[%s2 + $0x18] sm:$0xff]
      %332 = vset.pattern.permute.xlu0 0
      %333 = vperm.xlu0 %332, %v327
      %v334 = vpop.permute.xlu0 %333
      %337 = vset.pattern.permute.xlu0 0
      %338 = vperm.xlu0 %337, %v328
      %v339 = vpop.permute.xlu0 %338
      %342 = vset.pattern.permute.xlu0 0
      %343 = vperm.xlu0 %342, %v329
      %v344 = vpop.permute.xlu0 %343
      %347 = vset.pattern.permute.xlu0 0
      %348 = vperm.xlu0 %347, %v330
      %v349 = vpop.permute.xlu0 %348
      %v367 = vunpack.c.l.b16 %v203
      %v368 = vunpack.c.h.b16 %v203
      %v369 = vunpack.c.l.b16 %v204
      %v370 = vunpack.c.h.b16 %v204
      %v371 = vunpack.c.l.b16 %v205
      %v372 = vunpack.c.h.b16 %v205
      %v373 = vunpack.c.l.b16 %v206
      %v374 = vunpack.c.l.b16 %v207
      %v375 = vunpack.c.h.b16 %v207
      %v376 = vunpack.c.l.b16 %v208
      %v377 = vunpack.c.h.b16 %v208
      %v378 = vunpack.c.l.b16 %v209
      %v379 = vunpack.c.h.b16 %v209
      %v380 = vunpack.c.l.b16 %v210
      %v381 = vunpack.c.l.b16 %v211
      %v382 = vunpack.c.h.b16 %v211
      %v383 = vunpack.c.l.b16 %v212
      %v384 = vunpack.c.h.b16 %v212
      %v385 = vunpack.c.l.b16 %v213
      %v386 = vunpack.c.h.b16 %v213
      %v387 = vunpack.c.l.b16 %v214
      %v388 = vunpack.c.l.b16 %v215
      %v389 = vunpack.c.h.b16 %v215
      %v390 = vunpack.c.l.b16 %v216
      %v391 = vunpack.c.h.b16 %v216
      %v392 = vunpack.c.l.b16 %v217
      %v393 = vunpack.c.h.b16 %v217
      %v394 = vunpack.c.l.b16 %v218
      %v395 = vpack.c.b16 %v374, %v367
      %v396 = vpack.c.b16 %v375, %v368
      %v397 = vpack.c.b16 %v376, %v369
      %v398 = vpack.c.b16 %v377, %v370
      %v399 = vpack.c.b16 %v378, %v371
      %v400 = vpack.c.b16 %v379, %v372
      %v401 = vpack.c.b16 %v380, %v373
      %v402 = vpack.c.b16 %v388, %v381
      %v403 = vpack.c.b16 %v389, %v382
      %v404 = vpack.c.b16 %v390, %v383
      %v405 = vpack.c.b16 %v391, %v384
      %v406 = vpack.c.b16 %v392, %v385
      %v407 = vpack.c.b16 %v393, %v386
      %v408 = vpack.c.b16 %v394, %v387
      %v529 = vunpack.c.l.b16 %v219
      %v530 = vunpack.c.l.b16 %v220
      %v531 = vunpack.c.l.b16 %v221
      %v532 = vunpack.c.l.b16 %v222
      %v533 = vunpack.c.l.b16 %v223
      %v534 = vunpack.c.l.b16 %v224
      %v535 = vunpack.c.l.b16 %v225
      %v536 = vunpack.c.l.b16 %v226
      %v537 = vunpack.c.l.b16 %v227
      %v538 = vunpack.c.l.b16 %v228
      %v539 = vunpack.c.l.b16 %v229
      %v540 = vunpack.c.l.b16 %v230
      %v541 = vunpack.c.l.b16 %v231
      %v542 = vunpack.c.l.b16 %v232
      %v543 = vunpack.c.l.b16 %v233
      %v544 = vunpack.c.l.b16 %v234
      %v545 = vunpack.c.l.b16 %v235
      %v546 = vunpack.c.l.b16 %v236
      %v547 = vunpack.c.l.b16 %v237
      %v548 = vunpack.c.l.b16 %v238
      %v549 = vunpack.c.l.b16 %v239
      %v550 = vunpack.c.l.b16 %v240
      %v551 = vunpack.c.l.b16 %v241
      %v552 = vunpack.c.l.b16 %v242
      %v553 = vunpack.c.l.b16 %v243
      %v554 = vunpack.c.l.b16 %v244
      %v555 = vunpack.c.l.b16 %v245
      %v556 = vunpack.c.l.b16 %v246
      %v557 = vunpack.c.l.b16 %v247
      %v558 = vunpack.c.l.b16 %v248
      %v559 = vunpack.c.l.b16 %v249
      %v560 = vunpack.c.l.b16 %v250
      %v561 = vunpack.c.l.b16 %v251
      %v562 = vunpack.c.l.b16 %v252
      %v563 = vunpack.c.l.b16 %v253
      %v564 = vunpack.c.l.b16 %v254
      %v565 = vunpack.c.l.b16 %v255
      %v566 = vunpack.c.l.b16 %v256
      %v567 = vunpack.c.l.b16 %v257
      %v568 = vunpack.c.l.b16 %v258
      %v569 = vunpack.c.l.b16 %v259
      %v570 = vunpack.c.l.b16 %v260
      %v571 = vunpack.c.l.b16 %v261
      %v572 = vunpack.c.l.b16 %v262
      %v573 = vunpack.c.l.b16 %v263
      %v574 = vunpack.c.l.b16 %v264
      %v575 = vunpack.c.l.b16 %v265
      %v576 = vunpack.c.l.b16 %v266
      %v577 = vunpack.c.l.b16 %v267
      %v578 = vunpack.c.l.b16 %v268
      %v579 = vunpack.c.l.b16 %v269
      %v580 = vunpack.c.l.b16 %v270
      %v581 = vunpack.c.l.b16 %v271
      %v582 = vunpack.c.l.b16 %v272
      %v583 = vunpack.c.l.b16 %v273
      %v584 = vunpack.c.l.b16 %v274
      %v585 = vunpack.c.l.b16 %v275
      %v586 = vunpack.c.l.b16 %v276
      %v587 = vunpack.c.l.b16 %v277
      %v588 = vunpack.c.l.b16 %v278
      %v589 = vunpack.c.l.b16 %v279
      %v590 = vunpack.c.l.b16 %v280
      %v591 = vunpack.c.l.b16 %v281
      %v592 = vunpack.c.l.b16 %v282
      %v593 = vunpack.c.l.b16 %v283
      %v594 = vunpack.c.l.b16 %v284
      %v595 = vunpack.c.l.b16 %v285
      %v596 = vunpack.c.l.b16 %v286
      %v597 = vunpack.c.l.b16 %v287
      %v598 = vunpack.c.l.b16 %v288
      %v599 = vunpack.c.l.b16 %v289
      %v600 = vunpack.c.l.b16 %v290
      %v601 = vunpack.c.l.b16 %v291
      %v602 = vunpack.c.l.b16 %v292
      %v603 = vunpack.c.l.b16 %v293
      %v604 = vunpack.c.l.b16 %v294
      %v605 = vunpack.c.l.b16 %v295
      %v606 = vunpack.c.l.b16 %v296
      %v607 = vunpack.c.l.b16 %v297
      %v608 = vunpack.c.l.b16 %v298
      %v609 = vunpack.c.l.b16 %v299
      %v610 = vunpack.c.l.b16 %v300
      %v611 = vunpack.c.l.b16 %v301
      %v612 = vunpack.c.l.b16 %v302
      %v613 = vunpack.c.l.b16 %v303
      %v614 = vunpack.c.l.b16 %v304
      %v615 = vunpack.c.l.b16 %v305
      %v616 = vunpack.c.l.b16 %v306
      %v617 = vunpack.c.l.b16 %v307
      %v618 = vunpack.c.l.b16 %v308
      %v619 = vunpack.c.l.b16 %v309
      %v620 = vunpack.c.l.b16 %v310
      %v621 = vunpack.c.l.b16 %v311
      %v622 = vunpack.c.l.b16 %v312
      %v623 = vunpack.c.l.b16 %v313
      %v624 = vunpack.c.l.b16 %v314
      %v625 = vunpack.c.l.b16 %v315
      %v626 = vunpack.c.l.b16 %v316
      %v627 = vunpack.c.l.b16 %v317
      %v628 = vunpack.c.l.b16 %v318
      %v629 = vunpack.c.l.b16 %v319
      %v630 = vunpack.c.l.b16 %v320
      %v631 = vunpack.c.l.b16 %v321
      %v632 = vunpack.c.l.b16 %v322
      %v633 = vunpack.c.l.b16 %v323
      %v634 = vunpack.c.l.b16 %v324
      %v635 = vunpack.c.l.b16 %v325
      %v636 = vunpack.c.l.b16 %v326
      %v637 = vpack.c.b16 %v530, %v529
      %v638 = vpack.c.b16 %v532, %v531
      %v639 = vpack.c.b16 %v534, %v533
      %v640 = vpack.c.b16 %v536, %v535
      %v641 = vpack.c.b16 %v538, %v537
      %v642 = vpack.c.b16 %v540, %v539
      %v643 = vpack.c.b16 %v542, %v541
      %v644 = vpack.c.b16 %v544, %v543
      %v645 = vpack.c.b16 %v546, %v545
      %v646 = vpack.c.b16 %v548, %v547
      %v647 = vpack.c.b16 %v550, %v549
      %v648 = vpack.c.b16 %v552, %v551
      %v649 = vpack.c.b16 %v554, %v553
      %v650 = vpack.c.b16 %v556, %v555
      %v651 = vpack.c.b16 %v558, %v557
      %v652 = vpack.c.b16 %v560, %v559
      %v653 = vpack.c.b16 %v562, %v561
      %v654 = vpack.c.b16 %v564, %v563
      %v655 = vpack.c.b16 %v566, %v565
      %v656 = vpack.c.b16 %v568, %v567
      %v657 = vpack.c.b16 %v570, %v569
      %v658 = vpack.c.b16 %v572, %v571
      %v659 = vpack.c.b16 %v574, %v573
      %v660 = vpack.c.b16 %v576, %v575
      %v661 = vpack.c.b16 %v578, %v577
      %v662 = vpack.c.b16 %v580, %v579
      %v663 = vpack.c.b16 %v582, %v581
      %v664 = vpack.c.b16 %v584, %v583
      %v665 = vpack.c.b16 %v586, %v585
      %v666 = vpack.c.b16 %v588, %v587
      %v667 = vpack.c.b16 %v590, %v589
      %v668 = vpack.c.b16 %v592, %v591
      %v669 = vpack.c.b16 %v594, %v593
      %v670 = vpack.c.b16 %v596, %v595
      %v671 = vpack.c.b16 %v598, %v597
      %v672 = vpack.c.b16 %v600, %v599
      %v673 = vpack.c.b16 %v602, %v601
      %v674 = vpack.c.b16 %v604, %v603
      %v675 = vpack.c.b16 %v606, %v605
      %v676 = vpack.c.b16 %v608, %v607
      %v677 = vpack.c.b16 %v610, %v609
      %v678 = vpack.c.b16 %v612, %v611
      %v679 = vpack.c.b16 %v614, %v613
      %v680 = vpack.c.b16 %v616, %v615
      %v681 = vpack.c.b16 %v618, %v617
      %v682 = vpack.c.b16 %v620, %v619
      %v683 = vpack.c.b16 %v622, %v621
      %v684 = vpack.c.b16 %v624, %v623
      %v685 = vpack.c.b16 %v626, %v625
      %v686 = vpack.c.b16 %v628, %v627
      %v687 = vpack.c.b16 %v630, %v629
      %v688 = vpack.c.b16 %v632, %v631
      %v689 = vpack.c.b16 %v634, %v633
      %v690 = vpack.c.b16 %v636, %v635
      %vm745 = vcmask 785408
      %v747 = vsel %vm745, %v401, 0
      %v750 = vsel %vm745, %v408, 0
      %752 = vmatprep.subr.bf16.mxu0 0
      %753 = vmatpush1.bf16.msra.mxu0 %v637
      %754 = vmatprep.subr.bf16.mxu0 0
      %755 = vmatpush1.bf16.msra.mxu0 %v638
      %756 = vmatprep.subr.bf16.mxu0 0
      %757 = vmatpush1.bf16.msra.mxu0 %v639
      %758 = vmatprep.subr.bf16.mxu0 0
      %759 = vmatpush1.bf16.msra.mxu0 %v640
      %760 = vmatprep.subr.bf16.mxu0 0
      %761 = vmatpush1.bf16.msra.mxu0 %v641
      %762 = vmatprep.subr.bf16.mxu0 0
      %763 = vmatpush1.bf16.msra.mxu0 %v642
      %764 = vmatprep.subr.bf16.mxu0 0
      %765 = vmatpush1.bf16.msra.mxu0 %v643
      %766 = vmatprep.subr.bf16.mxu0 0
      %767 = vmatpush1.bf16.msra.mxu0 %v644
      %768 = vmatprep.subr.bf16.mxu0 0
      %769 = vmatpush1.bf16.msra.mxu0 %v645
      %770 = vmatprep.subr.bf16.mxu0 0
      %771 = vmatpush1.bf16.msra.mxu0 %v646
      %772 = vmatprep.subr.bf16.mxu0 0
      %773 = vmatpush1.bf16.msra.mxu0 %v647
      %774 = vmatprep.subr.bf16.mxu0 0
      %775 = vmatpush1.bf16.msra.mxu0 %v648
      %776 = vmatprep.subr.bf16.mxu0 0
      %777 = vmatpush1.bf16.msra.mxu0 %v649
      %778 = vmatprep.subr.bf16.mxu0 0
      %779 = vmatpush1.bf16.msra.mxu0 %v650
      %780 = vmatprep.subr.bf16.mxu0 0
      %781 = vmatpush1.bf16.msra.mxu0 %v651
      %782 = vmatprep.subr.bf16.mxu0 0
      %783 = vmatpush1.bf16.msra.mxu0 %v652
      %784 = vmatprep.mubr.bf16.mxu0 %v396
      %785 = vmatmul.mubr.bf16.gmra.mrb[0].mxu0 %v395
      %v786 = vpop.f32.mrb[0].mxu0
      %v787 = vadd.f32 %v334, %v786
      %v788 = vpop.f32.mrb[0].mxu0
      %v789 = vpop.f32.mrb[0].mxu0
      %v790 = vadd.f32 %v339, %v789
      %v791 = vpop.f32.mrb[0].mxu0
      %792 = vmatprep.mubr.bf16.mxu0 %v403
      %793 = vmatmul.mubr.bf16.gmra.mrb[0].mxu0 %v402
      %v794 = vpop.f32.mrb[0].mxu0
      %v795 = vadd.f32 %v344, %v794
      %v796 = vpop.f32.mrb[0].mxu0
      %v797 = vpop.f32.mrb[0].mxu0
      %v798 = vadd.f32 %v349, %v797
      %v799 = vpop.f32.mrb[0].mxu0
      %800 = vdwg.mxu0
      %801 = vmatprep.subr.bf16.mxu0 0
      %802 = vmatpush1.bf16.msra.mxu0 %v653
      %803 = vmatprep.subr.bf16.mxu0 0
      %804 = vmatpush1.bf16.msra.mxu0 %v654
      %805 = vmatprep.subr.bf16.mxu0 0
      %806 = vmatpush1.bf16.msra.mxu0 %v655
      %807 = vmatprep.subr.bf16.mxu0 0
      %808 = vmatpush1.bf16.msra.mxu0 %v656
      %809 = vmatprep.subr.bf16.mxu0 0
      %810 = vmatpush1.bf16.msra.mxu0 %v657
      %811 = vmatprep.subr.bf16.mxu0 0
      %812 = vmatpush1.bf16.msra.mxu0 %v658
      %813 = vmatprep.subr.bf16.mxu0 0
      %814 = vmatpush1.bf16.msra.mxu0 %v659
      %815 = vmatprep.subr.bf16.mxu0 0
      %816 = vmatpush1.bf16.msra.mxu0 %v660
      %817 = vmatprep.subr.bf16.mxu0 0
      %818 = vmatpush1.bf16.msra.mxu0 %v661
      %819 = vmatprep.subr.bf16.mxu0 0
      %820 = vmatpush1.bf16.msra.mxu0 %v662
      %821 = vmatprep.subr.bf16.mxu0 0
      %822 = vmatpush1.bf16.msra.mxu0 %v663
      %823 = vmatprep.subr.bf16.mxu0 0
      %824 = vmatpush1.bf16.msra.mxu0 %v664
      %825 = vmatprep.subr.bf16.mxu0 0
      %826 = vmatpush1.bf16.msra.mxu0 %v665
      %827 = vmatprep.subr.bf16.mxu0 0
      %828 = vmatpush1.bf16.msra.mxu0 %v666
      %829 = vmatprep.subr.bf16.mxu0 0
      %830 = vmatpush1.bf16.msra.mxu0 %v667
      %831 = vmatprep.subr.bf16.mxu0 0
      %832 = vmatpush1.bf16.msra.mxu0 %v668
      %833 = vmatprep.mubr.bf16.mxu0 %v398
      %834 = vmatmul.mubr.bf16.gmra.mrb[0].mxu0 %v397
      %v835 = vpop.f32.mrb[0].mxu0
      %v836 = vadd.f32 %v787, %v835
      %v837 = vpop.f32.mrb[0].mxu0
      %v838 = vpop.f32.mrb[0].mxu0
      %v839 = vadd.f32 %v790, %v838
      %v840 = vpop.f32.mrb[0].mxu0
      %841 = vmatprep.mubr.bf16.mxu0 %v405
      %842 = vmatmul.mubr.bf16.gmra.mrb[0].mxu0 %v404
      %v843 = vpop.f32.mrb[0].mxu0
      %v844 = vadd.f32 %v795, %v843
      %v845 = vpop.f32.mrb[0].mxu0
      %v846 = vpop.f32.mrb[0].mxu0
      %v847 = vadd.f32 %v798, %v846
      %v848 = vpop.f32.mrb[0].mxu0
      %849 = vdwg.mxu0
      %850 = vmatprep.subr.bf16.mxu0 0
      %851 = vmatpush1.bf16.msra.mxu0 %v669
      %852 = vmatprep.subr.bf16.mxu0 0
      %853 = vmatpush1.bf16.msra.mxu0 %v670
      %854 = vmatprep.subr.bf16.mxu0 0
      %855 = vmatpush1.bf16.msra.mxu0 %v671
      %856 = vmatprep.subr.bf16.mxu0 0
      %857 = vmatpush1.bf16.msra.mxu0 %v672
      %858 = vmatprep.subr.bf16.mxu0 0
      %859 = vmatpush1.bf16.msra.mxu0 %v673
      %860 = vmatprep.subr.bf16.mxu0 0
      %861 = vmatpush1.bf16.msra.mxu0 %v674
      %862 = vmatprep.subr.bf16.mxu0 0
      %863 = vmatpush1.bf16.msra.mxu0 %v675
      %864 = vmatprep.subr.bf16.mxu0 0
      %865 = vmatpush1.bf16.msra.mxu0 %v676
      %866 = vmatprep.subr.bf16.mxu0 0
      %867 = vmatpush1.bf16.msra.mxu0 %v677
      %868 = vmatprep.subr.bf16.mxu0 0
      %869 = vmatpush1.bf16.msra.mxu0 %v678
      %870 = vmatprep.subr.bf16.mxu0 0
      %871 = vmatpush1.bf16.msra.mxu0 %v679
      %872 = vmatprep.subr.bf16.mxu0 0
      %873 = vmatpush1.bf16.msra.mxu0 %v680
      %874 = vmatprep.subr.bf16.mxu0 0
      %875 = vmatpush1.bf16.msra.mxu0 %v681
      %876 = vmatprep.subr.bf16.mxu0 0
      %877 = vmatpush1.bf16.msra.mxu0 %v682
      %878 = vmatprep.subr.bf16.mxu0 0
      %879 = vmatpush1.bf16.msra.mxu0 %v683
      %880 = vmatprep.subr.bf16.mxu0 0
      %881 = vmatpush1.bf16.msra.mxu0 %v684
      %882 = vmatprep.mubr.bf16.mxu0 %v400
      %883 = vmatmul.mubr.bf16.gmra.mrb[0].mxu0 %v399
      %v884 = vpop.f32.mrb[0].mxu0
      %v885 = vadd.f32 %v836, %v884
      %v886 = vpop.f32.mrb[0].mxu0
      %v887 = vpop.f32.mrb[0].mxu0
      %v888 = vadd.f32 %v839, %v887
      %v889 = vpop.f32.mrb[0].mxu0
      %890 = vmatprep.mubr.bf16.mxu0 %v407
      %891 = vmatmul.mubr.bf16.gmra.mrb[0].mxu0 %v406
      %v892 = vpop.f32.mrb[0].mxu0
      %v893 = vadd.f32 %v844, %v892
      %v894 = vpop.f32.mrb[0].mxu0
      %v895 = vpop.f32.mrb[0].mxu0
      %v896 = vadd.f32 %v847, %v895
      %v897 = vpop.f32.mrb[0].mxu0
      %898 = vdwg.mxu0
      %899 = vmatprep.subr.bf16.mxu0 0
      %900 = vmatpush1.bf16.msra.mxu0 %v685
      %901 = vmatprep.subr.bf16.mxu0 0
      %902 = vmatpush1.bf16.msra.mxu0 %v686
      %903 = vmatprep.subr.bf16.mxu0 0
      %904 = vmatpush1.bf16.msra.mxu0 %v687
      %905 = vmatprep.subr.bf16.mxu0 0
      %906 = vmatpush1.bf16.msra.mxu0 %v688
      %907 = vmatprep.subr.bf16.mxu0 0
      %908 = vmatpush1.bf16.msra.mxu0 %v689
      %909 = vmatprep.subr.bf16.mxu0 0
      %910 = vmatpush1.bf16.msra.mxu0 %v690
      %911 = vmatprep.subr.bf16.mxu0 0
      %912 = vmatpush1.bf16.msra.mxu0 0
      %913 = vmatprep.subr.bf16.mxu0 0
      %914 = vmatpush1.bf16.msra.mxu0 0
      %915 = vmatprep.subr.bf16.mxu0 0
      %916 = vmatpush1.bf16.msra.mxu0 0
      %917 = vmatprep.subr.bf16.mxu0 0
      %918 = vmatpush1.bf16.msra.mxu0 0
      %919 = vmatprep.subr.bf16.mxu0 0
      %920 = vmatpush1.bf16.msra.mxu0 0
      %921 = vmatprep.subr.bf16.mxu0 0
      %922 = vmatpush1.bf16.msra.mxu0 0
      %923 = vmatprep.subr.bf16.mxu0 0
      %924 = vmatpush1.bf16.msra.mxu0 0
      %925 = vmatprep.subr.bf16.mxu0 0
      %926 = vmatpush1.bf16.msra.mxu0 0
      %927 = vmatprep.subr.bf16.mxu0 0
      %928 = vmatpush1.bf16.msra.mxu0 0
      %929 = vmatprep.subr.bf16.mxu0 0
      %930 = vmatpush1.bf16.msra.mxu0 0
      %931 = vmatprep.mubr.bf16.mxu0 0
      %932 = vmatmul.mubr.bf16.gmra.mrb[0].mxu0 %v747
      %v933 = vpop.f32.mrb[0].mxu0
      %v934 = vadd.f32 %v885, %v933
      %v935 = vpop.f32.mrb[0].mxu0
      %v936 = vpop.f32.mrb[0].mxu0
      %v937 = vadd.f32 %v888, %v936
      %v938 = vpop.f32.mrb[0].mxu0
      %939 = vmatprep.mubr.bf16.mxu0 0
      %940 = vmatmul.mubr.bf16.gmra.mrb[0].mxu0 %v750
      %v941 = vpop.f32.mrb[0].mxu0
      %v942 = vadd.f32 %v893, %v941
      %v943 = vpop.f32.mrb[0].mxu0
      %v944 = vpop.f32.mrb[0].mxu0
      %v945 = vadd.f32 %v896, %v944
      %v946 = vpop.f32.mrb[0].mxu0
      %947 = vdwg.mxu0
      %v948 = vmax.f32 %v934, 0.0
      %v949 = vmax.f32 %v937, 0.0
      %v950 = vmax.f32 %v942, 0.0
      %v951 = vmax.f32 %v945, 0.0
      %v952 = vpack.c.bf16 %v949, %v948
      %v953 = vpack.c.bf16 %v951, %v950
      %v956 = vunpack.c.l.b16 %v952
      %v957 = vunpack.c.h.b16 %v952
      %v958 = vunpack.c.l.b16 %v953
      %v959 = vunpack.c.h.b16 %v953
      %v960 = vpack.c.b16 %v956, %v956
      %v961 = vpack.c.b16 %v957, %v957
      %v962 = vpack.c.b16 %v958, %v958
      %v963 = vpack.c.b16 %v959, %v959
      %vm968 = vcmask 519168
      %969 = vst.msk [vmem:[%s201] sm:$0xf] %vm968, %v960
      %970 = vst.msk [vmem:[%s201 + $0x4] sm:$0xf] %vm968, %v961
      %971 = vst.msk [vmem:[%s201 + $0x8] sm:$0xf] %vm968, %v962
      %972 = vst.msk [vmem:[%s201 + $0xc] sm:$0xf] %vm968, %v963
      %p973 = scmp.lt.s32.totalorder %s18, 1
      %s974 = scalar_select %p973, %s18, 1
      %p975 = scmp.lt.s32.totalorder %s19, 0
      %s976 = scalar_select %p975, %s19, 0
      %s977 = smul.addr %s974, 4
      %s978 = sadd.s32 %s976, %s977
      %s979 = smul.addr %s978, 4
      %s980 = scalar_lea.vmem %s3, %s979
      // Predicated region
      $region33: #{decoder_forward.11} parent=31 // pred_check
        %p981 = pneg %p116
      $region34: #{decoder_forward.11} parent=31 // pred_check_branch
        %983 = sbr.rel (%p981) target = $region36
      $region35: #{decoder_forward.11} parent=31 // pred_region
        _
      $region36: #{decoder_forward.11} parent=31 // pred_fallthru
        _
    $region32: #{decoder_forward.11} parent=5 // pred_fallthru
      _
    %p984 = scmp.le.s32.totalorder 2, %s9
    // Predicated region
    $region37: #{decoder_forward.11} parent=5 // pred_check
      %p985 = pneg %p984
    $region38: #{decoder_forward.11} parent=5 // pred_check_branch
      %987 = sbr.rel (%p985) target = $region40
    $region39: #{decoder_forward.11} parent=5 // pred_region
      %s988 = ssub.s32 %s9, 2
      // Predicated region
      $region41: #{decoder_forward.11} parent=39 // pred_check
        %p989 = pneg %p122
      $region42: #{decoder_forward.11} parent=39 // pred_check_branch
        %991 = sbr.rel (%p989) target = $region44
      $region43: #{decoder_forward.11} parent=39 // pred_region
        %p992 = scmp.lt.s32.totalorder %s20, 1
        %s993 = scalar_select %p992, %s20, 1
        %p994 = scmp.lt.s32.totalorder %s21, 0
        %s995 = scalar_select %p994, %s21, 0
        %s996 = smul.addr %s993, 4
        %s997 = sadd.s32 %s995, %s996
        %s998 = smul.addr %s997, 4
        %s999 = scalar_lea.vmem %s3, %s998
      $region44: #{decoder_forward.11} parent=39 // pred_fallthru
        _
    $region40: #{decoder_forward.11} parent=5 // pred_fallthru
      _
  $region6: #{decoder_forward.11} parent=0 // loop_footer
    %s13 = sadd.s32 1, %s9
  $region7: #{decoder_forward.11} parent=0 // loop_footer_branch
    %8 = sbr.rel target = $region3
  $region8: #{decoder_forward.11} parent=0 // loop_exit
    _

// kernel: decoder_forward.12
$region0: #{decoder_forward.12}
  #allocation0 [shape = 'u32[]', space=smem, size = 0x4, offset = 0x4, fixed_abs, tag = 'smem constant byte address 0x4 - core index']
  #allocation1 [shape = 'u32[144,128]{1,0:T(1,128)}', space=vmem, size = 0x12000, scoped, tag = 'internal scratch']
  %s0 = inlined_call_operand.vmem [shape: bf16[2,864,64], index: 0, kind: input, shape index: {}]
  %s1 = inlined_call_operand.vmem [shape: bf16[32,864], index: 1, kind: input, shape index: {}]
  %s2 = inlined_call_operand.vmem [shape: f32[32,1], index: 2, kind: input, shape index: {}]
  %s3 = inlined_call_operand.vmem [shape: bf16[2,32,64], index: 3, kind: input, shape index: {}]
  %s4 = inlined_call_operand.vmem [shape: bf16[2,32,64], index: 4, kind: output, shape index: {}]
  %s5 = sld [smem:[#allocation0]]
  $region49: #{decoder_forward.12} parent=0
    _
  %s7 = ssub.s32 1, %s5
  %s8 = scalar_select 0, %s7, %s5
  loop: start=0, step=1, limit=4
  $region2: #{decoder_forward.12} parent=0 // loop_pre_header
    _
  $region3: #{decoder_forward.12} parent=0 // loop_header
    %s10 = sphi 0, %s14
    %p11 = scmp.ge.s32.totalorder %s10, 4
    %s17 = sphi 0, %s29
    %s18 = sphi 0, %s25
    %s19 = sphi 0, %s17
    %s20 = sphi 0, %s18
    %s21 = sphi 0, %s19
    %s22 = sphi 0, %s20
    %s34 = sphi 0, %s36
    %s37 = sphi 0, %s34
    %s38 = sphi 0, %s37
    %s54 = sphi 0, %s38
    %s58 = sphi 0, %s58
    %s60 = sphi 0, %s58
    %s61 = sphi 0, %s60
    %s75 = sphi 0, %s61
    %s79 = sphi 0, %s79
    %s81 = sphi 0, %s79
    %s82 = sphi 0, %s81
    %s96 = sphi 0, %s82
    %s104 = sphi 0, %s106
    %s107 = sphi 0, %s104
    %s108 = sphi 0, %s107
    %s124 = sphi 0, %s108
    %s132 = sphi 0, %s134
    %s135 = sphi 0, %s132
    %s136 = sphi 0, %s135
    %s152 = sphi 0, %s136
  $region4: #{decoder_forward.12} parent=0 // loop_header_branch
    %13 = sbr.rel (%p11) target = $region8
  $region5: #{decoder_forward.12} parent=0 // loop_body
    %s15 = ssub.s32 %s10, 1
    %s16 = ssub.s32 %s10, 2
    %s23 = sadd.s32 1, %s18
    %p24 = scmp.ge.s32.totalorder %s23, 1
    %s25 = scalar_select %p24, 0, %s23
    %s26 = sadd.s32 1, %s17
    %s27 = scalar_select %p24, %s26, %s17
    %p28 = scmp.ge.s32.totalorder %s27, 2
    %s29 = scalar_select %p28, 0, %s27
    %s30 = ssub.s32 %s17, %s29
    %s31 = ssub.s32 %s18, %s25
    %s32 = sor.u32 %s30, %s31
    %p33 = scmp.eq.s32.totalorder %s32, 0
    %s35 = sadd.s32 %s34, 1
    %s36 = scalar_select %p33, %s34, %s35
    %p39 = pneg %p33
    %p40 = scmp.eq.s32.totalorder %s10, 1
    %p41 = por %p39, %p40
    %p42 = scmp.ne.s32.totalorder %s34, %s37
    %p43 = scmp.eq.s32.totalorder %s10, 0
    %p44 = por %p42, %p43
    %p45 = scmp.ne.s32.totalorder %s34, %s37
    %p46 = scmp.eq.s32.totalorder %s15, 1
    %p47 = por %p45, %p46
    %p48 = scmp.ne.s32.totalorder %s37, %s38
    %p49 = scmp.eq.s32.totalorder %s15, 0
    %p50 = por %p48, %p49
    %p51 = scmp.ne.s32.totalorder %s37, %s38
    %p52 = scmp.eq.s32.totalorder %s16, 1
    %p53 = por %p51, %p52
    %p55 = scmp.ne.s32.totalorder %s38, %s54
    %p56 = scmp.eq.s32.totalorder %s16, 0
    %p57 = por %p55, %p56
    %s59 = sadd.s32 %s58, 1
    %p62 = scmp.eq.s32.totalorder %s10, 1
    %p63 = scmp.ne.s32.totalorder %s58, %s60
    %p64 = scmp.eq.s32.totalorder %s10, 0
    %p65 = por %p63, %p64
    %p66 = scmp.ne.s32.totalorder %s58, %s60
    %p67 = scmp.eq.s32.totalorder %s15, 1
    %p68 = por %p66, %p67
    %p69 = scmp.ne.s32.totalorder %s60, %s61
    %p70 = scmp.eq.s32.totalorder %s15, 0
    %p71 = por %p69, %p70
    %p72 = scmp.ne.s32.totalorder %s60, %s61
    %p73 = scmp.eq.s32.totalorder %s16, 1
    %p74 = por %p72, %p73
    %p76 = scmp.ne.s32.totalorder %s61, %s75
    %p77 = scmp.eq.s32.totalorder %s16, 0
    %p78 = por %p76, %p77
    %s80 = sadd.s32 %s79, 1
    %p83 = scmp.eq.s32.totalorder %s10, 1
    %p84 = scmp.ne.s32.totalorder %s79, %s81
    %p85 = scmp.eq.s32.totalorder %s10, 0
    %p86 = por %p84, %p85
    %p87 = scmp.ne.s32.totalorder %s79, %s81
    %p88 = scmp.eq.s32.totalorder %s15, 1
    %p89 = por %p87, %p88
    %p90 = scmp.ne.s32.totalorder %s81, %s82
    %p91 = scmp.eq.s32.totalorder %s15, 0
    %p92 = por %p90, %p91
    %p93 = scmp.ne.s32.totalorder %s81, %s82
    %p94 = scmp.eq.s32.totalorder %s16, 1
    %p95 = por %p93, %p94
    %p97 = scmp.ne.s32.totalorder %s82, %s96
    %p98 = scmp.eq.s32.totalorder %s16, 0
    %p99 = por %p97, %p98
    %s100 = ssub.s32 %s17, %s29
    %s101 = ssub.s32 %s18, %s25
    %s102 = sor.u32 %s100, %s101
    %p103 = scmp.eq.s32.totalorder %s102, 0
    %s105 = sadd.s32 %s104, 1
    %s106 = scalar_select %p103, %s104, %s105
    %p109 = pneg %p103
    %p110 = scmp.eq.s32.totalorder %s10, 1
    %p111 = por %p109, %p110
    %p112 = scmp.ne.s32.totalorder %s104, %s107
    %p113 = scmp.eq.s32.totalorder %s10, 0
    %p114 = por %p112, %p113
    %p115 = scmp.ne.s32.totalorder %s104, %s107
    %p116 = scmp.eq.s32.totalorder %s15, 1
    %p117 = por %p115, %p116
    %p118 = scmp.ne.s32.totalorder %s107, %s108
    %p119 = scmp.eq.s32.totalorder %s15, 0
    %p120 = por %p118, %p119
    %p121 = scmp.ne.s32.totalorder %s107, %s108
    %p122 = scmp.eq.s32.totalorder %s16, 1
    %p123 = por %p121, %p122
    %p125 = scmp.ne.s32.totalorder %s108, %s124
    %p126 = scmp.eq.s32.totalorder %s16, 0
    %p127 = por %p125, %p126
    %s128 = ssub.s32 %s17, %s29
    %s129 = ssub.s32 %s18, %s25
    %s130 = sor.u32 %s128, %s129
    %p131 = scmp.eq.s32.totalorder %s130, 0
    %s133 = sadd.s32 %s132, 1
    %s134 = scalar_select %p131, %s132, %s133
    %p137 = pneg %p131
    %p138 = scmp.eq.s32.totalorder %s10, 1
    %p139 = por %p137, %p138
    %p140 = scmp.ne.s32.totalorder %s132, %s135
    %p141 = scmp.eq.s32.totalorder %s10, 0
    %p142 = por %p140, %p141
    %p143 = scmp.ne.s32.totalorder %s132, %s135
    %p144 = scmp.eq.s32.totalorder %s15, 1
    %p145 = por %p143, %p144
    %p146 = scmp.ne.s32.totalorder %s135, %s136
    %p147 = scmp.eq.s32.totalorder %s15, 0
    %p148 = por %p146, %p147
    %p149 = scmp.ne.s32.totalorder %s135, %s136
    %p150 = scmp.eq.s32.totalorder %s16, 1
    %p151 = por %p149, %p150
    %p153 = scmp.ne.s32.totalorder %s136, %s152
    %p154 = scmp.eq.s32.totalorder %s16, 0
    %p155 = por %p153, %p154
    %p156 = scmp.le.s32.totalorder 1, %s10
    %p157 = scmp.lt.s32.totalorder %s10, 3
    %p158 = pnand %p156, %p157
    %p159 = pneg %p158
    // Predicated region
    $region9: #{decoder_forward.12} parent=5 // pred_check
      _
    $region10: #{decoder_forward.12} parent=5 // pred_check_branch
      %161 = sbr.rel (%p158) target = $region12
    $region11: #{decoder_forward.12} parent=5 // pred_region
      %s162 = ssub.s32 %s10, 1
      // Predicated region
      $region13: #{decoder_forward.12} parent=11 // pred_check
        %p163 = pneg %p71
      $region14: #{decoder_forward.12} parent=11 // pred_check_branch
        %165 = sbr.rel (%p163) target = $region16
      $region15: #{decoder_forward.12} parent=11 // pred_region
        _
      $region16: #{decoder_forward.12} parent=11 // pred_fallthru
        _
      // Predicated region
      $region17: #{decoder_forward.12} parent=11 // pred_check
        %p166 = pneg %p92
      $region18: #{decoder_forward.12} parent=11 // pred_check_branch
        %168 = sbr.rel (%p166) target = $region20
      $region19: #{decoder_forward.12} parent=11 // pred_region
        _
      $region20: #{decoder_forward.12} parent=11 // pred_fallthru
        _
    $region12: #{decoder_forward.12} parent=5 // pred_fallthru
      _
    %p169 = scmp.lt.s32.totalorder %s10, 2
    // Predicated region
    $region21: #{decoder_forward.12} parent=5 // pred_check
      %p170 = pneg %p169
    $region22: #{decoder_forward.12} parent=5 // pred_check_branch
      %172 = sbr.rel (%p170) target = $region24
    $region23: #{decoder_forward.12} parent=5 // pred_region
      // Predicated region
      $region25: #{decoder_forward.12} parent=23 // pred_check
        %p173 = pneg %p44
      $region26: #{decoder_forward.12} parent=23 // pred_check_branch
        %175 = sbr.rel (%p173) target = $region28
      $region27: #{decoder_forward.12} parent=23 // pred_region
        %p176 = scmp.lt.s32.totalorder %s17, 1
        %s177 = scalar_select %p176, %s17, 1
        %p178 = scmp.lt.s32.totalorder %s18, 0
        %s179 = scalar_select %p178, %s18, 0
        %s180 = smul.addr %s177, 108
        %s181 = sadd.s32 %s179, %s180
        %s182 = smul.addr %s181, 4
        %s183 = scalar_lea.vmem %s0, %s182
      $region28: #{decoder_forward.12} parent=23 // pred_fallthru
        _
      // Predicated region
      $region29: #{decoder_forward.12} parent=23 // pred_check
        %p184 = pneg %p114
      $region30: #{decoder_forward.12} parent=23 // pred_check_branch
        %186 = sbr.rel (%p184) target = $region32
      $region31: #{decoder_forward.12} parent=23 // pred_region
        %p187 = scmp.lt.s32.totalorder %s17, 1
        %s188 = scalar_select %p187, %s17, 1
        %p189 = scmp.lt.s32.totalorder %s18, 0
        %s190 = scalar_select %p189, %s18, 0
        %s191 = smul.addr %s188, 4
        %s192 = sadd.s32 %s190, %s191
        %s193 = smul.addr %s192, 4
        %s194 = scalar_lea.vmem %s3, %s193
      $region32: #{decoder_forward.12} parent=23 // pred_fallthru
        _
    $region24: #{decoder_forward.12} parent=5 // pred_fallthru
      _
    %p195 = scmp.le.s32.totalorder 1, %s10
    %p196 = scmp.lt.s32.totalorder %s10, 3
    %p197 = pnand %p195, %p196
    %p198 = pneg %p197
    // Predicated region
    $region33: #{decoder_forward.12} parent=5 // pred_check
      _
    $region34: #{decoder_forward.12} parent=5 // pred_check_branch
      %200 = sbr.rel (%p197) target = $region36
    $region35: #{decoder_forward.12} parent=5 // pred_region
      %s201 = ssub.s32 %s10, 1
      %p202 = scmp.lt.s32.totalorder %s19, 1
      %s203 = scalar_select %p202, %s19, 1
      %p204 = scmp.lt.s32.totalorder %s20, 0
      %s205 = scalar_select %p204, %s20, 0
      %s206 = smul.addr %s203, 108
      %s207 = sadd.s32 %s205, %s206
      %s208 = smul.addr %s207, 4
      %s209 = scalar_lea.vmem %s0, %s208
      %p210 = pneg %p50
      %p211 = pneg %p47
      %p212 = pneg %p71
      %p213 = pneg %p68
      %p214 = pneg %p92
      %p215 = pneg %p89
      %p216 = scmp.lt.s32.totalorder %s19, 1
      %s217 = scalar_select %p216, %s19, 1
      %p218 = scmp.lt.s32.totalorder %s20, 0
      %s219 = scalar_select %p218, %s20, 0
      %s220 = smul.addr %s217, 4
      %s221 = sadd.s32 %s219, %s220
      %s222 = smul.addr %s221, 4
      %s223 = scalar_lea.vmem %s3, %s222
      %p224 = pneg %p120
      %p225 = pneg %p117
      %p226 = pneg %p148
      %p227 = pneg %p145
      %p228 = scmp.lt.s32.totalorder %s19, 1
      %s229 = scalar_select %p228, %s19, 1
      %p230 = scmp.lt.s32.totalorder %s20, 0
      %s231 = scalar_select %p230, %s20, 0
      %s232 = smul.addr %s229, 4
      %s233 = sadd.s32 %s231, %s232
      %s234 = smul.addr %s233, 4
      %s235 = scalar_lea.vmem %s4, %s234
      %p236 = scmp.lt.s32.totalorder %s19, 1
      %s237 = scalar_select %p236, %s19, 1
      %p238 = scmp.lt.s32.totalorder %s20, 0
      %s239 = scalar_select %p238, %s20, 0
      %s240 = smul.addr %s237, 108
      %s241 = sadd.s32 %s239, %s240
      %s242 = smul.addr %s241, 4
      %s243 = scalar_lea.vmem %s0, %s242
      %p244 = scmp.lt.s32.totalorder %s19, 1
      %s245 = scalar_select %p244, %s19, 1
      %p246 = scmp.lt.s32.totalorder %s20, 0
      %s247 = scalar_select %p246, %s20, 0
      %s248 = smul.addr %s245, 4
      %s249 = sadd.s32 %s247, %s248
      %s250 = smul.addr %s249, 4
      %s251 = scalar_lea.vmem %s3, %s250
      %p252 = scmp.lt.s32.totalorder %s19, 1
      %s253 = scalar_select %p252, %s19, 1
      %p254 = scmp.lt.s32.totalorder %s20, 0
      %s255 = scalar_select %p254, %s20, 0
      %s256 = smul.addr %s253, 4
      %s257 = sadd.s32 %s255, %s256
      %s258 = smul.addr %s257, 4
      %s259 = scalar_lea.vmem %s4, %s258
      %v261 = vld [vmem:[%s1] sm:$0xff]
      %v262 = vld [vmem:[%s1 + $0x8] sm:$0xff]
      %v263 = vld [vmem:[%s1 + $0x10] sm:$0xff]
      %v264 = vld [vmem:[%s1 + $0x18] sm:$0xf]
      %v265 = vld [vmem:[%s1 + $0x1c] sm:$0xff]
      %v266 = vld [vmem:[%s1 + $0x24] sm:$0xff]
      %v267 = vld [vmem:[%s1 + $0x2c] sm:$0xff]
      %v268 = vld [vmem:[%s1 + $0x34] sm:$0xf]
      %v269 = vld [vmem:[%s1 + $0x38] sm:$0xff]
      %v270 = vld [vmem:[%s1 + $0x40] sm:$0xff]
      %v271 = vld [vmem:[%s1 + $0x48] sm:$0xff]
      %v272 = vld [vmem:[%s1 + $0x50] sm:$0xf]
      %v273 = vld [vmem:[%s1 + $0x54] sm:$0xff]
      %v274 = vld [vmem:[%s1 + $0x5c] sm:$0xff]
      %v275 = vld [vmem:[%s1 + $0x64] sm:$0xff]
      %v276 = vld [vmem:[%s1 + $0x6c] sm:$0xf]
      %v277 = vld [vmem:[%s243] sm:$0xf]
      %v278 = vld [vmem:[%s243 + $0x4] sm:$0xf]
      %v279 = vld [vmem:[%s243 + $0x8] sm:$0xf]
      %v280 = vld [vmem:[%s243 + $0xc] sm:$0xf]
      %v281 = vld [vmem:[%s243 + $0x10] sm:$0xf]
      %v282 = vld [vmem:[%s243 + $0x14] sm:$0xf]
      %v283 = vld [vmem:[%s243 + $0x18] sm:$0xf]
      %v284 = vld [vmem:[%s243 + $0x1c] sm:$0xf]
      %v285 = vld [vmem:[%s243 + $0x20] sm:$0xf]
      %v286 = vld [vmem:[%s243 + $0x24] sm:$0xf]
      %v287 = vld [vmem:[%s243 + $0x28] sm:$0xf]
      %v288 = vld [vmem:[%s243 + $0x2c] sm:$0xf]
      %v289 = vld [vmem:[%s243 + $0x30] sm:$0xf]
      %v290 = vld [vmem:[%s243 + $0x34] sm:$0xf]
      %v291 = vld [vmem:[%s243 + $0x38] sm:$0xf]
      %v292 = vld [vmem:[%s243 + $0x3c] sm:$0xf]
      %v293 = vld [vmem:[%s243 + $0x40] sm:$0xf]
      %v294 = vld [vmem:[%s243 + $0x44] sm:$0xf]
      %v295 = vld [vmem:[%s243 + $0x48] sm:$0xf]
      %v296 = vld [vmem:[%s243 + $0x4c] sm:$0xf]
      %v297 = vld [vmem:[%s243 + $0x50] sm:$0xf]
      %v298 = vld [vmem:[%s243 + $0x54] sm:$0xf]
      %v299 = vld [vmem:[%s243 + $0x58] sm:$0xf]
      %v300 = vld [vmem:[%s243 + $0x5c] sm:$0xf]
      %v301 = vld [vmem:[%s243 + $0x60] sm:$0xf]
      %v302 = vld [vmem:[%s243 + $0x64] sm:$0xf]
      %v303 = vld [vmem:[%s243 + $0x68] sm:$0xf]
      %v304 = vld [vmem:[%s243 + $0x6c] sm:$0xf]
      %v305 = vld [vmem:[%s243 + $0x70] sm:$0xf]
      %v306 = vld [vmem:[%s243 + $0x74] sm:$0xf]
      %v307 = vld [vmem:[%s243 + $0x78] sm:$0xf]
      %v308 = vld [vmem:[%s243 + $0x7c] sm:$0xf]
      %v309 = vld [vmem:[%s243 + $0x80] sm:$0xf]
      %v310 = vld [vmem:[%s243 + $0x84] sm:$0xf]
      %v311 = vld [vmem:[%s243 + $0x88] sm:$0xf]
      %v312 = vld [vmem:[%s243 + $0x8c] sm:$0xf]
      %v313 = vld [vmem:[%s243 + $0x90] sm:$0xf]
      %v314 = vld [vmem:[%s243 + $0x94] sm:$0xf]
      %v315 = vld [vmem:[%s243 + $0x98] sm:$0xf]
      %v316 = vld [vmem:[%s243 + $0x9c] sm:$0xf]
      %v317 = vld [vmem:[%s243 + $0xa0] sm:$0xf]
      %v318 = vld [vmem:[%s243 + $0xa4] sm:$0xf]
      %v319 = vld [vmem:[%s243 + $0xa8] sm:$0xf]
      %v320 = vld [vmem:[%s243 + $0xac] sm:$0xf]
      %v321 = vld [vmem:[%s243 + $0xb0] sm:$0xf]
      %v322 = vld [vmem:[%s243 + $0xb4] sm:$0xf]
      %v323 = vld [vmem:[%s243 + $0xb8] sm:$0xf]
      %v324 = vld [vmem:[%s243 + $0xbc] sm:$0xf]
      %v325 = vld [vmem:[%s243 + $0xc0] sm:$0xf]
      %v326 = vld [vmem:[%s243 + $0xc4] sm:$0xf]
      %v327 = vld [vmem:[%s243 + $0xc8] sm:$0xf]
      %v328 = vld [vmem:[%s243 + $0xcc] sm:$0xf]
      %v329 = vld [vmem:[%s243 + $0xd0] sm:$0xf]
      %v330 = vld [vmem:[%s243 + $0xd4] sm:$0xf]
      %v331 = vld [vmem:[%s243 + $0xd8] sm:$0xf]
      %v332 = vld [vmem:[%s243 + $0xdc] sm:$0xf]
      %v333 = vld [vmem:[%s243 + $0xe0] sm:$0xf]
      %v334 = vld [vmem:[%s243 + $0xe4] sm:$0xf]
      %v335 = vld [vmem:[%s243 + $0xe8] sm:$0xf]
      %v336 = vld [vmem:[%s243 + $0xec] sm:$0xf]
      %v337 = vld [vmem:[%s243 + $0xf0] sm:$0xf]
      %v338 = vld [vmem:[%s243 + $0xf4] sm:$0xf]
      %v339 = vld [vmem:[%s243 + $0xf8] sm:$0xf]
      %v340 = vld [vmem:[%s243 + $0xfc] sm:$0xf]
      %v341 = vld [vmem:[%s243 + $0x100] sm:$0xf]
      %v342 = vld [vmem:[%s243 + $0x104] sm:$0xf]
      %v343 = vld [vmem:[%s243 + $0x108] sm:$0xf]
      %v344 = vld [vmem:[%s243 + $0x10c] sm:$0xf]
      %v345 = vld [vmem:[%s243 + $0x110] sm:$0xf]
      %v346 = vld [vmem:[%s243 + $0x114] sm:$0xf]
      %v347 = vld [vmem:[%s243 + $0x118] sm:$0xf]
      %v348 = vld [vmem:[%s243 + $0x11c] sm:$0xf]
      %v349 = vld [vmem:[%s243 + $0x120] sm:$0xf]
      %v350 = vld [vmem:[%s243 + $0x124] sm:$0xf]
      %v351 = vld [vmem:[%s243 + $0x128] sm:$0xf]
      %v352 = vld [vmem:[%s243 + $0x12c] sm:$0xf]
      %v353 = vld [vmem:[%s243 + $0x130] sm:$0xf]
      %v354 = vld [vmem:[%s243 + $0x134] sm:$0xf]
      %v355 = vld [vmem:[%s243 + $0x138] sm:$0xf]
      %v356 = vld [vmem:[%s243 + $0x13c] sm:$0xf]
      %v357 = vld [vmem:[%s243 + $0x140] sm:$0xf]
      %v358 = vld [vmem:[%s243 + $0x144] sm:$0xf]
      %v359 = vld [vmem:[%s243 + $0x148] sm:$0xf]
      %v360 = vld [vmem:[%s243 + $0x14c] sm:$0xf]
      %v361 = vld [vmem:[%s243 + $0x150] sm:$0xf]
      %v362 = vld [vmem:[%s243 + $0x154] sm:$0xf]
      %v363 = vld [vmem:[%s243 + $0x158] sm:$0xf]
      %v364 = vld [vmem:[%s243 + $0x15c] sm:$0xf]
      %v365 = vld [vmem:[%s243 + $0x160] sm:$0xf]
      %v366 = vld [vmem:[%s243 + $0x164] sm:$0xf]
      %v367 = vld [vmem:[%s243 + $0x168] sm:$0xf]
      %v368 = vld [vmem:[%s243 + $0x16c] sm:$0xf]
      %v369 = vld [vmem:[%s243 + $0x170] sm:$0xf]
      %v370 = vld [vmem:[%s243 + $0x174] sm:$0xf]
      %v371 = vld [vmem:[%s243 + $0x178] sm:$0xf]
      %v372 = vld [vmem:[%s243 + $0x17c] sm:$0xf]
      %v373 = vld [vmem:[%s243 + $0x180] sm:$0xf]
      %v374 = vld [vmem:[%s243 + $0x184] sm:$0xf]
      %v375 = vld [vmem:[%s243 + $0x188] sm:$0xf]
      %v376 = vld [vmem:[%s243 + $0x18c] sm:$0xf]
      %v377 = vld [vmem:[%s243 + $0x190] sm:$0xf]
      %v378 = vld [vmem:[%s243 + $0x194] sm:$0xf]
      %v379 = vld [vmem:[%s243 + $0x198] sm:$0xf]
      %v380 = vld [vmem:[%s243 + $0x19c] sm:$0xf]
      %v381 = vld [vmem:[%s243 + $0x1a0] sm:$0xf]
      %v382 = vld [vmem:[%s243 + $0x1a4] sm:$0xf]
      %v383 = vld [vmem:[%s243 + $0x1a8] sm:$0xf]
      %v384 = vld [vmem:[%s243 + $0x1ac] sm:$0xf]
      %v385 = vld [vmem:[%s2] sm:$0xff]
      %v386 = vld [vmem:[%s2 + $0x8] sm:$0xff]
      %v387 = vld [vmem:[%s2 + $0x10] sm:$0xff]
      %v388 = vld [vmem:[%s2 + $0x18] sm:$0xff]
      %390 = vset.pattern.permute.xlu0 0
      %391 = vperm.xlu0 %390, %v385
      %v392 = vpop.permute.xlu0 %391
      %395 = vset.pattern.permute.xlu0 0
      %396 = vperm.xlu0 %395, %v386
      %v397 = vpop.permute.xlu0 %396
      %400 = vset.pattern.permute.xlu0 0
      %401 = vperm.xlu0 %400, %v387
      %v402 = vpop.permute.xlu0 %401
      %405 = vset.pattern.permute.xlu0 0
      %406 = vperm.xlu0 %405, %v388
      %v407 = vpop.permute.xlu0 %406
      %v425 = vunpack.c.l.b16 %v261
      %v426 = vunpack.c.h.b16 %v261
      %v427 = vunpack.c.l.b16 %v262
      %v428 = vunpack.c.h.b16 %v262
      %v429 = vunpack.c.l.b16 %v263
      %v430 = vunpack.c.h.b16 %v263
      %v431 = vunpack.c.l.b16 %v264
      %v432 = vunpack.c.l.b16 %v265
      %v433 = vunpack.c.h.b16 %v265
      %v434 = vunpack.c.l.b16 %v266
      %v435 = vunpack.c.h.b16 %v266
      %v436 = vunpack.c.l.b16 %v267
      %v437 = vunpack.c.h.b16 %v267
      %v438 = vunpack.c.l.b16 %v268
      %v439 = vunpack.c.l.b16 %v269
      %v440 = vunpack.c.h.b16 %v269
      %v441 = vunpack.c.l.b16 %v270
      %v442 = vunpack.c.h.b16 %v270
      %v443 = vunpack.c.l.b16 %v271
      %v444 = vunpack.c.h.b16 %v271
      %v445 = vunpack.c.l.b16 %v272
      %v446 = vunpack.c.l.b16 %v273
      %v447 = vunpack.c.h.b16 %v273
      %v448 = vunpack.c.l.b16 %v274
      %v449 = vunpack.c.h.b16 %v274
      %v450 = vunpack.c.l.b16 %v275
      %v451 = vunpack.c.h.b16 %v275
      %v452 = vunpack.c.l.b16 %v276
      %v453 = vpack.c.b16 %v432, %v425
      %v454 = vpack.c.b16 %v433, %v426
      %v455 = vpack.c.b16 %v434, %v427
      %v456 = vpack.c.b16 %v435, %v428
      %v457 = vpack.c.b16 %v436, %v429
      %v458 = vpack.c.b16 %v437, %v430
      %v459 = vpack.c.b16 %v438, %v431
      %v460 = vpack.c.b16 %v446, %v439
      %v461 = vpack.c.b16 %v447, %v440
      %v462 = vpack.c.b16 %v448, %v441
      %v463 = vpack.c.b16 %v449, %v442
      %v464 = vpack.c.b16 %v450, %v443
      %v465 = vpack.c.b16 %v451, %v444
      %v466 = vpack.c.b16 %v452, %v445
      %v587 = vunpack.c.l.b16 %v277
      %v588 = vunpack.c.l.b16 %v278
      %v589 = vunpack.c.l.b16 %v279
      %v590 = vunpack.c.l.b16 %v280
      %v591 = vunpack.c.l.b16 %v281
      %v592 = vunpack.c.l.b16 %v282
      %v593 = vunpack.c.l.b16 %v283
      %v594 = vunpack.c.l.b16 %v284
      %v595 = vunpack.c.l.b16 %v285
      %v596 = vunpack.c.l.b16 %v286
      %v597 = vunpack.c.l.b16 %v287
      %v598 = vunpack.c.l.b16 %v288
      %v599 = vunpack.c.l.b16 %v289
      %v600 = vunpack.c.l.b16 %v290
      %v601 = vunpack.c.l.b16 %v291
      %v602 = vunpack.c.l.b16 %v292
      %v603 = vunpack.c.l.b16 %v293
      %v604 = vunpack.c.l.b16 %v294
      %v605 = vunpack.c.l.b16 %v295
      %v606 = vunpack.c.l.b16 %v296
      %v607 = vunpack.c.l.b16 %v297
      %v608 = vunpack.c.l.b16 %v298
      %v609 = vunpack.c.l.b16 %v299
      %v610 = vunpack.c.l.b16 %v300
      %v611 = vunpack.c.l.b16 %v301
      %v612 = vunpack.c.l.b16 %v302
      %v613 = vunpack.c.l.b16 %v303
      %v614 = vunpack.c.l.b16 %v304
      %v615 = vunpack.c.l.b16 %v305
      %v616 = vunpack.c.l.b16 %v306
      %v617 = vunpack.c.l.b16 %v307
      %v618 = vunpack.c.l.b16 %v308
      %v619 = vunpack.c.l.b16 %v309
      %v620 = vunpack.c.l.b16 %v310
      %v621 = vunpack.c.l.b16 %v311
      %v622 = vunpack.c.l.b16 %v312
      %v623 = vunpack.c.l.b16 %v313
      %v624 = vunpack.c.l.b16 %v314
      %v625 = vunpack.c.l.b16 %v315
      %v626 = vunpack.c.l.b16 %v316
      %v627 = vunpack.c.l.b16 %v317
      %v628 = vunpack.c.l.b16 %v318
      %v629 = vunpack.c.l.b16 %v319
      %v630 = vunpack.c.l.b16 %v320
      %v631 = vunpack.c.l.b16 %v321
      %v632 = vunpack.c.l.b16 %v322
      %v633 = vunpack.c.l.b16 %v323
      %v634 = vunpack.c.l.b16 %v324
      %v635 = vunpack.c.l.b16 %v325
      %v636 = vunpack.c.l.b16 %v326
      %v637 = vunpack.c.l.b16 %v327
      %v638 = vunpack.c.l.b16 %v328
      %v639 = vunpack.c.l.b16 %v329
      %v640 = vunpack.c.l.b16 %v330
      %v641 = vunpack.c.l.b16 %v331
      %v642 = vunpack.c.l.b16 %v332
      %v643 = vunpack.c.l.b16 %v333
      %v644 = vunpack.c.l.b16 %v334
      %v645 = vunpack.c.l.b16 %v335
      %v646 = vunpack.c.l.b16 %v336
      %v647 = vunpack.c.l.b16 %v337
      %v648 = vunpack.c.l.b16 %v338
      %v649 = vunpack.c.l.b16 %v339
      %v650 = vunpack.c.l.b16 %v340
      %v651 = vunpack.c.l.b16 %v341
      %v652 = vunpack.c.l.b16 %v342
      %v653 = vunpack.c.l.b16 %v343
      %v654 = vunpack.c.l.b16 %v344
      %v655 = vunpack.c.l.b16 %v345
      %v656 = vunpack.c.l.b16 %v346
      %v657 = vunpack.c.l.b16 %v347
      %v658 = vunpack.c.l.b16 %v348
      %v659 = vunpack.c.l.b16 %v349
      %v660 = vunpack.c.l.b16 %v350
      %v661 = vunpack.c.l.b16 %v351
      %v662 = vunpack.c.l.b16 %v352
      %v663 = vunpack.c.l.b16 %v353
      %v664 = vunpack.c.l.b16 %v354
      %v665 = vunpack.c.l.b16 %v355
      %v666 = vunpack.c.l.b16 %v356
      %v667 = vunpack.c.l.b16 %v357
      %v668 = vunpack.c.l.b16 %v358
      %v669 = vunpack.c.l.b16 %v359
      %v670 = vunpack.c.l.b16 %v360
      %v671 = vunpack.c.l.b16 %v361
      %v672 = vunpack.c.l.b16 %v362
      %v673 = vunpack.c.l.b16 %v363
      %v674 = vunpack.c.l.b16 %v364
      %v675 = vunpack.c.l.b16 %v365
      %v676 = vunpack.c.l.b16 %v366
      %v677 = vunpack.c.l.b16 %v367
      %v678 = vunpack.c.l.b16 %v368
      %v679 = vunpack.c.l.b16 %v369
      %v680 = vunpack.c.l.b16 %v370
      %v681 = vunpack.c.l.b16 %v371
      %v682 = vunpack.c.l.b16 %v372
      %v683 = vunpack.c.l.b16 %v373
      %v684 = vunpack.c.l.b16 %v374
      %v685 = vunpack.c.l.b16 %v375
      %v686 = vunpack.c.l.b16 %v376
      %v687 = vunpack.c.l.b16 %v377
      %v688 = vunpack.c.l.b16 %v378
      %v689 = vunpack.c.l.b16 %v379
      %v690 = vunpack.c.l.b16 %v380
      %v691 = vunpack.c.l.b16 %v381
      %v692 = vunpack.c.l.b16 %v382
      %v693 = vunpack.c.l.b16 %v383
      %v694 = vunpack.c.l.b16 %v384
      %v695 = vpack.c.b16 %v588, %v587
      %v696 = vpack.c.b16 %v590, %v589
      %v697 = vpack.c.b16 %v592, %v591
      %v698 = vpack.c.b16 %v594, %v593
      %v699 = vpack.c.b16 %v596, %v595
      %v700 = vpack.c.b16 %v598, %v597
      %v701 = vpack.c.b16 %v600, %v599
      %v702 = vpack.c.b16 %v602, %v601
      %v703 = vpack.c.b16 %v604, %v603
      %v704 = vpack.c.b16 %v606, %v605
      %v705 = vpack.c.b16 %v608, %v607
      %v706 = vpack.c.b16 %v610, %v609
      %v707 = vpack.c.b16 %v612, %v611
      %v708 = vpack.c.b16 %v614, %v613
      %v709 = vpack.c.b16 %v616, %v615
      %v710 = vpack.c.b16 %v618, %v617
      %v711 = vpack.c.b16 %v620, %v619
      %v712 = vpack.c.b16 %v622, %v621
      %v713 = vpack.c.b16 %v624, %v623
      %v714 = vpack.c.b16 %v626, %v625
      %v715 = vpack.c.b16 %v628, %v627
      %v716 = vpack.c.b16 %v630, %v629
      %v717 = vpack.c.b16 %v632, %v631
      %v718 = vpack.c.b16 %v634, %v633
      %v719 = vpack.c.b16 %v636, %v635
      %v720 = vpack.c.b16 %v638, %v637
      %v721 = vpack.c.b16 %v640, %v639
      %v722 = vpack.c.b16 %v642, %v641
      %v723 = vpack.c.b16 %v644, %v643
      %v724 = vpack.c.b16 %v646, %v645
      %v725 = vpack.c.b16 %v648, %v647
      %v726 = vpack.c.b16 %v650, %v649
      %v727 = vpack.c.b16 %v652, %v651
      %v728 = vpack.c.b16 %v654, %v653
      %v729 = vpack.c.b16 %v656, %v655
      %v730 = vpack.c.b16 %v658, %v657
      %v731 = vpack.c.b16 %v660, %v659
      %v732 = vpack.c.b16 %v662, %v661
      %v733 = vpack.c.b16 %v664, %v663
      %v734 = vpack.c.b16 %v666, %v665
      %v735 = vpack.c.b16 %v668, %v667
      %v736 = vpack.c.b16 %v670, %v669
      %v737 = vpack.c.b16 %v672, %v671
      %v738 = vpack.c.b16 %v674, %v673
      %v739 = vpack.c.b16 %v676, %v675
      %v740 = vpack.c.b16 %v678, %v677
      %v741 = vpack.c.b16 %v680, %v679
      %v742 = vpack.c.b16 %v682, %v681
      %v743 = vpack.c.b16 %v684, %v683
      %v744 = vpack.c.b16 %v686, %v685
      %v745 = vpack.c.b16 %v688, %v687
      %v746 = vpack.c.b16 %v690, %v689
      %v747 = vpack.c.b16 %v692, %v691
      %v748 = vpack.c.b16 %v694, %v693
      %vm803 = vcmask 785408
      %v805 = vsel %vm803, %v459, 0
      %v808 = vsel %vm803, %v466, 0
      %810 = vmatprep.subr.bf16.mxu0 0
      %811 = vmatpush1.bf16.msra.mxu0 %v695
      %812 = vmatprep.subr.bf16.mxu0 0
      %813 = vmatpush1.bf16.msra.mxu0 %v696
      %814 = vmatprep.subr.bf16.mxu0 0
      %815 = vmatpush1.bf16.msra.mxu0 %v697
      %816 = vmatprep.subr.bf16.mxu0 0
      %817 = vmatpush1.bf16.msra.mxu0 %v698
      %818 = vmatprep.subr.bf16.mxu0 0
      %819 = vmatpush1.bf16.msra.mxu0 %v699
      %820 = vmatprep.subr.bf16.mxu0 0
      %821 = vmatpush1.bf16.msra.mxu0 %v700
      %822 = vmatprep.subr.bf16.mxu0 0
      %823 = vmatpush1.bf16.msra.mxu0 %v701
      %824 = vmatprep.subr.bf16.mxu0 0
      %825 = vmatpush1.bf16.msra.mxu0 %v702
      %826 = vmatprep.subr.bf16.mxu0 0
      %827 = vmatpush1.bf16.msra.mxu0 %v703
      %828 = vmatprep.subr.bf16.mxu0 0
      %829 = vmatpush1.bf16.msra.mxu0 %v704
      %830 = vmatprep.subr.bf16.mxu0 0
      %831 = vmatpush1.bf16.msra.mxu0 %v705
      %832 = vmatprep.subr.bf16.mxu0 0
      %833 = vmatpush1.bf16.msra.mxu0 %v706
      %834 = vmatprep.subr.bf16.mxu0 0
      %835 = vmatpush1.bf16.msra.mxu0 %v707
      %836 = vmatprep.subr.bf16.mxu0 0
      %837 = vmatpush1.bf16.msra.mxu0 %v708
      %838 = vmatprep.subr.bf16.mxu0 0
      %839 = vmatpush1.bf16.msra.mxu0 %v709
      %840 = vmatprep.subr.bf16.mxu0 0
      %841 = vmatpush1.bf16.msra.mxu0 %v710
      %842 = vmatprep.mubr.bf16.mxu0 %v454
      %843 = vmatmul.mubr.bf16.gmra.mrb[0].mxu0 %v453
      %v844 = vpop.f32.mrb[0].mxu0
      %v845 = vadd.f32 %v392, %v844
      %v846 = vpop.f32.mrb[0].mxu0
      %v847 = vpop.f32.mrb[0].mxu0
      %v848 = vadd.f32 %v397, %v847
      %v849 = vpop.f32.mrb[0].mxu0
      %850 = vmatprep.mubr.bf16.mxu0 %v461
      %851 = vmatmul.mubr.bf16.gmra.mrb[0].mxu0 %v460
      %v852 = vpop.f32.mrb[0].mxu0
      %v853 = vadd.f32 %v402, %v852
      %v854 = vpop.f32.mrb[0].mxu0
      %v855 = vpop.f32.mrb[0].mxu0
      %v856 = vadd.f32 %v407, %v855
      %v857 = vpop.f32.mrb[0].mxu0
      %858 = vdwg.mxu0
      %859 = vmatprep.subr.bf16.mxu0 0
      %860 = vmatpush1.bf16.msra.mxu0 %v711
      %861 = vmatprep.subr.bf16.mxu0 0
      %862 = vmatpush1.bf16.msra.mxu0 %v712
      %863 = vmatprep.subr.bf16.mxu0 0
      %864 = vmatpush1.bf16.msra.mxu0 %v713
      %865 = vmatprep.subr.bf16.mxu0 0
      %866 = vmatpush1.bf16.msra.mxu0 %v714
      %867 = vmatprep.subr.bf16.mxu0 0
      %868 = vmatpush1.bf16.msra.mxu0 %v715
      %869 = vmatprep.subr.bf16.mxu0 0
      %870 = vmatpush1.bf16.msra.mxu0 %v716
      %871 = vmatprep.subr.bf16.mxu0 0
      %872 = vmatpush1.bf16.msra.mxu0 %v717
      %873 = vmatprep.subr.bf16.mxu0 0
      %874 = vmatpush1.bf16.msra.mxu0 %v718
      %875 = vmatprep.subr.bf16.mxu0 0
      %876 = vmatpush1.bf16.msra.mxu0 %v719
      %877 = vmatprep.subr.bf16.mxu0 0
      %878 = vmatpush1.bf16.msra.mxu0 %v720
      %879 = vmatprep.subr.bf16.mxu0 0
      %880 = vmatpush1.bf16.msra.mxu0 %v721
      %881 = vmatprep.subr.bf16.mxu0 0
      %882 = vmatpush1.bf16.msra.mxu0 %v722
      %883 = vmatprep.subr.bf16.mxu0 0
      %884 = vmatpush1.bf16.msra.mxu0 %v723
      %885 = vmatprep.subr.bf16.mxu0 0
      %886 = vmatpush1.bf16.msra.mxu0 %v724
      %887 = vmatprep.subr.bf16.mxu0 0
      %888 = vmatpush1.bf16.msra.mxu0 %v725
      %889 = vmatprep.subr.bf16.mxu0 0
      %890 = vmatpush1.bf16.msra.mxu0 %v726
      %891 = vmatprep.mubr.bf16.mxu0 %v456
      %892 = vmatmul.mubr.bf16.gmra.mrb[0].mxu0 %v455
      %v893 = vpop.f32.mrb[0].mxu0
      %v894 = vadd.f32 %v845, %v893
      %v895 = vpop.f32.mrb[0].mxu0
      %v896 = vpop.f32.mrb[0].mxu0
      %v897 = vadd.f32 %v848, %v896
      %v898 = vpop.f32.mrb[0].mxu0
      %899 = vmatprep.mubr.bf16.mxu0 %v463
      %900 = vmatmul.mubr.bf16.gmra.mrb[0].mxu0 %v462
      %v901 = vpop.f32.mrb[0].mxu0
      %v902 = vadd.f32 %v853, %v901
      %v903 = vpop.f32.mrb[0].mxu0
      %v904 = vpop.f32.mrb[0].mxu0
      %v905 = vadd.f32 %v856, %v904
      %v906 = vpop.f32.mrb[0].mxu0
      %907 = vdwg.mxu0
      %908 = vmatprep.subr.bf16.mxu0 0
      %909 = vmatpush1.bf16.msra.mxu0 %v727
      %910 = vmatprep.subr.bf16.mxu0 0
      %911 = vmatpush1.bf16.msra.mxu0 %v728
      %912 = vmatprep.subr.bf16.mxu0 0
      %913 = vmatpush1.bf16.msra.mxu0 %v729
      %914 = vmatprep.subr.bf16.mxu0 0
      %915 = vmatpush1.bf16.msra.mxu0 %v730
      %916 = vmatprep.subr.bf16.mxu0 0
      %917 = vmatpush1.bf16.msra.mxu0 %v731
      %918 = vmatprep.subr.bf16.mxu0 0
      %919 = vmatpush1.bf16.msra.mxu0 %v732
      %920 = vmatprep.subr.bf16.mxu0 0
      %921 = vmatpush1.bf16.msra.mxu0 %v733
      %922 = vmatprep.subr.bf16.mxu0 0
      %923 = vmatpush1.bf16.msra.mxu0 %v734
      %924 = vmatprep.subr.bf16.mxu0 0
      %925 = vmatpush1.bf16.msra.mxu0 %v735
      %926 = vmatprep.subr.bf16.mxu0 0
      %927 = vmatpush1.bf16.msra.mxu0 %v736
      %928 = vmatprep.subr.bf16.mxu0 0
      %929 = vmatpush1.bf16.msra.mxu0 %v737
      %930 = vmatprep.subr.bf16.mxu0 0
      %931 = vmatpush1.bf16.msra.mxu0 %v738
      %932 = vmatprep.subr.bf16.mxu0 0
      %933 = vmatpush1.bf16.msra.mxu0 %v739
      %934 = vmatprep.subr.bf16.mxu0 0
      %935 = vmatpush1.bf16.msra.mxu0 %v740
      %936 = vmatprep.subr.bf16.mxu0 0
      %937 = vmatpush1.bf16.msra.mxu0 %v741
      %938 = vmatprep.subr.bf16.mxu0 0
      %939 = vmatpush1.bf16.msra.mxu0 %v742
      %940 = vmatprep.mubr.bf16.mxu0 %v458
      %941 = vmatmul.mubr.bf16.gmra.mrb[0].mxu0 %v457
      %v942 = vpop.f32.mrb[0].mxu0
      %v943 = vadd.f32 %v894, %v942
      %v944 = vpop.f32.mrb[0].mxu0
      %v945 = vpop.f32.mrb[0].mxu0
      %v946 = vadd.f32 %v897, %v945
      %v947 = vpop.f32.mrb[0].mxu0
      %948 = vmatprep.mubr.bf16.mxu0 %v465
      %949 = vmatmul.mubr.bf16.gmra.mrb[0].mxu0 %v464
      %v950 = vpop.f32.mrb[0].mxu0
      %v951 = vadd.f32 %v902, %v950
      %v952 = vpop.f32.mrb[0].mxu0
      %v953 = vpop.f32.mrb[0].mxu0
      %v954 = vadd.f32 %v905, %v953
      %v955 = vpop.f32.mrb[0].mxu0
      %956 = vdwg.mxu0
      %957 = vmatprep.subr.bf16.mxu0 0
      %958 = vmatpush1.bf16.msra.mxu0 %v743
      %959 = vmatprep.subr.bf16.mxu0 0
      %960 = vmatpush1.bf16.msra.mxu0 %v744
      %961 = vmatprep.subr.bf16.mxu0 0
      %962 = vmatpush1.bf16.msra.mxu0 %v745
      %963 = vmatprep.subr.bf16.mxu0 0
      %964 = vmatpush1.bf16.msra.mxu0 %v746
      %965 = vmatprep.subr.bf16.mxu0 0
      %966 = vmatpush1.bf16.msra.mxu0 %v747
      %967 = vmatprep.subr.bf16.mxu0 0
      %968 = vmatpush1.bf16.msra.mxu0 %v748
      %969 = vmatprep.subr.bf16.mxu0 0
      %970 = vmatpush1.bf16.msra.mxu0 0
      %971 = vmatprep.subr.bf16.mxu0 0
      %972 = vmatpush1.bf16.msra.mxu0 0
      %973 = vmatprep.subr.bf16.mxu0 0
      %974 = vmatpush1.bf16.msra.mxu0 0
      %975 = vmatprep.subr.bf16.mxu0 0
      %976 = vmatpush1.bf16.msra.mxu0 0
      %977 = vmatprep.subr.bf16.mxu0 0
      %978 = vmatpush1.bf16.msra.mxu0 0
      %979 = vmatprep.subr.bf16.mxu0 0
      %980 = vmatpush1.bf16.msra.mxu0 0
      %981 = vmatprep.subr.bf16.mxu0 0
      %982 = vmatpush1.bf16.msra.mxu0 0
      %983 = vmatprep.subr.bf16.mxu0 0
      %984 = vmatpush1.bf16.msra.mxu0 0
      %985 = vmatprep.subr.bf16.mxu0 0
      %986 = vmatpush1.bf16.msra.mxu0 0
      %987 = vmatprep.subr.bf16.mxu0 0
      %988 = vmatpush1.bf16.msra.mxu0 0
      %989 = vmatprep.mubr.bf16.mxu0 0
      %990 = vmatmul.mubr.bf16.gmra.mrb[0].mxu0 %v805
      %v991 = vpop.f32.mrb[0].mxu0
      %v992 = vadd.f32 %v943, %v991
      %v993 = vpop.f32.mrb[0].mxu0
      %v994 = vpop.f32.mrb[0].mxu0
      %v995 = vadd.f32 %v946, %v994
      %v996 = vpop.f32.mrb[0].mxu0
      %997 = vmatprep.mubr.bf16.mxu0 0
      %998 = vmatmul.mubr.bf16.gmra.mrb[0].mxu0 %v808
      %v999 = vpop.f32.mrb[0].mxu0
      %v1000 = vadd.f32 %v951, %v999
      %v1001 = vpop.f32.mrb[0].mxu0
      %v1002 = vpop.f32.mrb[0].mxu0
      %v1003 = vadd.f32 %v954, %v1002
      %v1004 = vpop.f32.mrb[0].mxu0
      %1005 = vdwg.mxu0
      %v1006 = vld [vmem:[%s251] sm:$0xf]
      %v1007 = vld [vmem:[%s251 + $0x4] sm:$0xf]
      %v1008 = vld [vmem:[%s251 + $0x8] sm:$0xf]
      %v1009 = vld [vmem:[%s251 + $0xc] sm:$0xf]
      %v1010 = vunpack.c.l.bf16 %v1006
      %v1011 = vunpack.c.l.bf16 %v1007
      %v1012 = vunpack.c.l.bf16 %v1008
      %v1013 = vunpack.c.l.bf16 %v1009
      %v1014 = vadd.f32 %v992, %v1010
      %v1015 = vadd.f32 %v995, %v1011
      %v1016 = vadd.f32 %v1000, %v1012
      %v1017 = vadd.f32 %v1003, %v1013
      %v1018 = vpack.c.bf16 %v1015, %v1014
      %v1019 = vpack.c.bf16 %v1017, %v1016
      %v1022 = vunpack.c.l.b16 %v1018
      %v1023 = vunpack.c.h.b16 %v1018
      %v1024 = vunpack.c.l.b16 %v1019
      %v1025 = vunpack.c.h.b16 %v1019
      %v1026 = vpack.c.b16 %v1022, %v1022
      %v1027 = vpack.c.b16 %v1023, %v1023
      %v1028 = vpack.c.b16 %v1024, %v1024
      %v1029 = vpack.c.b16 %v1025, %v1025
      %vm1034 = vcmask 519168
      %1035 = vst.msk [vmem:[%s259] sm:$0xf] %vm1034, %v1026
      %1036 = vst.msk [vmem:[%s259 + $0x4] sm:$0xf] %vm1034, %v1027
      %1037 = vst.msk [vmem:[%s259 + $0x8] sm:$0xf] %vm1034, %v1028
      %1038 = vst.msk [vmem:[%s259 + $0xc] sm:$0xf] %vm1034, %v1029
      %p1039 = scmp.lt.s32.totalorder %s19, 1
      %s1040 = scalar_select %p1039, %s19, 1
      %p1041 = scmp.lt.s32.totalorder %s20, 0
      %s1042 = scalar_select %p1041, %s20, 0
      %s1043 = smul.addr %s1040, 4
      %s1044 = sadd.s32 %s1042, %s1043
      %s1045 = smul.addr %s1044, 4
      %s1046 = scalar_lea.vmem %s4, %s1045
      // Predicated region
      $region37: #{decoder_forward.12} parent=35 // pred_check
        %p1047 = pneg %p145
      $region38: #{decoder_forward.12} parent=35 // pred_check_branch
        %1049 = sbr.rel (%p1047) target = $region40
      $region39: #{decoder_forward.12} parent=35 // pred_region
        _
      $region40: #{decoder_forward.12} parent=35 // pred_fallthru
        _
    $region36: #{decoder_forward.12} parent=5 // pred_fallthru
      _
    %p1050 = scmp.le.s32.totalorder 2, %s10
    // Predicated region
    $region41: #{decoder_forward.12} parent=5 // pred_check
      %p1051 = pneg %p1050
    $region42: #{decoder_forward.12} parent=5 // pred_check_branch
      %1053 = sbr.rel (%p1051) target = $region44
    $region43: #{decoder_forward.12} parent=5 // pred_region
      %s1054 = ssub.s32 %s10, 2
      // Predicated region
      $region45: #{decoder_forward.12} parent=43 // pred_check
        %p1055 = pneg %p151
      $region46: #{decoder_forward.12} parent=43 // pred_check_branch
        %1057 = sbr.rel (%p1055) target = $region48
      $region47: #{decoder_forward.12} parent=43 // pred_region
        %p1058 = scmp.lt.s32.totalorder %s21, 1
        %s1059 = scalar_select %p1058, %s21, 1
        %p1060 = scmp.lt.s32.totalorder %s22, 0
        %s1061 = scalar_select %p1060, %s22, 0
        %s1062 = smul.addr %s1059, 4
        %s1063 = sadd.s32 %s1061, %s1062
        %s1064 = smul.addr %s1063, 4
        %s1065 = scalar_lea.vmem %s4, %s1064
      $region48: #{decoder_forward.12} parent=43 // pred_fallthru
        _
    $region44: #{decoder_forward.12} parent=5 // pred_fallthru
      _
  $region6: #{decoder_forward.12} parent=0 // loop_footer
    %s14 = sadd.s32 1, %s10
  $region7: #{decoder_forward.12} parent=0 // loop_footer_branch
    %9 = sbr.rel target = $region3
  $region8: #{decoder_forward.12} parent=0 // loop_exit
    _

// kernel: decoder_forward.15
$region0: #{decoder_forward.15}
  #allocation0 [shape = 'u32[]', space=smem, size = 0x4, offset = 0x4, fixed_abs, tag = 'smem constant byte address 0x4 - core index']
  #allocation1 [shape = 'u32[144,128]{1,0:T(1,128)}', space=vmem, size = 0x12000, scoped, tag = 'internal scratch']
  %s0 = inlined_call_operand.vmem [shape: bf16[2,864,512], index: 0, kind: input, shape index: {}]
  %s1 = inlined_call_operand.vmem [shape: bf16[16,864], index: 1, kind: input, shape index: {}]
  %s2 = inlined_call_operand.vmem [shape: f32[16,1], index: 2, kind: input, shape index: {}]
  %s3 = inlined_call_operand.vmem [shape: bf16[2,16,512], index: 3, kind: output, shape index: {}]
  %s4 = sld [smem:[#allocation0]]
  $region45: #{decoder_forward.15} parent=0
    _
  %s6 = ssub.s32 1, %s4
  %s7 = scalar_select 0, %s6, %s4
  loop: start=0, step=1, limit=4
  $region2: #{decoder_forward.15} parent=0 // loop_pre_header
    _
  $region3: #{decoder_forward.15} parent=0 // loop_header
    %s9 = sphi 0, %s13
    %p10 = scmp.ge.s32.totalorder %s9, 4
    %s16 = sphi 0, %s28
    %s17 = sphi 0, %s24
    %s18 = sphi 0, %s16
    %s19 = sphi 0, %s17
    %s20 = sphi 0, %s18
    %s21 = sphi 0, %s19
    %s33 = sphi 0, %s35
    %s36 = sphi 0, %s33
    %s37 = sphi 0, %s36
    %s53 = sphi 0, %s37
    %s57 = sphi 0, %s57
    %s59 = sphi 0, %s57
    %s60 = sphi 0, %s59
    %s74 = sphi 0, %s60
    %s78 = sphi 0, %s78
    %s80 = sphi 0, %s78
    %s81 = sphi 0, %s80
    %s95 = sphi 0, %s81
    %s103 = sphi 0, %s105
    %s106 = sphi 0, %s103
    %s107 = sphi 0, %s106
    %s123 = sphi 0, %s107
  $region4: #{decoder_forward.15} parent=0 // loop_header_branch
    %12 = sbr.rel (%p10) target = $region8
  $region5: #{decoder_forward.15} parent=0 // loop_body
    %s14 = ssub.s32 %s9, 1
    %s15 = ssub.s32 %s9, 2
    %s22 = sadd.s32 1, %s17
    %p23 = scmp.ge.s32.totalorder %s22, 1
    %s24 = scalar_select %p23, 0, %s22
    %s25 = sadd.s32 1, %s16
    %s26 = scalar_select %p23, %s25, %s16
    %p27 = scmp.ge.s32.totalorder %s26, 2
    %s28 = scalar_select %p27, 0, %s26
    %s29 = ssub.s32 %s16, %s28
    %s30 = ssub.s32 %s17, %s24
    %s31 = sor.u32 %s29, %s30
    %p32 = scmp.eq.s32.totalorder %s31, 0
    %s34 = sadd.s32 %s33, 1
    %s35 = scalar_select %p32, %s33, %s34
    %p38 = pneg %p32
    %p39 = scmp.eq.s32.totalorder %s9, 1
    %p40 = por %p38, %p39
    %p41 = scmp.ne.s32.totalorder %s33, %s36
    %p42 = scmp.eq.s32.totalorder %s9, 0
    %p43 = por %p41, %p42
    %p44 = scmp.ne.s32.totalorder %s33, %s36
    %p45 = scmp.eq.s32.totalorder %s14, 1
    %p46 = por %p44, %p45
    %p47 = scmp.ne.s32.totalorder %s36, %s37
    %p48 = scmp.eq.s32.totalorder %s14, 0
    %p49 = por %p47, %p48
    %p50 = scmp.ne.s32.totalorder %s36, %s37
    %p51 = scmp.eq.s32.totalorder %s15, 1
    %p52 = por %p50, %p51
    %p54 = scmp.ne.s32.totalorder %s37, %s53
    %p55 = scmp.eq.s32.totalorder %s15, 0
    %p56 = por %p54, %p55
    %s58 = sadd.s32 %s57, 1
    %p61 = scmp.eq.s32.totalorder %s9, 1
    %p62 = scmp.ne.s32.totalorder %s57, %s59
    %p63 = scmp.eq.s32.totalorder %s9, 0
    %p64 = por %p62, %p63
    %p65 = scmp.ne.s32.totalorder %s57, %s59
    %p66 = scmp.eq.s32.totalorder %s14, 1
    %p67 = por %p65, %p66
    %p68 = scmp.ne.s32.totalorder %s59, %s60
    %p69 = scmp.eq.s32.totalorder %s14, 0
    %p70 = por %p68, %p69
    %p71 = scmp.ne.s32.totalorder %s59, %s60
    %p72 = scmp.eq.s32.totalorder %s15, 1
    %p73 = por %p71, %p72
    %p75 = scmp.ne.s32.totalorder %s60, %s74
    %p76 = scmp.eq.s32.totalorder %s15, 0
    %p77 = por %p75, %p76
    %s79 = sadd.s32 %s78, 1
    %p82 = scmp.eq.s32.totalorder %s9, 1
    %p83 = scmp.ne.s32.totalorder %s78, %s80
    %p84 = scmp.eq.s32.totalorder %s9, 0
    %p85 = por %p83, %p84
    %p86 = scmp.ne.s32.totalorder %s78, %s80
    %p87 = scmp.eq.s32.totalorder %s14, 1
    %p88 = por %p86, %p87
    %p89 = scmp.ne.s32.totalorder %s80, %s81
    %p90 = scmp.eq.s32.totalorder %s14, 0
    %p91 = por %p89, %p90
    %p92 = scmp.ne.s32.totalorder %s80, %s81
    %p93 = scmp.eq.s32.totalorder %s15, 1
    %p94 = por %p92, %p93
    %p96 = scmp.ne.s32.totalorder %s81, %s95
    %p97 = scmp.eq.s32.totalorder %s15, 0
    %p98 = por %p96, %p97
    %s99 = ssub.s32 %s16, %s28
    %s100 = ssub.s32 %s17, %s24
    %s101 = sor.u32 %s99, %s100
    %p102 = scmp.eq.s32.totalorder %s101, 0
    %s104 = sadd.s32 %s103, 1
    %s105 = scalar_select %p102, %s103, %s104
    %p108 = pneg %p102
    %p109 = scmp.eq.s32.totalorder %s9, 1
    %p110 = por %p108, %p109
    %p111 = scmp.ne.s32.totalorder %s103, %s106
    %p112 = scmp.eq.s32.totalorder %s9, 0
    %p113 = por %p111, %p112
    %p114 = scmp.ne.s32.totalorder %s103, %s106
    %p115 = scmp.eq.s32.totalorder %s14, 1
    %p116 = por %p114, %p115
    %p117 = scmp.ne.s32.totalorder %s106, %s107
    %p118 = scmp.eq.s32.totalorder %s14, 0
    %p119 = por %p117, %p118
    %p120 = scmp.ne.s32.totalorder %s106, %s107
    %p121 = scmp.eq.s32.totalorder %s15, 1
    %p122 = por %p120, %p121
    %p124 = scmp.ne.s32.totalorder %s107, %s123
    %p125 = scmp.eq.s32.totalorder %s15, 0
    %p126 = por %p124, %p125
    %p127 = scmp.le.s32.totalorder 1, %s9
    %p128 = scmp.lt.s32.totalorder %s9, 3
    %p129 = pnand %p127, %p128
    %p130 = pneg %p129
    // Predicated region
    $region9: #{decoder_forward.15} parent=5 // pred_check
      _
    $region10: #{decoder_forward.15} parent=5 // pred_check_branch
      %132 = sbr.rel (%p129) target = $region12
    $region11: #{decoder_forward.15} parent=5 // pred_region
      %s133 = ssub.s32 %s9, 1
      // Predicated region
      $region13: #{decoder_forward.15} parent=11 // pred_check
        %p134 = pneg %p70
      $region14: #{decoder_forward.15} parent=11 // pred_check_branch
        %136 = sbr.rel (%p134) target = $region16
      $region15: #{decoder_forward.15} parent=11 // pred_region
        _
      $region16: #{decoder_forward.15} parent=11 // pred_fallthru
        _
      // Predicated region
      $region17: #{decoder_forward.15} parent=11 // pred_check
        %p137 = pneg %p91
      $region18: #{decoder_forward.15} parent=11 // pred_check_branch
        %139 = sbr.rel (%p137) target = $region20
      $region19: #{decoder_forward.15} parent=11 // pred_region
        _
      $region20: #{decoder_forward.15} parent=11 // pred_fallthru
        _
    $region12: #{decoder_forward.15} parent=5 // pred_fallthru
      _
    %p140 = scmp.lt.s32.totalorder %s9, 2
    // Predicated region
    $region21: #{decoder_forward.15} parent=5 // pred_check
      %p141 = pneg %p140
    $region22: #{decoder_forward.15} parent=5 // pred_check_branch
      %143 = sbr.rel (%p141) target = $region24
    $region23: #{decoder_forward.15} parent=5 // pred_region
      // Predicated region
      $region25: #{decoder_forward.15} parent=23 // pred_check
        %p144 = pneg %p43
      $region26: #{decoder_forward.15} parent=23 // pred_check_branch
        %146 = sbr.rel (%p144) target = $region28
      $region27: #{decoder_forward.15} parent=23 // pred_region
        %s147 = smul.u32 4, %s17
        %p148 = scmp.lt.s32.totalorder %s16, 1
        %s149 = scalar_select %p148, %s16, 1
        %p150 = scmp.lt.s32.totalorder %s147, 3
        %s151 = scalar_select %p150, %s147, 3
        %s152 = smul.addr %s149, 432
        %s153 = sadd.s32 %s151, %s152
        %s154 = smul.addr %s153, 4
        %s155 = scalar_lea.vmem %s0, %s154
        %s156 = smul.u32 4, %s17
      $region28: #{decoder_forward.15} parent=23 // pred_fallthru
        _
    $region24: #{decoder_forward.15} parent=5 // pred_fallthru
      _
    %p157 = scmp.le.s32.totalorder 1, %s9
    %p158 = scmp.lt.s32.totalorder %s9, 3
    %p159 = pnand %p157, %p158
    %p160 = pneg %p159
    // Predicated region
    $region29: #{decoder_forward.15} parent=5 // pred_check
      _
    $region30: #{decoder_forward.15} parent=5 // pred_check_branch
      %162 = sbr.rel (%p159) target = $region32
    $region31: #{decoder_forward.15} parent=5 // pred_region
      %s163 = ssub.s32 %s9, 1
      %s164 = smul.u32 4, %s19
      %p165 = scmp.lt.s32.totalorder %s18, 1
      %s166 = scalar_select %p165, %s18, 1
      %p167 = scmp.lt.s32.totalorder %s164, 3
      %s168 = scalar_select %p167, %s164, 3
      %s169 = smul.addr %s166, 432
      %s170 = sadd.s32 %s168, %s169
      %s171 = smul.addr %s170, 4
      %s172 = scalar_lea.vmem %s0, %s171
      %p173 = pneg %p49
      %p174 = pneg %p46
      %p175 = pneg %p70
      %p176 = pneg %p67
      %p177 = pneg %p91
      %p178 = pneg %p88
      %p179 = pneg %p119
      %p180 = pneg %p116
      %s181 = smul.u32 4, %s19
      %p182 = scmp.lt.s32.totalorder %s18, 1
      %s183 = scalar_select %p182, %s18, 1
      %p184 = scmp.lt.s32.totalorder %s181, 3
      %s185 = scalar_select %p184, %s181, 3
      %s186 = smul.addr %s183, 8
      %s187 = sadd.s32 %s185, %s186
      %s188 = smul.addr %s187, 4
      %s189 = scalar_lea.vmem %s3, %s188
      %s190 = smul.u32 4, %s19
      %p191 = scmp.lt.s32.totalorder %s18, 1
      %s192 = scalar_select %p191, %s18, 1
      %p193 = scmp.lt.s32.totalorder %s190, 3
      %s194 = scalar_select %p193, %s190, 3
      %s195 = smul.addr %s192, 432
      %s196 = sadd.s32 %s194, %s195
      %s197 = smul.addr %s196, 4
      %s198 = scalar_lea.vmem %s0, %s197
      %s199 = smul.u32 4, %s19
      %s200 = smul.u32 4, %s19
      %p201 = scmp.lt.s32.totalorder %s18, 1
      %s202 = scalar_select %p201, %s18, 1
      %p203 = scmp.lt.s32.totalorder %s200, 3
      %s204 = scalar_select %p203, %s200, 3
      %s205 = smul.addr %s202, 8
      %s206 = sadd.s32 %s204, %s205
      %s207 = smul.addr %s206, 4
      %s208 = scalar_lea.vmem %s3, %s207
      %s209 = smul.u32 4, %s19
      %v211 = vld [vmem:[%s1] sm:$0xff]
      %v212 = vld [vmem:[%s1 + $0x8] sm:$0xff]
      %v213 = vld [vmem:[%s1 + $0x10] sm:$0xff]
      %v214 = vld [vmem:[%s1 + $0x18] sm:$0xf]
      %v215 = vld [vmem:[%s1 + $0x1c] sm:$0xff]
      %v216 = vld [vmem:[%s1 + $0x24] sm:$0xff]
      %v217 = vld [vmem:[%s1 + $0x2c] sm:$0xff]
      %v218 = vld [vmem:[%s1 + $0x34] sm:$0xf]
      %v219 = vld [vmem:[%s198] sm:$0xff]
      %v220 = vld [vmem:[%s198 + $0x8] sm:$0xff]
      %v221 = vld [vmem:[%s198 + $0x10] sm:$0xff]
      %v222 = vld [vmem:[%s198 + $0x18] sm:$0xff]
      %v223 = vld [vmem:[%s198 + $0x20] sm:$0xff]
      %v224 = vld [vmem:[%s198 + $0x28] sm:$0xff]
      %v225 = vld [vmem:[%s198 + $0x30] sm:$0xff]
      %v226 = vld [vmem:[%s198 + $0x38] sm:$0xff]
      %v227 = vld [vmem:[%s198 + $0x40] sm:$0xff]
      %v228 = vld [vmem:[%s198 + $0x48] sm:$0xff]
      %v229 = vld [vmem:[%s198 + $0x50] sm:$0xff]
      %v230 = vld [vmem:[%s198 + $0x58] sm:$0xff]
      %v231 = vld [vmem:[%s198 + $0x60] sm:$0xff]
      %v232 = vld [vmem:[%s198 + $0x68] sm:$0xff]
      %v233 = vld [vmem:[%s198 + $0x70] sm:$0xff]
      %v234 = vld [vmem:[%s198 + $0x78] sm:$0xff]
      %v235 = vld [vmem:[%s198 + $0x80] sm:$0xff]
      %v236 = vld [vmem:[%s198 + $0x88] sm:$0xff]
      %v237 = vld [vmem:[%s198 + $0x90] sm:$0xff]
      %v238 = vld [vmem:[%s198 + $0x98] sm:$0xff]
      %v239 = vld [vmem:[%s198 + $0xa0] sm:$0xff]
      %v240 = vld [vmem:[%s198 + $0xa8] sm:$0xff]
      %v241 = vld [vmem:[%s198 + $0xb0] sm:$0xff]
      %v242 = vld [vmem:[%s198 + $0xb8] sm:$0xff]
      %v243 = vld [vmem:[%s198 + $0xc0] sm:$0xff]
      %v244 = vld [vmem:[%s198 + $0xc8] sm:$0xff]
      %v245 = vld [vmem:[%s198 + $0xd0] sm:$0xff]
      %v246 = vld [vmem:[%s198 + $0xd8] sm:$0xff]
      %v247 = vld [vmem:[%s198 + $0xe0] sm:$0xff]
      %v248 = vld [vmem:[%s198 + $0xe8] sm:$0xff]
      %v249 = vld [vmem:[%s198 + $0xf0] sm:$0xff]
      %v250 = vld [vmem:[%s198 + $0xf8] sm:$0xff]
      %v251 = vld [vmem:[%s198 + $0x100] sm:$0xff]
      %v252 = vld [vmem:[%s198 + $0x108] sm:$0xff]
      %v253 = vld [vmem:[%s198 + $0x110] sm:$0xff]
      %v254 = vld [vmem:[%s198 + $0x118] sm:$0xff]
      %v255 = vld [vmem:[%s198 + $0x120] sm:$0xff]
      %v256 = vld [vmem:[%s198 + $0x128] sm:$0xff]
      %v257 = vld [vmem:[%s198 + $0x130] sm:$0xff]
      %v258 = vld [vmem:[%s198 + $0x138] sm:$0xff]
      %v259 = vld [vmem:[%s198 + $0x140] sm:$0xff]
      %v260 = vld [vmem:[%s198 + $0x148] sm:$0xff]
      %v261 = vld [vmem:[%s198 + $0x150] sm:$0xff]
      %v262 = vld [vmem:[%s198 + $0x158] sm:$0xff]
      %v263 = vld [vmem:[%s198 + $0x160] sm:$0xff]
      %v264 = vld [vmem:[%s198 + $0x168] sm:$0xff]
      %v265 = vld [vmem:[%s198 + $0x170] sm:$0xff]
      %v266 = vld [vmem:[%s198 + $0x178] sm:$0xff]
      %v267 = vld [vmem:[%s198 + $0x180] sm:$0xff]
      %v268 = vld [vmem:[%s198 + $0x188] sm:$0xff]
      %v269 = vld [vmem:[%s198 + $0x190] sm:$0xff]
      %v270 = vld [vmem:[%s198 + $0x198] sm:$0xff]
      %v271 = vld [vmem:[%s198 + $0x1a0] sm:$0xff]
      %v272 = vld [vmem:[%s198 + $0x1a8] sm:$0xff]
      %v273 = vld [vmem:[%s198 + $0x1b0] sm:$0xff]
      %v274 = vld [vmem:[%s198 + $0x1b8] sm:$0xff]
      %v275 = vld [vmem:[%s198 + $0x1c0] sm:$0xff]
      %v276 = vld [vmem:[%s198 + $0x1c8] sm:$0xff]
      %v277 = vld [vmem:[%s198 + $0x1d0] sm:$0xff]
      %v278 = vld [vmem:[%s198 + $0x1d8] sm:$0xff]
      %v279 = vld [vmem:[%s198 + $0x1e0] sm:$0xff]
      %v280 = vld [vmem:[%s198 + $0x1e8] sm:$0xff]
      %v281 = vld [vmem:[%s198 + $0x1f0] sm:$0xff]
      %v282 = vld [vmem:[%s198 + $0x1f8] sm:$0xff]
      %v283 = vld [vmem:[%s198 + $0x200] sm:$0xff]
      %v284 = vld [vmem:[%s198 + $0x208] sm:$0xff]
      %v285 = vld [vmem:[%s198 + $0x210] sm:$0xff]
      %v286 = vld [vmem:[%s198 + $0x218] sm:$0xff]
      %v287 = vld [vmem:[%s198 + $0x220] sm:$0xff]
      %v288 = vld [vmem:[%s198 + $0x228] sm:$0xff]
      %v289 = vld [vmem:[%s198 + $0x230] sm:$0xff]
      %v290 = vld [vmem:[%s198 + $0x238] sm:$0xff]
      %v291 = vld [vmem:[%s198 + $0x240] sm:$0xff]
      %v292 = vld [vmem:[%s198 + $0x248] sm:$0xff]
      %v293 = vld [vmem:[%s198 + $0x250] sm:$0xff]
      %v294 = vld [vmem:[%s198 + $0x258] sm:$0xff]
      %v295 = vld [vmem:[%s198 + $0x260] sm:$0xff]
      %v296 = vld [vmem:[%s198 + $0x268] sm:$0xff]
      %v297 = vld [vmem:[%s198 + $0x270] sm:$0xff]
      %v298 = vld [vmem:[%s198 + $0x278] sm:$0xff]
      %v299 = vld [vmem:[%s198 + $0x280] sm:$0xff]
      %v300 = vld [vmem:[%s198 + $0x288] sm:$0xff]
      %v301 = vld [vmem:[%s198 + $0x290] sm:$0xff]
      %v302 = vld [vmem:[%s198 + $0x298] sm:$0xff]
      %v303 = vld [vmem:[%s198 + $0x2a0] sm:$0xff]
      %v304 = vld [vmem:[%s198 + $0x2a8] sm:$0xff]
      %v305 = vld [vmem:[%s198 + $0x2b0] sm:$0xff]
      %v306 = vld [vmem:[%s198 + $0x2b8] sm:$0xff]
      %v307 = vld [vmem:[%s198 + $0x2c0] sm:$0xff]
      %v308 = vld [vmem:[%s198 + $0x2c8] sm:$0xff]
      %v309 = vld [vmem:[%s198 + $0x2d0] sm:$0xff]
      %v310 = vld [vmem:[%s198 + $0x2d8] sm:$0xff]
      %v311 = vld [vmem:[%s198 + $0x2e0] sm:$0xff]
      %v312 = vld [vmem:[%s198 + $0x2e8] sm:$0xff]
      %v313 = vld [vmem:[%s198 + $0x2f0] sm:$0xff]
      %v314 = vld [vmem:[%s198 + $0x2f8] sm:$0xff]
      %v315 = vld [vmem:[%s198 + $0x300] sm:$0xff]
      %v316 = vld [vmem:[%s198 + $0x308] sm:$0xff]
      %v317 = vld [vmem:[%s198 + $0x310] sm:$0xff]
      %v318 = vld [vmem:[%s198 + $0x318] sm:$0xff]
      %v319 = vld [vmem:[%s198 + $0x320] sm:$0xff]
      %v320 = vld [vmem:[%s198 + $0x328] sm:$0xff]
      %v321 = vld [vmem:[%s198 + $0x330] sm:$0xff]
      %v322 = vld [vmem:[%s198 + $0x338] sm:$0xff]
      %v323 = vld [vmem:[%s198 + $0x340] sm:$0xff]
      %v324 = vld [vmem:[%s198 + $0x348] sm:$0xff]
      %v325 = vld [vmem:[%s198 + $0x350] sm:$0xff]
      %v326 = vld [vmem:[%s198 + $0x358] sm:$0xff]
      %v327 = vld [vmem:[%s198 + $0x360] sm:$0xff]
      %v328 = vld [vmem:[%s198 + $0x368] sm:$0xff]
      %v329 = vld [vmem:[%s198 + $0x370] sm:$0xff]
      %v330 = vld [vmem:[%s198 + $0x378] sm:$0xff]
      %v331 = vld [vmem:[%s198 + $0x380] sm:$0xff]
      %v332 = vld [vmem:[%s198 + $0x388] sm:$0xff]
      %v333 = vld [vmem:[%s198 + $0x390] sm:$0xff]
      %v334 = vld [vmem:[%s198 + $0x398] sm:$0xff]
      %v335 = vld [vmem:[%s198 + $0x3a0] sm:$0xff]
      %v336 = vld [vmem:[%s198 + $0x3a8] sm:$0xff]
      %v337 = vld [vmem:[%s198 + $0x3b0] sm:$0xff]
      %v338 = vld [vmem:[%s198 + $0x3b8] sm:$0xff]
      %v339 = vld [vmem:[%s198 + $0x3c0] sm:$0xff]
      %v340 = vld [vmem:[%s198 + $0x3c8] sm:$0xff]
      %v341 = vld [vmem:[%s198 + $0x3d0] sm:$0xff]
      %v342 = vld [vmem:[%s198 + $0x3d8] sm:$0xff]
      %v343 = vld [vmem:[%s198 + $0x3e0] sm:$0xff]
      %v344 = vld [vmem:[%s198 + $0x3e8] sm:$0xff]
      %v345 = vld [vmem:[%s198 + $0x3f0] sm:$0xff]
      %v346 = vld [vmem:[%s198 + $0x3f8] sm:$0xff]
      %v347 = vld [vmem:[%s198 + $0x400] sm:$0xff]
      %v348 = vld [vmem:[%s198 + $0x408] sm:$0xff]
      %v349 = vld [vmem:[%s198 + $0x410] sm:$0xff]
      %v350 = vld [vmem:[%s198 + $0x418] sm:$0xff]
      %v351 = vld [vmem:[%s198 + $0x420] sm:$0xff]
      %v352 = vld [vmem:[%s198 + $0x428] sm:$0xff]
      %v353 = vld [vmem:[%s198 + $0x430] sm:$0xff]
      %v354 = vld [vmem:[%s198 + $0x438] sm:$0xff]
      %v355 = vld [vmem:[%s198 + $0x440] sm:$0xff]
      %v356 = vld [vmem:[%s198 + $0x448] sm:$0xff]
      %v357 = vld [vmem:[%s198 + $0x450] sm:$0xff]
      %v358 = vld [vmem:[%s198 + $0x458] sm:$0xff]
      %v359 = vld [vmem:[%s198 + $0x460] sm:$0xff]
      %v360 = vld [vmem:[%s198 + $0x468] sm:$0xff]
      %v361 = vld [vmem:[%s198 + $0x470] sm:$0xff]
      %v362 = vld [vmem:[%s198 + $0x478] sm:$0xff]
      %v363 = vld [vmem:[%s198 + $0x480] sm:$0xff]
      %v364 = vld [vmem:[%s198 + $0x488] sm:$0xff]
      %v365 = vld [vmem:[%s198 + $0x490] sm:$0xff]
      %v366 = vld [vmem:[%s198 + $0x498] sm:$0xff]
      %v367 = vld [vmem:[%s198 + $0x4a0] sm:$0xff]
      %v368 = vld [vmem:[%s198 + $0x4a8] sm:$0xff]
      %v369 = vld [vmem:[%s198 + $0x4b0] sm:$0xff]
      %v370 = vld [vmem:[%s198 + $0x4b8] sm:$0xff]
      %v371 = vld [vmem:[%s198 + $0x4c0] sm:$0xff]
      %v372 = vld [vmem:[%s198 + $0x4c8] sm:$0xff]
      %v373 = vld [vmem:[%s198 + $0x4d0] sm:$0xff]
      %v374 = vld [vmem:[%s198 + $0x4d8] sm:$0xff]
      %v375 = vld [vmem:[%s198 + $0x4e0] sm:$0xff]
      %v376 = vld [vmem:[%s198 + $0x4e8] sm:$0xff]
      %v377 = vld [vmem:[%s198 + $0x4f0] sm:$0xff]
      %v378 = vld [vmem:[%s198 + $0x4f8] sm:$0xff]
      %v379 = vld [vmem:[%s198 + $0x500] sm:$0xff]
      %v380 = vld [vmem:[%s198 + $0x508] sm:$0xff]
      %v381 = vld [vmem:[%s198 + $0x510] sm:$0xff]
      %v382 = vld [vmem:[%s198 + $0x518] sm:$0xff]
      %v383 = vld [vmem:[%s198 + $0x520] sm:$0xff]
      %v384 = vld [vmem:[%s198 + $0x528] sm:$0xff]
      %v385 = vld [vmem:[%s198 + $0x530] sm:$0xff]
      %v386 = vld [vmem:[%s198 + $0x538] sm:$0xff]
      %v387 = vld [vmem:[%s198 + $0x540] sm:$0xff]
      %v388 = vld [vmem:[%s198 + $0x548] sm:$0xff]
      %v389 = vld [vmem:[%s198 + $0x550] sm:$0xff]
      %v390 = vld [vmem:[%s198 + $0x558] sm:$0xff]
      %v391 = vld [vmem:[%s198 + $0x560] sm:$0xff]
      %v392 = vld [vmem:[%s198 + $0x568] sm:$0xff]
      %v393 = vld [vmem:[%s198 + $0x570] sm:$0xff]
      %v394 = vld [vmem:[%s198 + $0x578] sm:$0xff]
      %v395 = vld [vmem:[%s198 + $0x580] sm:$0xff]
      %v396 = vld [vmem:[%s198 + $0x588] sm:$0xff]
      %v397 = vld [vmem:[%s198 + $0x590] sm:$0xff]
      %v398 = vld [vmem:[%s198 + $0x598] sm:$0xff]
      %v399 = vld [vmem:[%s198 + $0x5a0] sm:$0xff]
      %v400 = vld [vmem:[%s198 + $0x5a8] sm:$0xff]
      %v401 = vld [vmem:[%s198 + $0x5b0] sm:$0xff]
      %v402 = vld [vmem:[%s198 + $0x5b8] sm:$0xff]
      %v403 = vld [vmem:[%s198 + $0x5c0] sm:$0xff]
      %v404 = vld [vmem:[%s198 + $0x5c8] sm:$0xff]
      %v405 = vld [vmem:[%s198 + $0x5d0] sm:$0xff]
      %v406 = vld [vmem:[%s198 + $0x5d8] sm:$0xff]
      %v407 = vld [vmem:[%s198 + $0x5e0] sm:$0xff]
      %v408 = vld [vmem:[%s198 + $0x5e8] sm:$0xff]
      %v409 = vld [vmem:[%s198 + $0x5f0] sm:$0xff]
      %v410 = vld [vmem:[%s198 + $0x5f8] sm:$0xff]
      %v411 = vld [vmem:[%s198 + $0x600] sm:$0xff]
      %v412 = vld [vmem:[%s198 + $0x608] sm:$0xff]
      %v413 = vld [vmem:[%s198 + $0x610] sm:$0xff]
      %v414 = vld [vmem:[%s198 + $0x618] sm:$0xff]
      %v415 = vld [vmem:[%s198 + $0x620] sm:$0xff]
      %v416 = vld [vmem:[%s198 + $0x628] sm:$0xff]
      %v417 = vld [vmem:[%s198 + $0x630] sm:$0xff]
      %v418 = vld [vmem:[%s198 + $0x638] sm:$0xff]
      %v419 = vld [vmem:[%s198 + $0x640] sm:$0xff]
      %v420 = vld [vmem:[%s198 + $0x648] sm:$0xff]
      %v421 = vld [vmem:[%s198 + $0x650] sm:$0xff]
      %v422 = vld [vmem:[%s198 + $0x658] sm:$0xff]
      %v423 = vld [vmem:[%s198 + $0x660] sm:$0xff]
      %v424 = vld [vmem:[%s198 + $0x668] sm:$0xff]
      %v425 = vld [vmem:[%s198 + $0x670] sm:$0xff]
      %v426 = vld [vmem:[%s198 + $0x678] sm:$0xff]
      %v427 = vld [vmem:[%s198 + $0x680] sm:$0xff]
      %v428 = vld [vmem:[%s198 + $0x688] sm:$0xff]
      %v429 = vld [vmem:[%s198 + $0x690] sm:$0xff]
      %v430 = vld [vmem:[%s198 + $0x698] sm:$0xff]
      %v431 = vld [vmem:[%s198 + $0x6a0] sm:$0xff]
      %v432 = vld [vmem:[%s198 + $0x6a8] sm:$0xff]
      %v433 = vld [vmem:[%s198 + $0x6b0] sm:$0xff]
      %v434 = vld [vmem:[%s198 + $0x6b8] sm:$0xff]
      %v435 = vld [vmem:[%s2] sm:$0xff]
      %v436 = vld [vmem:[%s2 + $0x8] sm:$0xff]
      %438 = vset.pattern.permute.xlu0 0
      %439 = vperm.xlu0 %438, %v435
      %v440 = vpop.permute.xlu0 %439
      %443 = vset.pattern.permute.xlu0 0
      %444 = vperm.xlu0 %443, %v436
      %v445 = vpop.permute.xlu0 %444
      %v455 = vunpack.c.l.b16 %v211
      %v456 = vunpack.c.h.b16 %v211
      %v457 = vunpack.c.l.b16 %v212
      %v458 = vunpack.c.h.b16 %v212
      %v459 = vunpack.c.l.b16 %v213
      %v460 = vunpack.c.h.b16 %v213
      %v461 = vunpack.c.l.b16 %v214
      %v462 = vunpack.c.l.b16 %v215
      %v463 = vunpack.c.h.b16 %v215
      %v464 = vunpack.c.l.b16 %v216
      %v465 = vunpack.c.h.b16 %v216
      %v466 = vunpack.c.l.b16 %v217
      %v467 = vunpack.c.h.b16 %v217
      %v468 = vunpack.c.l.b16 %v218
      %v469 = vpack.c.b16 %v462, %v455
      %v470 = vpack.c.b16 %v463, %v456
      %v471 = vpack.c.b16 %v464, %v457
      %v472 = vpack.c.b16 %v465, %v458
      %v473 = vpack.c.b16 %v466, %v459
      %v474 = vpack.c.b16 %v467, %v460
      %v475 = vpack.c.b16 %v468, %v461
      %v698 = vunpack.c.l.b16 %v219
      %v699 = vunpack.c.h.b16 %v219
      %v700 = vunpack.c.l.b16 %v220
      %v701 = vunpack.c.h.b16 %v220
      %v702 = vunpack.c.l.b16 %v221
      %v703 = vunpack.c.h.b16 %v221
      %v704 = vunpack.c.l.b16 %v222
      %v705 = vunpack.c.h.b16 %v222
      %v706 = vunpack.c.l.b16 %v223
      %v707 = vunpack.c.h.b16 %v223
      %v708 = vunpack.c.l.b16 %v224
      %v709 = vunpack.c.h.b16 %v224
      %v710 = vunpack.c.l.b16 %v225
      %v711 = vunpack.c.h.b16 %v225
      %v712 = vunpack.c.l.b16 %v226
      %v713 = vunpack.c.h.b16 %v226
      %v714 = vunpack.c.l.b16 %v227
      %v715 = vunpack.c.h.b16 %v227
      %v716 = vunpack.c.l.b16 %v228
      %v717 = vunpack.c.h.b16 %v228
      %v718 = vunpack.c.l.b16 %v229
      %v719 = vunpack.c.h.b16 %v229
      %v720 = vunpack.c.l.b16 %v230
      %v721 = vunpack.c.h.b16 %v230
      %v722 = vunpack.c.l.b16 %v231
      %v723 = vunpack.c.h.b16 %v231
      %v724 = vunpack.c.l.b16 %v232
      %v725 = vunpack.c.h.b16 %v232
      %v726 = vunpack.c.l.b16 %v233
      %v727 = vunpack.c.h.b16 %v233
      %v728 = vunpack.c.l.b16 %v234
      %v729 = vunpack.c.h.b16 %v234
      %v730 = vunpack.c.l.b16 %v235
      %v731 = vunpack.c.h.b16 %v235
      %v732 = vunpack.c.l.b16 %v236
      %v733 = vunpack.c.h.b16 %v236
      %v734 = vunpack.c.l.b16 %v237
      %v735 = vunpack.c.h.b16 %v237
      %v736 = vunpack.c.l.b16 %v238
      %v737 = vunpack.c.h.b16 %v238
      %v738 = vunpack.c.l.b16 %v239
      %v739 = vunpack.c.h.b16 %v239
      %v740 = vunpack.c.l.b16 %v240
      %v741 = vunpack.c.h.b16 %v240
      %v742 = vunpack.c.l.b16 %v241
      %v743 = vunpack.c.h.b16 %v241
      %v744 = vunpack.c.l.b16 %v242
      %v745 = vunpack.c.h.b16 %v242
      %v746 = vunpack.c.l.b16 %v243
      %v747 = vunpack.c.h.b16 %v243
      %v748 = vunpack.c.l.b16 %v244
      %v749 = vunpack.c.h.b16 %v244
      %v750 = vunpack.c.l.b16 %v245
      %v751 = vunpack.c.h.b16 %v245
      %v752 = vunpack.c.l.b16 %v246
      %v753 = vunpack.c.h.b16 %v246
      %v754 = vunpack.c.l.b16 %v247
      %v755 = vunpack.c.h.b16 %v247
      %v756 = vunpack.c.l.b16 %v248
      %v757 = vunpack.c.h.b16 %v248
      %v758 = vunpack.c.l.b16 %v249
      %v759 = vunpack.c.h.b16 %v249
      %v760 = vunpack.c.l.b16 %v250
      %v761 = vunpack.c.h.b16 %v250
      %v762 = vunpack.c.l.b16 %v251
      %v763 = vunpack.c.h.b16 %v251
      %v764 = vunpack.c.l.b16 %v252
      %v765 = vunpack.c.h.b16 %v252
      %v766 = vunpack.c.l.b16 %v253
      %v767 = vunpack.c.h.b16 %v253
      %v768 = vunpack.c.l.b16 %v254
      %v769 = vunpack.c.h.b16 %v254
      %v770 = vunpack.c.l.b16 %v255
      %v771 = vunpack.c.h.b16 %v255
      %v772 = vunpack.c.l.b16 %v256
      %v773 = vunpack.c.h.b16 %v256
      %v774 = vunpack.c.l.b16 %v257
      %v775 = vunpack.c.h.b16 %v257
      %v776 = vunpack.c.l.b16 %v258
      %v777 = vunpack.c.h.b16 %v258
      %v778 = vunpack.c.l.b16 %v259
      %v779 = vunpack.c.h.b16 %v259
      %v780 = vunpack.c.l.b16 %v260
      %v781 = vunpack.c.h.b16 %v260
      %v782 = vunpack.c.l.b16 %v261
      %v783 = vunpack.c.h.b16 %v261
      %v784 = vunpack.c.l.b16 %v262
      %v785 = vunpack.c.h.b16 %v262
      %v786 = vunpack.c.l.b16 %v263
      %v787 = vunpack.c.h.b16 %v263
      %v788 = vunpack.c.l.b16 %v264
      %v789 = vunpack.c.h.b16 %v264
      %v790 = vunpack.c.l.b16 %v265
      %v791 = vunpack.c.h.b16 %v265
      %v792 = vunpack.c.l.b16 %v266
      %v793 = vunpack.c.h.b16 %v266
      %v794 = vunpack.c.l.b16 %v267
      %v795 = vunpack.c.h.b16 %v267
      %v796 = vunpack.c.l.b16 %v268
      %v797 = vunpack.c.h.b16 %v268
      %v798 = vunpack.c.l.b16 %v269
      %v799 = vunpack.c.h.b16 %v269
      %v800 = vunpack.c.l.b16 %v270
      %v801 = vunpack.c.h.b16 %v270
      %v802 = vunpack.c.l.b16 %v271
      %v803 = vunpack.c.h.b16 %v271
      %v804 = vunpack.c.l.b16 %v272
      %v805 = vunpack.c.h.b16 %v272
      %v806 = vunpack.c.l.b16 %v273
      %v807 = vunpack.c.h.b16 %v273
      %v808 = vunpack.c.l.b16 %v274
      %v809 = vunpack.c.h.b16 %v274
      %v810 = vunpack.c.l.b16 %v275
      %v811 = vunpack.c.h.b16 %v275
      %v812 = vunpack.c.l.b16 %v276
      %v813 = vunpack.c.h.b16 %v276
      %v814 = vunpack.c.l.b16 %v277
      %v815 = vunpack.c.h.b16 %v277
      %v816 = vunpack.c.l.b16 %v278
      %v817 = vunpack.c.h.b16 %v278
      %v818 = vunpack.c.l.b16 %v279
      %v819 = vunpack.c.h.b16 %v279
      %v820 = vunpack.c.l.b16 %v280
      %v821 = vunpack.c.h.b16 %v280
      %v822 = vunpack.c.l.b16 %v281
      %v823 = vunpack.c.h.b16 %v281
      %v824 = vunpack.c.l.b16 %v282
      %v825 = vunpack.c.h.b16 %v282
      %v826 = vunpack.c.l.b16 %v283
      %v827 = vunpack.c.h.b16 %v283
      %v828 = vunpack.c.l.b16 %v284
      %v829 = vunpack.c.h.b16 %v284
      %v830 = vunpack.c.l.b16 %v285
      %v831 = vunpack.c.h.b16 %v285
      %v832 = vunpack.c.l.b16 %v286
      %v833 = vunpack.c.h.b16 %v286
      %v834 = vunpack.c.l.b16 %v287
      %v835 = vunpack.c.h.b16 %v287
      %v836 = vunpack.c.l.b16 %v288
      %v837 = vunpack.c.h.b16 %v288
      %v838 = vunpack.c.l.b16 %v289
      %v839 = vunpack.c.h.b16 %v289
      %v840 = vunpack.c.l.b16 %v290
      %v841 = vunpack.c.h.b16 %v290
      %v842 = vunpack.c.l.b16 %v291
      %v843 = vunpack.c.h.b16 %v291
      %v844 = vunpack.c.l.b16 %v292
      %v845 = vunpack.c.h.b16 %v292
      %v846 = vunpack.c.l.b16 %v293
      %v847 = vunpack.c.h.b16 %v293
      %v848 = vunpack.c.l.b16 %v294
      %v849 = vunpack.c.h.b16 %v294
      %v850 = vunpack.c.l.b16 %v295
      %v851 = vunpack.c.h.b16 %v295
      %v852 = vunpack.c.l.b16 %v296
      %v853 = vunpack.c.h.b16 %v296
      %v854 = vunpack.c.l.b16 %v297
      %v855 = vunpack.c.h.b16 %v297
      %v856 = vunpack.c.l.b16 %v298
      %v857 = vunpack.c.h.b16 %v298
      %v858 = vunpack.c.l.b16 %v299
      %v859 = vunpack.c.h.b16 %v299
      %v860 = vunpack.c.l.b16 %v300
      %v861 = vunpack.c.h.b16 %v300
      %v862 = vunpack.c.l.b16 %v301
      %v863 = vunpack.c.h.b16 %v301
      %v864 = vunpack.c.l.b16 %v302
      %v865 = vunpack.c.h.b16 %v302
      %v866 = vunpack.c.l.b16 %v303
      %v867 = vunpack.c.h.b16 %v303
      %v868 = vunpack.c.l.b16 %v304
      %v869 = vunpack.c.h.b16 %v304
      %v870 = vunpack.c.l.b16 %v305
      %v871 = vunpack.c.h.b16 %v305
      %v872 = vunpack.c.l.b16 %v306
      %v873 = vunpack.c.h.b16 %v306
      %v874 = vunpack.c.l.b16 %v307
      %v875 = vunpack.c.h.b16 %v307
      %v876 = vunpack.c.l.b16 %v308
      %v877 = vunpack.c.h.b16 %v308
      %v878 = vunpack.c.l.b16 %v309
      %v879 = vunpack.c.h.b16 %v309
      %v880 = vunpack.c.l.b16 %v310
      %v881 = vunpack.c.h.b16 %v310
      %v882 = vunpack.c.l.b16 %v311
      %v883 = vunpack.c.h.b16 %v311
      %v884 = vunpack.c.l.b16 %v312
      %v885 = vunpack.c.h.b16 %v312
      %v886 = vunpack.c.l.b16 %v313
      %v887 = vunpack.c.h.b16 %v313
      %v888 = vunpack.c.l.b16 %v314
      %v889 = vunpack.c.h.b16 %v314
      %v890 = vunpack.c.l.b16 %v315
      %v891 = vunpack.c.h.b16 %v315
      %v892 = vunpack.c.l.b16 %v316
      %v893 = vunpack.c.h.b16 %v316
      %v894 = vunpack.c.l.b16 %v317
      %v895 = vunpack.c.h.b16 %v317
      %v896 = vunpack.c.l.b16 %v318
      %v897 = vunpack.c.h.b16 %v318
      %v898 = vunpack.c.l.b16 %v319
      %v899 = vunpack.c.h.b16 %v319
      %v900 = vunpack.c.l.b16 %v320
      %v901 = vunpack.c.h.b16 %v320
      %v902 = vunpack.c.l.b16 %v321
      %v903 = vunpack.c.h.b16 %v321
      %v904 = vunpack.c.l.b16 %v322
      %v905 = vunpack.c.h.b16 %v322
      %v906 = vunpack.c.l.b16 %v323
      %v907 = vunpack.c.h.b16 %v323
      %v908 = vunpack.c.l.b16 %v324
      %v909 = vunpack.c.h.b16 %v324
      %v910 = vunpack.c.l.b16 %v325
      %v911 = vunpack.c.h.b16 %v325
      %v912 = vunpack.c.l.b16 %v326
      %v913 = vunpack.c.h.b16 %v326
      %v914 = vunpack.c.l.b16 %v327
      %v915 = vunpack.c.h.b16 %v327
      %v916 = vunpack.c.l.b16 %v328
      %v917 = vunpack.c.h.b16 %v328
      %v918 = vunpack.c.l.b16 %v329
      %v919 = vunpack.c.h.b16 %v329
      %v920 = vunpack.c.l.b16 %v330
      %v921 = vunpack.c.h.b16 %v330
      %v922 = vunpack.c.l.b16 %v331
      %v923 = vunpack.c.h.b16 %v331
      %v924 = vunpack.c.l.b16 %v332
      %v925 = vunpack.c.h.b16 %v332
      %v926 = vunpack.c.l.b16 %v333
      %v927 = vunpack.c.h.b16 %v333
      %v928 = vunpack.c.l.b16 %v334
      %v929 = vunpack.c.h.b16 %v334
      %v930 = vunpack.c.l.b16 %v335
      %v931 = vunpack.c.h.b16 %v335
      %v932 = vunpack.c.l.b16 %v336
      %v933 = vunpack.c.h.b16 %v336
      %v934 = vunpack.c.l.b16 %v337
      %v935 = vunpack.c.h.b16 %v337
      %v936 = vunpack.c.l.b16 %v338
      %v937 = vunpack.c.h.b16 %v338
      %v938 = vunpack.c.l.b16 %v339
      %v939 = vunpack.c.h.b16 %v339
      %v940 = vunpack.c.l.b16 %v340
      %v941 = vunpack.c.h.b16 %v340
      %v942 = vunpack.c.l.b16 %v341
      %v943 = vunpack.c.h.b16 %v341
      %v944 = vunpack.c.l.b16 %v342
      %v945 = vunpack.c.h.b16 %v342
      %v946 = vunpack.c.l.b16 %v343
      %v947 = vunpack.c.h.b16 %v343
      %v948 = vunpack.c.l.b16 %v344
      %v949 = vunpack.c.h.b16 %v344
      %v950 = vunpack.c.l.b16 %v345
      %v951 = vunpack.c.h.b16 %v345
      %v952 = vunpack.c.l.b16 %v346
      %v953 = vunpack.c.h.b16 %v346
      %v954 = vunpack.c.l.b16 %v347
      %v955 = vunpack.c.h.b16 %v347
      %v956 = vunpack.c.l.b16 %v348
      %v957 = vunpack.c.h.b16 %v348
      %v958 = vunpack.c.l.b16 %v349
      %v959 = vunpack.c.h.b16 %v349
      %v960 = vunpack.c.l.b16 %v350
      %v961 = vunpack.c.h.b16 %v350
      %v962 = vunpack.c.l.b16 %v351
      %v963 = vunpack.c.h.b16 %v351
      %v964 = vunpack.c.l.b16 %v352
      %v965 = vunpack.c.h.b16 %v352
      %v966 = vunpack.c.l.b16 %v353
      %v967 = vunpack.c.h.b16 %v353
      %v968 = vunpack.c.l.b16 %v354
      %v969 = vunpack.c.h.b16 %v354
      %v970 = vunpack.c.l.b16 %v355
      %v971 = vunpack.c.h.b16 %v355
      %v972 = vunpack.c.l.b16 %v356
      %v973 = vunpack.c.h.b16 %v356
      %v974 = vunpack.c.l.b16 %v357
      %v975 = vunpack.c.h.b16 %v357
      %v976 = vunpack.c.l.b16 %v358
      %v977 = vunpack.c.h.b16 %v358
      %v978 = vunpack.c.l.b16 %v359
      %v979 = vunpack.c.h.b16 %v359
      %v980 = vunpack.c.l.b16 %v360
      %v981 = vunpack.c.h.b16 %v360
      %v982 = vunpack.c.l.b16 %v361
      %v983 = vunpack.c.h.b16 %v361
      %v984 = vunpack.c.l.b16 %v362
      %v985 = vunpack.c.h.b16 %v362
      %v986 = vunpack.c.l.b16 %v363
      %v987 = vunpack.c.h.b16 %v363
      %v988 = vunpack.c.l.b16 %v364
      %v989 = vunpack.c.h.b16 %v364
      %v990 = vunpack.c.l.b16 %v365
      %v991 = vunpack.c.h.b16 %v365
      %v992 = vunpack.c.l.b16 %v366
      %v993 = vunpack.c.h.b16 %v366
      %v994 = vunpack.c.l.b16 %v367
      %v995 = vunpack.c.h.b16 %v367
      %v996 = vunpack.c.l.b16 %v368
      %v997 = vunpack.c.h.b16 %v368
      %v998 = vunpack.c.l.b16 %v369
      %v999 = vunpack.c.h.b16 %v369
      %v1000 = vunpack.c.l.b16 %v370
      %v1001 = vunpack.c.h.b16 %v370
      %v1002 = vunpack.c.l.b16 %v371
      %v1003 = vunpack.c.h.b16 %v371
      %v1004 = vunpack.c.l.b16 %v372
      %v1005 = vunpack.c.h.b16 %v372
      %v1006 = vunpack.c.l.b16 %v373
      %v1007 = vunpack.c.h.b16 %v373
      %v1008 = vunpack.c.l.b16 %v374
      %v1009 = vunpack.c.h.b16 %v374
      %v1010 = vunpack.c.l.b16 %v375
      %v1011 = vunpack.c.h.b16 %v375
      %v1012 = vunpack.c.l.b16 %v376
      %v1013 = vunpack.c.h.b16 %v376
      %v1014 = vunpack.c.l.b16 %v377
      %v1015 = vunpack.c.h.b16 %v377
      %v1016 = vunpack.c.l.b16 %v378
      %v1017 = vunpack.c.h.b16 %v378
      %v1018 = vunpack.c.l.b16 %v379
      %v1019 = vunpack.c.h.b16 %v379
      %v1020 = vunpack.c.l.b16 %v380
      %v1021 = vunpack.c.h.b16 %v380
      %v1022 = vunpack.c.l.b16 %v381
      %v1023 = vunpack.c.h.b16 %v381
      %v1024 = vunpack.c.l.b16 %v382
      %v1025 = vunpack.c.h.b16 %v382
      %v1026 = vunpack.c.l.b16 %v383
      %v1027 = vunpack.c.h.b16 %v383
      %v1028 = vunpack.c.l.b16 %v384
      %v1029 = vunpack.c.h.b16 %v384
      %v1030 = vunpack.c.l.b16 %v385
      %v1031 = vunpack.c.h.b16 %v385
      %v1032 = vunpack.c.l.b16 %v386
      %v1033 = vunpack.c.h.b16 %v386
      %v1034 = vunpack.c.l.b16 %v387
      %v1035 = vunpack.c.h.b16 %v387
      %v1036 = vunpack.c.l.b16 %v388
      %v1037 = vunpack.c.h.b16 %v388
      %v1038 = vunpack.c.l.b16 %v389
      %v1039 = vunpack.c.h.b16 %v389
      %v1040 = vunpack.c.l.b16 %v390
      %v1041 = vunpack.c.h.b16 %v390
      %v1042 = vunpack.c.l.b16 %v391
      %v1043 = vunpack.c.h.b16 %v391
      %v1044 = vunpack.c.l.b16 %v392
      %v1045 = vunpack.c.h.b16 %v392
      %v1046 = vunpack.c.l.b16 %v393
      %v1047 = vunpack.c.h.b16 %v393
      %v1048 = vunpack.c.l.b16 %v394
      %v1049 = vunpack.c.h.b16 %v394
      %v1050 = vunpack.c.l.b16 %v395
      %v1051 = vunpack.c.h.b16 %v395
      %v1052 = vunpack.c.l.b16 %v396
      %v1053 = vunpack.c.h.b16 %v396
      %v1054 = vunpack.c.l.b16 %v397
      %v1055 = vunpack.c.h.b16 %v397
      %v1056 = vunpack.c.l.b16 %v398
      %v1057 = vunpack.c.h.b16 %v398
      %v1058 = vunpack.c.l.b16 %v399
      %v1059 = vunpack.c.h.b16 %v399
      %v1060 = vunpack.c.l.b16 %v400
      %v1061 = vunpack.c.h.b16 %v400
      %v1062 = vunpack.c.l.b16 %v401
      %v1063 = vunpack.c.h.b16 %v401
      %v1064 = vunpack.c.l.b16 %v402
      %v1065 = vunpack.c.h.b16 %v402
      %v1066 = vunpack.c.l.b16 %v403
      %v1067 = vunpack.c.h.b16 %v403
      %v1068 = vunpack.c.l.b16 %v404
      %v1069 = vunpack.c.h.b16 %v404
      %v1070 = vunpack.c.l.b16 %v405
      %v1071 = vunpack.c.h.b16 %v405
      %v1072 = vunpack.c.l.b16 %v406
      %v1073 = vunpack.c.h.b16 %v406
      %v1074 = vunpack.c.l.b16 %v407
      %v1075 = vunpack.c.h.b16 %v407
      %v1076 = vunpack.c.l.b16 %v408
      %v1077 = vunpack.c.h.b16 %v408
      %v1078 = vunpack.c.l.b16 %v409
      %v1079 = vunpack.c.h.b16 %v409
      %v1080 = vunpack.c.l.b16 %v410
      %v1081 = vunpack.c.h.b16 %v410
      %v1082 = vunpack.c.l.b16 %v411
      %v1083 = vunpack.c.h.b16 %v411
      %v1084 = vunpack.c.l.b16 %v412
      %v1085 = vunpack.c.h.b16 %v412
      %v1086 = vunpack.c.l.b16 %v413
      %v1087 = vunpack.c.h.b16 %v413
      %v1088 = vunpack.c.l.b16 %v414
      %v1089 = vunpack.c.h.b16 %v414
      %v1090 = vunpack.c.l.b16 %v415
      %v1091 = vunpack.c.h.b16 %v415
      %v1092 = vunpack.c.l.b16 %v416
      %v1093 = vunpack.c.h.b16 %v416
      %v1094 = vunpack.c.l.b16 %v417
      %v1095 = vunpack.c.h.b16 %v417
      %v1096 = vunpack.c.l.b16 %v418
      %v1097 = vunpack.c.h.b16 %v418
      %v1098 = vunpack.c.l.b16 %v419
      %v1099 = vunpack.c.h.b16 %v419
      %v1100 = vunpack.c.l.b16 %v420
      %v1101 = vunpack.c.h.b16 %v420
      %v1102 = vunpack.c.l.b16 %v421
      %v1103 = vunpack.c.h.b16 %v421
      %v1104 = vunpack.c.l.b16 %v422
      %v1105 = vunpack.c.h.b16 %v422
      %v1106 = vunpack.c.l.b16 %v423
      %v1107 = vunpack.c.h.b16 %v423
      %v1108 = vunpack.c.l.b16 %v424
      %v1109 = vunpack.c.h.b16 %v424
      %v1110 = vunpack.c.l.b16 %v425
      %v1111 = vunpack.c.h.b16 %v425
      %v1112 = vunpack.c.l.b16 %v426
      %v1113 = vunpack.c.h.b16 %v426
      %v1114 = vunpack.c.l.b16 %v427
      %v1115 = vunpack.c.h.b16 %v427
      %v1116 = vunpack.c.l.b16 %v428
      %v1117 = vunpack.c.h.b16 %v428
      %v1118 = vunpack.c.l.b16 %v429
      %v1119 = vunpack.c.h.b16 %v429
      %v1120 = vunpack.c.l.b16 %v430
      %v1121 = vunpack.c.h.b16 %v430
      %v1122 = vunpack.c.l.b16 %v431
      %v1123 = vunpack.c.h.b16 %v431
      %v1124 = vunpack.c.l.b16 %v432
      %v1125 = vunpack.c.h.b16 %v432
      %v1126 = vunpack.c.l.b16 %v433
      %v1127 = vunpack.c.h.b16 %v433
      %v1128 = vunpack.c.l.b16 %v434
      %v1129 = vunpack.c.h.b16 %v434
      %v1130 = vpack.c.b16 %v702, %v698
      %v1131 = vpack.c.b16 %v703, %v699
      %v1132 = vpack.c.b16 %v704, %v700
      %v1133 = vpack.c.b16 %v705, %v701
      %v1134 = vpack.c.b16 %v710, %v706
      %v1135 = vpack.c.b16 %v711, %v707
      %v1136 = vpack.c.b16 %v712, %v708
      %v1137 = vpack.c.b16 %v713, %v709
      %v1138 = vpack.c.b16 %v718, %v714
      %v1139 = vpack.c.b16 %v719, %v715
      %v1140 = vpack.c.b16 %v720, %v716
      %v1141 = vpack.c.b16 %v721, %v717
      %v1142 = vpack.c.b16 %v726, %v722
      %v1143 = vpack.c.b16 %v727, %v723
      %v1144 = vpack.c.b16 %v728, %v724
      %v1145 = vpack.c.b16 %v729, %v725
      %v1146 = vpack.c.b16 %v734, %v730
      %v1147 = vpack.c.b16 %v735, %v731
      %v1148 = vpack.c.b16 %v736, %v732
      %v1149 = vpack.c.b16 %v737, %v733
      %v1150 = vpack.c.b16 %v742, %v738
      %v1151 = vpack.c.b16 %v743, %v739
      %v1152 = vpack.c.b16 %v744, %v740
      %v1153 = vpack.c.b16 %v745, %v741
      %v1154 = vpack.c.b16 %v750, %v746
      %v1155 = vpack.c.b16 %v751, %v747
      %v1156 = vpack.c.b16 %v752, %v748
      %v1157 = vpack.c.b16 %v753, %v749
      %v1158 = vpack.c.b16 %v758, %v754
      %v1159 = vpack.c.b16 %v759, %v755
      %v1160 = vpack.c.b16 %v760, %v756
      %v1161 = vpack.c.b16 %v761, %v757
      %v1162 = vpack.c.b16 %v766, %v762
      %v1163 = vpack.c.b16 %v767, %v763
      %v1164 = vpack.c.b16 %v768, %v764
      %v1165 = vpack.c.b16 %v769, %v765
      %v1166 = vpack.c.b16 %v774, %v770
      %v1167 = vpack.c.b16 %v775, %v771
      %v1168 = vpack.c.b16 %v776, %v772
      %v1169 = vpack.c.b16 %v777, %v773
      %v1170 = vpack.c.b16 %v782, %v778
      %v1171 = vpack.c.b16 %v783, %v779
      %v1172 = vpack.c.b16 %v784, %v780
      %v1173 = vpack.c.b16 %v785, %v781
      %v1174 = vpack.c.b16 %v790, %v786
      %v1175 = vpack.c.b16 %v791, %v787
      %v1176 = vpack.c.b16 %v792, %v788
      %v1177 = vpack.c.b16 %v793, %v789
      %v1178 = vpack.c.b16 %v798, %v794
      %v1179 = vpack.c.b16 %v799, %v795
      %v1180 = vpack.c.b16 %v800, %v796
      %v1181 = vpack.c.b16 %v801, %v797
      %v1182 = vpack.c.b16 %v806, %v802
      %v1183 = vpack.c.b16 %v807, %v803
      %v1184 = vpack.c.b16 %v808, %v804
      %v1185 = vpack.c.b16 %v809, %v805
      %v1186 = vpack.c.b16 %v814, %v810
      %v1187 = vpack.c.b16 %v815, %v811
      %v1188 = vpack.c.b16 %v816, %v812
      %v1189 = vpack.c.b16 %v817, %v813
      %v1190 = vpack.c.b16 %v822, %v818
      %v1191 = vpack.c.b16 %v823, %v819
      %v1192 = vpack.c.b16 %v824, %v820
      %v1193 = vpack.c.b16 %v825, %v821
      %v1194 = vpack.c.b16 %v830, %v826
      %v1195 = vpack.c.b16 %v831, %v827
      %v1196 = vpack.c.b16 %v832, %v828
      %v1197 = vpack.c.b16 %v833, %v829
      %v1198 = vpack.c.b16 %v838, %v834
      %v1199 = vpack.c.b16 %v839, %v835
      %v1200 = vpack.c.b16 %v840, %v836
      %v1201 = vpack.c.b16 %v841, %v837
      %v1202 = vpack.c.b16 %v846, %v842
      %v1203 = vpack.c.b16 %v847, %v843
      %v1204 = vpack.c.b16 %v848, %v844
      %v1205 = vpack.c.b16 %v849, %v845
      %v1206 = vpack.c.b16 %v854, %v850
      %v1207 = vpack.c.b16 %v855, %v851
      %v1208 = vpack.c.b16 %v856, %v852
      %v1209 = vpack.c.b16 %v857, %v853
      %v1210 = vpack.c.b16 %v862, %v858
      %v1211 = vpack.c.b16 %v863, %v859
      %v1212 = vpack.c.b16 %v864, %v860
      %v1213 = vpack.c.b16 %v865, %v861
      %v1214 = vpack.c.b16 %v870, %v866
      %v1215 = vpack.c.b16 %v871, %v867
      %v1216 = vpack.c.b16 %v872, %v868
      %v1217 = vpack.c.b16 %v873, %v869
      %v1218 = vpack.c.b16 %v878, %v874
      %v1219 = vpack.c.b16 %v879, %v875
      %v1220 = vpack.c.b16 %v880, %v876
      %v1221 = vpack.c.b16 %v881, %v877
      %v1222 = vpack.c.b16 %v886, %v882
      %v1223 = vpack.c.b16 %v887, %v883
      %v1224 = vpack.c.b16 %v888, %v884
      %v1225 = vpack.c.b16 %v889, %v885
      %v1226 = vpack.c.b16 %v894, %v890
      %v1227 = vpack.c.b16 %v895, %v891
      %v1228 = vpack.c.b16 %v896, %v892
      %v1229 = vpack.c.b16 %v897, %v893
      %v1230 = vpack.c.b16 %v902, %v898
      %v1231 = vpack.c.b16 %v903, %v899
      %v1232 = vpack.c.b16 %v904, %v900
      %v1233 = vpack.c.b16 %v905, %v901
      %v1234 = vpack.c.b16 %v910, %v906
      %v1235 = vpack.c.b16 %v911, %v907
      %v1236 = vpack.c.b16 %v912, %v908
      %v1237 = vpack.c.b16 %v913, %v909
      %v1238 = vpack.c.b16 %v918, %v914
      %v1239 = vpack.c.b16 %v919, %v915
      %v1240 = vpack.c.b16 %v920, %v916
      %v1241 = vpack.c.b16 %v921, %v917
      %v1242 = vpack.c.b16 %v926, %v922
      %v1243 = vpack.c.b16 %v927, %v923
      %v1244 = vpack.c.b16 %v928, %v924
      %v1245 = vpack.c.b16 %v929, %v925
      %v1246 = vpack.c.b16 %v934, %v930
      %v1247 = vpack.c.b16 %v935, %v931
      %v1248 = vpack.c.b16 %v936, %v932
      %v1249 = vpack.c.b16 %v937, %v933
      %v1250 = vpack.c.b16 %v942, %v938
      %v1251 = vpack.c.b16 %v943, %v939
      %v1252 = vpack.c.b16 %v944, %v940
      %v1253 = vpack.c.b16 %v945, %v941
      %v1254 = vpack.c.b16 %v950, %v946
      %v1255 = vpack.c.b16 %v951, %v947
      %v1256 = vpack.c.b16 %v952, %v948
      %v1257 = vpack.c.b16 %v953, %v949
      %v1258 = vpack.c.b16 %v958, %v954
      %v1259 = vpack.c.b16 %v959, %v955
      %v1260 = vpack.c.b16 %v960, %v956
      %v1261 = vpack.c.b16 %v961, %v957
      %v1262 = vpack.c.b16 %v966, %v962
      %v1263 = vpack.c.b16 %v967, %v963
      %v1264 = vpack.c.b16 %v968, %v964
      %v1265 = vpack.c.b16 %v969, %v965
      %v1266 = vpack.c.b16 %v974, %v970
      %v1267 = vpack.c.b16 %v975, %v971
      %v1268 = vpack.c.b16 %v976, %v972
      %v1269 = vpack.c.b16 %v977, %v973
      %v1270 = vpack.c.b16 %v982, %v978
      %v1271 = vpack.c.b16 %v983, %v979
      %v1272 = vpack.c.b16 %v984, %v980
      %v1273 = vpack.c.b16 %v985, %v981
      %v1274 = vpack.c.b16 %v990, %v986
      %v1275 = vpack.c.b16 %v991, %v987
      %v1276 = vpack.c.b16 %v992, %v988
      %v1277 = vpack.c.b16 %v993, %v989
      %v1278 = vpack.c.b16 %v998, %v994
      %v1279 = vpack.c.b16 %v999, %v995
      %v1280 = vpack.c.b16 %v1000, %v996
      %v1281 = vpack.c.b16 %v1001, %v997
      %v1282 = vpack.c.b16 %v1006, %v1002
      %v1283 = vpack.c.b16 %v1007, %v1003
      %v1284 = vpack.c.b16 %v1008, %v1004
      %v1285 = vpack.c.b16 %v1009, %v1005
      %v1286 = vpack.c.b16 %v1014, %v1010
      %v1287 = vpack.c.b16 %v1015, %v1011
      %v1288 = vpack.c.b16 %v1016, %v1012
      %v1289 = vpack.c.b16 %v1017, %v1013
      %v1290 = vpack.c.b16 %v1022, %v1018
      %v1291 = vpack.c.b16 %v1023, %v1019
      %v1292 = vpack.c.b16 %v1024, %v1020
      %v1293 = vpack.c.b16 %v1025, %v1021
      %v1294 = vpack.c.b16 %v1030, %v1026
      %v1295 = vpack.c.b16 %v1031, %v1027
      %v1296 = vpack.c.b16 %v1032, %v1028
      %v1297 = vpack.c.b16 %v1033, %v1029
      %v1298 = vpack.c.b16 %v1038, %v1034
      %v1299 = vpack.c.b16 %v1039, %v1035
      %v1300 = vpack.c.b16 %v1040, %v1036
      %v1301 = vpack.c.b16 %v1041, %v1037
      %v1302 = vpack.c.b16 %v1046, %v1042
      %v1303 = vpack.c.b16 %v1047, %v1043
      %v1304 = vpack.c.b16 %v1048, %v1044
      %v1305 = vpack.c.b16 %v1049, %v1045
      %v1306 = vpack.c.b16 %v1054, %v1050
      %v1307 = vpack.c.b16 %v1055, %v1051
      %v1308 = vpack.c.b16 %v1056, %v1052
      %v1309 = vpack.c.b16 %v1057, %v1053
      %v1310 = vpack.c.b16 %v1062, %v1058
      %v1311 = vpack.c.b16 %v1063, %v1059
      %v1312 = vpack.c.b16 %v1064, %v1060
      %v1313 = vpack.c.b16 %v1065, %v1061
      %v1314 = vpack.c.b16 %v1070, %v1066
      %v1315 = vpack.c.b16 %v1071, %v1067
      %v1316 = vpack.c.b16 %v1072, %v1068
      %v1317 = vpack.c.b16 %v1073, %v1069
      %v1318 = vpack.c.b16 %v1078, %v1074
      %v1319 = vpack.c.b16 %v1079, %v1075
      %v1320 = vpack.c.b16 %v1080, %v1076
      %v1321 = vpack.c.b16 %v1081, %v1077
      %v1322 = vpack.c.b16 %v1086, %v1082
      %v1323 = vpack.c.b16 %v1087, %v1083
      %v1324 = vpack.c.b16 %v1088, %v1084
      %v1325 = vpack.c.b16 %v1089, %v1085
      %v1326 = vpack.c.b16 %v1094, %v1090
      %v1327 = vpack.c.b16 %v1095, %v1091
      %v1328 = vpack.c.b16 %v1096, %v1092
      %v1329 = vpack.c.b16 %v1097, %v1093
      %v1330 = vpack.c.b16 %v1102, %v1098
      %v1331 = vpack.c.b16 %v1103, %v1099
      %v1332 = vpack.c.b16 %v1104, %v1100
      %v1333 = vpack.c.b16 %v1105, %v1101
      %v1334 = vpack.c.b16 %v1110, %v1106
      %v1335 = vpack.c.b16 %v1111, %v1107
      %v1336 = vpack.c.b16 %v1112, %v1108
      %v1337 = vpack.c.b16 %v1113, %v1109
      %v1338 = vpack.c.b16 %v1118, %v1114
      %v1339 = vpack.c.b16 %v1119, %v1115
      %v1340 = vpack.c.b16 %v1120, %v1116
      %v1341 = vpack.c.b16 %v1121, %v1117
      %v1342 = vpack.c.b16 %v1126, %v1122
      %v1343 = vpack.c.b16 %v1127, %v1123
      %v1344 = vpack.c.b16 %v1128, %v1124
      %v1345 = vpack.c.b16 %v1129, %v1125
      %vm1562 = vcmask 785408
      %v1564 = vsel %vm1562, %v475, 0
      %1566 = vmatprep.subr.bf16.mxu0 %v1131
      %1567 = vmatpush1.bf16.msra.mxu0 %v1130
      %1568 = vmatprep.subr.bf16.mxu0 %v1135
      %1569 = vmatpush1.bf16.msra.mxu0 %v1134
      %1570 = vmatprep.subr.bf16.mxu0 %v1139
      %1571 = vmatpush1.bf16.msra.mxu0 %v1138
      %1572 = vmatprep.subr.bf16.mxu0 %v1143
      %1573 = vmatpush1.bf16.msra.mxu0 %v1142
      %1574 = vmatprep.subr.bf16.mxu0 %v1147
      %1575 = vmatpush1.bf16.msra.mxu0 %v1146
      %1576 = vmatprep.subr.bf16.mxu0 %v1151
      %1577 = vmatpush1.bf16.msra.mxu0 %v1150
      %1578 = vmatprep.subr.bf16.mxu0 %v1155
      %1579 = vmatpush1.bf16.msra.mxu0 %v1154
      %1580 = vmatprep.subr.bf16.mxu0 %v1159
      %1581 = vmatpush1.bf16.msra.mxu0 %v1158
      %1582 = vmatprep.subr.bf16.mxu0 %v1163
      %1583 = vmatpush1.bf16.msra.mxu0 %v1162
      %1584 = vmatprep.subr.bf16.mxu0 %v1167
      %1585 = vmatpush1.bf16.msra.mxu0 %v1166
      %1586 = vmatprep.subr.bf16.mxu0 %v1171
      %1587 = vmatpush1.bf16.msra.mxu0 %v1170
      %1588 = vmatprep.subr.bf16.mxu0 %v1175
      %1589 = vmatpush1.bf16.msra.mxu0 %v1174
      %1590 = vmatprep.subr.bf16.mxu0 %v1179
      %1591 = vmatpush1.bf16.msra.mxu0 %v1178
      %1592 = vmatprep.subr.bf16.mxu0 %v1183
      %1593 = vmatpush1.bf16.msra.mxu0 %v1182
      %1594 = vmatprep.subr.bf16.mxu0 %v1187
      %1595 = vmatpush1.bf16.msra.mxu0 %v1186
      %1596 = vmatprep.subr.bf16.mxu0 %v1191
      %1597 = vmatpush1.bf16.msra.mxu0 %v1190
      %1598 = vmatprep.mubr.bf16.mxu0 %v470
      %1599 = vmatmul.mubr.bf16.gmra.mrb[0].mxu0 %v469
      %v1600 = vpop.f32.mrb[0].mxu0
      %v1601 = vadd.f32 %v440, %v1600
      %v1602 = vpop.f32.mrb[0].mxu0
      %v1603 = vadd.f32 %v440, %v1602
      %v1604 = vpop.f32.mrb[0].mxu0
      %v1605 = vadd.f32 %v445, %v1604
      %v1606 = vpop.f32.mrb[0].mxu0
      %v1607 = vadd.f32 %v445, %v1606
      %1608 = vdwg.mxu0
      %1609 = vmatprep.subr.bf16.mxu0 %v1195
      %1610 = vmatpush1.bf16.msra.mxu0 %v1194
      %1611 = vmatprep.subr.bf16.mxu0 %v1199
      %1612 = vmatpush1.bf16.msra.mxu0 %v1198
      %1613 = vmatprep.subr.bf16.mxu0 %v1203
      %1614 = vmatpush1.bf16.msra.mxu0 %v1202
      %1615 = vmatprep.subr.bf16.mxu0 %v1207
      %1616 = vmatpush1.bf16.msra.mxu0 %v1206
      %1617 = vmatprep.subr.bf16.mxu0 %v1211
      %1618 = vmatpush1.bf16.msra.mxu0 %v1210
      %1619 = vmatprep.subr.bf16.mxu0 %v1215
      %1620 = vmatpush1.bf16.msra.mxu0 %v1214
      %1621 = vmatprep.subr.bf16.mxu0 %v1219
      %1622 = vmatpush1.bf16.msra.mxu0 %v1218
      %1623 = vmatprep.subr.bf16.mxu0 %v1223
      %1624 = vmatpush1.bf16.msra.mxu0 %v1222
      %1625 = vmatprep.subr.bf16.mxu0 %v1227
      %1626 = vmatpush1.bf16.msra.mxu0 %v1226
      %1627 = vmatprep.subr.bf16.mxu0 %v1231
      %1628 = vmatpush1.bf16.msra.mxu0 %v1230
      %1629 = vmatprep.subr.bf16.mxu0 %v1235
      %1630 = vmatpush1.bf16.msra.mxu0 %v1234
      %1631 = vmatprep.subr.bf16.mxu0 %v1239
      %1632 = vmatpush1.bf16.msra.mxu0 %v1238
      %1633 = vmatprep.subr.bf16.mxu0 %v1243
      %1634 = vmatpush1.bf16.msra.mxu0 %v1242
      %1635 = vmatprep.subr.bf16.mxu0 %v1247
      %1636 = vmatpush1.bf16.msra.mxu0 %v1246
      %1637 = vmatprep.subr.bf16.mxu0 %v1251
      %1638 = vmatpush1.bf16.msra.mxu0 %v1250
      %1639 = vmatprep.subr.bf16.mxu0 %v1255
      %1640 = vmatpush1.bf16.msra.mxu0 %v1254
      %1641 = vmatprep.mubr.bf16.mxu0 %v472
      %1642 = vmatmul.mubr.bf16.gmra.mrb[0].mxu0 %v471
      %v1643 = vpop.f32.mrb[0].mxu0
      %v1644 = vadd.f32 %v1601, %v1643
      %v1645 = vpop.f32.mrb[0].mxu0
      %v1646 = vadd.f32 %v1603, %v1645
      %v1647 = vpop.f32.mrb[0].mxu0
      %v1648 = vadd.f32 %v1605, %v1647
      %v1649 = vpop.f32.mrb[0].mxu0
      %v1650 = vadd.f32 %v1607, %v1649
      %1651 = vdwg.mxu0
      %1652 = vmatprep.subr.bf16.mxu0 %v1259
      %1653 = vmatpush1.bf16.msra.mxu0 %v1258
      %1654 = vmatprep.subr.bf16.mxu0 %v1263
      %1655 = vmatpush1.bf16.msra.mxu0 %v1262
      %1656 = vmatprep.subr.bf16.mxu0 %v1267
      %1657 = vmatpush1.bf16.msra.mxu0 %v1266
      %1658 = vmatprep.subr.bf16.mxu0 %v1271
      %1659 = vmatpush1.bf16.msra.mxu0 %v1270
      %1660 = vmatprep.subr.bf16.mxu0 %v1275
      %1661 = vmatpush1.bf16.msra.mxu0 %v1274
      %1662 = vmatprep.subr.bf16.mxu0 %v1279
      %1663 = vmatpush1.bf16.msra.mxu0 %v1278
      %1664 = vmatprep.subr.bf16.mxu0 %v1283
      %1665 = vmatpush1.bf16.msra.mxu0 %v1282
      %1666 = vmatprep.subr.bf16.mxu0 %v1287
      %1667 = vmatpush1.bf16.msra.mxu0 %v1286
      %1668 = vmatprep.subr.bf16.mxu0 %v1291
      %1669 = vmatpush1.bf16.msra.mxu0 %v1290
      %1670 = vmatprep.subr.bf16.mxu0 %v1295
      %1671 = vmatpush1.bf16.msra.mxu0 %v1294
      %1672 = vmatprep.subr.bf16.mxu0 %v1299
      %1673 = vmatpush1.bf16.msra.mxu0 %v1298
      %1674 = vmatprep.subr.bf16.mxu0 %v1303
      %1675 = vmatpush1.bf16.msra.mxu0 %v1302
      %1676 = vmatprep.subr.bf16.mxu0 %v1307
      %1677 = vmatpush1.bf16.msra.mxu0 %v1306
      %1678 = vmatprep.subr.bf16.mxu0 %v1311
      %1679 = vmatpush1.bf16.msra.mxu0 %v1310
      %1680 = vmatprep.subr.bf16.mxu0 %v1315
      %1681 = vmatpush1.bf16.msra.mxu0 %v1314
      %1682 = vmatprep.subr.bf16.mxu0 %v1319
      %1683 = vmatpush1.bf16.msra.mxu0 %v1318
      %1684 = vmatprep.mubr.bf16.mxu0 %v474
      %1685 = vmatmul.mubr.bf16.gmra.mrb[0].mxu0 %v473
      %v1686 = vpop.f32.mrb[0].mxu0
      %v1687 = vadd.f32 %v1644, %v1686
      %v1688 = vpop.f32.mrb[0].mxu0
      %v1689 = vadd.f32 %v1646, %v1688
      %v1690 = vpop.f32.mrb[0].mxu0
      %v1691 = vadd.f32 %v1648, %v1690
      %v1692 = vpop.f32.mrb[0].mxu0
      %v1693 = vadd.f32 %v1650, %v1692
      %1694 = vdwg.mxu0
      %1695 = vmatprep.subr.bf16.mxu0 %v1323
      %1696 = vmatpush1.bf16.msra.mxu0 %v1322
      %1697 = vmatprep.subr.bf16.mxu0 %v1327
      %1698 = vmatpush1.bf16.msra.mxu0 %v1326
      %1699 = vmatprep.subr.bf16.mxu0 %v1331
      %1700 = vmatpush1.bf16.msra.mxu0 %v1330
      %1701 = vmatprep.subr.bf16.mxu0 %v1335
      %1702 = vmatpush1.bf16.msra.mxu0 %v1334
      %1703 = vmatprep.subr.bf16.mxu0 %v1339
      %1704 = vmatpush1.bf16.msra.mxu0 %v1338
      %1705 = vmatprep.subr.bf16.mxu0 %v1343
      %1706 = vmatpush1.bf16.msra.mxu0 %v1342
      %1707 = vmatprep.subr.bf16.mxu0 0
      %1708 = vmatpush1.bf16.msra.mxu0 0
      %1709 = vmatprep.subr.bf16.mxu0 0
      %1710 = vmatpush1.bf16.msra.mxu0 0
      %1711 = vmatprep.subr.bf16.mxu0 0
      %1712 = vmatpush1.bf16.msra.mxu0 0
      %1713 = vmatprep.subr.bf16.mxu0 0
      %1714 = vmatpush1.bf16.msra.mxu0 0
      %1715 = vmatprep.subr.bf16.mxu0 0
      %1716 = vmatpush1.bf16.msra.mxu0 0
      %1717 = vmatprep.subr.bf16.mxu0 0
      %1718 = vmatpush1.bf16.msra.mxu0 0
      %1719 = vmatprep.subr.bf16.mxu0 0
      %1720 = vmatpush1.bf16.msra.mxu0 0
      %1721 = vmatprep.subr.bf16.mxu0 0
      %1722 = vmatpush1.bf16.msra.mxu0 0
      %1723 = vmatprep.subr.bf16.mxu0 0
      %1724 = vmatpush1.bf16.msra.mxu0 0
      %1725 = vmatprep.subr.bf16.mxu0 0
      %1726 = vmatpush1.bf16.msra.mxu0 0
      %1727 = vmatprep.mubr.bf16.mxu0 0
      %1728 = vmatmul.mubr.bf16.gmra.mrb[0].mxu0 %v1564
      %v1729 = vpop.f32.mrb[0].mxu0
      %v1730 = vadd.f32 %v1687, %v1729
      %v1731 = vpop.f32.mrb[0].mxu0
      %v1732 = vadd.f32 %v1689, %v1731
      %v1733 = vpop.f32.mrb[0].mxu0
      %v1734 = vadd.f32 %v1691, %v1733
      %v1735 = vpop.f32.mrb[0].mxu0
      %v1736 = vadd.f32 %v1693, %v1735
      %1737 = vdwg.mxu0
      %1738 = vmatprep.subr.bf16.mxu0 %v1133
      %1739 = vmatpush1.bf16.msra.mxu0 %v1132
      %1740 = vmatprep.subr.bf16.mxu0 %v1137
      %1741 = vmatpush1.bf16.msra.mxu0 %v1136
      %1742 = vmatprep.subr.bf16.mxu0 %v1141
      %1743 = vmatpush1.bf16.msra.mxu0 %v1140
      %1744 = vmatprep.subr.bf16.mxu0 %v1145
      %1745 = vmatpush1.bf16.msra.mxu0 %v1144
      %1746 = vmatprep.subr.bf16.mxu0 %v1149
      %1747 = vmatpush1.bf16.msra.mxu0 %v1148
      %1748 = vmatprep.subr.bf16.mxu0 %v1153
      %1749 = vmatpush1.bf16.msra.mxu0 %v1152
      %1750 = vmatprep.subr.bf16.mxu0 %v1157
      %1751 = vmatpush1.bf16.msra.mxu0 %v1156
      %1752 = vmatprep.subr.bf16.mxu0 %v1161
      %1753 = vmatpush1.bf16.msra.mxu0 %v1160
      %1754 = vmatprep.subr.bf16.mxu0 %v1165
      %1755 = vmatpush1.bf16.msra.mxu0 %v1164
      %1756 = vmatprep.subr.bf16.mxu0 %v1169
      %1757 = vmatpush1.bf16.msra.mxu0 %v1168
      %1758 = vmatprep.subr.bf16.mxu0 %v1173
      %1759 = vmatpush1.bf16.msra.mxu0 %v1172
      %1760 = vmatprep.subr.bf16.mxu0 %v1177
      %1761 = vmatpush1.bf16.msra.mxu0 %v1176
      %1762 = vmatprep.subr.bf16.mxu0 %v1181
      %1763 = vmatpush1.bf16.msra.mxu0 %v1180
      %1764 = vmatprep.subr.bf16.mxu0 %v1185
      %1765 = vmatpush1.bf16.msra.mxu0 %v1184
      %1766 = vmatprep.subr.bf16.mxu0 %v1189
      %1767 = vmatpush1.bf16.msra.mxu0 %v1188
      %1768 = vmatprep.subr.bf16.mxu0 %v1193
      %1769 = vmatpush1.bf16.msra.mxu0 %v1192
      %1770 = vmatprep.mubr.bf16.mxu0 %v470
      %1771 = vmatmul.mubr.bf16.gmra.mrb[0].mxu0 %v469
      %v1772 = vpop.f32.mrb[0].mxu0
      %v1773 = vadd.f32 %v440, %v1772
      %v1774 = vpop.f32.mrb[0].mxu0
      %v1775 = vadd.f32 %v440, %v1774
      %v1776 = vpop.f32.mrb[0].mxu0
      %v1777 = vadd.f32 %v445, %v1776
      %v1778 = vpop.f32.mrb[0].mxu0
      %v1779 = vadd.f32 %v445, %v1778
      %1780 = vdwg.mxu0
      %1781 = vmatprep.subr.bf16.mxu0 %v1197
      %1782 = vmatpush1.bf16.msra.mxu0 %v1196
      %1783 = vmatprep.subr.bf16.mxu0 %v1201
      %1784 = vmatpush1.bf16.msra.mxu0 %v1200
      %1785 = vmatprep.subr.bf16.mxu0 %v1205
      %1786 = vmatpush1.bf16.msra.mxu0 %v1204
      %1787 = vmatprep.subr.bf16.mxu0 %v1209
      %1788 = vmatpush1.bf16.msra.mxu0 %v1208
      %1789 = vmatprep.subr.bf16.mxu0 %v1213
      %1790 = vmatpush1.bf16.msra.mxu0 %v1212
      %1791 = vmatprep.subr.bf16.mxu0 %v1217
      %1792 = vmatpush1.bf16.msra.mxu0 %v1216
      %1793 = vmatprep.subr.bf16.mxu0 %v1221
      %1794 = vmatpush1.bf16.msra.mxu0 %v1220
      %1795 = vmatprep.subr.bf16.mxu0 %v1225
      %1796 = vmatpush1.bf16.msra.mxu0 %v1224
      %1797 = vmatprep.subr.bf16.mxu0 %v1229
      %1798 = vmatpush1.bf16.msra.mxu0 %v1228
      %1799 = vmatprep.subr.bf16.mxu0 %v1233
      %1800 = vmatpush1.bf16.msra.mxu0 %v1232
      %1801 = vmatprep.subr.bf16.mxu0 %v1237
      %1802 = vmatpush1.bf16.msra.mxu0 %v1236
      %1803 = vmatprep.subr.bf16.mxu0 %v1241
      %1804 = vmatpush1.bf16.msra.mxu0 %v1240
      %1805 = vmatprep.subr.bf16.mxu0 %v1245
      %1806 = vmatpush1.bf16.msra.mxu0 %v1244
      %1807 = vmatprep.subr.bf16.mxu0 %v1249
      %1808 = vmatpush1.bf16.msra.mxu0 %v1248
      %1809 = vmatprep.subr.bf16.mxu0 %v1253
      %1810 = vmatpush1.bf16.msra.mxu0 %v1252
      %1811 = vmatprep.subr.bf16.mxu0 %v1257
      %1812 = vmatpush1.bf16.msra.mxu0 %v1256
      %1813 = vmatprep.mubr.bf16.mxu0 %v472
      %1814 = vmatmul.mubr.bf16.gmra.mrb[0].mxu0 %v471
      %v1815 = vpop.f32.mrb[0].mxu0
      %v1816 = vadd.f32 %v1773, %v1815
      %v1817 = vpop.f32.mrb[0].mxu0
      %v1818 = vadd.f32 %v1775, %v1817
      %v1819 = vpop.f32.mrb[0].mxu0
      %v1820 = vadd.f32 %v1777, %v1819
      %v1821 = vpop.f32.mrb[0].mxu0
      %v1822 = vadd.f32 %v1779, %v1821
      %1823 = vdwg.mxu0
      %1824 = vmatprep.subr.bf16.mxu0 %v1261
      %1825 = vmatpush1.bf16.msra.mxu0 %v1260
      %1826 = vmatprep.subr.bf16.mxu0 %v1265
      %1827 = vmatpush1.bf16.msra.mxu0 %v1264
      %1828 = vmatprep.subr.bf16.mxu0 %v1269
      %1829 = vmatpush1.bf16.msra.mxu0 %v1268
      %1830 = vmatprep.subr.bf16.mxu0 %v1273
      %1831 = vmatpush1.bf16.msra.mxu0 %v1272
      %1832 = vmatprep.subr.bf16.mxu0 %v1277
      %1833 = vmatpush1.bf16.msra.mxu0 %v1276
      %1834 = vmatprep.subr.bf16.mxu0 %v1281
      %1835 = vmatpush1.bf16.msra.mxu0 %v1280
      %1836 = vmatprep.subr.bf16.mxu0 %v1285
      %1837 = vmatpush1.bf16.msra.mxu0 %v1284
      %1838 = vmatprep.subr.bf16.mxu0 %v1289
      %1839 = vmatpush1.bf16.msra.mxu0 %v1288
      %1840 = vmatprep.subr.bf16.mxu0 %v1293
      %1841 = vmatpush1.bf16.msra.mxu0 %v1292
      %1842 = vmatprep.subr.bf16.mxu0 %v1297
      %1843 = vmatpush1.bf16.msra.mxu0 %v1296
      %1844 = vmatprep.subr.bf16.mxu0 %v1301
      %1845 = vmatpush1.bf16.msra.mxu0 %v1300
      %1846 = vmatprep.subr.bf16.mxu0 %v1305
      %1847 = vmatpush1.bf16.msra.mxu0 %v1304
      %1848 = vmatprep.subr.bf16.mxu0 %v1309
      %1849 = vmatpush1.bf16.msra.mxu0 %v1308
      %1850 = vmatprep.subr.bf16.mxu0 %v1313
      %1851 = vmatpush1.bf16.msra.mxu0 %v1312
      %1852 = vmatprep.subr.bf16.mxu0 %v1317
      %1853 = vmatpush1.bf16.msra.mxu0 %v1316
      %1854 = vmatprep.subr.bf16.mxu0 %v1321
      %1855 = vmatpush1.bf16.msra.mxu0 %v1320
      %1856 = vmatprep.mubr.bf16.mxu0 %v474
      %1857 = vmatmul.mubr.bf16.gmra.mrb[0].mxu0 %v473
      %v1858 = vpop.f32.mrb[0].mxu0
      %v1859 = vadd.f32 %v1816, %v1858
      %v1860 = vpop.f32.mrb[0].mxu0
      %v1861 = vadd.f32 %v1818, %v1860
      %v1862 = vpop.f32.mrb[0].mxu0
      %v1863 = vadd.f32 %v1820, %v1862
      %v1864 = vpop.f32.mrb[0].mxu0
      %v1865 = vadd.f32 %v1822, %v1864
      %1866 = vdwg.mxu0
      %1867 = vmatprep.subr.bf16.mxu0 %v1325
      %1868 = vmatpush1.bf16.msra.mxu0 %v1324
      %1869 = vmatprep.subr.bf16.mxu0 %v1329
      %1870 = vmatpush1.bf16.msra.mxu0 %v1328
      %1871 = vmatprep.subr.bf16.mxu0 %v1333
      %1872 = vmatpush1.bf16.msra.mxu0 %v1332
      %1873 = vmatprep.subr.bf16.mxu0 %v1337
      %1874 = vmatpush1.bf16.msra.mxu0 %v1336
      %1875 = vmatprep.subr.bf16.mxu0 %v1341
      %1876 = vmatpush1.bf16.msra.mxu0 %v1340
      %1877 = vmatprep.subr.bf16.mxu0 %v1345
      %1878 = vmatpush1.bf16.msra.mxu0 %v1344
      %1879 = vmatprep.subr.bf16.mxu0 0
      %1880 = vmatpush1.bf16.msra.mxu0 0
      %1881 = vmatprep.subr.bf16.mxu0 0
      %1882 = vmatpush1.bf16.msra.mxu0 0
      %1883 = vmatprep.subr.bf16.mxu0 0
      %1884 = vmatpush1.bf16.msra.mxu0 0
      %1885 = vmatprep.subr.bf16.mxu0 0
      %1886 = vmatpush1.bf16.msra.mxu0 0
      %1887 = vmatprep.subr.bf16.mxu0 0
      %1888 = vmatpush1.bf16.msra.mxu0 0
      %1889 = vmatprep.subr.bf16.mxu0 0
      %1890 = vmatpush1.bf16.msra.mxu0 0
      %1891 = vmatprep.subr.bf16.mxu0 0
      %1892 = vmatpush1.bf16.msra.mxu0 0
      %1893 = vmatprep.subr.bf16.mxu0 0
      %1894 = vmatpush1.bf16.msra.mxu0 0
      %1895 = vmatprep.subr.bf16.mxu0 0
      %1896 = vmatpush1.bf16.msra.mxu0 0
      %1897 = vmatprep.subr.bf16.mxu0 0
      %1898 = vmatpush1.bf16.msra.mxu0 0
      %1899 = vmatprep.mubr.bf16.mxu0 0
      %1900 = vmatmul.mubr.bf16.gmra.mrb[0].mxu0 %v1564
      %v1901 = vpop.f32.mrb[0].mxu0
      %v1902 = vadd.f32 %v1859, %v1901
      %v1903 = vpop.f32.mrb[0].mxu0
      %v1904 = vadd.f32 %v1861, %v1903
      %v1905 = vpop.f32.mrb[0].mxu0
      %v1906 = vadd.f32 %v1863, %v1905
      %v1907 = vpop.f32.mrb[0].mxu0
      %v1908 = vadd.f32 %v1865, %v1907
      %1909 = vdwg.mxu0
      %v1910 = vmax.f32 %v1730, 0.0
      %v1911 = vmax.f32 %v1732, 0.0
      %v1912 = vmax.f32 %v1902, 0.0
      %v1913 = vmax.f32 %v1904, 0.0
      %v1914 = vmax.f32 %v1734, 0.0
      %v1915 = vmax.f32 %v1736, 0.0
      %v1916 = vmax.f32 %v1906, 0.0
      %v1917 = vmax.f32 %v1908, 0.0
      %v1918 = vpack.c.bf16 %v1914, %v1910
      %v1919 = vpack.c.bf16 %v1915, %v1911
      %v1920 = vpack.c.bf16 %v1916, %v1912
      %v1921 = vpack.c.bf16 %v1917, %v1913
      %v1926 = vunpack.c.l.b16 %v1918
      %v1927 = vunpack.c.l.b16 %v1919
      %v1928 = vunpack.c.l.b16 %v1920
      %v1929 = vunpack.c.l.b16 %v1921
      %v1930 = vunpack.c.h.b16 %v1918
      %v1931 = vunpack.c.h.b16 %v1919
      %v1932 = vunpack.c.h.b16 %v1920
      %v1933 = vunpack.c.h.b16 %v1921
      %v1934 = vpack.c.b16 %v1927, %v1926
      %v1935 = vpack.c.b16 %v1929, %v1928
      %v1936 = vpack.c.b16 %v1931, %v1930
      %v1937 = vpack.c.b16 %v1933, %v1932
      %1942 = vst [vmem:[%s208] sm:$0xff] %v1934
      %1943 = vst [vmem:[%s208 + $0x8] sm:$0xff] %v1935
      %1944 = vst [vmem:[%s208 + $0x10] sm:$0xff] %v1936
      %1945 = vst [vmem:[%s208 + $0x18] sm:$0xff] %v1937
      %s1946 = smul.u32 4, %s19
      %p1947 = scmp.lt.s32.totalorder %s18, 1
      %s1948 = scalar_select %p1947, %s18, 1
      %p1949 = scmp.lt.s32.totalorder %s1946, 3
      %s1950 = scalar_select %p1949, %s1946, 3
      %s1951 = smul.addr %s1948, 8
      %s1952 = sadd.s32 %s1950, %s1951
      %s1953 = smul.addr %s1952, 4
      %s1954 = scalar_lea.vmem %s3, %s1953
      // Predicated region
      $region33: #{decoder_forward.15} parent=31 // pred_check
        %p1955 = pneg %p116
      $region34: #{decoder_forward.15} parent=31 // pred_check_branch
        %1957 = sbr.rel (%p1955) target = $region36
      $region35: #{decoder_forward.15} parent=31 // pred_region
        %s1958 = smul.u32 4, %s19
      $region36: #{decoder_forward.15} parent=31 // pred_fallthru
        _
    $region32: #{decoder_forward.15} parent=5 // pred_fallthru
      _
    %p1959 = scmp.le.s32.totalorder 2, %s9
    // Predicated region
    $region37: #{decoder_forward.15} parent=5 // pred_check
      %p1960 = pneg %p1959
    $region38: #{decoder_forward.15} parent=5 // pred_check_branch
      %1962 = sbr.rel (%p1960) target = $region40
    $region39: #{decoder_forward.15} parent=5 // pred_region
      %s1963 = ssub.s32 %s9, 2
      // Predicated region
      $region41: #{decoder_forward.15} parent=39 // pred_check
        %p1964 = pneg %p122
      $region42: #{decoder_forward.15} parent=39 // pred_check_branch
        %1966 = sbr.rel (%p1964) target = $region44
      $region43: #{decoder_forward.15} parent=39 // pred_region
        %s1967 = smul.u32 4, %s21
        %p1968 = scmp.lt.s32.totalorder %s20, 1
        %s1969 = scalar_select %p1968, %s20, 1
        %p1970 = scmp.lt.s32.totalorder %s1967, 3
        %s1971 = scalar_select %p1970, %s1967, 3
        %s1972 = smul.addr %s1969, 8
        %s1973 = sadd.s32 %s1971, %s1972
        %s1974 = smul.addr %s1973, 4
        %s1975 = scalar_lea.vmem %s3, %s1974
      $region44: #{decoder_forward.15} parent=39 // pred_fallthru
        _
    $region40: #{decoder_forward.15} parent=5 // pred_fallthru
      _
  $region6: #{decoder_forward.15} parent=0 // loop_footer
    %s13 = sadd.s32 1, %s9
  $region7: #{decoder_forward.15} parent=0 // loop_footer_branch
    %8 = sbr.rel target = $region3
  $region8: #{decoder_forward.15} parent=0 // loop_exit
    _

// kernel: decoder_forward.16
$region0: #{decoder_forward.16}
  #allocation0 [shape = 'u32[]', space=smem, size = 0x4, offset = 0x4, fixed_abs, tag = 'smem constant byte address 0x4 - core index']
  #allocation1 [shape = 'u32[144,128]{1,0:T(1,128)}', space=vmem, size = 0x12000, scoped, tag = 'internal scratch']
  %s0 = inlined_call_operand.vmem [shape: bf16[2,432,512], index: 0, kind: input, shape index: {}]
  %s1 = inlined_call_operand.vmem [shape: bf16[16,432], index: 1, kind: input, shape index: {}]
  %s2 = inlined_call_operand.vmem [shape: f32[16,1], index: 2, kind: input, shape index: {}]
  %s3 = inlined_call_operand.vmem [shape: bf16[2,16,512], index: 3, kind: output, shape index: {}]
  %s4 = sld [smem:[#allocation0]]
  $region45: #{decoder_forward.16} parent=0
    _
  %s6 = ssub.s32 1, %s4
  %s7 = scalar_select 0, %s6, %s4
  loop: start=0, step=1, limit=4
  $region2: #{decoder_forward.16} parent=0 // loop_pre_header
    _
  $region3: #{decoder_forward.16} parent=0 // loop_header
    %s9 = sphi 0, %s13
    %p10 = scmp.ge.s32.totalorder %s9, 4
    %s16 = sphi 0, %s28
    %s17 = sphi 0, %s24
    %s18 = sphi 0, %s16
    %s19 = sphi 0, %s17
    %s20 = sphi 0, %s18
    %s21 = sphi 0, %s19
    %s33 = sphi 0, %s35
    %s36 = sphi 0, %s33
    %s37 = sphi 0, %s36
    %s53 = sphi 0, %s37
    %s57 = sphi 0, %s57
    %s59 = sphi 0, %s57
    %s60 = sphi 0, %s59
    %s74 = sphi 0, %s60
    %s78 = sphi 0, %s78
    %s80 = sphi 0, %s78
    %s81 = sphi 0, %s80
    %s95 = sphi 0, %s81
    %s103 = sphi 0, %s105
    %s106 = sphi 0, %s103
    %s107 = sphi 0, %s106
    %s123 = sphi 0, %s107
  $region4: #{decoder_forward.16} parent=0 // loop_header_branch
    %12 = sbr.rel (%p10) target = $region8
  $region5: #{decoder_forward.16} parent=0 // loop_body
    %s14 = ssub.s32 %s9, 1
    %s15 = ssub.s32 %s9, 2
    %s22 = sadd.s32 1, %s17
    %p23 = scmp.ge.s32.totalorder %s22, 1
    %s24 = scalar_select %p23, 0, %s22
    %s25 = sadd.s32 1, %s16
    %s26 = scalar_select %p23, %s25, %s16
    %p27 = scmp.ge.s32.totalorder %s26, 2
    %s28 = scalar_select %p27, 0, %s26
    %s29 = ssub.s32 %s16, %s28
    %s30 = ssub.s32 %s17, %s24
    %s31 = sor.u32 %s29, %s30
    %p32 = scmp.eq.s32.totalorder %s31, 0
    %s34 = sadd.s32 %s33, 1
    %s35 = scalar_select %p32, %s33, %s34
    %p38 = pneg %p32
    %p39 = scmp.eq.s32.totalorder %s9, 1
    %p40 = por %p38, %p39
    %p41 = scmp.ne.s32.totalorder %s33, %s36
    %p42 = scmp.eq.s32.totalorder %s9, 0
    %p43 = por %p41, %p42
    %p44 = scmp.ne.s32.totalorder %s33, %s36
    %p45 = scmp.eq.s32.totalorder %s14, 1
    %p46 = por %p44, %p45
    %p47 = scmp.ne.s32.totalorder %s36, %s37
    %p48 = scmp.eq.s32.totalorder %s14, 0
    %p49 = por %p47, %p48
    %p50 = scmp.ne.s32.totalorder %s36, %s37
    %p51 = scmp.eq.s32.totalorder %s15, 1
    %p52 = por %p50, %p51
    %p54 = scmp.ne.s32.totalorder %s37, %s53
    %p55 = scmp.eq.s32.totalorder %s15, 0
    %p56 = por %p54, %p55
    %s58 = sadd.s32 %s57, 1
    %p61 = scmp.eq.s32.totalorder %s9, 1
    %p62 = scmp.ne.s32.totalorder %s57, %s59
    %p63 = scmp.eq.s32.totalorder %s9, 0
    %p64 = por %p62, %p63
    %p65 = scmp.ne.s32.totalorder %s57, %s59
    %p66 = scmp.eq.s32.totalorder %s14, 1
    %p67 = por %p65, %p66
    %p68 = scmp.ne.s32.totalorder %s59, %s60
    %p69 = scmp.eq.s32.totalorder %s14, 0
    %p70 = por %p68, %p69
    %p71 = scmp.ne.s32.totalorder %s59, %s60
    %p72 = scmp.eq.s32.totalorder %s15, 1
    %p73 = por %p71, %p72
    %p75 = scmp.ne.s32.totalorder %s60, %s74
    %p76 = scmp.eq.s32.totalorder %s15, 0
    %p77 = por %p75, %p76
    %s79 = sadd.s32 %s78, 1
    %p82 = scmp.eq.s32.totalorder %s9, 1
    %p83 = scmp.ne.s32.totalorder %s78, %s80
    %p84 = scmp.eq.s32.totalorder %s9, 0
    %p85 = por %p83, %p84
    %p86 = scmp.ne.s32.totalorder %s78, %s80
    %p87 = scmp.eq.s32.totalorder %s14, 1
    %p88 = por %p86, %p87
    %p89 = scmp.ne.s32.totalorder %s80, %s81
    %p90 = scmp.eq.s32.totalorder %s14, 0
    %p91 = por %p89, %p90
    %p92 = scmp.ne.s32.totalorder %s80, %s81
    %p93 = scmp.eq.s32.totalorder %s15, 1
    %p94 = por %p92, %p93
    %p96 = scmp.ne.s32.totalorder %s81, %s95
    %p97 = scmp.eq.s32.totalorder %s15, 0
    %p98 = por %p96, %p97
    %s99 = ssub.s32 %s16, %s28
    %s100 = ssub.s32 %s17, %s24
    %s101 = sor.u32 %s99, %s100
    %p102 = scmp.eq.s32.totalorder %s101, 0
    %s104 = sadd.s32 %s103, 1
    %s105 = scalar_select %p102, %s103, %s104
    %p108 = pneg %p102
    %p109 = scmp.eq.s32.totalorder %s9, 1
    %p110 = por %p108, %p109
    %p111 = scmp.ne.s32.totalorder %s103, %s106
    %p112 = scmp.eq.s32.totalorder %s9, 0
    %p113 = por %p111, %p112
    %p114 = scmp.ne.s32.totalorder %s103, %s106
    %p115 = scmp.eq.s32.totalorder %s14, 1
    %p116 = por %p114, %p115
    %p117 = scmp.ne.s32.totalorder %s106, %s107
    %p118 = scmp.eq.s32.totalorder %s14, 0
    %p119 = por %p117, %p118
    %p120 = scmp.ne.s32.totalorder %s106, %s107
    %p121 = scmp.eq.s32.totalorder %s15, 1
    %p122 = por %p120, %p121
    %p124 = scmp.ne.s32.totalorder %s107, %s123
    %p125 = scmp.eq.s32.totalorder %s15, 0
    %p126 = por %p124, %p125
    %p127 = scmp.le.s32.totalorder 1, %s9
    %p128 = scmp.lt.s32.totalorder %s9, 3
    %p129 = pnand %p127, %p128
    %p130 = pneg %p129
    // Predicated region
    $region9: #{decoder_forward.16} parent=5 // pred_check
      _
    $region10: #{decoder_forward.16} parent=5 // pred_check_branch
      %132 = sbr.rel (%p129) target = $region12
    $region11: #{decoder_forward.16} parent=5 // pred_region
      %s133 = ssub.s32 %s9, 1
      // Predicated region
      $region13: #{decoder_forward.16} parent=11 // pred_check
        %p134 = pneg %p70
      $region14: #{decoder_forward.16} parent=11 // pred_check_branch
        %136 = sbr.rel (%p134) target = $region16
      $region15: #{decoder_forward.16} parent=11 // pred_region
        _
      $region16: #{decoder_forward.16} parent=11 // pred_fallthru
        _
      // Predicated region
      $region17: #{decoder_forward.16} parent=11 // pred_check
        %p137 = pneg %p91
      $region18: #{decoder_forward.16} parent=11 // pred_check_branch
        %139 = sbr.rel (%p137) target = $region20
      $region19: #{decoder_forward.16} parent=11 // pred_region
        _
      $region20: #{decoder_forward.16} parent=11 // pred_fallthru
        _
    $region12: #{decoder_forward.16} parent=5 // pred_fallthru
      _
    %p140 = scmp.lt.s32.totalorder %s9, 2
    // Predicated region
    $region21: #{decoder_forward.16} parent=5 // pred_check
      %p141 = pneg %p140
    $region22: #{decoder_forward.16} parent=5 // pred_check_branch
      %143 = sbr.rel (%p141) target = $region24
    $region23: #{decoder_forward.16} parent=5 // pred_region
      // Predicated region
      $region25: #{decoder_forward.16} parent=23 // pred_check
        %p144 = pneg %p43
      $region26: #{decoder_forward.16} parent=23 // pred_check_branch
        %146 = sbr.rel (%p144) target = $region28
      $region27: #{decoder_forward.16} parent=23 // pred_region
        %s147 = smul.u32 4, %s17
        %p148 = scmp.lt.s32.totalorder %s16, 1
        %s149 = scalar_select %p148, %s16, 1
        %p150 = scmp.lt.s32.totalorder %s147, 3
        %s151 = scalar_select %p150, %s147, 3
        %s152 = smul.addr %s149, 216
        %s153 = sadd.s32 %s151, %s152
        %s154 = smul.addr %s153, 4
        %s155 = scalar_lea.vmem %s0, %s154
        %s156 = smul.u32 4, %s17
      $region28: #{decoder_forward.16} parent=23 // pred_fallthru
        _
    $region24: #{decoder_forward.16} parent=5 // pred_fallthru
      _
    %p157 = scmp.le.s32.totalorder 1, %s9
    %p158 = scmp.lt.s32.totalorder %s9, 3
    %p159 = pnand %p157, %p158
    %p160 = pneg %p159
    // Predicated region
    $region29: #{decoder_forward.16} parent=5 // pred_check
      _
    $region30: #{decoder_forward.16} parent=5 // pred_check_branch
      %162 = sbr.rel (%p159) target = $region32
    $region31: #{decoder_forward.16} parent=5 // pred_region
      %s163 = ssub.s32 %s9, 1
      %s164 = smul.u32 4, %s19
      %p165 = scmp.lt.s32.totalorder %s18, 1
      %s166 = scalar_select %p165, %s18, 1
      %p167 = scmp.lt.s32.totalorder %s164, 3
      %s168 = scalar_select %p167, %s164, 3
      %s169 = smul.addr %s166, 216
      %s170 = sadd.s32 %s168, %s169
      %s171 = smul.addr %s170, 4
      %s172 = scalar_lea.vmem %s0, %s171
      %p173 = pneg %p49
      %p174 = pneg %p46
      %p175 = pneg %p70
      %p176 = pneg %p67
      %p177 = pneg %p91
      %p178 = pneg %p88
      %p179 = pneg %p119
      %p180 = pneg %p116
      %s181 = smul.u32 4, %s19
      %p182 = scmp.lt.s32.totalorder %s18, 1
      %s183 = scalar_select %p182, %s18, 1
      %p184 = scmp.lt.s32.totalorder %s181, 3
      %s185 = scalar_select %p184, %s181, 3
      %s186 = smul.addr %s183, 8
      %s187 = sadd.s32 %s185, %s186
      %s188 = smul.addr %s187, 4
      %s189 = scalar_lea.vmem %s3, %s188
      %s190 = smul.u32 4, %s19
      %p191 = scmp.lt.s32.totalorder %s18, 1
      %s192 = scalar_select %p191, %s18, 1
      %p193 = scmp.lt.s32.totalorder %s190, 3
      %s194 = scalar_select %p193, %s190, 3
      %s195 = smul.addr %s192, 216
      %s196 = sadd.s32 %s194, %s195
      %s197 = smul.addr %s196, 4
      %s198 = scalar_lea.vmem %s0, %s197
      %s199 = smul.u32 4, %s19
      %s200 = smul.u32 4, %s19
      %p201 = scmp.lt.s32.totalorder %s18, 1
      %s202 = scalar_select %p201, %s18, 1
      %p203 = scmp.lt.s32.totalorder %s200, 3
      %s204 = scalar_select %p203, %s200, 3
      %s205 = smul.addr %s202, 8
      %s206 = sadd.s32 %s204, %s205
      %s207 = smul.addr %s206, 4
      %s208 = scalar_lea.vmem %s3, %s207
      %s209 = smul.u32 4, %s19
      %v211 = vld [vmem:[%s1] sm:$0xff]
      %v212 = vld [vmem:[%s1 + $0x8] sm:$0xff]
      %v213 = vld [vmem:[%s1 + $0x10] sm:$0xff]
      %v214 = vld [vmem:[%s1 + $0x18] sm:$0xff]
      %v215 = vld [vmem:[%s198] sm:$0xff]
      %v216 = vld [vmem:[%s198 + $0x8] sm:$0xff]
      %v217 = vld [vmem:[%s198 + $0x10] sm:$0xff]
      %v218 = vld [vmem:[%s198 + $0x18] sm:$0xff]
      %v219 = vld [vmem:[%s198 + $0x20] sm:$0xff]
      %v220 = vld [vmem:[%s198 + $0x28] sm:$0xff]
      %v221 = vld [vmem:[%s198 + $0x30] sm:$0xff]
      %v222 = vld [vmem:[%s198 + $0x38] sm:$0xff]
      %v223 = vld [vmem:[%s198 + $0x40] sm:$0xff]
      %v224 = vld [vmem:[%s198 + $0x48] sm:$0xff]
      %v225 = vld [vmem:[%s198 + $0x50] sm:$0xff]
      %v226 = vld [vmem:[%s198 + $0x58] sm:$0xff]
      %v227 = vld [vmem:[%s198 + $0x60] sm:$0xff]
      %v228 = vld [vmem:[%s198 + $0x68] sm:$0xff]
      %v229 = vld [vmem:[%s198 + $0x70] sm:$0xff]
      %v230 = vld [vmem:[%s198 + $0x78] sm:$0xff]
      %v231 = vld [vmem:[%s198 + $0x80] sm:$0xff]
      %v232 = vld [vmem:[%s198 + $0x88] sm:$0xff]
      %v233 = vld [vmem:[%s198 + $0x90] sm:$0xff]
      %v234 = vld [vmem:[%s198 + $0x98] sm:$0xff]
      %v235 = vld [vmem:[%s198 + $0xa0] sm:$0xff]
      %v236 = vld [vmem:[%s198 + $0xa8] sm:$0xff]
      %v237 = vld [vmem:[%s198 + $0xb0] sm:$0xff]
      %v238 = vld [vmem:[%s198 + $0xb8] sm:$0xff]
      %v239 = vld [vmem:[%s198 + $0xc0] sm:$0xff]
      %v240 = vld [vmem:[%s198 + $0xc8] sm:$0xff]
      %v241 = vld [vmem:[%s198 + $0xd0] sm:$0xff]
      %v242 = vld [vmem:[%s198 + $0xd8] sm:$0xff]
      %v243 = vld [vmem:[%s198 + $0xe0] sm:$0xff]
      %v244 = vld [vmem:[%s198 + $0xe8] sm:$0xff]
      %v245 = vld [vmem:[%s198 + $0xf0] sm:$0xff]
      %v246 = vld [vmem:[%s198 + $0xf8] sm:$0xff]
      %v247 = vld [vmem:[%s198 + $0x100] sm:$0xff]
      %v248 = vld [vmem:[%s198 + $0x108] sm:$0xff]
      %v249 = vld [vmem:[%s198 + $0x110] sm:$0xff]
      %v250 = vld [vmem:[%s198 + $0x118] sm:$0xff]
      %v251 = vld [vmem:[%s198 + $0x120] sm:$0xff]
      %v252 = vld [vmem:[%s198 + $0x128] sm:$0xff]
      %v253 = vld [vmem:[%s198 + $0x130] sm:$0xff]
      %v254 = vld [vmem:[%s198 + $0x138] sm:$0xff]
      %v255 = vld [vmem:[%s198 + $0x140] sm:$0xff]
      %v256 = vld [vmem:[%s198 + $0x148] sm:$0xff]
      %v257 = vld [vmem:[%s198 + $0x150] sm:$0xff]
      %v258 = vld [vmem:[%s198 + $0x158] sm:$0xff]
      %v259 = vld [vmem:[%s198 + $0x160] sm:$0xff]
      %v260 = vld [vmem:[%s198 + $0x168] sm:$0xff]
      %v261 = vld [vmem:[%s198 + $0x170] sm:$0xff]
      %v262 = vld [vmem:[%s198 + $0x178] sm:$0xff]
      %v263 = vld [vmem:[%s198 + $0x180] sm:$0xff]
      %v264 = vld [vmem:[%s198 + $0x188] sm:$0xff]
      %v265 = vld [vmem:[%s198 + $0x190] sm:$0xff]
      %v266 = vld [vmem:[%s198 + $0x198] sm:$0xff]
      %v267 = vld [vmem:[%s198 + $0x1a0] sm:$0xff]
      %v268 = vld [vmem:[%s198 + $0x1a8] sm:$0xff]
      %v269 = vld [vmem:[%s198 + $0x1b0] sm:$0xff]
      %v270 = vld [vmem:[%s198 + $0x1b8] sm:$0xff]
      %v271 = vld [vmem:[%s198 + $0x1c0] sm:$0xff]
      %v272 = vld [vmem:[%s198 + $0x1c8] sm:$0xff]
      %v273 = vld [vmem:[%s198 + $0x1d0] sm:$0xff]
      %v274 = vld [vmem:[%s198 + $0x1d8] sm:$0xff]
      %v275 = vld [vmem:[%s198 + $0x1e0] sm:$0xff]
      %v276 = vld [vmem:[%s198 + $0x1e8] sm:$0xff]
      %v277 = vld [vmem:[%s198 + $0x1f0] sm:$0xff]
      %v278 = vld [vmem:[%s198 + $0x1f8] sm:$0xff]
      %v279 = vld [vmem:[%s198 + $0x200] sm:$0xff]
      %v280 = vld [vmem:[%s198 + $0x208] sm:$0xff]
      %v281 = vld [vmem:[%s198 + $0x210] sm:$0xff]
      %v282 = vld [vmem:[%s198 + $0x218] sm:$0xff]
      %v283 = vld [vmem:[%s198 + $0x220] sm:$0xff]
      %v284 = vld [vmem:[%s198 + $0x228] sm:$0xff]
      %v285 = vld [vmem:[%s198 + $0x230] sm:$0xff]
      %v286 = vld [vmem:[%s198 + $0x238] sm:$0xff]
      %v287 = vld [vmem:[%s198 + $0x240] sm:$0xff]
      %v288 = vld [vmem:[%s198 + $0x248] sm:$0xff]
      %v289 = vld [vmem:[%s198 + $0x250] sm:$0xff]
      %v290 = vld [vmem:[%s198 + $0x258] sm:$0xff]
      %v291 = vld [vmem:[%s198 + $0x260] sm:$0xff]
      %v292 = vld [vmem:[%s198 + $0x268] sm:$0xff]
      %v293 = vld [vmem:[%s198 + $0x270] sm:$0xff]
      %v294 = vld [vmem:[%s198 + $0x278] sm:$0xff]
      %v295 = vld [vmem:[%s198 + $0x280] sm:$0xff]
      %v296 = vld [vmem:[%s198 + $0x288] sm:$0xff]
      %v297 = vld [vmem:[%s198 + $0x290] sm:$0xff]
      %v298 = vld [vmem:[%s198 + $0x298] sm:$0xff]
      %v299 = vld [vmem:[%s198 + $0x2a0] sm:$0xff]
      %v300 = vld [vmem:[%s198 + $0x2a8] sm:$0xff]
      %v301 = vld [vmem:[%s198 + $0x2b0] sm:$0xff]
      %v302 = vld [vmem:[%s198 + $0x2b8] sm:$0xff]
      %v303 = vld [vmem:[%s198 + $0x2c0] sm:$0xff]
      %v304 = vld [vmem:[%s198 + $0x2c8] sm:$0xff]
      %v305 = vld [vmem:[%s198 + $0x2d0] sm:$0xff]
      %v306 = vld [vmem:[%s198 + $0x2d8] sm:$0xff]
      %v307 = vld [vmem:[%s198 + $0x2e0] sm:$0xff]
      %v308 = vld [vmem:[%s198 + $0x2e8] sm:$0xff]
      %v309 = vld [vmem:[%s198 + $0x2f0] sm:$0xff]
      %v310 = vld [vmem:[%s198 + $0x2f8] sm:$0xff]
      %v311 = vld [vmem:[%s198 + $0x300] sm:$0xff]
      %v312 = vld [vmem:[%s198 + $0x308] sm:$0xff]
      %v313 = vld [vmem:[%s198 + $0x310] sm:$0xff]
      %v314 = vld [vmem:[%s198 + $0x318] sm:$0xff]
      %v315 = vld [vmem:[%s198 + $0x320] sm:$0xff]
      %v316 = vld [vmem:[%s198 + $0x328] sm:$0xff]
      %v317 = vld [vmem:[%s198 + $0x330] sm:$0xff]
      %v318 = vld [vmem:[%s198 + $0x338] sm:$0xff]
      %v319 = vld [vmem:[%s198 + $0x340] sm:$0xff]
      %v320 = vld [vmem:[%s198 + $0x348] sm:$0xff]
      %v321 = vld [vmem:[%s198 + $0x350] sm:$0xff]
      %v322 = vld [vmem:[%s198 + $0x358] sm:$0xff]
      %v323 = vld [vmem:[%s2] sm:$0xff]
      %v324 = vld [vmem:[%s2 + $0x8] sm:$0xff]
      %326 = vset.pattern.permute.xlu0 0
      %327 = vperm.xlu0 %326, %v323
      %v328 = vpop.permute.xlu0 %327
      %331 = vset.pattern.permute.xlu0 0
      %332 = vperm.xlu0 %331, %v324
      %v333 = vpop.permute.xlu0 %332
      %v339 = vunpack.c.l.b16 %v211
      %v340 = vunpack.c.h.b16 %v211
      %v341 = vunpack.c.l.b16 %v212
      %v342 = vunpack.c.h.b16 %v212
      %v343 = vunpack.c.l.b16 %v213
      %v344 = vunpack.c.h.b16 %v213
      %v345 = vunpack.c.l.b16 %v214
      %v346 = vunpack.c.h.b16 %v214
      %v347 = vpack.c.b16 %v343, %v339
      %v348 = vpack.c.b16 %v344, %v340
      %v349 = vpack.c.b16 %v345, %v341
      %v350 = vpack.c.b16 %v346, %v342
      %v462 = vunpack.c.l.b16 %v215
      %v463 = vunpack.c.h.b16 %v215
      %v464 = vunpack.c.l.b16 %v216
      %v465 = vunpack.c.h.b16 %v216
      %v466 = vunpack.c.l.b16 %v217
      %v467 = vunpack.c.h.b16 %v217
      %v468 = vunpack.c.l.b16 %v218
      %v469 = vunpack.c.h.b16 %v218
      %v470 = vunpack.c.l.b16 %v219
      %v471 = vunpack.c.h.b16 %v219
      %v472 = vunpack.c.l.b16 %v220
      %v473 = vunpack.c.h.b16 %v220
      %v474 = vunpack.c.l.b16 %v221
      %v475 = vunpack.c.h.b16 %v221
      %v476 = vunpack.c.l.b16 %v222
      %v477 = vunpack.c.h.b16 %v222
      %v478 = vunpack.c.l.b16 %v223
      %v479 = vunpack.c.h.b16 %v223
      %v480 = vunpack.c.l.b16 %v224
      %v481 = vunpack.c.h.b16 %v224
      %v482 = vunpack.c.l.b16 %v225
      %v483 = vunpack.c.h.b16 %v225
      %v484 = vunpack.c.l.b16 %v226
      %v485 = vunpack.c.h.b16 %v226
      %v486 = vunpack.c.l.b16 %v227
      %v487 = vunpack.c.h.b16 %v227
      %v488 = vunpack.c.l.b16 %v228
      %v489 = vunpack.c.h.b16 %v228
      %v490 = vunpack.c.l.b16 %v229
      %v491 = vunpack.c.h.b16 %v229
      %v492 = vunpack.c.l.b16 %v230
      %v493 = vunpack.c.h.b16 %v230
      %v494 = vunpack.c.l.b16 %v231
      %v495 = vunpack.c.h.b16 %v231
      %v496 = vunpack.c.l.b16 %v232
      %v497 = vunpack.c.h.b16 %v232
      %v498 = vunpack.c.l.b16 %v233
      %v499 = vunpack.c.h.b16 %v233
      %v500 = vunpack.c.l.b16 %v234
      %v501 = vunpack.c.h.b16 %v234
      %v502 = vunpack.c.l.b16 %v235
      %v503 = vunpack.c.h.b16 %v235
      %v504 = vunpack.c.l.b16 %v236
      %v505 = vunpack.c.h.b16 %v236
      %v506 = vunpack.c.l.b16 %v237
      %v507 = vunpack.c.h.b16 %v237
      %v508 = vunpack.c.l.b16 %v238
      %v509 = vunpack.c.h.b16 %v238
      %v510 = vunpack.c.l.b16 %v239
      %v511 = vunpack.c.h.b16 %v239
      %v512 = vunpack.c.l.b16 %v240
      %v513 = vunpack.c.h.b16 %v240
      %v514 = vunpack.c.l.b16 %v241
      %v515 = vunpack.c.h.b16 %v241
      %v516 = vunpack.c.l.b16 %v242
      %v517 = vunpack.c.h.b16 %v242
      %v518 = vunpack.c.l.b16 %v243
      %v519 = vunpack.c.h.b16 %v243
      %v520 = vunpack.c.l.b16 %v244
      %v521 = vunpack.c.h.b16 %v244
      %v522 = vunpack.c.l.b16 %v245
      %v523 = vunpack.c.h.b16 %v245
      %v524 = vunpack.c.l.b16 %v246
      %v525 = vunpack.c.h.b16 %v246
      %v526 = vunpack.c.l.b16 %v247
      %v527 = vunpack.c.h.b16 %v247
      %v528 = vunpack.c.l.b16 %v248
      %v529 = vunpack.c.h.b16 %v248
      %v530 = vunpack.c.l.b16 %v249
      %v531 = vunpack.c.h.b16 %v249
      %v532 = vunpack.c.l.b16 %v250
      %v533 = vunpack.c.h.b16 %v250
      %v534 = vunpack.c.l.b16 %v251
      %v535 = vunpack.c.h.b16 %v251
      %v536 = vunpack.c.l.b16 %v252
      %v537 = vunpack.c.h.b16 %v252
      %v538 = vunpack.c.l.b16 %v253
      %v539 = vunpack.c.h.b16 %v253
      %v540 = vunpack.c.l.b16 %v254
      %v541 = vunpack.c.h.b16 %v254
      %v542 = vunpack.c.l.b16 %v255
      %v543 = vunpack.c.h.b16 %v255
      %v544 = vunpack.c.l.b16 %v256
      %v545 = vunpack.c.h.b16 %v256
      %v546 = vunpack.c.l.b16 %v257
      %v547 = vunpack.c.h.b16 %v257
      %v548 = vunpack.c.l.b16 %v258
      %v549 = vunpack.c.h.b16 %v258
      %v550 = vunpack.c.l.b16 %v259
      %v551 = vunpack.c.h.b16 %v259
      %v552 = vunpack.c.l.b16 %v260
      %v553 = vunpack.c.h.b16 %v260
      %v554 = vunpack.c.l.b16 %v261
      %v555 = vunpack.c.h.b16 %v261
      %v556 = vunpack.c.l.b16 %v262
      %v557 = vunpack.c.h.b16 %v262
      %v558 = vunpack.c.l.b16 %v263
      %v559 = vunpack.c.h.b16 %v263
      %v560 = vunpack.c.l.b16 %v264
      %v561 = vunpack.c.h.b16 %v264
      %v562 = vunpack.c.l.b16 %v265
      %v563 = vunpack.c.h.b16 %v265
      %v564 = vunpack.c.l.b16 %v266
      %v565 = vunpack.c.h.b16 %v266
      %v566 = vunpack.c.l.b16 %v267
      %v567 = vunpack.c.h.b16 %v267
      %v568 = vunpack.c.l.b16 %v268
      %v569 = vunpack.c.h.b16 %v268
      %v570 = vunpack.c.l.b16 %v269
      %v571 = vunpack.c.h.b16 %v269
      %v572 = vunpack.c.l.b16 %v270
      %v573 = vunpack.c.h.b16 %v270
      %v574 = vunpack.c.l.b16 %v271
      %v575 = vunpack.c.h.b16 %v271
      %v576 = vunpack.c.l.b16 %v272
      %v577 = vunpack.c.h.b16 %v272
      %v578 = vunpack.c.l.b16 %v273
      %v579 = vunpack.c.h.b16 %v273
      %v580 = vunpack.c.l.b16 %v274
      %v581 = vunpack.c.h.b16 %v274
      %v582 = vunpack.c.l.b16 %v275
      %v583 = vunpack.c.h.b16 %v275
      %v584 = vunpack.c.l.b16 %v276
      %v585 = vunpack.c.h.b16 %v276
      %v586 = vunpack.c.l.b16 %v277
      %v587 = vunpack.c.h.b16 %v277
      %v588 = vunpack.c.l.b16 %v278
      %v589 = vunpack.c.h.b16 %v278
      %v590 = vunpack.c.l.b16 %v279
      %v591 = vunpack.c.h.b16 %v279
      %v592 = vunpack.c.l.b16 %v280
      %v593 = vunpack.c.h.b16 %v280
      %v594 = vunpack.c.l.b16 %v281
      %v595 = vunpack.c.h.b16 %v281
      %v596 = vunpack.c.l.b16 %v282
      %v597 = vunpack.c.h.b16 %v282
      %v598 = vunpack.c.l.b16 %v283
      %v599 = vunpack.c.h.b16 %v283
      %v600 = vunpack.c.l.b16 %v284
      %v601 = vunpack.c.h.b16 %v284
      %v602 = vunpack.c.l.b16 %v285
      %v603 = vunpack.c.h.b16 %v285
      %v604 = vunpack.c.l.b16 %v286
      %v605 = vunpack.c.h.b16 %v286
      %v606 = vunpack.c.l.b16 %v287
      %v607 = vunpack.c.h.b16 %v287
      %v608 = vunpack.c.l.b16 %v288
      %v609 = vunpack.c.h.b16 %v288
      %v610 = vunpack.c.l.b16 %v289
      %v611 = vunpack.c.h.b16 %v289
      %v612 = vunpack.c.l.b16 %v290
      %v613 = vunpack.c.h.b16 %v290
      %v614 = vunpack.c.l.b16 %v291
      %v615 = vunpack.c.h.b16 %v291
      %v616 = vunpack.c.l.b16 %v292
      %v617 = vunpack.c.h.b16 %v292
      %v618 = vunpack.c.l.b16 %v293
      %v619 = vunpack.c.h.b16 %v293
      %v620 = vunpack.c.l.b16 %v294
      %v621 = vunpack.c.h.b16 %v294
      %v622 = vunpack.c.l.b16 %v295
      %v623 = vunpack.c.h.b16 %v295
      %v624 = vunpack.c.l.b16 %v296
      %v625 = vunpack.c.h.b16 %v296
      %v626 = vunpack.c.l.b16 %v297
      %v627 = vunpack.c.h.b16 %v297
      %v628 = vunpack.c.l.b16 %v298
      %v629 = vunpack.c.h.b16 %v298
      %v630 = vunpack.c.l.b16 %v299
      %v631 = vunpack.c.h.b16 %v299
      %v632 = vunpack.c.l.b16 %v300
      %v633 = vunpack.c.h.b16 %v300
      %v634 = vunpack.c.l.b16 %v301
      %v635 = vunpack.c.h.b16 %v301
      %v636 = vunpack.c.l.b16 %v302
      %v637 = vunpack.c.h.b16 %v302
      %v638 = vunpack.c.l.b16 %v303
      %v639 = vunpack.c.h.b16 %v303
      %v640 = vunpack.c.l.b16 %v304
      %v641 = vunpack.c.h.b16 %v304
      %v642 = vunpack.c.l.b16 %v305
      %v643 = vunpack.c.h.b16 %v305
      %v644 = vunpack.c.l.b16 %v306
      %v645 = vunpack.c.h.b16 %v306
      %v646 = vunpack.c.l.b16 %v307
      %v647 = vunpack.c.h.b16 %v307
      %v648 = vunpack.c.l.b16 %v308
      %v649 = vunpack.c.h.b16 %v308
      %v650 = vunpack.c.l.b16 %v309
      %v651 = vunpack.c.h.b16 %v309
      %v652 = vunpack.c.l.b16 %v310
      %v653 = vunpack.c.h.b16 %v310
      %v654 = vunpack.c.l.b16 %v311
      %v655 = vunpack.c.h.b16 %v311
      %v656 = vunpack.c.l.b16 %v312
      %v657 = vunpack.c.h.b16 %v312
      %v658 = vunpack.c.l.b16 %v313
      %v659 = vunpack.c.h.b16 %v313
      %v660 = vunpack.c.l.b16 %v314
      %v661 = vunpack.c.h.b16 %v314
      %v662 = vunpack.c.l.b16 %v315
      %v663 = vunpack.c.h.b16 %v315
      %v664 = vunpack.c.l.b16 %v316
      %v665 = vunpack.c.h.b16 %v316
      %v666 = vunpack.c.l.b16 %v317
      %v667 = vunpack.c.h.b16 %v317
      %v668 = vunpack.c.l.b16 %v318
      %v669 = vunpack.c.h.b16 %v318
      %v670 = vunpack.c.l.b16 %v319
      %v671 = vunpack.c.h.b16 %v319
      %v672 = vunpack.c.l.b16 %v320
      %v673 = vunpack.c.h.b16 %v320
      %v674 = vunpack.c.l.b16 %v321
      %v675 = vunpack.c.h.b16 %v321
      %v676 = vunpack.c.l.b16 %v322
      %v677 = vunpack.c.h.b16 %v322
      %v678 = vpack.c.b16 %v466, %v462
      %v679 = vpack.c.b16 %v467, %v463
      %v680 = vpack.c.b16 %v468, %v464
      %v681 = vpack.c.b16 %v469, %v465
      %v682 = vpack.c.b16 %v474, %v470
      %v683 = vpack.c.b16 %v475, %v471
      %v684 = vpack.c.b16 %v476, %v472
      %v685 = vpack.c.b16 %v477, %v473
      %v686 = vpack.c.b16 %v482, %v478
      %v687 = vpack.c.b16 %v483, %v479
      %v688 = vpack.c.b16 %v484, %v480
      %v689 = vpack.c.b16 %v485, %v481
      %v690 = vpack.c.b16 %v490, %v486
      %v691 = vpack.c.b16 %v491, %v487
      %v692 = vpack.c.b16 %v492, %v488
      %v693 = vpack.c.b16 %v493, %v489
      %v694 = vpack.c.b16 %v498, %v494
      %v695 = vpack.c.b16 %v499, %v495
      %v696 = vpack.c.b16 %v500, %v496
      %v697 = vpack.c.b16 %v501, %v497
      %v698 = vpack.c.b16 %v506, %v502
      %v699 = vpack.c.b16 %v507, %v503
      %v700 = vpack.c.b16 %v508, %v504
      %v701 = vpack.c.b16 %v509, %v505
      %v702 = vpack.c.b16 %v514, %v510
      %v703 = vpack.c.b16 %v515, %v511
      %v704 = vpack.c.b16 %v516, %v512
      %v705 = vpack.c.b16 %v517, %v513
      %v706 = vpack.c.b16 %v522, %v518
      %v707 = vpack.c.b16 %v523, %v519
      %v708 = vpack.c.b16 %v524, %v520
      %v709 = vpack.c.b16 %v525, %v521
      %v710 = vpack.c.b16 %v530, %v526
      %v711 = vpack.c.b16 %v531, %v527
      %v712 = vpack.c.b16 %v532, %v528
      %v713 = vpack.c.b16 %v533, %v529
      %v714 = vpack.c.b16 %v538, %v534
      %v715 = vpack.c.b16 %v539, %v535
      %v716 = vpack.c.b16 %v540, %v536
      %v717 = vpack.c.b16 %v541, %v537
      %v718 = vpack.c.b16 %v546, %v542
      %v719 = vpack.c.b16 %v547, %v543
      %v720 = vpack.c.b16 %v548, %v544
      %v721 = vpack.c.b16 %v549, %v545
      %v722 = vpack.c.b16 %v554, %v550
      %v723 = vpack.c.b16 %v555, %v551
      %v724 = vpack.c.b16 %v556, %v552
      %v725 = vpack.c.b16 %v557, %v553
      %v726 = vpack.c.b16 %v562, %v558
      %v727 = vpack.c.b16 %v563, %v559
      %v728 = vpack.c.b16 %v564, %v560
      %v729 = vpack.c.b16 %v565, %v561
      %v730 = vpack.c.b16 %v570, %v566
      %v731 = vpack.c.b16 %v571, %v567
      %v732 = vpack.c.b16 %v572, %v568
      %v733 = vpack.c.b16 %v573, %v569
      %v734 = vpack.c.b16 %v578, %v574
      %v735 = vpack.c.b16 %v579, %v575
      %v736 = vpack.c.b16 %v580, %v576
      %v737 = vpack.c.b16 %v581, %v577
      %v738 = vpack.c.b16 %v586, %v582
      %v739 = vpack.c.b16 %v587, %v583
      %v740 = vpack.c.b16 %v588, %v584
      %v741 = vpack.c.b16 %v589, %v585
      %v742 = vpack.c.b16 %v594, %v590
      %v743 = vpack.c.b16 %v595, %v591
      %v744 = vpack.c.b16 %v596, %v592
      %v745 = vpack.c.b16 %v597, %v593
      %v746 = vpack.c.b16 %v602, %v598
      %v747 = vpack.c.b16 %v603, %v599
      %v748 = vpack.c.b16 %v604, %v600
      %v749 = vpack.c.b16 %v605, %v601
      %v750 = vpack.c.b16 %v610, %v606
      %v751 = vpack.c.b16 %v611, %v607
      %v752 = vpack.c.b16 %v612, %v608
      %v753 = vpack.c.b16 %v613, %v609
      %v754 = vpack.c.b16 %v618, %v614
      %v755 = vpack.c.b16 %v619, %v615
      %v756 = vpack.c.b16 %v620, %v616
      %v757 = vpack.c.b16 %v621, %v617
      %v758 = vpack.c.b16 %v626, %v622
      %v759 = vpack.c.b16 %v627, %v623
      %v760 = vpack.c.b16 %v628, %v624
      %v761 = vpack.c.b16 %v629, %v625
      %v762 = vpack.c.b16 %v634, %v630
      %v763 = vpack.c.b16 %v635, %v631
      %v764 = vpack.c.b16 %v636, %v632
      %v765 = vpack.c.b16 %v637, %v633
      %v766 = vpack.c.b16 %v642, %v638
      %v767 = vpack.c.b16 %v643, %v639
      %v768 = vpack.c.b16 %v644, %v640
      %v769 = vpack.c.b16 %v645, %v641
      %v770 = vpack.c.b16 %v650, %v646
      %v771 = vpack.c.b16 %v651, %v647
      %v772 = vpack.c.b16 %v652, %v648
      %v773 = vpack.c.b16 %v653, %v649
      %v774 = vpack.c.b16 %v658, %v654
      %v775 = vpack.c.b16 %v659, %v655
      %v776 = vpack.c.b16 %v660, %v656
      %v777 = vpack.c.b16 %v661, %v657
      %v778 = vpack.c.b16 %v666, %v662
      %v779 = vpack.c.b16 %v667, %v663
      %v780 = vpack.c.b16 %v668, %v664
      %v781 = vpack.c.b16 %v669, %v665
      %v782 = vpack.c.b16 %v674, %v670
      %v783 = vpack.c.b16 %v675, %v671
      %v784 = vpack.c.b16 %v676, %v672
      %v785 = vpack.c.b16 %v677, %v673
      %vm894 = vcmask 392192
      %v896 = vsel %vm894, %v350, 0
      %898 = vmatprep.subr.bf16.mxu0 %v679
      %899 = vmatpush1.bf16.msra.mxu0 %v678
      %900 = vmatprep.subr.bf16.mxu0 %v683
      %901 = vmatpush1.bf16.msra.mxu0 %v682
      %902 = vmatprep.subr.bf16.mxu0 %v687
      %903 = vmatpush1.bf16.msra.mxu0 %v686
      %904 = vmatprep.subr.bf16.mxu0 %v691
      %905 = vmatpush1.bf16.msra.mxu0 %v690
      %906 = vmatprep.subr.bf16.mxu0 %v695
      %907 = vmatpush1.bf16.msra.mxu0 %v694
      %908 = vmatprep.subr.bf16.mxu0 %v699
      %909 = vmatpush1.bf16.msra.mxu0 %v698
      %910 = vmatprep.subr.bf16.mxu0 %v703
      %911 = vmatpush1.bf16.msra.mxu0 %v702
      %912 = vmatprep.subr.bf16.mxu0 %v707
      %913 = vmatpush1.bf16.msra.mxu0 %v706
      %914 = vmatprep.subr.bf16.mxu0 %v711
      %915 = vmatpush1.bf16.msra.mxu0 %v710
      %916 = vmatprep.subr.bf16.mxu0 %v715
      %917 = vmatpush1.bf16.msra.mxu0 %v714
      %918 = vmatprep.subr.bf16.mxu0 %v719
      %919 = vmatpush1.bf16.msra.mxu0 %v718
      %920 = vmatprep.subr.bf16.mxu0 %v723
      %921 = vmatpush1.bf16.msra.mxu0 %v722
      %922 = vmatprep.subr.bf16.mxu0 %v727
      %923 = vmatpush1.bf16.msra.mxu0 %v726
      %924 = vmatprep.subr.bf16.mxu0 %v731
      %925 = vmatpush1.bf16.msra.mxu0 %v730
      %926 = vmatprep.subr.bf16.mxu0 %v735
      %927 = vmatpush1.bf16.msra.mxu0 %v734
      %928 = vmatprep.subr.bf16.mxu0 %v739
      %929 = vmatpush1.bf16.msra.mxu0 %v738
      %930 = vmatprep.mubr.bf16.mxu0 %v348
      %931 = vmatmul.mubr.bf16.gmra.mrb[0].mxu0 %v347
      %v932 = vpop.f32.mrb[0].mxu0
      %v933 = vadd.f32 %v328, %v932
      %v934 = vpop.f32.mrb[0].mxu0
      %v935 = vadd.f32 %v328, %v934
      %v936 = vpop.f32.mrb[0].mxu0
      %v937 = vadd.f32 %v333, %v936
      %v938 = vpop.f32.mrb[0].mxu0
      %v939 = vadd.f32 %v333, %v938
      %940 = vdwg.mxu0
      %941 = vmatprep.subr.bf16.mxu0 %v743
      %942 = vmatpush1.bf16.msra.mxu0 %v742
      %943 = vmatprep.subr.bf16.mxu0 %v747
      %944 = vmatpush1.bf16.msra.mxu0 %v746
      %945 = vmatprep.subr.bf16.mxu0 %v751
      %946 = vmatpush1.bf16.msra.mxu0 %v750
      %947 = vmatprep.subr.bf16.mxu0 %v755
      %948 = vmatpush1.bf16.msra.mxu0 %v754
      %949 = vmatprep.subr.bf16.mxu0 %v759
      %950 = vmatpush1.bf16.msra.mxu0 %v758
      %951 = vmatprep.subr.bf16.mxu0 %v763
      %952 = vmatpush1.bf16.msra.mxu0 %v762
      %953 = vmatprep.subr.bf16.mxu0 %v767
      %954 = vmatpush1.bf16.msra.mxu0 %v766
      %955 = vmatprep.subr.bf16.mxu0 %v771
      %956 = vmatpush1.bf16.msra.mxu0 %v770
      %957 = vmatprep.subr.bf16.mxu0 %v775
      %958 = vmatpush1.bf16.msra.mxu0 %v774
      %959 = vmatprep.subr.bf16.mxu0 %v779
      %960 = vmatpush1.bf16.msra.mxu0 %v778
      %961 = vmatprep.subr.bf16.mxu0 %v783
      %962 = vmatpush1.bf16.msra.mxu0 %v782
      %963 = vmatprep.subr.bf16.mxu0 0
      %964 = vmatpush1.bf16.msra.mxu0 0
      %965 = vmatprep.subr.bf16.mxu0 0
      %966 = vmatpush1.bf16.msra.mxu0 0
      %967 = vmatprep.subr.bf16.mxu0 0
      %968 = vmatpush1.bf16.msra.mxu0 0
      %969 = vmatprep.subr.bf16.mxu0 0
      %970 = vmatpush1.bf16.msra.mxu0 0
      %971 = vmatprep.subr.bf16.mxu0 0
      %972 = vmatpush1.bf16.msra.mxu0 0
      %973 = vmatprep.mubr.bf16.mxu0 %v896
      %974 = vmatmul.mubr.bf16.gmra.mrb[0].mxu0 %v349
      %v975 = vpop.f32.mrb[0].mxu0
      %v976 = vadd.f32 %v933, %v975
      %v977 = vpop.f32.mrb[0].mxu0
      %v978 = vadd.f32 %v935, %v977
      %v979 = vpop.f32.mrb[0].mxu0
      %v980 = vadd.f32 %v937, %v979
      %v981 = vpop.f32.mrb[0].mxu0
      %v982 = vadd.f32 %v939, %v981
      %983 = vdwg.mxu0
      %984 = vmatprep.subr.bf16.mxu0 %v681
      %985 = vmatpush1.bf16.msra.mxu0 %v680
      %986 = vmatprep.subr.bf16.mxu0 %v685
      %987 = vmatpush1.bf16.msra.mxu0 %v684
      %988 = vmatprep.subr.bf16.mxu0 %v689
      %989 = vmatpush1.bf16.msra.mxu0 %v688
      %990 = vmatprep.subr.bf16.mxu0 %v693
      %991 = vmatpush1.bf16.msra.mxu0 %v692
      %992 = vmatprep.subr.bf16.mxu0 %v697
      %993 = vmatpush1.bf16.msra.mxu0 %v696
      %994 = vmatprep.subr.bf16.mxu0 %v701
      %995 = vmatpush1.bf16.msra.mxu0 %v700
      %996 = vmatprep.subr.bf16.mxu0 %v705
      %997 = vmatpush1.bf16.msra.mxu0 %v704
      %998 = vmatprep.subr.bf16.mxu0 %v709
      %999 = vmatpush1.bf16.msra.mxu0 %v708
      %1000 = vmatprep.subr.bf16.mxu0 %v713
      %1001 = vmatpush1.bf16.msra.mxu0 %v712
      %1002 = vmatprep.subr.bf16.mxu0 %v717
      %1003 = vmatpush1.bf16.msra.mxu0 %v716
      %1004 = vmatprep.subr.bf16.mxu0 %v721
      %1005 = vmatpush1.bf16.msra.mxu0 %v720
      %1006 = vmatprep.subr.bf16.mxu0 %v725
      %1007 = vmatpush1.bf16.msra.mxu0 %v724
      %1008 = vmatprep.subr.bf16.mxu0 %v729
      %1009 = vmatpush1.bf16.msra.mxu0 %v728
      %1010 = vmatprep.subr.bf16.mxu0 %v733
      %1011 = vmatpush1.bf16.msra.mxu0 %v732
      %1012 = vmatprep.subr.bf16.mxu0 %v737
      %1013 = vmatpush1.bf16.msra.mxu0 %v736
      %1014 = vmatprep.subr.bf16.mxu0 %v741
      %1015 = vmatpush1.bf16.msra.mxu0 %v740
      %1016 = vmatprep.mubr.bf16.mxu0 %v348
      %1017 = vmatmul.mubr.bf16.gmra.mrb[0].mxu0 %v347
      %v1018 = vpop.f32.mrb[0].mxu0
      %v1019 = vadd.f32 %v328, %v1018
      %v1020 = vpop.f32.mrb[0].mxu0
      %v1021 = vadd.f32 %v328, %v1020
      %v1022 = vpop.f32.mrb[0].mxu0
      %v1023 = vadd.f32 %v333, %v1022
      %v1024 = vpop.f32.mrb[0].mxu0
      %v1025 = vadd.f32 %v333, %v1024
      %1026 = vdwg.mxu0
      %1027 = vmatprep.subr.bf16.mxu0 %v745
      %1028 = vmatpush1.bf16.msra.mxu0 %v744
      %1029 = vmatprep.subr.bf16.mxu0 %v749
      %1030 = vmatpush1.bf16.msra.mxu0 %v748
      %1031 = vmatprep.subr.bf16.mxu0 %v753
      %1032 = vmatpush1.bf16.msra.mxu0 %v752
      %1033 = vmatprep.subr.bf16.mxu0 %v757
      %1034 = vmatpush1.bf16.msra.mxu0 %v756
      %1035 = vmatprep.subr.bf16.mxu0 %v761
      %1036 = vmatpush1.bf16.msra.mxu0 %v760
      %1037 = vmatprep.subr.bf16.mxu0 %v765
      %1038 = vmatpush1.bf16.msra.mxu0 %v764
      %1039 = vmatprep.subr.bf16.mxu0 %v769
      %1040 = vmatpush1.bf16.msra.mxu0 %v768
      %1041 = vmatprep.subr.bf16.mxu0 %v773
      %1042 = vmatpush1.bf16.msra.mxu0 %v772
      %1043 = vmatprep.subr.bf16.mxu0 %v777
      %1044 = vmatpush1.bf16.msra.mxu0 %v776
      %1045 = vmatprep.subr.bf16.mxu0 %v781
      %1046 = vmatpush1.bf16.msra.mxu0 %v780
      %1047 = vmatprep.subr.bf16.mxu0 %v785
      %1048 = vmatpush1.bf16.msra.mxu0 %v784
      %1049 = vmatprep.subr.bf16.mxu0 0
      %1050 = vmatpush1.bf16.msra.mxu0 0
      %1051 = vmatprep.subr.bf16.mxu0 0
      %1052 = vmatpush1.bf16.msra.mxu0 0
      %1053 = vmatprep.subr.bf16.mxu0 0
      %1054 = vmatpush1.bf16.msra.mxu0 0
      %1055 = vmatprep.subr.bf16.mxu0 0
      %1056 = vmatpush1.bf16.msra.mxu0 0
      %1057 = vmatprep.subr.bf16.mxu0 0
      %1058 = vmatpush1.bf16.msra.mxu0 0
      %1059 = vmatprep.mubr.bf16.mxu0 %v896
      %1060 = vmatmul.mubr.bf16.gmra.mrb[0].mxu0 %v349
      %v1061 = vpop.f32.mrb[0].mxu0
      %v1062 = vadd.f32 %v1019, %v1061
      %v1063 = vpop.f32.mrb[0].mxu0
      %v1064 = vadd.f32 %v1021, %v1063
      %v1065 = vpop.f32.mrb[0].mxu0
      %v1066 = vadd.f32 %v1023, %v1065
      %v1067 = vpop.f32.mrb[0].mxu0
      %v1068 = vadd.f32 %v1025, %v1067
      %1069 = vdwg.mxu0
      %v1070 = vmax.f32 %v976, 0.0
      %v1071 = vmax.f32 %v978, 0.0
      %v1072 = vmax.f32 %v1062, 0.0
      %v1073 = vmax.f32 %v1064, 0.0
      %v1074 = vmax.f32 %v980, 0.0
      %v1075 = vmax.f32 %v982, 0.0
      %v1076 = vmax.f32 %v1066, 0.0
      %v1077 = vmax.f32 %v1068, 0.0
      %v1078 = vpack.c.bf16 %v1074, %v1070
      %v1079 = vpack.c.bf16 %v1075, %v1071
      %v1080 = vpack.c.bf16 %v1076, %v1072
      %v1081 = vpack.c.bf16 %v1077, %v1073
      %v1086 = vunpack.c.l.b16 %v1078
      %v1087 = vunpack.c.l.b16 %v1079
      %v1088 = vunpack.c.l.b16 %v1080
      %v1089 = vunpack.c.l.b16 %v1081
      %v1090 = vunpack.c.h.b16 %v1078
      %v1091 = vunpack.c.h.b16 %v1079
      %v1092 = vunpack.c.h.b16 %v1080
      %v1093 = vunpack.c.h.b16 %v1081
      %v1094 = vpack.c.b16 %v1087, %v1086
      %v1095 = vpack.c.b16 %v1089, %v1088
      %v1096 = vpack.c.b16 %v1091, %v1090
      %v1097 = vpack.c.b16 %v1093, %v1092
      %1102 = vst [vmem:[%s208] sm:$0xff] %v1094
      %1103 = vst [vmem:[%s208 + $0x8] sm:$0xff] %v1095
      %1104 = vst [vmem:[%s208 + $0x10] sm:$0xff] %v1096
      %1105 = vst [vmem:[%s208 + $0x18] sm:$0xff] %v1097
      %s1106 = smul.u32 4, %s19
      %p1107 = scmp.lt.s32.totalorder %s18, 1
      %s1108 = scalar_select %p1107, %s18, 1
      %p1109 = scmp.lt.s32.totalorder %s1106, 3
      %s1110 = scalar_select %p1109, %s1106, 3
      %s1111 = smul.addr %s1108, 8
      %s1112 = sadd.s32 %s1110, %s1111
      %s1113 = smul.addr %s1112, 4
      %s1114 = scalar_lea.vmem %s3, %s1113
      // Predicated region
      $region33: #{decoder_forward.16} parent=31 // pred_check
        %p1115 = pneg %p116
      $region34: #{decoder_forward.16} parent=31 // pred_check_branch
        %1117 = sbr.rel (%p1115) target = $region36
      $region35: #{decoder_forward.16} parent=31 // pred_region
        %s1118 = smul.u32 4, %s19
      $region36: #{decoder_forward.16} parent=31 // pred_fallthru
        _
    $region32: #{decoder_forward.16} parent=5 // pred_fallthru
      _
    %p1119 = scmp.le.s32.totalorder 2, %s9
    // Predicated region
    $region37: #{decoder_forward.16} parent=5 // pred_check
      %p1120 = pneg %p1119
    $region38: #{decoder_forward.16} parent=5 // pred_check_branch
      %1122 = sbr.rel (%p1120) target = $region40
    $region39: #{decoder_forward.16} parent=5 // pred_region
      %s1123 = ssub.s32 %s9, 2
      // Predicated region
      $region41: #{decoder_forward.16} parent=39 // pred_check
        %p1124 = pneg %p122
      $region42: #{decoder_forward.16} parent=39 // pred_check_branch
        %1126 = sbr.rel (%p1124) target = $region44
      $region43: #{decoder_forward.16} parent=39 // pred_region
        %s1127 = smul.u32 4, %s21
        %p1128 = scmp.lt.s32.totalorder %s20, 1
        %s1129 = scalar_select %p1128, %s20, 1
        %p1130 = scmp.lt.s32.totalorder %s1127, 3
        %s1131 = scalar_select %p1130, %s1127, 3
        %s1132 = smul.addr %s1129, 8
        %s1133 = sadd.s32 %s1131, %s1132
        %s1134 = smul.addr %s1133, 4
        %s1135 = scalar_lea.vmem %s3, %s1134
      $region44: #{decoder_forward.16} parent=39 // pred_fallthru
        _
    $region40: #{decoder_forward.16} parent=5 // pred_fallthru
      _
  $region6: #{decoder_forward.16} parent=0 // loop_footer
    %s13 = sadd.s32 1, %s9
  $region7: #{decoder_forward.16} parent=0 // loop_footer_branch
    %8 = sbr.rel target = $region3
  $region8: #{decoder_forward.16} parent=0 // loop_exit
    _

// kernel: decoder_forward.17
$region0: #{decoder_forward.17}
  #allocation0 [shape = 'u32[]', space=smem, size = 0x4, offset = 0x4, fixed_abs, tag = 'smem constant byte address 0x4 - core index']
  #allocation1 [shape = 'u32[144,128]{1,0:T(1,128)}', space=vmem, size = 0x12000, scoped, tag = 'internal scratch']
  %s0 = inlined_call_operand.vmem [shape: bf16[2,432,512], index: 0, kind: input, shape index: {}]
  %s1 = inlined_call_operand.vmem [shape: bf16[16,432], index: 1, kind: input, shape index: {}]
  %s2 = inlined_call_operand.vmem [shape: f32[16,1], index: 2, kind: input, shape index: {}]
  %s3 = inlined_call_operand.vmem [shape: bf16[2,16,512], index: 3, kind: input, shape index: {}]
  %s4 = inlined_call_operand.vmem [shape: bf16[2,16,512], index: 4, kind: output, shape index: {}]
  %s5 = sld [smem:[#allocation0]]
  $region49: #{decoder_forward.17} parent=0
    _
  %s7 = ssub.s32 1, %s5
  %s8 = scalar_select 0, %s7, %s5
  loop: start=0, step=1, limit=4
  $region2: #{decoder_forward.17} parent=0 // loop_pre_header
    _
  $region3: #{decoder_forward.17} parent=0 // loop_header
    %s10 = sphi 0, %s14
    %p11 = scmp.ge.s32.totalorder %s10, 4
    %s17 = sphi 0, %s29
    %s18 = sphi 0, %s25
    %s19 = sphi 0, %s17
    %s20 = sphi 0, %s18
    %s21 = sphi 0, %s19
    %s22 = sphi 0, %s20
    %s34 = sphi 0, %s36
    %s37 = sphi 0, %s34
    %s38 = sphi 0, %s37
    %s54 = sphi 0, %s38
    %s58 = sphi 0, %s58
    %s60 = sphi 0, %s58
    %s61 = sphi 0, %s60
    %s75 = sphi 0, %s61
    %s79 = sphi 0, %s79
    %s81 = sphi 0, %s79
    %s82 = sphi 0, %s81
    %s96 = sphi 0, %s82
    %s104 = sphi 0, %s106
    %s107 = sphi 0, %s104
    %s108 = sphi 0, %s107
    %s124 = sphi 0, %s108
    %s132 = sphi 0, %s134
    %s135 = sphi 0, %s132
    %s136 = sphi 0, %s135
    %s152 = sphi 0, %s136
  $region4: #{decoder_forward.17} parent=0 // loop_header_branch
    %13 = sbr.rel (%p11) target = $region8
  $region5: #{decoder_forward.17} parent=0 // loop_body
    %s15 = ssub.s32 %s10, 1
    %s16 = ssub.s32 %s10, 2
    %s23 = sadd.s32 1, %s18
    %p24 = scmp.ge.s32.totalorder %s23, 1
    %s25 = scalar_select %p24, 0, %s23
    %s26 = sadd.s32 1, %s17
    %s27 = scalar_select %p24, %s26, %s17
    %p28 = scmp.ge.s32.totalorder %s27, 2
    %s29 = scalar_select %p28, 0, %s27
    %s30 = ssub.s32 %s17, %s29
    %s31 = ssub.s32 %s18, %s25
    %s32 = sor.u32 %s30, %s31
    %p33 = scmp.eq.s32.totalorder %s32, 0
    %s35 = sadd.s32 %s34, 1
    %s36 = scalar_select %p33, %s34, %s35
    %p39 = pneg %p33
    %p40 = scmp.eq.s32.totalorder %s10, 1
    %p41 = por %p39, %p40
    %p42 = scmp.ne.s32.totalorder %s34, %s37
    %p43 = scmp.eq.s32.totalorder %s10, 0
    %p44 = por %p42, %p43
    %p45 = scmp.ne.s32.totalorder %s34, %s37
    %p46 = scmp.eq.s32.totalorder %s15, 1
    %p47 = por %p45, %p46
    %p48 = scmp.ne.s32.totalorder %s37, %s38
    %p49 = scmp.eq.s32.totalorder %s15, 0
    %p50 = por %p48, %p49
    %p51 = scmp.ne.s32.totalorder %s37, %s38
    %p52 = scmp.eq.s32.totalorder %s16, 1
    %p53 = por %p51, %p52
    %p55 = scmp.ne.s32.totalorder %s38, %s54
    %p56 = scmp.eq.s32.totalorder %s16, 0
    %p57 = por %p55, %p56
    %s59 = sadd.s32 %s58, 1
    %p62 = scmp.eq.s32.totalorder %s10, 1
    %p63 = scmp.ne.s32.totalorder %s58, %s60
    %p64 = scmp.eq.s32.totalorder %s10, 0
    %p65 = por %p63, %p64
    %p66 = scmp.ne.s32.totalorder %s58, %s60
    %p67 = scmp.eq.s32.totalorder %s15, 1
    %p68 = por %p66, %p67
    %p69 = scmp.ne.s32.totalorder %s60, %s61
    %p70 = scmp.eq.s32.totalorder %s15, 0
    %p71 = por %p69, %p70
    %p72 = scmp.ne.s32.totalorder %s60, %s61
    %p73 = scmp.eq.s32.totalorder %s16, 1
    %p74 = por %p72, %p73
    %p76 = scmp.ne.s32.totalorder %s61, %s75
    %p77 = scmp.eq.s32.totalorder %s16, 0
    %p78 = por %p76, %p77
    %s80 = sadd.s32 %s79, 1
    %p83 = scmp.eq.s32.totalorder %s10, 1
    %p84 = scmp.ne.s32.totalorder %s79, %s81
    %p85 = scmp.eq.s32.totalorder %s10, 0
    %p86 = por %p84, %p85
    %p87 = scmp.ne.s32.totalorder %s79, %s81
    %p88 = scmp.eq.s32.totalorder %s15, 1
    %p89 = por %p87, %p88
    %p90 = scmp.ne.s32.totalorder %s81, %s82
    %p91 = scmp.eq.s32.totalorder %s15, 0
    %p92 = por %p90, %p91
    %p93 = scmp.ne.s32.totalorder %s81, %s82
    %p94 = scmp.eq.s32.totalorder %s16, 1
    %p95 = por %p93, %p94
    %p97 = scmp.ne.s32.totalorder %s82, %s96
    %p98 = scmp.eq.s32.totalorder %s16, 0
    %p99 = por %p97, %p98
    %s100 = ssub.s32 %s17, %s29
    %s101 = ssub.s32 %s18, %s25
    %s102 = sor.u32 %s100, %s101
    %p103 = scmp.eq.s32.totalorder %s102, 0
    %s105 = sadd.s32 %s104, 1
    %s106 = scalar_select %p103, %s104, %s105
    %p109 = pneg %p103
    %p110 = scmp.eq.s32.totalorder %s10, 1
    %p111 = por %p109, %p110
    %p112 = scmp.ne.s32.totalorder %s104, %s107
    %p113 = scmp.eq.s32.totalorder %s10, 0
    %p114 = por %p112, %p113
    %p115 = scmp.ne.s32.totalorder %s104, %s107
    %p116 = scmp.eq.s32.totalorder %s15, 1
    %p117 = por %p115, %p116
    %p118 = scmp.ne.s32.totalorder %s107, %s108
    %p119 = scmp.eq.s32.totalorder %s15, 0
    %p120 = por %p118, %p119
    %p121 = scmp.ne.s32.totalorder %s107, %s108
    %p122 = scmp.eq.s32.totalorder %s16, 1
    %p123 = por %p121, %p122
    %p125 = scmp.ne.s32.totalorder %s108, %s124
    %p126 = scmp.eq.s32.totalorder %s16, 0
    %p127 = por %p125, %p126
    %s128 = ssub.s32 %s17, %s29
    %s129 = ssub.s32 %s18, %s25
    %s130 = sor.u32 %s128, %s129
    %p131 = scmp.eq.s32.totalorder %s130, 0
    %s133 = sadd.s32 %s132, 1
    %s134 = scalar_select %p131, %s132, %s133
    %p137 = pneg %p131
    %p138 = scmp.eq.s32.totalorder %s10, 1
    %p139 = por %p137, %p138
    %p140 = scmp.ne.s32.totalorder %s132, %s135
    %p141 = scmp.eq.s32.totalorder %s10, 0
    %p142 = por %p140, %p141
    %p143 = scmp.ne.s32.totalorder %s132, %s135
    %p144 = scmp.eq.s32.totalorder %s15, 1
    %p145 = por %p143, %p144
    %p146 = scmp.ne.s32.totalorder %s135, %s136
    %p147 = scmp.eq.s32.totalorder %s15, 0
    %p148 = por %p146, %p147
    %p149 = scmp.ne.s32.totalorder %s135, %s136
    %p150 = scmp.eq.s32.totalorder %s16, 1
    %p151 = por %p149, %p150
    %p153 = scmp.ne.s32.totalorder %s136, %s152
    %p154 = scmp.eq.s32.totalorder %s16, 0
    %p155 = por %p153, %p154
    %p156 = scmp.le.s32.totalorder 1, %s10
    %p157 = scmp.lt.s32.totalorder %s10, 3
    %p158 = pnand %p156, %p157
    %p159 = pneg %p158
    // Predicated region
    $region9: #{decoder_forward.17} parent=5 // pred_check
      _
    $region10: #{decoder_forward.17} parent=5 // pred_check_branch
      %161 = sbr.rel (%p158) target = $region12
    $region11: #{decoder_forward.17} parent=5 // pred_region
      %s162 = ssub.s32 %s10, 1
      // Predicated region
      $region13: #{decoder_forward.17} parent=11 // pred_check
        %p163 = pneg %p71
      $region14: #{decoder_forward.17} parent=11 // pred_check_branch
        %165 = sbr.rel (%p163) target = $region16
      $region15: #{decoder_forward.17} parent=11 // pred_region
        _
      $region16: #{decoder_forward.17} parent=11 // pred_fallthru
        _
      // Predicated region
      $region17: #{decoder_forward.17} parent=11 // pred_check
        %p166 = pneg %p92
      $region18: #{decoder_forward.17} parent=11 // pred_check_branch
        %168 = sbr.rel (%p166) target = $region20
      $region19: #{decoder_forward.17} parent=11 // pred_region
        _
      $region20: #{decoder_forward.17} parent=11 // pred_fallthru
        _
    $region12: #{decoder_forward.17} parent=5 // pred_fallthru
      _
    %p169 = scmp.lt.s32.totalorder %s10, 2
    // Predicated region
    $region21: #{decoder_forward.17} parent=5 // pred_check
      %p170 = pneg %p169
    $region22: #{decoder_forward.17} parent=5 // pred_check_branch
      %172 = sbr.rel (%p170) target = $region24
    $region23: #{decoder_forward.17} parent=5 // pred_region
      // Predicated region
      $region25: #{decoder_forward.17} parent=23 // pred_check
        %p173 = pneg %p44
      $region26: #{decoder_forward.17} parent=23 // pred_check_branch
        %175 = sbr.rel (%p173) target = $region28
      $region27: #{decoder_forward.17} parent=23 // pred_region
        %s176 = smul.u32 4, %s18
        %p177 = scmp.lt.s32.totalorder %s17, 1
        %s178 = scalar_select %p177, %s17, 1
        %p179 = scmp.lt.s32.totalorder %s176, 3
        %s180 = scalar_select %p179, %s176, 3
        %s181 = smul.addr %s178, 216
        %s182 = sadd.s32 %s180, %s181
        %s183 = smul.addr %s182, 4
        %s184 = scalar_lea.vmem %s0, %s183
        %s185 = smul.u32 4, %s18
      $region28: #{decoder_forward.17} parent=23 // pred_fallthru
        _
      // Predicated region
      $region29: #{decoder_forward.17} parent=23 // pred_check
        %p186 = pneg %p114
      $region30: #{decoder_forward.17} parent=23 // pred_check_branch
        %188 = sbr.rel (%p186) target = $region32
      $region31: #{decoder_forward.17} parent=23 // pred_region
        %s189 = smul.u32 4, %s18
        %p190 = scmp.lt.s32.totalorder %s17, 1
        %s191 = scalar_select %p190, %s17, 1
        %p192 = scmp.lt.s32.totalorder %s189, 3
        %s193 = scalar_select %p192, %s189, 3
        %s194 = smul.addr %s191, 8
        %s195 = sadd.s32 %s193, %s194
        %s196 = smul.addr %s195, 4
        %s197 = scalar_lea.vmem %s3, %s196
        %s198 = smul.u32 4, %s18
      $region32: #{decoder_forward.17} parent=23 // pred_fallthru
        _
    $region24: #{decoder_forward.17} parent=5 // pred_fallthru
      _
    %p199 = scmp.le.s32.totalorder 1, %s10
    %p200 = scmp.lt.s32.totalorder %s10, 3
    %p201 = pnand %p199, %p200
    %p202 = pneg %p201
    // Predicated region
    $region33: #{decoder_forward.17} parent=5 // pred_check
      _
    $region34: #{decoder_forward.17} parent=5 // pred_check_branch
      %204 = sbr.rel (%p201) target = $region36
    $region35: #{decoder_forward.17} parent=5 // pred_region
      %s205 = ssub.s32 %s10, 1
      %s206 = smul.u32 4, %s20
      %p207 = scmp.lt.s32.totalorder %s19, 1
      %s208 = scalar_select %p207, %s19, 1
      %p209 = scmp.lt.s32.totalorder %s206, 3
      %s210 = scalar_select %p209, %s206, 3
      %s211 = smul.addr %s208, 216
      %s212 = sadd.s32 %s210, %s211
      %s213 = smul.addr %s212, 4
      %s214 = scalar_lea.vmem %s0, %s213
      %p215 = pneg %p50
      %p216 = pneg %p47
      %p217 = pneg %p71
      %p218 = pneg %p68
      %p219 = pneg %p92
      %p220 = pneg %p89
      %s221 = smul.u32 4, %s20
      %p222 = scmp.lt.s32.totalorder %s19, 1
      %s223 = scalar_select %p222, %s19, 1
      %p224 = scmp.lt.s32.totalorder %s221, 3
      %s225 = scalar_select %p224, %s221, 3
      %s226 = smul.addr %s223, 8
      %s227 = sadd.s32 %s225, %s226
      %s228 = smul.addr %s227, 4
      %s229 = scalar_lea.vmem %s3, %s228
      %p230 = pneg %p120
      %p231 = pneg %p117
      %p232 = pneg %p148
      %p233 = pneg %p145
      %s234 = smul.u32 4, %s20
      %p235 = scmp.lt.s32.totalorder %s19, 1
      %s236 = scalar_select %p235, %s19, 1
      %p237 = scmp.lt.s32.totalorder %s234, 3
      %s238 = scalar_select %p237, %s234, 3
      %s239 = smul.addr %s236, 8
      %s240 = sadd.s32 %s238, %s239
      %s241 = smul.addr %s240, 4
      %s242 = scalar_lea.vmem %s4, %s241
      %s243 = smul.u32 4, %s20
      %p244 = scmp.lt.s32.totalorder %s19, 1
      %s245 = scalar_select %p244, %s19, 1
      %p246 = scmp.lt.s32.totalorder %s243, 3
      %s247 = scalar_select %p246, %s243, 3
      %s248 = smul.addr %s245, 216
      %s249 = sadd.s32 %s247, %s248
      %s250 = smul.addr %s249, 4
      %s251 = scalar_lea.vmem %s0, %s250
      %s252 = smul.u32 4, %s20
      %s253 = smul.u32 4, %s20
      %p254 = scmp.lt.s32.totalorder %s19, 1
      %s255 = scalar_select %p254, %s19, 1
      %p256 = scmp.lt.s32.totalorder %s253, 3
      %s257 = scalar_select %p256, %s253, 3
      %s258 = smul.addr %s255, 8
      %s259 = sadd.s32 %s257, %s258
      %s260 = smul.addr %s259, 4
      %s261 = scalar_lea.vmem %s3, %s260
      %s262 = smul.u32 4, %s20
      %s263 = smul.u32 4, %s20
      %p264 = scmp.lt.s32.totalorder %s19, 1
      %s265 = scalar_select %p264, %s19, 1
      %p266 = scmp.lt.s32.totalorder %s263, 3
      %s267 = scalar_select %p266, %s263, 3
      %s268 = smul.addr %s265, 8
      %s269 = sadd.s32 %s267, %s268
      %s270 = smul.addr %s269, 4
      %s271 = scalar_lea.vmem %s4, %s270
      %s272 = smul.u32 4, %s20
      %v274 = vld [vmem:[%s1] sm:$0xff]
      %v275 = vld [vmem:[%s1 + $0x8] sm:$0xff]
      %v276 = vld [vmem:[%s1 + $0x10] sm:$0xff]
      %v277 = vld [vmem:[%s1 + $0x18] sm:$0xff]
      %v278 = vld [vmem:[%s251] sm:$0xff]
      %v279 = vld [vmem:[%s251 + $0x8] sm:$0xff]
      %v280 = vld [vmem:[%s251 + $0x10] sm:$0xff]
      %v281 = vld [vmem:[%s251 + $0x18] sm:$0xff]
      %v282 = vld [vmem:[%s251 + $0x20] sm:$0xff]
      %v283 = vld [vmem:[%s251 + $0x28] sm:$0xff]
      %v284 = vld [vmem:[%s251 + $0x30] sm:$0xff]
      %v285 = vld [vmem:[%s251 + $0x38] sm:$0xff]
      %v286 = vld [vmem:[%s251 + $0x40] sm:$0xff]
      %v287 = vld [vmem:[%s251 + $0x48] sm:$0xff]
      %v288 = vld [vmem:[%s251 + $0x50] sm:$0xff]
      %v289 = vld [vmem:[%s251 + $0x58] sm:$0xff]
      %v290 = vld [vmem:[%s251 + $0x60] sm:$0xff]
      %v291 = vld [vmem:[%s251 + $0x68] sm:$0xff]
      %v292 = vld [vmem:[%s251 + $0x70] sm:$0xff]
      %v293 = vld [vmem:[%s251 + $0x78] sm:$0xff]
      %v294 = vld [vmem:[%s251 + $0x80] sm:$0xff]
      %v295 = vld [vmem:[%s251 + $0x88] sm:$0xff]
      %v296 = vld [vmem:[%s251 + $0x90] sm:$0xff]
      %v297 = vld [vmem:[%s251 + $0x98] sm:$0xff]
      %v298 = vld [vmem:[%s251 + $0xa0] sm:$0xff]
      %v299 = vld [vmem:[%s251 + $0xa8] sm:$0xff]
      %v300 = vld [vmem:[%s251 + $0xb0] sm:$0xff]
      %v301 = vld [vmem:[%s251 + $0xb8] sm:$0xff]
      %v302 = vld [vmem:[%s251 + $0xc0] sm:$0xff]
      %v303 = vld [vmem:[%s251 + $0xc8] sm:$0xff]
      %v304 = vld [vmem:[%s251 + $0xd0] sm:$0xff]
      %v305 = vld [vmem:[%s251 + $0xd8] sm:$0xff]
      %v306 = vld [vmem:[%s251 + $0xe0] sm:$0xff]
      %v307 = vld [vmem:[%s251 + $0xe8] sm:$0xff]
      %v308 = vld [vmem:[%s251 + $0xf0] sm:$0xff]
      %v309 = vld [vmem:[%s251 + $0xf8] sm:$0xff]
      %v310 = vld [vmem:[%s251 + $0x100] sm:$0xff]
      %v311 = vld [vmem:[%s251 + $0x108] sm:$0xff]
      %v312 = vld [vmem:[%s251 + $0x110] sm:$0xff]
      %v313 = vld [vmem:[%s251 + $0x118] sm:$0xff]
      %v314 = vld [vmem:[%s251 + $0x120] sm:$0xff]
      %v315 = vld [vmem:[%s251 + $0x128] sm:$0xff]
      %v316 = vld [vmem:[%s251 + $0x130] sm:$0xff]
      %v317 = vld [vmem:[%s251 + $0x138] sm:$0xff]
      %v318 = vld [vmem:[%s251 + $0x140] sm:$0xff]
      %v319 = vld [vmem:[%s251 + $0x148] sm:$0xff]
      %v320 = vld [vmem:[%s251 + $0x150] sm:$0xff]
      %v321 = vld [vmem:[%s251 + $0x158] sm:$0xff]
      %v322 = vld [vmem:[%s251 + $0x160] sm:$0xff]
      %v323 = vld [vmem:[%s251 + $0x168] sm:$0xff]
      %v324 = vld [vmem:[%s251 + $0x170] sm:$0xff]
      %v325 = vld [vmem:[%s251 + $0x178] sm:$0xff]
      %v326 = vld [vmem:[%s251 + $0x180] sm:$0xff]
      %v327 = vld [vmem:[%s251 + $0x188] sm:$0xff]
      %v328 = vld [vmem:[%s251 + $0x190] sm:$0xff]
      %v329 = vld [vmem:[%s251 + $0x198] sm:$0xff]
      %v330 = vld [vmem:[%s251 + $0x1a0] sm:$0xff]
      %v331 = vld [vmem:[%s251 + $0x1a8] sm:$0xff]
      %v332 = vld [vmem:[%s251 + $0x1b0] sm:$0xff]
      %v333 = vld [vmem:[%s251 + $0x1b8] sm:$0xff]
      %v334 = vld [vmem:[%s251 + $0x1c0] sm:$0xff]
      %v335 = vld [vmem:[%s251 + $0x1c8] sm:$0xff]
      %v336 = vld [vmem:[%s251 + $0x1d0] sm:$0xff]
      %v337 = vld [vmem:[%s251 + $0x1d8] sm:$0xff]
      %v338 = vld [vmem:[%s251 + $0x1e0] sm:$0xff]
      %v339 = vld [vmem:[%s251 + $0x1e8] sm:$0xff]
      %v340 = vld [vmem:[%s251 + $0x1f0] sm:$0xff]
      %v341 = vld [vmem:[%s251 + $0x1f8] sm:$0xff]
      %v342 = vld [vmem:[%s251 + $0x200] sm:$0xff]
      %v343 = vld [vmem:[%s251 + $0x208] sm:$0xff]
      %v344 = vld [vmem:[%s251 + $0x210] sm:$0xff]
      %v345 = vld [vmem:[%s251 + $0x218] sm:$0xff]
      %v346 = vld [vmem:[%s251 + $0x220] sm:$0xff]
      %v347 = vld [vmem:[%s251 + $0x228] sm:$0xff]
      %v348 = vld [vmem:[%s251 + $0x230] sm:$0xff]
      %v349 = vld [vmem:[%s251 + $0x238] sm:$0xff]
      %v350 = vld [vmem:[%s251 + $0x240] sm:$0xff]
      %v351 = vld [vmem:[%s251 + $0x248] sm:$0xff]
      %v352 = vld [vmem:[%s251 + $0x250] sm:$0xff]
      %v353 = vld [vmem:[%s251 + $0x258] sm:$0xff]
      %v354 = vld [vmem:[%s251 + $0x260] sm:$0xff]
      %v355 = vld [vmem:[%s251 + $0x268] sm:$0xff]
      %v356 = vld [vmem:[%s251 + $0x270] sm:$0xff]
      %v357 = vld [vmem:[%s251 + $0x278] sm:$0xff]
      %v358 = vld [vmem:[%s251 + $0x280] sm:$0xff]
      %v359 = vld [vmem:[%s251 + $0x288] sm:$0xff]
      %v360 = vld [vmem:[%s251 + $0x290] sm:$0xff]
      %v361 = vld [vmem:[%s251 + $0x298] sm:$0xff]
      %v362 = vld [vmem:[%s251 + $0x2a0] sm:$0xff]
      %v363 = vld [vmem:[%s251 + $0x2a8] sm:$0xff]
      %v364 = vld [vmem:[%s251 + $0x2b0] sm:$0xff]
      %v365 = vld [vmem:[%s251 + $0x2b8] sm:$0xff]
      %v366 = vld [vmem:[%s251 + $0x2c0] sm:$0xff]
      %v367 = vld [vmem:[%s251 + $0x2c8] sm:$0xff]
      %v368 = vld [vmem:[%s251 + $0x2d0] sm:$0xff]
      %v369 = vld [vmem:[%s251 + $0x2d8] sm:$0xff]
      %v370 = vld [vmem:[%s251 + $0x2e0] sm:$0xff]
      %v371 = vld [vmem:[%s251 + $0x2e8] sm:$0xff]
      %v372 = vld [vmem:[%s251 + $0x2f0] sm:$0xff]
      %v373 = vld [vmem:[%s251 + $0x2f8] sm:$0xff]
      %v374 = vld [vmem:[%s251 + $0x300] sm:$0xff]
      %v375 = vld [vmem:[%s251 + $0x308] sm:$0xff]
      %v376 = vld [vmem:[%s251 + $0x310] sm:$0xff]
      %v377 = vld [vmem:[%s251 + $0x318] sm:$0xff]
      %v378 = vld [vmem:[%s251 + $0x320] sm:$0xff]
      %v379 = vld [vmem:[%s251 + $0x328] sm:$0xff]
      %v380 = vld [vmem:[%s251 + $0x330] sm:$0xff]
      %v381 = vld [vmem:[%s251 + $0x338] sm:$0xff]
      %v382 = vld [vmem:[%s251 + $0x340] sm:$0xff]
      %v383 = vld [vmem:[%s251 + $0x348] sm:$0xff]
      %v384 = vld [vmem:[%s251 + $0x350] sm:$0xff]
      %v385 = vld [vmem:[%s251 + $0x358] sm:$0xff]
      %v386 = vld [vmem:[%s2] sm:$0xff]
      %v387 = vld [vmem:[%s2 + $0x8] sm:$0xff]
      %389 = vset.pattern.permute.xlu0 0
      %390 = vperm.xlu0 %389, %v386
      %v391 = vpop.permute.xlu0 %390
      %394 = vset.pattern.permute.xlu0 0
      %395 = vperm.xlu0 %394, %v387
      %v396 = vpop.permute.xlu0 %395
      %v402 = vunpack.c.l.b16 %v274
      %v403 = vunpack.c.h.b16 %v274
      %v404 = vunpack.c.l.b16 %v275
      %v405 = vunpack.c.h.b16 %v275
      %v406 = vunpack.c.l.b16 %v276
      %v407 = vunpack.c.h.b16 %v276
      %v408 = vunpack.c.l.b16 %v277
      %v409 = vunpack.c.h.b16 %v277
      %v410 = vpack.c.b16 %v406, %v402
      %v411 = vpack.c.b16 %v407, %v403
      %v412 = vpack.c.b16 %v408, %v404
      %v413 = vpack.c.b16 %v409, %v405
      %v525 = vunpack.c.l.b16 %v278
      %v526 = vunpack.c.h.b16 %v278
      %v527 = vunpack.c.l.b16 %v279
      %v528 = vunpack.c.h.b16 %v279
      %v529 = vunpack.c.l.b16 %v280
      %v530 = vunpack.c.h.b16 %v280
      %v531 = vunpack.c.l.b16 %v281
      %v532 = vunpack.c.h.b16 %v281
      %v533 = vunpack.c.l.b16 %v282
      %v534 = vunpack.c.h.b16 %v282
      %v535 = vunpack.c.l.b16 %v283
      %v536 = vunpack.c.h.b16 %v283
      %v537 = vunpack.c.l.b16 %v284
      %v538 = vunpack.c.h.b16 %v284
      %v539 = vunpack.c.l.b16 %v285
      %v540 = vunpack.c.h.b16 %v285
      %v541 = vunpack.c.l.b16 %v286
      %v542 = vunpack.c.h.b16 %v286
      %v543 = vunpack.c.l.b16 %v287
      %v544 = vunpack.c.h.b16 %v287
      %v545 = vunpack.c.l.b16 %v288
      %v546 = vunpack.c.h.b16 %v288
      %v547 = vunpack.c.l.b16 %v289
      %v548 = vunpack.c.h.b16 %v289
      %v549 = vunpack.c.l.b16 %v290
      %v550 = vunpack.c.h.b16 %v290
      %v551 = vunpack.c.l.b16 %v291
      %v552 = vunpack.c.h.b16 %v291
      %v553 = vunpack.c.l.b16 %v292
      %v554 = vunpack.c.h.b16 %v292
      %v555 = vunpack.c.l.b16 %v293
      %v556 = vunpack.c.h.b16 %v293
      %v557 = vunpack.c.l.b16 %v294
      %v558 = vunpack.c.h.b16 %v294
      %v559 = vunpack.c.l.b16 %v295
      %v560 = vunpack.c.h.b16 %v295
      %v561 = vunpack.c.l.b16 %v296
      %v562 = vunpack.c.h.b16 %v296
      %v563 = vunpack.c.l.b16 %v297
      %v564 = vunpack.c.h.b16 %v297
      %v565 = vunpack.c.l.b16 %v298
      %v566 = vunpack.c.h.b16 %v298
      %v567 = vunpack.c.l.b16 %v299
      %v568 = vunpack.c.h.b16 %v299
      %v569 = vunpack.c.l.b16 %v300
      %v570 = vunpack.c.h.b16 %v300
      %v571 = vunpack.c.l.b16 %v301
      %v572 = vunpack.c.h.b16 %v301
      %v573 = vunpack.c.l.b16 %v302
      %v574 = vunpack.c.h.b16 %v302
      %v575 = vunpack.c.l.b16 %v303
      %v576 = vunpack.c.h.b16 %v303
      %v577 = vunpack.c.l.b16 %v304
      %v578 = vunpack.c.h.b16 %v304
      %v579 = vunpack.c.l.b16 %v305
      %v580 = vunpack.c.h.b16 %v305
      %v581 = vunpack.c.l.b16 %v306
      %v582 = vunpack.c.h.b16 %v306
      %v583 = vunpack.c.l.b16 %v307
      %v584 = vunpack.c.h.b16 %v307
      %v585 = vunpack.c.l.b16 %v308
      %v586 = vunpack.c.h.b16 %v308
      %v587 = vunpack.c.l.b16 %v309
      %v588 = vunpack.c.h.b16 %v309
      %v589 = vunpack.c.l.b16 %v310
      %v590 = vunpack.c.h.b16 %v310
      %v591 = vunpack.c.l.b16 %v311
      %v592 = vunpack.c.h.b16 %v311
      %v593 = vunpack.c.l.b16 %v312
      %v594 = vunpack.c.h.b16 %v312
      %v595 = vunpack.c.l.b16 %v313
      %v596 = vunpack.c.h.b16 %v313
      %v597 = vunpack.c.l.b16 %v314
      %v598 = vunpack.c.h.b16 %v314
      %v599 = vunpack.c.l.b16 %v315
      %v600 = vunpack.c.h.b16 %v315
      %v601 = vunpack.c.l.b16 %v316
      %v602 = vunpack.c.h.b16 %v316
      %v603 = vunpack.c.l.b16 %v317
      %v604 = vunpack.c.h.b16 %v317
      %v605 = vunpack.c.l.b16 %v318
      %v606 = vunpack.c.h.b16 %v318
      %v607 = vunpack.c.l.b16 %v319
      %v608 = vunpack.c.h.b16 %v319
      %v609 = vunpack.c.l.b16 %v320
      %v610 = vunpack.c.h.b16 %v320
      %v611 = vunpack.c.l.b16 %v321
      %v612 = vunpack.c.h.b16 %v321
      %v613 = vunpack.c.l.b16 %v322
      %v614 = vunpack.c.h.b16 %v322
      %v615 = vunpack.c.l.b16 %v323
      %v616 = vunpack.c.h.b16 %v323
      %v617 = vunpack.c.l.b16 %v324
      %v618 = vunpack.c.h.b16 %v324
      %v619 = vunpack.c.l.b16 %v325
      %v620 = vunpack.c.h.b16 %v325
      %v621 = vunpack.c.l.b16 %v326
      %v622 = vunpack.c.h.b16 %v326
      %v623 = vunpack.c.l.b16 %v327
      %v624 = vunpack.c.h.b16 %v327
      %v625 = vunpack.c.l.b16 %v328
      %v626 = vunpack.c.h.b16 %v328
      %v627 = vunpack.c.l.b16 %v329
      %v628 = vunpack.c.h.b16 %v329
      %v629 = vunpack.c.l.b16 %v330
      %v630 = vunpack.c.h.b16 %v330
      %v631 = vunpack.c.l.b16 %v331
      %v632 = vunpack.c.h.b16 %v331
      %v633 = vunpack.c.l.b16 %v332
      %v634 = vunpack.c.h.b16 %v332
      %v635 = vunpack.c.l.b16 %v333
      %v636 = vunpack.c.h.b16 %v333
      %v637 = vunpack.c.l.b16 %v334
      %v638 = vunpack.c.h.b16 %v334
      %v639 = vunpack.c.l.b16 %v335
      %v640 = vunpack.c.h.b16 %v335
      %v641 = vunpack.c.l.b16 %v336
      %v642 = vunpack.c.h.b16 %v336
      %v643 = vunpack.c.l.b16 %v337
      %v644 = vunpack.c.h.b16 %v337
      %v645 = vunpack.c.l.b16 %v338
      %v646 = vunpack.c.h.b16 %v338
      %v647 = vunpack.c.l.b16 %v339
      %v648 = vunpack.c.h.b16 %v339
      %v649 = vunpack.c.l.b16 %v340
      %v650 = vunpack.c.h.b16 %v340
      %v651 = vunpack.c.l.b16 %v341
      %v652 = vunpack.c.h.b16 %v341
      %v653 = vunpack.c.l.b16 %v342
      %v654 = vunpack.c.h.b16 %v342
      %v655 = vunpack.c.l.b16 %v343
      %v656 = vunpack.c.h.b16 %v343
      %v657 = vunpack.c.l.b16 %v344
      %v658 = vunpack.c.h.b16 %v344
      %v659 = vunpack.c.l.b16 %v345
      %v660 = vunpack.c.h.b16 %v345
      %v661 = vunpack.c.l.b16 %v346
      %v662 = vunpack.c.h.b16 %v346
      %v663 = vunpack.c.l.b16 %v347
      %v664 = vunpack.c.h.b16 %v347
      %v665 = vunpack.c.l.b16 %v348
      %v666 = vunpack.c.h.b16 %v348
      %v667 = vunpack.c.l.b16 %v349
      %v668 = vunpack.c.h.b16 %v349
      %v669 = vunpack.c.l.b16 %v350
      %v670 = vunpack.c.h.b16 %v350
      %v671 = vunpack.c.l.b16 %v351
      %v672 = vunpack.c.h.b16 %v351
      %v673 = vunpack.c.l.b16 %v352
      %v674 = vunpack.c.h.b16 %v352
      %v675 = vunpack.c.l.b16 %v353
      %v676 = vunpack.c.h.b16 %v353
      %v677 = vunpack.c.l.b16 %v354
      %v678 = vunpack.c.h.b16 %v354
      %v679 = vunpack.c.l.b16 %v355
      %v680 = vunpack.c.h.b16 %v355
      %v681 = vunpack.c.l.b16 %v356
      %v682 = vunpack.c.h.b16 %v356
      %v683 = vunpack.c.l.b16 %v357
      %v684 = vunpack.c.h.b16 %v357
      %v685 = vunpack.c.l.b16 %v358
      %v686 = vunpack.c.h.b16 %v358
      %v687 = vunpack.c.l.b16 %v359
      %v688 = vunpack.c.h.b16 %v359
      %v689 = vunpack.c.l.b16 %v360
      %v690 = vunpack.c.h.b16 %v360
      %v691 = vunpack.c.l.b16 %v361
      %v692 = vunpack.c.h.b16 %v361
      %v693 = vunpack.c.l.b16 %v362
      %v694 = vunpack.c.h.b16 %v362
      %v695 = vunpack.c.l.b16 %v363
      %v696 = vunpack.c.h.b16 %v363
      %v697 = vunpack.c.l.b16 %v364
      %v698 = vunpack.c.h.b16 %v364
      %v699 = vunpack.c.l.b16 %v365
      %v700 = vunpack.c.h.b16 %v365
      %v701 = vunpack.c.l.b16 %v366
      %v702 = vunpack.c.h.b16 %v366
      %v703 = vunpack.c.l.b16 %v367
      %v704 = vunpack.c.h.b16 %v367
      %v705 = vunpack.c.l.b16 %v368
      %v706 = vunpack.c.h.b16 %v368
      %v707 = vunpack.c.l.b16 %v369
      %v708 = vunpack.c.h.b16 %v369
      %v709 = vunpack.c.l.b16 %v370
      %v710 = vunpack.c.h.b16 %v370
      %v711 = vunpack.c.l.b16 %v371
      %v712 = vunpack.c.h.b16 %v371
      %v713 = vunpack.c.l.b16 %v372
      %v714 = vunpack.c.h.b16 %v372
      %v715 = vunpack.c.l.b16 %v373
      %v716 = vunpack.c.h.b16 %v373
      %v717 = vunpack.c.l.b16 %v374
      %v718 = vunpack.c.h.b16 %v374
      %v719 = vunpack.c.l.b16 %v375
      %v720 = vunpack.c.h.b16 %v375
      %v721 = vunpack.c.l.b16 %v376
      %v722 = vunpack.c.h.b16 %v376
      %v723 = vunpack.c.l.b16 %v377
      %v724 = vunpack.c.h.b16 %v377
      %v725 = vunpack.c.l.b16 %v378
      %v726 = vunpack.c.h.b16 %v378
      %v727 = vunpack.c.l.b16 %v379
      %v728 = vunpack.c.h.b16 %v379
      %v729 = vunpack.c.l.b16 %v380
      %v730 = vunpack.c.h.b16 %v380
      %v731 = vunpack.c.l.b16 %v381
      %v732 = vunpack.c.h.b16 %v381
      %v733 = vunpack.c.l.b16 %v382
      %v734 = vunpack.c.h.b16 %v382
      %v735 = vunpack.c.l.b16 %v383
      %v736 = vunpack.c.h.b16 %v383
      %v737 = vunpack.c.l.b16 %v384
      %v738 = vunpack.c.h.b16 %v384
      %v739 = vunpack.c.l.b16 %v385
      %v740 = vunpack.c.h.b16 %v385
      %v741 = vpack.c.b16 %v529, %v525
      %v742 = vpack.c.b16 %v530, %v526
      %v743 = vpack.c.b16 %v531, %v527
      %v744 = vpack.c.b16 %v532, %v528
      %v745 = vpack.c.b16 %v537, %v533
      %v746 = vpack.c.b16 %v538, %v534
      %v747 = vpack.c.b16 %v539, %v535
      %v748 = vpack.c.b16 %v540, %v536
      %v749 = vpack.c.b16 %v545, %v541
      %v750 = vpack.c.b16 %v546, %v542
      %v751 = vpack.c.b16 %v547, %v543
      %v752 = vpack.c.b16 %v548, %v544
      %v753 = vpack.c.b16 %v553, %v549
      %v754 = vpack.c.b16 %v554, %v550
      %v755 = vpack.c.b16 %v555, %v551
      %v756 = vpack.c.b16 %v556, %v552
      %v757 = vpack.c.b16 %v561, %v557
      %v758 = vpack.c.b16 %v562, %v558
      %v759 = vpack.c.b16 %v563, %v559
      %v760 = vpack.c.b16 %v564, %v560
      %v761 = vpack.c.b16 %v569, %v565
      %v762 = vpack.c.b16 %v570, %v566
      %v763 = vpack.c.b16 %v571, %v567
      %v764 = vpack.c.b16 %v572, %v568
      %v765 = vpack.c.b16 %v577, %v573
      %v766 = vpack.c.b16 %v578, %v574
      %v767 = vpack.c.b16 %v579, %v575
      %v768 = vpack.c.b16 %v580, %v576
      %v769 = vpack.c.b16 %v585, %v581
      %v770 = vpack.c.b16 %v586, %v582
      %v771 = vpack.c.b16 %v587, %v583
      %v772 = vpack.c.b16 %v588, %v584
      %v773 = vpack.c.b16 %v593, %v589
      %v774 = vpack.c.b16 %v594, %v590
      %v775 = vpack.c.b16 %v595, %v591
      %v776 = vpack.c.b16 %v596, %v592
      %v777 = vpack.c.b16 %v601, %v597
      %v778 = vpack.c.b16 %v602, %v598
      %v779 = vpack.c.b16 %v603, %v599
      %v780 = vpack.c.b16 %v604, %v600
      %v781 = vpack.c.b16 %v609, %v605
      %v782 = vpack.c.b16 %v610, %v606
      %v783 = vpack.c.b16 %v611, %v607
      %v784 = vpack.c.b16 %v612, %v608
      %v785 = vpack.c.b16 %v617, %v613
      %v786 = vpack.c.b16 %v618, %v614
      %v787 = vpack.c.b16 %v619, %v615
      %v788 = vpack.c.b16 %v620, %v616
      %v789 = vpack.c.b16 %v625, %v621
      %v790 = vpack.c.b16 %v626, %v622
      %v791 = vpack.c.b16 %v627, %v623
      %v792 = vpack.c.b16 %v628, %v624
      %v793 = vpack.c.b16 %v633, %v629
      %v794 = vpack.c.b16 %v634, %v630
      %v795 = vpack.c.b16 %v635, %v631
      %v796 = vpack.c.b16 %v636, %v632
      %v797 = vpack.c.b16 %v641, %v637
      %v798 = vpack.c.b16 %v642, %v638
      %v799 = vpack.c.b16 %v643, %v639
      %v800 = vpack.c.b16 %v644, %v640
      %v801 = vpack.c.b16 %v649, %v645
      %v802 = vpack.c.b16 %v650, %v646
      %v803 = vpack.c.b16 %v651, %v647
      %v804 = vpack.c.b16 %v652, %v648
      %v805 = vpack.c.b16 %v657, %v653
      %v806 = vpack.c.b16 %v658, %v654
      %v807 = vpack.c.b16 %v659, %v655
      %v808 = vpack.c.b16 %v660, %v656
      %v809 = vpack.c.b16 %v665, %v661
      %v810 = vpack.c.b16 %v666, %v662
      %v811 = vpack.c.b16 %v667, %v663
      %v812 = vpack.c.b16 %v668, %v664
      %v813 = vpack.c.b16 %v673, %v669
      %v814 = vpack.c.b16 %v674, %v670
      %v815 = vpack.c.b16 %v675, %v671
      %v816 = vpack.c.b16 %v676, %v672
      %v817 = vpack.c.b16 %v681, %v677
      %v818 = vpack.c.b16 %v682, %v678
      %v819 = vpack.c.b16 %v683, %v679
      %v820 = vpack.c.b16 %v684, %v680
      %v821 = vpack.c.b16 %v689, %v685
      %v822 = vpack.c.b16 %v690, %v686
      %v823 = vpack.c.b16 %v691, %v687
      %v824 = vpack.c.b16 %v692, %v688
      %v825 = vpack.c.b16 %v697, %v693
      %v826 = vpack.c.b16 %v698, %v694
      %v827 = vpack.c.b16 %v699, %v695
      %v828 = vpack.c.b16 %v700, %v696
      %v829 = vpack.c.b16 %v705, %v701
      %v830 = vpack.c.b16 %v706, %v702
      %v831 = vpack.c.b16 %v707, %v703
      %v832 = vpack.c.b16 %v708, %v704
      %v833 = vpack.c.b16 %v713, %v709
      %v834 = vpack.c.b16 %v714, %v710
      %v835 = vpack.c.b16 %v715, %v711
      %v836 = vpack.c.b16 %v716, %v712
      %v837 = vpack.c.b16 %v721, %v717
      %v838 = vpack.c.b16 %v722, %v718
      %v839 = vpack.c.b16 %v723, %v719
      %v840 = vpack.c.b16 %v724, %v720
      %v841 = vpack.c.b16 %v729, %v725
      %v842 = vpack.c.b16 %v730, %v726
      %v843 = vpack.c.b16 %v731, %v727
      %v844 = vpack.c.b16 %v732, %v728
      %v845 = vpack.c.b16 %v737, %v733
      %v846 = vpack.c.b16 %v738, %v734
      %v847 = vpack.c.b16 %v739, %v735
      %v848 = vpack.c.b16 %v740, %v736
      %vm957 = vcmask 392192
      %v959 = vsel %vm957, %v413, 0
      %961 = vmatprep.subr.bf16.mxu0 %v742
      %962 = vmatpush1.bf16.msra.mxu0 %v741
      %963 = vmatprep.subr.bf16.mxu0 %v746
      %964 = vmatpush1.bf16.msra.mxu0 %v745
      %965 = vmatprep.subr.bf16.mxu0 %v750
      %966 = vmatpush1.bf16.msra.mxu0 %v749
      %967 = vmatprep.subr.bf16.mxu0 %v754
      %968 = vmatpush1.bf16.msra.mxu0 %v753
      %969 = vmatprep.subr.bf16.mxu0 %v758
      %970 = vmatpush1.bf16.msra.mxu0 %v757
      %971 = vmatprep.subr.bf16.mxu0 %v762
      %972 = vmatpush1.bf16.msra.mxu0 %v761
      %973 = vmatprep.subr.bf16.mxu0 %v766
      %974 = vmatpush1.bf16.msra.mxu0 %v765
      %975 = vmatprep.subr.bf16.mxu0 %v770
      %976 = vmatpush1.bf16.msra.mxu0 %v769
      %977 = vmatprep.subr.bf16.mxu0 %v774
      %978 = vmatpush1.bf16.msra.mxu0 %v773
      %979 = vmatprep.subr.bf16.mxu0 %v778
      %980 = vmatpush1.bf16.msra.mxu0 %v777
      %981 = vmatprep.subr.bf16.mxu0 %v782
      %982 = vmatpush1.bf16.msra.mxu0 %v781
      %983 = vmatprep.subr.bf16.mxu0 %v786
      %984 = vmatpush1.bf16.msra.mxu0 %v785
      %985 = vmatprep.subr.bf16.mxu0 %v790
      %986 = vmatpush1.bf16.msra.mxu0 %v789
      %987 = vmatprep.subr.bf16.mxu0 %v794
      %988 = vmatpush1.bf16.msra.mxu0 %v793
      %989 = vmatprep.subr.bf16.mxu0 %v798
      %990 = vmatpush1.bf16.msra.mxu0 %v797
      %991 = vmatprep.subr.bf16.mxu0 %v802
      %992 = vmatpush1.bf16.msra.mxu0 %v801
      %993 = vmatprep.mubr.bf16.mxu0 %v411
      %994 = vmatmul.mubr.bf16.gmra.mrb[0].mxu0 %v410
      %v995 = vpop.f32.mrb[0].mxu0
      %v996 = vadd.f32 %v391, %v995
      %v997 = vpop.f32.mrb[0].mxu0
      %v998 = vadd.f32 %v391, %v997
      %v999 = vpop.f32.mrb[0].mxu0
      %v1000 = vadd.f32 %v396, %v999
      %v1001 = vpop.f32.mrb[0].mxu0
      %v1002 = vadd.f32 %v396, %v1001
      %1003 = vdwg.mxu0
      %1004 = vmatprep.subr.bf16.mxu0 %v806
      %1005 = vmatpush1.bf16.msra.mxu0 %v805
      %1006 = vmatprep.subr.bf16.mxu0 %v810
      %1007 = vmatpush1.bf16.msra.mxu0 %v809
      %1008 = vmatprep.subr.bf16.mxu0 %v814
      %1009 = vmatpush1.bf16.msra.mxu0 %v813
      %1010 = vmatprep.subr.bf16.mxu0 %v818
      %1011 = vmatpush1.bf16.msra.mxu0 %v817
      %1012 = vmatprep.subr.bf16.mxu0 %v822
      %1013 = vmatpush1.bf16.msra.mxu0 %v821
      %1014 = vmatprep.subr.bf16.mxu0 %v826
      %1015 = vmatpush1.bf16.msra.mxu0 %v825
      %1016 = vmatprep.subr.bf16.mxu0 %v830
      %1017 = vmatpush1.bf16.msra.mxu0 %v829
      %1018 = vmatprep.subr.bf16.mxu0 %v834
      %1019 = vmatpush1.bf16.msra.mxu0 %v833
      %1020 = vmatprep.subr.bf16.mxu0 %v838
      %1021 = vmatpush1.bf16.msra.mxu0 %v837
      %1022 = vmatprep.subr.bf16.mxu0 %v842
      %1023 = vmatpush1.bf16.msra.mxu0 %v841
      %1024 = vmatprep.subr.bf16.mxu0 %v846
      %1025 = vmatpush1.bf16.msra.mxu0 %v845
      %1026 = vmatprep.subr.bf16.mxu0 0
      %1027 = vmatpush1.bf16.msra.mxu0 0
      %1028 = vmatprep.subr.bf16.mxu0 0
      %1029 = vmatpush1.bf16.msra.mxu0 0
      %1030 = vmatprep.subr.bf16.mxu0 0
      %1031 = vmatpush1.bf16.msra.mxu0 0
      %1032 = vmatprep.subr.bf16.mxu0 0
      %1033 = vmatpush1.bf16.msra.mxu0 0
      %1034 = vmatprep.subr.bf16.mxu0 0
      %1035 = vmatpush1.bf16.msra.mxu0 0
      %1036 = vmatprep.mubr.bf16.mxu0 %v959
      %1037 = vmatmul.mubr.bf16.gmra.mrb[0].mxu0 %v412
      %v1038 = vpop.f32.mrb[0].mxu0
      %v1039 = vadd.f32 %v996, %v1038
      %v1040 = vpop.f32.mrb[0].mxu0
      %v1041 = vadd.f32 %v998, %v1040
      %v1042 = vpop.f32.mrb[0].mxu0
      %v1043 = vadd.f32 %v1000, %v1042
      %v1044 = vpop.f32.mrb[0].mxu0
      %v1045 = vadd.f32 %v1002, %v1044
      %1046 = vdwg.mxu0
      %1047 = vmatprep.subr.bf16.mxu0 %v744
      %1048 = vmatpush1.bf16.msra.mxu0 %v743
      %1049 = vmatprep.subr.bf16.mxu0 %v748
      %1050 = vmatpush1.bf16.msra.mxu0 %v747
      %1051 = vmatprep.subr.bf16.mxu0 %v752
      %1052 = vmatpush1.bf16.msra.mxu0 %v751
      %1053 = vmatprep.subr.bf16.mxu0 %v756
      %1054 = vmatpush1.bf16.msra.mxu0 %v755
      %1055 = vmatprep.subr.bf16.mxu0 %v760
      %1056 = vmatpush1.bf16.msra.mxu0 %v759
      %1057 = vmatprep.subr.bf16.mxu0 %v764
      %1058 = vmatpush1.bf16.msra.mxu0 %v763
      %1059 = vmatprep.subr.bf16.mxu0 %v768
      %1060 = vmatpush1.bf16.msra.mxu0 %v767
      %1061 = vmatprep.subr.bf16.mxu0 %v772
      %1062 = vmatpush1.bf16.msra.mxu0 %v771
      %1063 = vmatprep.subr.bf16.mxu0 %v776
      %1064 = vmatpush1.bf16.msra.mxu0 %v775
      %1065 = vmatprep.subr.bf16.mxu0 %v780
      %1066 = vmatpush1.bf16.msra.mxu0 %v779
      %1067 = vmatprep.subr.bf16.mxu0 %v784
      %1068 = vmatpush1.bf16.msra.mxu0 %v783
      %1069 = vmatprep.subr.bf16.mxu0 %v788
      %1070 = vmatpush1.bf16.msra.mxu0 %v787
      %1071 = vmatprep.subr.bf16.mxu0 %v792
      %1072 = vmatpush1.bf16.msra.mxu0 %v791
      %1073 = vmatprep.subr.bf16.mxu0 %v796
      %1074 = vmatpush1.bf16.msra.mxu0 %v795
      %1075 = vmatprep.subr.bf16.mxu0 %v800
      %1076 = vmatpush1.bf16.msra.mxu0 %v799
      %1077 = vmatprep.subr.bf16.mxu0 %v804
      %1078 = vmatpush1.bf16.msra.mxu0 %v803
      %1079 = vmatprep.mubr.bf16.mxu0 %v411
      %1080 = vmatmul.mubr.bf16.gmra.mrb[0].mxu0 %v410
      %v1081 = vpop.f32.mrb[0].mxu0
      %v1082 = vadd.f32 %v391, %v1081
      %v1083 = vpop.f32.mrb[0].mxu0
      %v1084 = vadd.f32 %v391, %v1083
      %v1085 = vpop.f32.mrb[0].mxu0
      %v1086 = vadd.f32 %v396, %v1085
      %v1087 = vpop.f32.mrb[0].mxu0
      %v1088 = vadd.f32 %v396, %v1087
      %1089 = vdwg.mxu0
      %1090 = vmatprep.subr.bf16.mxu0 %v808
      %1091 = vmatpush1.bf16.msra.mxu0 %v807
      %1092 = vmatprep.subr.bf16.mxu0 %v812
      %1093 = vmatpush1.bf16.msra.mxu0 %v811
      %1094 = vmatprep.subr.bf16.mxu0 %v816
      %1095 = vmatpush1.bf16.msra.mxu0 %v815
      %1096 = vmatprep.subr.bf16.mxu0 %v820
      %1097 = vmatpush1.bf16.msra.mxu0 %v819
      %1098 = vmatprep.subr.bf16.mxu0 %v824
      %1099 = vmatpush1.bf16.msra.mxu0 %v823
      %1100 = vmatprep.subr.bf16.mxu0 %v828
      %1101 = vmatpush1.bf16.msra.mxu0 %v827
      %1102 = vmatprep.subr.bf16.mxu0 %v832
      %1103 = vmatpush1.bf16.msra.mxu0 %v831
      %1104 = vmatprep.subr.bf16.mxu0 %v836
      %1105 = vmatpush1.bf16.msra.mxu0 %v835
      %1106 = vmatprep.subr.bf16.mxu0 %v840
      %1107 = vmatpush1.bf16.msra.mxu0 %v839
      %1108 = vmatprep.subr.bf16.mxu0 %v844
      %1109 = vmatpush1.bf16.msra.mxu0 %v843
      %1110 = vmatprep.subr.bf16.mxu0 %v848
      %1111 = vmatpush1.bf16.msra.mxu0 %v847
      %1112 = vmatprep.subr.bf16.mxu0 0
      %1113 = vmatpush1.bf16.msra.mxu0 0
      %1114 = vmatprep.subr.bf16.mxu0 0
      %1115 = vmatpush1.bf16.msra.mxu0 0
      %1116 = vmatprep.subr.bf16.mxu0 0
      %1117 = vmatpush1.bf16.msra.mxu0 0
      %1118 = vmatprep.subr.bf16.mxu0 0
      %1119 = vmatpush1.bf16.msra.mxu0 0
      %1120 = vmatprep.subr.bf16.mxu0 0
      %1121 = vmatpush1.bf16.msra.mxu0 0
      %1122 = vmatprep.mubr.bf16.mxu0 %v959
      %1123 = vmatmul.mubr.bf16.gmra.mrb[0].mxu0 %v412
      %v1124 = vpop.f32.mrb[0].mxu0
      %v1125 = vadd.f32 %v1082, %v1124
      %v1126 = vpop.f32.mrb[0].mxu0
      %v1127 = vadd.f32 %v1084, %v1126
      %v1128 = vpop.f32.mrb[0].mxu0
      %v1129 = vadd.f32 %v1086, %v1128
      %v1130 = vpop.f32.mrb[0].mxu0
      %v1131 = vadd.f32 %v1088, %v1130
      %1132 = vdwg.mxu0
      %v1133 = vld [vmem:[%s261] sm:$0xff]
      %v1134 = vld [vmem:[%s261 + $0x8] sm:$0xff]
      %v1135 = vld [vmem:[%s261 + $0x10] sm:$0xff]
      %v1136 = vld [vmem:[%s261 + $0x18] sm:$0xff]
      %v1137 = vunpack.c.l.bf16 %v1133
      %v1138 = vunpack.c.h.bf16 %v1133
      %v1139 = vunpack.c.l.bf16 %v1134
      %v1140 = vunpack.c.h.bf16 %v1134
      %v1141 = vunpack.c.l.bf16 %v1135
      %v1142 = vunpack.c.h.bf16 %v1135
      %v1143 = vunpack.c.l.bf16 %v1136
      %v1144 = vunpack.c.h.bf16 %v1136
      %v1145 = vadd.f32 %v1039, %v1137
      %v1146 = vadd.f32 %v1041, %v1138
      %v1147 = vadd.f32 %v1125, %v1139
      %v1148 = vadd.f32 %v1127, %v1140
      %v1149 = vadd.f32 %v1043, %v1141
      %v1150 = vadd.f32 %v1045, %v1142
      %v1151 = vadd.f32 %v1129, %v1143
      %v1152 = vadd.f32 %v1131, %v1144
      %v1153 = vpack.c.bf16 %v1149, %v1145
      %v1154 = vpack.c.bf16 %v1150, %v1146
      %v1155 = vpack.c.bf16 %v1151, %v1147
      %v1156 = vpack.c.bf16 %v1152, %v1148
      %v1161 = vunpack.c.l.b16 %v1153
      %v1162 = vunpack.c.l.b16 %v1154
      %v1163 = vunpack.c.l.b16 %v1155
      %v1164 = vunpack.c.l.b16 %v1156
      %v1165 = vunpack.c.h.b16 %v1153
      %v1166 = vunpack.c.h.b16 %v1154
      %v1167 = vunpack.c.h.b16 %v1155
      %v1168 = vunpack.c.h.b16 %v1156
      %v1169 = vpack.c.b16 %v1162, %v1161
      %v1170 = vpack.c.b16 %v1164, %v1163
      %v1171 = vpack.c.b16 %v1166, %v1165
      %v1172 = vpack.c.b16 %v1168, %v1167
      %1177 = vst [vmem:[%s271] sm:$0xff] %v1169
      %1178 = vst [vmem:[%s271 + $0x8] sm:$0xff] %v1170
      %1179 = vst [vmem:[%s271 + $0x10] sm:$0xff] %v1171
      %1180 = vst [vmem:[%s271 + $0x18] sm:$0xff] %v1172
      %s1181 = smul.u32 4, %s20
      %p1182 = scmp.lt.s32.totalorder %s19, 1
      %s1183 = scalar_select %p1182, %s19, 1
      %p1184 = scmp.lt.s32.totalorder %s1181, 3
      %s1185 = scalar_select %p1184, %s1181, 3
      %s1186 = smul.addr %s1183, 8
      %s1187 = sadd.s32 %s1185, %s1186
      %s1188 = smul.addr %s1187, 4
      %s1189 = scalar_lea.vmem %s4, %s1188
      // Predicated region
      $region37: #{decoder_forward.17} parent=35 // pred_check
        %p1190 = pneg %p145
      $region38: #{decoder_forward.17} parent=35 // pred_check_branch
        %1192 = sbr.rel (%p1190) target = $region40
      $region39: #{decoder_forward.17} parent=35 // pred_region
        %s1193 = smul.u32 4, %s20
      $region40: #{decoder_forward.17} parent=35 // pred_fallthru
        _
    $region36: #{decoder_forward.17} parent=5 // pred_fallthru
      _
    %p1194 = scmp.le.s32.totalorder 2, %s10
    // Predicated region
    $region41: #{decoder_forward.17} parent=5 // pred_check
      %p1195 = pneg %p1194
    $region42: #{decoder_forward.17} parent=5 // pred_check_branch
      %1197 = sbr.rel (%p1195) target = $region44
    $region43: #{decoder_forward.17} parent=5 // pred_region
      %s1198 = ssub.s32 %s10, 2
      // Predicated region
      $region45: #{decoder_forward.17} parent=43 // pred_check
        %p1199 = pneg %p151
      $region46: #{decoder_forward.17} parent=43 // pred_check_branch
        %1201 = sbr.rel (%p1199) target = $region48
      $region47: #{decoder_forward.17} parent=43 // pred_region
        %s1202 = smul.u32 4, %s22
        %p1203 = scmp.lt.s32.totalorder %s21, 1
        %s1204 = scalar_select %p1203, %s21, 1
        %p1205 = scmp.lt.s32.totalorder %s1202, 3
        %s1206 = scalar_select %p1205, %s1202, 3
        %s1207 = smul.addr %s1204, 8
        %s1208 = sadd.s32 %s1206, %s1207
        %s1209 = smul.addr %s1208, 4
        %s1210 = scalar_lea.vmem %s4, %s1209
      $region48: #{decoder_forward.17} parent=43 // pred_fallthru
        _
    $region44: #{decoder_forward.17} parent=5 // pred_fallthru
      _
  $region6: #{decoder_forward.17} parent=0 // loop_footer
    %s14 = sadd.s32 1, %s10
  $region7: #{decoder_forward.17} parent=0 // loop_footer_branch
    %9 = sbr.rel target = $region3
  $region8: #{decoder_forward.17} parent=0 // loop_exit
    _

// kernel: decoder_forward.20
$region0: #{decoder_forward.20}
  #allocation0 [shape = 'u32[]', space=smem, size = 0x4, offset = 0x4, fixed_abs, tag = 'smem constant byte address 0x4 - core index']
  #allocation1 [shape = 'u32[144,128]{1,0:T(1,128)}', space=vmem, size = 0x12000, scoped, tag = 'internal scratch']
  %s0 = inlined_call_operand.hbm [shape: bf16[2,432,4096], index: 0, kind: input, shape index: {}]
  %s1 = inlined_call_operand.vmem [shape: bf16[8,432], index: 1, kind: input, shape index: {}]
  %s2 = inlined_call_operand.vmem [shape: f32[8,1], index: 2, kind: input, shape index: {}]
  %s3 = inlined_call_operand.vmem [shape: bf16[2,8,4096], index: 3, kind: output, shape index: {}]
  %s4 = sld [smem:[#allocation0]]
  $region49: #{decoder_forward.20} parent=0
    _
  %s6 = ssub.s32 1, %s4
  %s7 = scalar_select 0, %s6, %s4
  $region1: #{decoder_forward.20} parent=0
    #allocation2 [shape = 'u8[3538944]{0}', space=vmem, size = 0x360000, scoped, tag = 'input window, operand 0']
    #allocation3 [shape = 's32[2]{0}', space=sflag, size = 0x8, scoped, tag = 'scoped memory for decoder_forward.20']
    %8 = vsyncpa [#allocation3], 0
    %s9 = scalar_lea.sflag [#allocation3], 1
    %10 = vsyncpa %s9, 0
    loop: start=0, step=1, limit=6
    $region2: #{decoder_forward.20} parent=1 // loop_pre_header
      _
    $region3: #{decoder_forward.20} parent=1 // loop_header
      %s12 = sphi 0, %s16
      %p13 = scmp.ge.s32.totalorder %s12, 6
      %s19 = sphi 0, %s31
      %s20 = sphi 0, %s27
      %s21 = sphi 0, %s19
      %s22 = sphi 0, %s20
      %s23 = sphi 0, %s21
      %s24 = sphi 0, %s22
      %s36 = sphi 0, %s38
      %s39 = sphi 0, %s36
      %s40 = sphi 0, %s39
      %s56 = sphi 0, %s40
      %s60 = sphi 0, %s60
      %s62 = sphi 0, %s60
      %s63 = sphi 0, %s62
      %s77 = sphi 0, %s63
      %s81 = sphi 0, %s81
      %s83 = sphi 0, %s81
      %s84 = sphi 0, %s83
      %s98 = sphi 0, %s84
      %s106 = sphi 0, %s108
      %s109 = sphi 0, %s106
      %s110 = sphi 0, %s109
      %s126 = sphi 0, %s110
    $region4: #{decoder_forward.20} parent=1 // loop_header_branch
      %15 = sbr.rel (%p13) target = $region8
    $region5: #{decoder_forward.20} parent=1 // loop_body
      %s17 = ssub.s32 %s12, 1
      %s18 = ssub.s32 %s12, 2
      %s25 = sadd.s32 1, %s20
      %p26 = scmp.ge.s32.totalorder %s25, 2
      %s27 = scalar_select %p26, 0, %s25
      %s28 = sadd.s32 1, %s19
      %s29 = scalar_select %p26, %s28, %s19
      %p30 = scmp.ge.s32.totalorder %s29, 2
      %s31 = scalar_select %p30, 0, %s29
      %s32 = ssub.s32 %s19, %s31
      %s33 = ssub.s32 %s20, %s27
      %s34 = sor.u32 %s32, %s33
      %p35 = scmp.eq.s32.totalorder %s34, 0
      %s37 = sadd.s32 %s36, 1
      %s38 = scalar_select %p35, %s36, %s37
      %p41 = pneg %p35
      %p42 = scmp.eq.s32.totalorder %s12, 3
      %p43 = por %p41, %p42
      %p44 = scmp.ne.s32.totalorder %s36, %s39
      %p45 = scmp.eq.s32.totalorder %s12, 0
      %p46 = por %p44, %p45
      %p47 = scmp.ne.s32.totalorder %s36, %s39
      %p48 = scmp.eq.s32.totalorder %s17, 3
      %p49 = por %p47, %p48
      %p50 = scmp.ne.s32.totalorder %s39, %s40
      %p51 = scmp.eq.s32.totalorder %s17, 0
      %p52 = por %p50, %p51
      %p53 = scmp.ne.s32.totalorder %s39, %s40
      %p54 = scmp.eq.s32.totalorder %s18, 3
      %p55 = por %p53, %p54
      %p57 = scmp.ne.s32.totalorder %s40, %s56
      %p58 = scmp.eq.s32.totalorder %s18, 0
      %p59 = por %p57, %p58
      %s61 = sadd.s32 %s60, 1
      %p64 = scmp.eq.s32.totalorder %s12, 3
      %p65 = scmp.ne.s32.totalorder %s60, %s62
      %p66 = scmp.eq.s32.totalorder %s12, 0
      %p67 = por %p65, %p66
      %p68 = scmp.ne.s32.totalorder %s60, %s62
      %p69 = scmp.eq.s32.totalorder %s17, 3
      %p70 = por %p68, %p69
      %p71 = scmp.ne.s32.totalorder %s62, %s63
      %p72 = scmp.eq.s32.totalorder %s17, 0
      %p73 = por %p71, %p72
      %p74 = scmp.ne.s32.totalorder %s62, %s63
      %p75 = scmp.eq.s32.totalorder %s18, 3
      %p76 = por %p74, %p75
      %p78 = scmp.ne.s32.totalorder %s63, %s77
      %p79 = scmp.eq.s32.totalorder %s18, 0
      %p80 = por %p78, %p79
      %s82 = sadd.s32 %s81, 1
      %p85 = scmp.eq.s32.totalorder %s12, 3
      %p86 = scmp.ne.s32.totalorder %s81, %s83
      %p87 = scmp.eq.s32.totalorder %s12, 0
      %p88 = por %p86, %p87
      %p89 = scmp.ne.s32.totalorder %s81, %s83
      %p90 = scmp.eq.s32.totalorder %s17, 3
      %p91 = por %p89, %p90
      %p92 = scmp.ne.s32.totalorder %s83, %s84
      %p93 = scmp.eq.s32.totalorder %s17, 0
      %p94 = por %p92, %p93
      %p95 = scmp.ne.s32.totalorder %s83, %s84
      %p96 = scmp.eq.s32.totalorder %s18, 3
      %p97 = por %p95, %p96
      %p99 = scmp.ne.s32.totalorder %s84, %s98
      %p100 = scmp.eq.s32.totalorder %s18, 0
      %p101 = por %p99, %p100
      %s102 = ssub.s32 %s19, %s31
      %s103 = ssub.s32 %s20, %s27
      %s104 = sor.u32 %s102, %s103
      %p105 = scmp.eq.s32.totalorder %s104, 0
      %s107 = sadd.s32 %s106, 1
      %s108 = scalar_select %p105, %s106, %s107
      %p111 = pneg %p105
      %p112 = scmp.eq.s32.totalorder %s12, 3
      %p113 = por %p111, %p112
      %p114 = scmp.ne.s32.totalorder %s106, %s109
      %p115 = scmp.eq.s32.totalorder %s12, 0
      %p116 = por %p114, %p115
      %p117 = scmp.ne.s32.totalorder %s106, %s109
      %p118 = scmp.eq.s32.totalorder %s17, 3
      %p119 = por %p117, %p118
      %p120 = scmp.ne.s32.totalorder %s109, %s110
      %p121 = scmp.eq.s32.totalorder %s17, 0
      %p122 = por %p120, %p121
      %p123 = scmp.ne.s32.totalorder %s109, %s110
      %p124 = scmp.eq.s32.totalorder %s18, 3
      %p125 = por %p123, %p124
      %p127 = scmp.ne.s32.totalorder %s110, %s126
      %p128 = scmp.eq.s32.totalorder %s18, 0
      %p129 = por %p127, %p128
      %p130 = scmp.le.s32.totalorder 1, %s12
      %p131 = scmp.lt.s32.totalorder %s12, 5
      %p132 = pnand %p130, %p131
      %p133 = pneg %p132
      // Predicated region
      $region9: #{decoder_forward.20} parent=5 // pred_check
        _
      $region10: #{decoder_forward.20} parent=5 // pred_check_branch
        %135 = sbr.rel (%p132) target = $region12
      $region11: #{decoder_forward.20} parent=5 // pred_region
        %s136 = ssub.s32 %s12, 1
        // Predicated region
        $region13: #{decoder_forward.20} parent=11 // pred_check
          %p137 = pneg %p73
        $region14: #{decoder_forward.20} parent=11 // pred_check_branch
          %139 = sbr.rel (%p137) target = $region16
        $region15: #{decoder_forward.20} parent=11 // pred_region
          _
        $region16: #{decoder_forward.20} parent=11 // pred_fallthru
          _
        // Predicated region
        $region17: #{decoder_forward.20} parent=11 // pred_check
          %p140 = pneg %p94
        $region18: #{decoder_forward.20} parent=11 // pred_check_branch
          %142 = sbr.rel (%p140) target = $region20
        $region19: #{decoder_forward.20} parent=11 // pred_region
          _
        $region20: #{decoder_forward.20} parent=11 // pred_fallthru
          _
      $region12: #{decoder_forward.20} parent=5 // pred_fallthru
        _
      %p143 = scmp.lt.s32.totalorder %s12, 4
      // Predicated region
      $region21: #{decoder_forward.20} parent=5 // pred_check
        %p144 = pneg %p143
      $region22: #{decoder_forward.20} parent=5 // pred_check_branch
        %146 = sbr.rel (%p144) target = $region24
      $region23: #{decoder_forward.20} parent=5 // pred_region
        // Predicated region
        $region25: #{decoder_forward.20} parent=23 // pred_check
          %p147 = pneg %p46
        $region26: #{decoder_forward.20} parent=23 // pred_check_branch
          %149 = sbr.rel (%p147) target = $region28
        $region27: #{decoder_forward.20} parent=23 // pred_region
          %s150 = sand.u32 %s36, 1
          %s151 = scalar_lea.sflag [#allocation3], %s150
          %s152 = sand.u32 %s36, 1
          %s153 = smul.addr %s152, 3456
          %s154 = scalar_lea.vmem [#allocation2], %s153
          %s155 = smul.u32 16, %s20
          %s157 = ssub.s32 55296, 55296
          %158 = vsyncadd %s151, %s157
          %s159 = smul.addr %s19, 1728
          %s160 = sadd.s32 %s155, %s159
          %s161 = smul.addr %s160, 64
          %s162 = scalar_lea.hbm %s0, %s161
          %s163 = sshll.u32 %s154, 4
          %s164 = int_to_ptr.vmem [resolvable:$true] %s163
          %169 = dma.hbm_to_vmem [thread:$0]  %s162, 55296, %s164, %s151, 2048, 1024, 64
        $region28: #{decoder_forward.20} parent=23 // pred_fallthru
          _
      $region24: #{decoder_forward.20} parent=5 // pred_fallthru
        _
      %p170 = scmp.le.s32.totalorder 1, %s12
      %p171 = scmp.lt.s32.totalorder %s12, 5
      %p172 = pnand %p170, %p171
      %p173 = pneg %p172
      // Predicated region
      $region29: #{decoder_forward.20} parent=5 // pred_check
        _
      $region30: #{decoder_forward.20} parent=5 // pred_check_branch
        %175 = sbr.rel (%p172) target = $region32
      $region31: #{decoder_forward.20} parent=5 // pred_region
        %s176 = ssub.s32 %s12, 1
        %s177 = sand.u32 %s39, 1
        %s178 = scalar_lea.sflag [#allocation3], %s177
        %s179 = sand.u32 %s39, 1
        %s180 = smul.addr %s179, 3456
        %s181 = scalar_lea.vmem [#allocation2], %s180
        // Predicated region
        $region33: #{decoder_forward.20} parent=31 // pred_check
          %p182 = pneg %p52
        $region34: #{decoder_forward.20} parent=31 // pred_check_branch
          %184 = sbr.rel (%p182) target = $region36
        $region35: #{decoder_forward.20} parent=31 // pred_region
          %185 = dma.done %s178, 55296
        $region36: #{decoder_forward.20} parent=31 // pred_fallthru
          _
        %s186 = sand.u32 %s39, 1
        %s187 = scalar_lea.sflag [#allocation3], %s186
        %s188 = sand.u32 %s39, 1
        %s189 = smul.addr %s188, 3456
        %s190 = scalar_lea.vmem [#allocation2], %s189
        %p191 = pneg %p52
        %p192 = pneg %p49
        %p193 = pneg %p73
        %p194 = pneg %p70
        %p195 = pneg %p94
        %p196 = pneg %p91
        %p197 = pneg %p122
        %p198 = pneg %p119
        %s199 = smul.u32 16, %s22
        %p200 = scmp.lt.s32.totalorder %s21, 1
        %s201 = scalar_select %p200, %s21, 1
        %p202 = scmp.lt.s32.totalorder %s199, 31
        %s203 = scalar_select %p202, %s199, 31
        %s204 = smul.addr %s201, 32
        %s205 = sadd.s32 %s203, %s204
        %s206 = smul.addr %s205, 4
        %s207 = scalar_lea.vmem %s3, %s206
        %s208 = smul.u32 16, %s22
        %s209 = smul.u32 16, %s22
        %p210 = scmp.lt.s32.totalorder %s21, 1
        %s211 = scalar_select %p210, %s21, 1
        %p212 = scmp.lt.s32.totalorder %s209, 31
        %s213 = scalar_select %p212, %s209, 31
        %s214 = smul.addr %s211, 32
        %s215 = sadd.s32 %s213, %s214
        %s216 = smul.addr %s215, 4
        %s217 = scalar_lea.vmem %s3, %s216
        %s218 = smul.u32 16, %s22
        %v220 = vld [vmem:[%s1] sm:$0xff]
        %v221 = vld [vmem:[%s1 + $0x8] sm:$0xff]
        %v222 = vld [vmem:[%s181] sm:$0xff]
        %v223 = vld [vmem:[%s181 + $0x8] sm:$0xff]
        %v224 = vld [vmem:[%s181 + $0x10] sm:$0xff]
        %v225 = vld [vmem:[%s181 + $0x18] sm:$0xff]
        %v226 = vld [vmem:[%s181 + $0x20] sm:$0xff]
        %v227 = vld [vmem:[%s181 + $0x28] sm:$0xff]
        %v228 = vld [vmem:[%s181 + $0x30] sm:$0xff]
        %v229 = vld [vmem:[%s181 + $0x38] sm:$0xff]
        %v230 = vld [vmem:[%s181 + $0x40] sm:$0xff]
        %v231 = vld [vmem:[%s181 + $0x48] sm:$0xff]
        %v232 = vld [vmem:[%s181 + $0x50] sm:$0xff]
        %v233 = vld [vmem:[%s181 + $0x58] sm:$0xff]
        %v234 = vld [vmem:[%s181 + $0x60] sm:$0xff]
        %v235 = vld [vmem:[%s181 + $0x68] sm:$0xff]
        %v236 = vld [vmem:[%s181 + $0x70] sm:$0xff]
        %v237 = vld [vmem:[%s181 + $0x78] sm:$0xff]
        %v238 = vld [vmem:[%s181 + $0x80] sm:$0xff]
        %v239 = vld [vmem:[%s181 + $0x88] sm:$0xff]
        %v240 = vld [vmem:[%s181 + $0x90] sm:$0xff]
        %v241 = vld [vmem:[%s181 + $0x98] sm:$0xff]
        %v242 = vld [vmem:[%s181 + $0xa0] sm:$0xff]
        %v243 = vld [vmem:[%s181 + $0xa8] sm:$0xff]
        %v244 = vld [vmem:[%s181 + $0xb0] sm:$0xff]
        %v245 = vld [vmem:[%s181 + $0xb8] sm:$0xff]
        %v246 = vld [vmem:[%s181 + $0xc0] sm:$0xff]
        %v247 = vld [vmem:[%s181 + $0xc8] sm:$0xff]
        %v248 = vld [vmem:[%s181 + $0xd0] sm:$0xff]
        %v249 = vld [vmem:[%s181 + $0xd8] sm:$0xff]
        %v250 = vld [vmem:[%s181 + $0xe0] sm:$0xff]
        %v251 = vld [vmem:[%s181 + $0xe8] sm:$0xff]
        %v252 = vld [vmem:[%s181 + $0xf0] sm:$0xff]
        %v253 = vld [vmem:[%s181 + $0xf8] sm:$0xff]
        %v254 = vld [vmem:[%s181 + $0x100] sm:$0xff]
        %v255 = vld [vmem:[%s181 + $0x108] sm:$0xff]
        %v256 = vld [vmem:[%s181 + $0x110] sm:$0xff]
        %v257 = vld [vmem:[%s181 + $0x118] sm:$0xff]
        %v258 = vld [vmem:[%s181 + $0x120] sm:$0xff]
        %v259 = vld [vmem:[%s181 + $0x128] sm:$0xff]
        %v260 = vld [vmem:[%s181 + $0x130] sm:$0xff]
        %v261 = vld [vmem:[%s181 + $0x138] sm:$0xff]
        %v262 = vld [vmem:[%s181 + $0x140] sm:$0xff]
        %v263 = vld [vmem:[%s181 + $0x148] sm:$0xff]
        %v264 = vld [vmem:[%s181 + $0x150] sm:$0xff]
        %v265 = vld [vmem:[%s181 + $0x158] sm:$0xff]
        %v266 = vld [vmem:[%s181 + $0x160] sm:$0xff]
        %v267 = vld [vmem:[%s181 + $0x168] sm:$0xff]
        %v268 = vld [vmem:[%s181 + $0x170] sm:$0xff]
        %v269 = vld [vmem:[%s181 + $0x178] sm:$0xff]
        %v270 = vld [vmem:[%s181 + $0x180] sm:$0xff]
        %v271 = vld [vmem:[%s181 + $0x188] sm:$0xff]
        %v272 = vld [vmem:[%s181 + $0x190] sm:$0xff]
        %v273 = vld [vmem:[%s181 + $0x198] sm:$0xff]
        %v274 = vld [vmem:[%s181 + $0x1a0] sm:$0xff]
        %v275 = vld [vmem:[%s181 + $0x1a8] sm:$0xff]
        %v276 = vld [vmem:[%s181 + $0x1b0] sm:$0xff]
        %v277 = vld [vmem:[%s181 + $0x1b8] sm:$0xff]
        %v278 = vld [vmem:[%s181 + $0x1c0] sm:$0xff]
        %v279 = vld [vmem:[%s181 + $0x1c8] sm:$0xff]
        %v280 = vld [vmem:[%s181 + $0x1d0] sm:$0xff]
        %v281 = vld [vmem:[%s181 + $0x1d8] sm:$0xff]
        %v282 = vld [vmem:[%s181 + $0x1e0] sm:$0xff]
        %v283 = vld [vmem:[%s181 + $0x1e8] sm:$0xff]
        %v284 = vld [vmem:[%s181 + $0x1f0] sm:$0xff]
        %v285 = vld [vmem:[%s181 + $0x1f8] sm:$0xff]
        %v286 = vld [vmem:[%s181 + $0x200] sm:$0xff]
        %v287 = vld [vmem:[%s181 + $0x208] sm:$0xff]
        %v288 = vld [vmem:[%s181 + $0x210] sm:$0xff]
        %v289 = vld [vmem:[%s181 + $0x218] sm:$0xff]
        %v290 = vld [vmem:[%s181 + $0x220] sm:$0xff]
        %v291 = vld [vmem:[%s181 + $0x228] sm:$0xff]
        %v292 = vld [vmem:[%s181 + $0x230] sm:$0xff]
        %v293 = vld [vmem:[%s181 + $0x238] sm:$0xff]
        %v294 = vld [vmem:[%s181 + $0x240] sm:$0xff]
        %v295 = vld [vmem:[%s181 + $0x248] sm:$0xff]
        %v296 = vld [vmem:[%s181 + $0x250] sm:$0xff]
        %v297 = vld [vmem:[%s181 + $0x258] sm:$0xff]
        %v298 = vld [vmem:[%s181 + $0x260] sm:$0xff]
        %v299 = vld [vmem:[%s181 + $0x268] sm:$0xff]
        %v300 = vld [vmem:[%s181 + $0x270] sm:$0xff]
        %v301 = vld [vmem:[%s181 + $0x278] sm:$0xff]
        %v302 = vld [vmem:[%s181 + $0x280] sm:$0xff]
        %v303 = vld [vmem:[%s181 + $0x288] sm:$0xff]
        %v304 = vld [vmem:[%s181 + $0x290] sm:$0xff]
        %v305 = vld [vmem:[%s181 + $0x298] sm:$0xff]
        %v306 = vld [vmem:[%s181 + $0x2a0] sm:$0xff]
        %v307 = vld [vmem:[%s181 + $0x2a8] sm:$0xff]
        %v308 = vld [vmem:[%s181 + $0x2b0] sm:$0xff]
        %v309 = vld [vmem:[%s181 + $0x2b8] sm:$0xff]
        %v310 = vld [vmem:[%s181 + $0x2c0] sm:$0xff]
        %v311 = vld [vmem:[%s181 + $0x2c8] sm:$0xff]
        %v312 = vld [vmem:[%s181 + $0x2d0] sm:$0xff]
        %v313 = vld [vmem:[%s181 + $0x2d8] sm:$0xff]
        %v314 = vld [vmem:[%s181 + $0x2e0] sm:$0xff]
        %v315 = vld [vmem:[%s181 + $0x2e8] sm:$0xff]
        %v316 = vld [vmem:[%s181 + $0x2f0] sm:$0xff]
        %v317 = vld [vmem:[%s181 + $0x2f8] sm:$0xff]
        %v318 = vld [vmem:[%s181 + $0x300] sm:$0xff]
        %v319 = vld [vmem:[%s181 + $0x308] sm:$0xff]
        %v320 = vld [vmem:[%s181 + $0x310] sm:$0xff]
        %v321 = vld [vmem:[%s181 + $0x318] sm:$0xff]
        %v322 = vld [vmem:[%s181 + $0x320] sm:$0xff]
        %v323 = vld [vmem:[%s181 + $0x328] sm:$0xff]
        %v324 = vld [vmem:[%s181 + $0x330] sm:$0xff]
        %v325 = vld [vmem:[%s181 + $0x338] sm:$0xff]
        %v326 = vld [vmem:[%s181 + $0x340] sm:$0xff]
        %v327 = vld [vmem:[%s181 + $0x348] sm:$0xff]
        %v328 = vld [vmem:[%s181 + $0x350] sm:$0xff]
        %v329 = vld [vmem:[%s181 + $0x358] sm:$0xff]
        %v330 = vld [vmem:[%s181 + $0x360] sm:$0xff]
        %v331 = vld [vmem:[%s181 + $0x368] sm:$0xff]
        %v332 = vld [vmem:[%s181 + $0x370] sm:$0xff]
        %v333 = vld [vmem:[%s181 + $0x378] sm:$0xff]
        %v334 = vld [vmem:[%s181 + $0x380] sm:$0xff]
        %v335 = vld [vmem:[%s181 + $0x388] sm:$0xff]
        %v336 = vld [vmem:[%s181 + $0x390] sm:$0xff]
        %v337 = vld [vmem:[%s181 + $0x398] sm:$0xff]
        %v338 = vld [vmem:[%s181 + $0x3a0] sm:$0xff]
        %v339 = vld [vmem:[%s181 + $0x3a8] sm:$0xff]
        %v340 = vld [vmem:[%s181 + $0x3b0] sm:$0xff]
        %v341 = vld [vmem:[%s181 + $0x3b8] sm:$0xff]
        %v342 = vld [vmem:[%s181 + $0x3c0] sm:$0xff]
        %v343 = vld [vmem:[%s181 + $0x3c8] sm:$0xff]
        %v344 = vld [vmem:[%s181 + $0x3d0] sm:$0xff]
        %v345 = vld [vmem:[%s181 + $0x3d8] sm:$0xff]
        %v346 = vld [vmem:[%s181 + $0x3e0] sm:$0xff]
        %v347 = vld [vmem:[%s181 + $0x3e8] sm:$0xff]
        %v348 = vld [vmem:[%s181 + $0x3f0] sm:$0xff]
        %v349 = vld [vmem:[%s181 + $0x3f8] sm:$0xff]
        %v350 = vld [vmem:[%s181 + $0x400] sm:$0xff]
        %v351 = vld [vmem:[%s181 + $0x408] sm:$0xff]
        %v352 = vld [vmem:[%s181 + $0x410] sm:$0xff]
        %v353 = vld [vmem:[%s181 + $0x418] sm:$0xff]
        %v354 = vld [vmem:[%s181 + $0x420] sm:$0xff]
        %v355 = vld [vmem:[%s181 + $0x428] sm:$0xff]
        %v356 = vld [vmem:[%s181 + $0x430] sm:$0xff]
        %v357 = vld [vmem:[%s181 + $0x438] sm:$0xff]
        %v358 = vld [vmem:[%s181 + $0x440] sm:$0xff]
        %v359 = vld [vmem:[%s181 + $0x448] sm:$0xff]
        %v360 = vld [vmem:[%s181 + $0x450] sm:$0xff]
        %v361 = vld [vmem:[%s181 + $0x458] sm:$0xff]
        %v362 = vld [vmem:[%s181 + $0x460] sm:$0xff]
        %v363 = vld [vmem:[%s181 + $0x468] sm:$0xff]
        %v364 = vld [vmem:[%s181 + $0x470] sm:$0xff]
        %v365 = vld [vmem:[%s181 + $0x478] sm:$0xff]
        %v366 = vld [vmem:[%s181 + $0x480] sm:$0xff]
        %v367 = vld [vmem:[%s181 + $0x488] sm:$0xff]
        %v368 = vld [vmem:[%s181 + $0x490] sm:$0xff]
        %v369 = vld [vmem:[%s181 + $0x498] sm:$0xff]
        %v370 = vld [vmem:[%s181 + $0x4a0] sm:$0xff]
        %v371 = vld [vmem:[%s181 + $0x4a8] sm:$0xff]
        %v372 = vld [vmem:[%s181 + $0x4b0] sm:$0xff]
        %v373 = vld [vmem:[%s181 + $0x4b8] sm:$0xff]
        %v374 = vld [vmem:[%s181 + $0x4c0] sm:$0xff]
        %v375 = vld [vmem:[%s181 + $0x4c8] sm:$0xff]
        %v376 = vld [vmem:[%s181 + $0x4d0] sm:$0xff]
        %v377 = vld [vmem:[%s181 + $0x4d8] sm:$0xff]
        %v378 = vld [vmem:[%s181 + $0x4e0] sm:$0xff]
        %v379 = vld [vmem:[%s181 + $0x4e8] sm:$0xff]
        %v380 = vld [vmem:[%s181 + $0x4f0] sm:$0xff]
        %v381 = vld [vmem:[%s181 + $0x4f8] sm:$0xff]
        %v382 = vld [vmem:[%s181 + $0x500] sm:$0xff]
        %v383 = vld [vmem:[%s181 + $0x508] sm:$0xff]
        %v384 = vld [vmem:[%s181 + $0x510] sm:$0xff]
        %v385 = vld [vmem:[%s181 + $0x518] sm:$0xff]
        %v386 = vld [vmem:[%s181 + $0x520] sm:$0xff]
        %v387 = vld [vmem:[%s181 + $0x528] sm:$0xff]
        %v388 = vld [vmem:[%s181 + $0x530] sm:$0xff]
        %v389 = vld [vmem:[%s181 + $0x538] sm:$0xff]
        %v390 = vld [vmem:[%s181 + $0x540] sm:$0xff]
        %v391 = vld [vmem:[%s181 + $0x548] sm:$0xff]
        %v392 = vld [vmem:[%s181 + $0x550] sm:$0xff]
        %v393 = vld [vmem:[%s181 + $0x558] sm:$0xff]
        %v394 = vld [vmem:[%s181 + $0x560] sm:$0xff]
        %v395 = vld [vmem:[%s181 + $0x568] sm:$0xff]
        %v396 = vld [vmem:[%s181 + $0x570] sm:$0xff]
        %v397 = vld [vmem:[%s181 + $0x578] sm:$0xff]
        %v398 = vld [vmem:[%s181 + $0x580] sm:$0xff]
        %v399 = vld [vmem:[%s181 + $0x588] sm:$0xff]
        %v400 = vld [vmem:[%s181 + $0x590] sm:$0xff]
        %v401 = vld [vmem:[%s181 + $0x598] sm:$0xff]
        %v402 = vld [vmem:[%s181 + $0x5a0] sm:$0xff]
        %v403 = vld [vmem:[%s181 + $0x5a8] sm:$0xff]
        %v404 = vld [vmem:[%s181 + $0x5b0] sm:$0xff]
        %v405 = vld [vmem:[%s181 + $0x5b8] sm:$0xff]
        %v406 = vld [vmem:[%s181 + $0x5c0] sm:$0xff]
        %v407 = vld [vmem:[%s181 + $0x5c8] sm:$0xff]
        %v408 = vld [vmem:[%s181 + $0x5d0] sm:$0xff]
        %v409 = vld [vmem:[%s181 + $0x5d8] sm:$0xff]
        %v410 = vld [vmem:[%s181 + $0x5e0] sm:$0xff]
        %v411 = vld [vmem:[%s181 + $0x5e8] sm:$0xff]
        %v412 = vld [vmem:[%s181 + $0x5f0] sm:$0xff]
        %v413 = vld [vmem:[%s181 + $0x5f8] sm:$0xff]
        %v414 = vld [vmem:[%s181 + $0x600] sm:$0xff]
        %v415 = vld [vmem:[%s181 + $0x608] sm:$0xff]
        %v416 = vld [vmem:[%s181 + $0x610] sm:$0xff]
        %v417 = vld [vmem:[%s181 + $0x618] sm:$0xff]
        %v418 = vld [vmem:[%s181 + $0x620] sm:$0xff]
        %v419 = vld [vmem:[%s181 + $0x628] sm:$0xff]
        %v420 = vld [vmem:[%s181 + $0x630] sm:$0xff]
        %v421 = vld [vmem:[%s181 + $0x638] sm:$0xff]
        %v422 = vld [vmem:[%s181 + $0x640] sm:$0xff]
        %v423 = vld [vmem:[%s181 + $0x648] sm:$0xff]
        %v424 = vld [vmem:[%s181 + $0x650] sm:$0xff]
        %v425 = vld [vmem:[%s181 + $0x658] sm:$0xff]
        %v426 = vld [vmem:[%s181 + $0x660] sm:$0xff]
        %v427 = vld [vmem:[%s181 + $0x668] sm:$0xff]
        %v428 = vld [vmem:[%s181 + $0x670] sm:$0xff]
        %v429 = vld [vmem:[%s181 + $0x678] sm:$0xff]
        %v430 = vld [vmem:[%s181 + $0x680] sm:$0xff]
        %v431 = vld [vmem:[%s181 + $0x688] sm:$0xff]
        %v432 = vld [vmem:[%s181 + $0x690] sm:$0xff]
        %v433 = vld [vmem:[%s181 + $0x698] sm:$0xff]
        %v434 = vld [vmem:[%s181 + $0x6a0] sm:$0xff]
        %v435 = vld [vmem:[%s181 + $0x6a8] sm:$0xff]
        %v436 = vld [vmem:[%s181 + $0x6b0] sm:$0xff]
        %v437 = vld [vmem:[%s181 + $0x6b8] sm:$0xff]
        %v438 = vld [vmem:[%s181 + $0x6c0] sm:$0xff]
        %v439 = vld [vmem:[%s181 + $0x6c8] sm:$0xff]
        %v440 = vld [vmem:[%s181 + $0x6d0] sm:$0xff]
        %v441 = vld [vmem:[%s181 + $0x6d8] sm:$0xff]
        %v442 = vld [vmem:[%s181 + $0x6e0] sm:$0xff]
        %v443 = vld [vmem:[%s181 + $0x6e8] sm:$0xff]
        %v444 = vld [vmem:[%s181 + $0x6f0] sm:$0xff]
        %v445 = vld [vmem:[%s181 + $0x6f8] sm:$0xff]
        %v446 = vld [vmem:[%s181 + $0x700] sm:$0xff]
        %v447 = vld [vmem:[%s181 + $0x708] sm:$0xff]
        %v448 = vld [vmem:[%s181 + $0x710] sm:$0xff]
        %v449 = vld [vmem:[%s181 + $0x718] sm:$0xff]
        %v450 = vld [vmem:[%s181 + $0x720] sm:$0xff]
        %v451 = vld [vmem:[%s181 + $0x728] sm:$0xff]
        %v452 = vld [vmem:[%s181 + $0x730] sm:$0xff]
        %v453 = vld [vmem:[%s181 + $0x738] sm:$0xff]
        %v454 = vld [vmem:[%s181 + $0x740] sm:$0xff]
        %v455 = vld [vmem:[%s181 + $0x748] sm:$0xff]
        %v456 = vld [vmem:[%s181 + $0x750] sm:$0xff]
        %v457 = vld [vmem:[%s181 + $0x758] sm:$0xff]
        %v458 = vld [vmem:[%s181 + $0x760] sm:$0xff]
        %v459 = vld [vmem:[%s181 + $0x768] sm:$0xff]
        %v460 = vld [vmem:[%s181 + $0x770] sm:$0xff]
        %v461 = vld [vmem:[%s181 + $0x778] sm:$0xff]
        %v462 = vld [vmem:[%s181 + $0x780] sm:$0xff]
        %v463 = vld [vmem:[%s181 + $0x788] sm:$0xff]
        %v464 = vld [vmem:[%s181 + $0x790] sm:$0xff]
        %v465 = vld [vmem:[%s181 + $0x798] sm:$0xff]
        %v466 = vld [vmem:[%s181 + $0x7a0] sm:$0xff]
        %v467 = vld [vmem:[%s181 + $0x7a8] sm:$0xff]
        %v468 = vld [vmem:[%s181 + $0x7b0] sm:$0xff]
        %v469 = vld [vmem:[%s181 + $0x7b8] sm:$0xff]
        %v470 = vld [vmem:[%s181 + $0x7c0] sm:$0xff]
        %v471 = vld [vmem:[%s181 + $0x7c8] sm:$0xff]
        %v472 = vld [vmem:[%s181 + $0x7d0] sm:$0xff]
        %v473 = vld [vmem:[%s181 + $0x7d8] sm:$0xff]
        %v474 = vld [vmem:[%s181 + $0x7e0] sm:$0xff]
        %v475 = vld [vmem:[%s181 + $0x7e8] sm:$0xff]
        %v476 = vld [vmem:[%s181 + $0x7f0] sm:$0xff]
        %v477 = vld [vmem:[%s181 + $0x7f8] sm:$0xff]
        %v478 = vld [vmem:[%s181 + $0x800] sm:$0xff]
        %v479 = vld [vmem:[%s181 + $0x808] sm:$0xff]
        %v480 = vld [vmem:[%s181 + $0x810] sm:$0xff]
        %v481 = vld [vmem:[%s181 + $0x818] sm:$0xff]
        %v482 = vld [vmem:[%s181 + $0x820] sm:$0xff]
        %v483 = vld [vmem:[%s181 + $0x828] sm:$0xff]
        %v484 = vld [vmem:[%s181 + $0x830] sm:$0xff]
        %v485 = vld [vmem:[%s181 + $0x838] sm:$0xff]
        %v486 = vld [vmem:[%s181 + $0x840] sm:$0xff]
        %v487 = vld [vmem:[%s181 + $0x848] sm:$0xff]
        %v488 = vld [vmem:[%s181 + $0x850] sm:$0xff]
        %v489 = vld [vmem:[%s181 + $0x858] sm:$0xff]
        %v490 = vld [vmem:[%s181 + $0x860] sm:$0xff]
        %v491 = vld [vmem:[%s181 + $0x868] sm:$0xff]
        %v492 = vld [vmem:[%s181 + $0x870] sm:$0xff]
        %v493 = vld [vmem:[%s181 + $0x878] sm:$0xff]
        %v494 = vld [vmem:[%s181 + $0x880] sm:$0xff]
        %v495 = vld [vmem:[%s181 + $0x888] sm:$0xff]
        %v496 = vld [vmem:[%s181 + $0x890] sm:$0xff]
        %v497 = vld [vmem:[%s181 + $0x898] sm:$0xff]
        %v498 = vld [vmem:[%s181 + $0x8a0] sm:$0xff]
        %v499 = vld [vmem:[%s181 + $0x8a8] sm:$0xff]
        %v500 = vld [vmem:[%s181 + $0x8b0] sm:$0xff]
        %v501 = vld [vmem:[%s181 + $0x8b8] sm:$0xff]
        %v502 = vld [vmem:[%s181 + $0x8c0] sm:$0xff]
        %v503 = vld [vmem:[%s181 + $0x8c8] sm:$0xff]
        %v504 = vld [vmem:[%s181 + $0x8d0] sm:$0xff]
        %v505 = vld [vmem:[%s181 + $0x8d8] sm:$0xff]
        %v506 = vld [vmem:[%s181 + $0x8e0] sm:$0xff]
        %v507 = vld [vmem:[%s181 + $0x8e8] sm:$0xff]
        %v508 = vld [vmem:[%s181 + $0x8f0] sm:$0xff]
        %v509 = vld [vmem:[%s181 + $0x8f8] sm:$0xff]
        %v510 = vld [vmem:[%s181 + $0x900] sm:$0xff]
        %v511 = vld [vmem:[%s181 + $0x908] sm:$0xff]
        %v512 = vld [vmem:[%s181 + $0x910] sm:$0xff]
        %v513 = vld [vmem:[%s181 + $0x918] sm:$0xff]
        %v514 = vld [vmem:[%s181 + $0x920] sm:$0xff]
        %v515 = vld [vmem:[%s181 + $0x928] sm:$0xff]
        %v516 = vld [vmem:[%s181 + $0x930] sm:$0xff]
        %v517 = vld [vmem:[%s181 + $0x938] sm:$0xff]
        %v518 = vld [vmem:[%s181 + $0x940] sm:$0xff]
        %v519 = vld [vmem:[%s181 + $0x948] sm:$0xff]
        %v520 = vld [vmem:[%s181 + $0x950] sm:$0xff]
        %v521 = vld [vmem:[%s181 + $0x958] sm:$0xff]
        %v522 = vld [vmem:[%s181 + $0x960] sm:$0xff]
        %v523 = vld [vmem:[%s181 + $0x968] sm:$0xff]
        %v524 = vld [vmem:[%s181 + $0x970] sm:$0xff]
        %v525 = vld [vmem:[%s181 + $0x978] sm:$0xff]
        %v526 = vld [vmem:[%s181 + $0x980] sm:$0xff]
        %v527 = vld [vmem:[%s181 + $0x988] sm:$0xff]
        %v528 = vld [vmem:[%s181 + $0x990] sm:$0xff]
        %v529 = vld [vmem:[%s181 + $0x998] sm:$0xff]
        %v530 = vld [vmem:[%s181 + $0x9a0] sm:$0xff]
        %v531 = vld [vmem:[%s181 + $0x9a8] sm:$0xff]
        %v532 = vld [vmem:[%s181 + $0x9b0] sm:$0xff]
        %v533 = vld [vmem:[%s181 + $0x9b8] sm:$0xff]
        %v534 = vld [vmem:[%s181 + $0x9c0] sm:$0xff]
        %v535 = vld [vmem:[%s181 + $0x9c8] sm:$0xff]
        %v536 = vld [vmem:[%s181 + $0x9d0] sm:$0xff]
        %v537 = vld [vmem:[%s181 + $0x9d8] sm:$0xff]
        %v538 = vld [vmem:[%s181 + $0x9e0] sm:$0xff]
        %v539 = vld [vmem:[%s181 + $0x9e8] sm:$0xff]
        %v540 = vld [vmem:[%s181 + $0x9f0] sm:$0xff]
        %v541 = vld [vmem:[%s181 + $0x9f8] sm:$0xff]
        %v542 = vld [vmem:[%s181 + $0xa00] sm:$0xff]
        %v543 = vld [vmem:[%s181 + $0xa08] sm:$0xff]
        %v544 = vld [vmem:[%s181 + $0xa10] sm:$0xff]
        %v545 = vld [vmem:[%s181 + $0xa18] sm:$0xff]
        %v546 = vld [vmem:[%s181 + $0xa20] sm:$0xff]
        %v547 = vld [vmem:[%s181 + $0xa28] sm:$0xff]
        %v548 = vld [vmem:[%s181 + $0xa30] sm:$0xff]
        %v549 = vld [vmem:[%s181 + $0xa38] sm:$0xff]
        %v550 = vld [vmem:[%s181 + $0xa40] sm:$0xff]
        %v551 = vld [vmem:[%s181 + $0xa48] sm:$0xff]
        %v552 = vld [vmem:[%s181 + $0xa50] sm:$0xff]
        %v553 = vld [vmem:[%s181 + $0xa58] sm:$0xff]
        %v554 = vld [vmem:[%s181 + $0xa60] sm:$0xff]
        %v555 = vld [vmem:[%s181 + $0xa68] sm:$0xff]
        %v556 = vld [vmem:[%s181 + $0xa70] sm:$0xff]
        %v557 = vld [vmem:[%s181 + $0xa78] sm:$0xff]
        %v558 = vld [vmem:[%s181 + $0xa80] sm:$0xff]
        %v559 = vld [vmem:[%s181 + $0xa88] sm:$0xff]
        %v560 = vld [vmem:[%s181 + $0xa90] sm:$0xff]
        %v561 = vld [vmem:[%s181 + $0xa98] sm:$0xff]
        %v562 = vld [vmem:[%s181 + $0xaa0] sm:$0xff]
        %v563 = vld [vmem:[%s181 + $0xaa8] sm:$0xff]
        %v564 = vld [vmem:[%s181 + $0xab0] sm:$0xff]
        %v565 = vld [vmem:[%s181 + $0xab8] sm:$0xff]
        %v566 = vld [vmem:[%s181 + $0xac0] sm:$0xff]
        %v567 = vld [vmem:[%s181 + $0xac8] sm:$0xff]
        %v568 = vld [vmem:[%s181 + $0xad0] sm:$0xff]
        %v569 = vld [vmem:[%s181 + $0xad8] sm:$0xff]
        %v570 = vld [vmem:[%s181 + $0xae0] sm:$0xff]
        %v571 = vld [vmem:[%s181 + $0xae8] sm:$0xff]
        %v572 = vld [vmem:[%s181 + $0xaf0] sm:$0xff]
        %v573 = vld [vmem:[%s181 + $0xaf8] sm:$0xff]
        %v574 = vld [vmem:[%s181 + $0xb00] sm:$0xff]
        %v575 = vld [vmem:[%s181 + $0xb08] sm:$0xff]
        %v576 = vld [vmem:[%s181 + $0xb10] sm:$0xff]
        %v577 = vld [vmem:[%s181 + $0xb18] sm:$0xff]
        %v578 = vld [vmem:[%s181 + $0xb20] sm:$0xff]
        %v579 = vld [vmem:[%s181 + $0xb28] sm:$0xff]
        %v580 = vld [vmem:[%s181 + $0xb30] sm:$0xff]
        %v581 = vld [vmem:[%s181 + $0xb38] sm:$0xff]
        %v582 = vld [vmem:[%s181 + $0xb40] sm:$0xff]
        %v583 = vld [vmem:[%s181 + $0xb48] sm:$0xff]
        %v584 = vld [vmem:[%s181 + $0xb50] sm:$0xff]
        %v585 = vld [vmem:[%s181 + $0xb58] sm:$0xff]
        %v586 = vld [vmem:[%s181 + $0xb60] sm:$0xff]
        %v587 = vld [vmem:[%s181 + $0xb68] sm:$0xff]
        %v588 = vld [vmem:[%s181 + $0xb70] sm:$0xff]
        %v589 = vld [vmem:[%s181 + $0xb78] sm:$0xff]
        %v590 = vld [vmem:[%s181 + $0xb80] sm:$0xff]
        %v591 = vld [vmem:[%s181 + $0xb88] sm:$0xff]
        %v592 = vld [vmem:[%s181 + $0xb90] sm:$0xff]
        %v593 = vld [vmem:[%s181 + $0xb98] sm:$0xff]
        %v594 = vld [vmem:[%s181 + $0xba0] sm:$0xff]
        %v595 = vld [vmem:[%s181 + $0xba8] sm:$0xff]
        %v596 = vld [vmem:[%s181 + $0xbb0] sm:$0xff]
        %v597 = vld [vmem:[%s181 + $0xbb8] sm:$0xff]
        %v598 = vld [vmem:[%s181 + $0xbc0] sm:$0xff]
        %v599 = vld [vmem:[%s181 + $0xbc8] sm:$0xff]
        %v600 = vld [vmem:[%s181 + $0xbd0] sm:$0xff]
        %v601 = vld [vmem:[%s181 + $0xbd8] sm:$0xff]
        %v602 = vld [vmem:[%s181 + $0xbe0] sm:$0xff]
        %v603 = vld [vmem:[%s181 + $0xbe8] sm:$0xff]
        %v604 = vld [vmem:[%s181 + $0xbf0] sm:$0xff]
        %v605 = vld [vmem:[%s181 + $0xbf8] sm:$0xff]
        %v606 = vld [vmem:[%s181 + $0xc00] sm:$0xff]
        %v607 = vld [vmem:[%s181 + $0xc08] sm:$0xff]
        %v608 = vld [vmem:[%s181 + $0xc10] sm:$0xff]
        %v609 = vld [vmem:[%s181 + $0xc18] sm:$0xff]
        %v610 = vld [vmem:[%s181 + $0xc20] sm:$0xff]
        %v611 = vld [vmem:[%s181 + $0xc28] sm:$0xff]
        %v612 = vld [vmem:[%s181 + $0xc30] sm:$0xff]
        %v613 = vld [vmem:[%s181 + $0xc38] sm:$0xff]
        %v614 = vld [vmem:[%s181 + $0xc40] sm:$0xff]
        %v615 = vld [vmem:[%s181 + $0xc48] sm:$0xff]
        %v616 = vld [vmem:[%s181 + $0xc50] sm:$0xff]
        %v617 = vld [vmem:[%s181 + $0xc58] sm:$0xff]
        %v618 = vld [vmem:[%s181 + $0xc60] sm:$0xff]
        %v619 = vld [vmem:[%s181 + $0xc68] sm:$0xff]
        %v620 = vld [vmem:[%s181 + $0xc70] sm:$0xff]
        %v621 = vld [vmem:[%s181 + $0xc78] sm:$0xff]
        %v622 = vld [vmem:[%s181 + $0xc80] sm:$0xff]
        %v623 = vld [vmem:[%s181 + $0xc88] sm:$0xff]
        %v624 = vld [vmem:[%s181 + $0xc90] sm:$0xff]
        %v625 = vld [vmem:[%s181 + $0xc98] sm:$0xff]
        %v626 = vld [vmem:[%s181 + $0xca0] sm:$0xff]
        %v627 = vld [vmem:[%s181 + $0xca8] sm:$0xff]
        %v628 = vld [vmem:[%s181 + $0xcb0] sm:$0xff]
        %v629 = vld [vmem:[%s181 + $0xcb8] sm:$0xff]
        %v630 = vld [vmem:[%s181 + $0xcc0] sm:$0xff]
        %v631 = vld [vmem:[%s181 + $0xcc8] sm:$0xff]
        %v632 = vld [vmem:[%s181 + $0xcd0] sm:$0xff]
        %v633 = vld [vmem:[%s181 + $0xcd8] sm:$0xff]
        %v634 = vld [vmem:[%s181 + $0xce0] sm:$0xff]
        %v635 = vld [vmem:[%s181 + $0xce8] sm:$0xff]
        %v636 = vld [vmem:[%s181 + $0xcf0] sm:$0xff]
        %v637 = vld [vmem:[%s181 + $0xcf8] sm:$0xff]
        %v638 = vld [vmem:[%s181 + $0xd00] sm:$0xff]
        %v639 = vld [vmem:[%s181 + $0xd08] sm:$0xff]
        %v640 = vld [vmem:[%s181 + $0xd10] sm:$0xff]
        %v641 = vld [vmem:[%s181 + $0xd18] sm:$0xff]
        %v642 = vld [vmem:[%s181 + $0xd20] sm:$0xff]
        %v643 = vld [vmem:[%s181 + $0xd28] sm:$0xff]
        %v644 = vld [vmem:[%s181 + $0xd30] sm:$0xff]
        %v645 = vld [vmem:[%s181 + $0xd38] sm:$0xff]
        %v646 = vld [vmem:[%s181 + $0xd40] sm:$0xff]
        %v647 = vld [vmem:[%s181 + $0xd48] sm:$0xff]
        %v648 = vld [vmem:[%s181 + $0xd50] sm:$0xff]
        %v649 = vld [vmem:[%s181 + $0xd58] sm:$0xff]
        %v650 = vld [vmem:[%s181 + $0xd60] sm:$0xff]
        %v651 = vld [vmem:[%s181 + $0xd68] sm:$0xff]
        %v652 = vld [vmem:[%s181 + $0xd70] sm:$0xff]
        %v653 = vld [vmem:[%s181 + $0xd78] sm:$0xff]
        %v654 = vld [vmem:[%s2] sm:$0xff]
        %656 = vset.pattern.permute.xlu0 0
        %657 = vperm.xlu0 %656, %v654
        %v658 = vpop.permute.xlu0 %657
        %v662 = vunpack.c.l.b16 %v220
        %v663 = vunpack.c.h.b16 %v220
        %v664 = vunpack.c.l.b16 %v221
        %v665 = vunpack.c.h.b16 %v221
        %v666 = vpack.c.b16 %v662, %v662
        %v667 = vpack.c.b16 %v663, %v663
        %v668 = vpack.c.b16 %v664, %v664
        %v669 = vpack.c.b16 %v665, %v665
        %v1105 = vunpack.c.l.b16 %v222
        %v1106 = vunpack.c.h.b16 %v222
        %v1107 = vunpack.c.l.b16 %v223
        %v1108 = vunpack.c.h.b16 %v223
        %v1109 = vunpack.c.l.b16 %v224
        %v1110 = vunpack.c.h.b16 %v224
        %v1111 = vunpack.c.l.b16 %v225
        %v1112 = vunpack.c.h.b16 %v225
        %v1113 = vunpack.c.l.b16 %v226
        %v1114 = vunpack.c.h.b16 %v226
        %v1115 = vunpack.c.l.b16 %v227
        %v1116 = vunpack.c.h.b16 %v227
        %v1117 = vunpack.c.l.b16 %v228
        %v1118 = vunpack.c.h.b16 %v228
        %v1119 = vunpack.c.l.b16 %v229
        %v1120 = vunpack.c.h.b16 %v229
        %v1121 = vunpack.c.l.b16 %v230
        %v1122 = vunpack.c.h.b16 %v230
        %v1123 = vunpack.c.l.b16 %v231
        %v1124 = vunpack.c.h.b16 %v231
        %v1125 = vunpack.c.l.b16 %v232
        %v1126 = vunpack.c.h.b16 %v232
        %v1127 = vunpack.c.l.b16 %v233
        %v1128 = vunpack.c.h.b16 %v233
        %v1129 = vunpack.c.l.b16 %v234
        %v1130 = vunpack.c.h.b16 %v234
        %v1131 = vunpack.c.l.b16 %v235
        %v1132 = vunpack.c.h.b16 %v235
        %v1133 = vunpack.c.l.b16 %v236
        %v1134 = vunpack.c.h.b16 %v236
        %v1135 = vunpack.c.l.b16 %v237
        %v1136 = vunpack.c.h.b16 %v237
        %v1137 = vunpack.c.l.b16 %v238
        %v1138 = vunpack.c.h.b16 %v238
        %v1139 = vunpack.c.l.b16 %v239
        %v1140 = vunpack.c.h.b16 %v239
        %v1141 = vunpack.c.l.b16 %v240
        %v1142 = vunpack.c.h.b16 %v240
        %v1143 = vunpack.c.l.b16 %v241
        %v1144 = vunpack.c.h.b16 %v241
        %v1145 = vunpack.c.l.b16 %v242
        %v1146 = vunpack.c.h.b16 %v242
        %v1147 = vunpack.c.l.b16 %v243
        %v1148 = vunpack.c.h.b16 %v243
        %v1149 = vunpack.c.l.b16 %v244
        %v1150 = vunpack.c.h.b16 %v244
        %v1151 = vunpack.c.l.b16 %v245
        %v1152 = vunpack.c.h.b16 %v245
        %v1153 = vunpack.c.l.b16 %v246
        %v1154 = vunpack.c.h.b16 %v246
        %v1155 = vunpack.c.l.b16 %v247
        %v1156 = vunpack.c.h.b16 %v247
        %v1157 = vunpack.c.l.b16 %v248
        %v1158 = vunpack.c.h.b16 %v248
        %v1159 = vunpack.c.l.b16 %v249
        %v1160 = vunpack.c.h.b16 %v249
        %v1161 = vunpack.c.l.b16 %v250
        %v1162 = vunpack.c.h.b16 %v250
        %v1163 = vunpack.c.l.b16 %v251
        %v1164 = vunpack.c.h.b16 %v251
        %v1165 = vunpack.c.l.b16 %v252
        %v1166 = vunpack.c.h.b16 %v252
        %v1167 = vunpack.c.l.b16 %v253
        %v1168 = vunpack.c.h.b16 %v253
        %v1169 = vunpack.c.l.b16 %v254
        %v1170 = vunpack.c.h.b16 %v254
        %v1171 = vunpack.c.l.b16 %v255
        %v1172 = vunpack.c.h.b16 %v255
        %v1173 = vunpack.c.l.b16 %v256
        %v1174 = vunpack.c.h.b16 %v256
        %v1175 = vunpack.c.l.b16 %v257
        %v1176 = vunpack.c.h.b16 %v257
        %v1177 = vunpack.c.l.b16 %v258
        %v1178 = vunpack.c.h.b16 %v258
        %v1179 = vunpack.c.l.b16 %v259
        %v1180 = vunpack.c.h.b16 %v259
        %v1181 = vunpack.c.l.b16 %v260
        %v1182 = vunpack.c.h.b16 %v260
        %v1183 = vunpack.c.l.b16 %v261
        %v1184 = vunpack.c.h.b16 %v261
        %v1185 = vunpack.c.l.b16 %v262
        %v1186 = vunpack.c.h.b16 %v262
        %v1187 = vunpack.c.l.b16 %v263
        %v1188 = vunpack.c.h.b16 %v263
        %v1189 = vunpack.c.l.b16 %v264
        %v1190 = vunpack.c.h.b16 %v264
        %v1191 = vunpack.c.l.b16 %v265
        %v1192 = vunpack.c.h.b16 %v265
        %v1193 = vunpack.c.l.b16 %v266
        %v1194 = vunpack.c.h.b16 %v266
        %v1195 = vunpack.c.l.b16 %v267
        %v1196 = vunpack.c.h.b16 %v267
        %v1197 = vunpack.c.l.b16 %v268
        %v1198 = vunpack.c.h.b16 %v268
        %v1199 = vunpack.c.l.b16 %v269
        %v1200 = vunpack.c.h.b16 %v269
        %v1201 = vunpack.c.l.b16 %v270
        %v1202 = vunpack.c.h.b16 %v270
        %v1203 = vunpack.c.l.b16 %v271
        %v1204 = vunpack.c.h.b16 %v271
        %v1205 = vunpack.c.l.b16 %v272
        %v1206 = vunpack.c.h.b16 %v272
        %v1207 = vunpack.c.l.b16 %v273
        %v1208 = vunpack.c.h.b16 %v273
        %v1209 = vunpack.c.l.b16 %v274
        %v1210 = vunpack.c.h.b16 %v274
        %v1211 = vunpack.c.l.b16 %v275
        %v1212 = vunpack.c.h.b16 %v275
        %v1213 = vunpack.c.l.b16 %v276
        %v1214 = vunpack.c.h.b16 %v276
        %v1215 = vunpack.c.l.b16 %v277
        %v1216 = vunpack.c.h.b16 %v277
        %v1217 = vunpack.c.l.b16 %v278
        %v1218 = vunpack.c.h.b16 %v278
        %v1219 = vunpack.c.l.b16 %v279
        %v1220 = vunpack.c.h.b16 %v279
        %v1221 = vunpack.c.l.b16 %v280
        %v1222 = vunpack.c.h.b16 %v280
        %v1223 = vunpack.c.l.b16 %v281
        %v1224 = vunpack.c.h.b16 %v281
        %v1225 = vunpack.c.l.b16 %v282
        %v1226 = vunpack.c.h.b16 %v282
        %v1227 = vunpack.c.l.b16 %v283
        %v1228 = vunpack.c.h.b16 %v283
        %v1229 = vunpack.c.l.b16 %v284
        %v1230 = vunpack.c.h.b16 %v284
        %v1231 = vunpack.c.l.b16 %v285
        %v1232 = vunpack.c.h.b16 %v285
        %v1233 = vunpack.c.l.b16 %v286
        %v1234 = vunpack.c.h.b16 %v286
        %v1235 = vunpack.c.l.b16 %v287
        %v1236 = vunpack.c.h.b16 %v287
        %v1237 = vunpack.c.l.b16 %v288
        %v1238 = vunpack.c.h.b16 %v288
        %v1239 = vunpack.c.l.b16 %v289
        %v1240 = vunpack.c.h.b16 %v289
        %v1241 = vunpack.c.l.b16 %v290
        %v1242 = vunpack.c.h.b16 %v290
        %v1243 = vunpack.c.l.b16 %v291
        %v1244 = vunpack.c.h.b16 %v291
        %v1245 = vunpack.c.l.b16 %v292
        %v1246 = vunpack.c.h.b16 %v292
        %v1247 = vunpack.c.l.b16 %v293
        %v1248 = vunpack.c.h.b16 %v293
        %v1249 = vunpack.c.l.b16 %v294
        %v1250 = vunpack.c.h.b16 %v294
        %v1251 = vunpack.c.l.b16 %v295
        %v1252 = vunpack.c.h.b16 %v295
        %v1253 = vunpack.c.l.b16 %v296
        %v1254 = vunpack.c.h.b16 %v296
        %v1255 = vunpack.c.l.b16 %v297
        %v1256 = vunpack.c.h.b16 %v297
        %v1257 = vunpack.c.l.b16 %v298
        %v1258 = vunpack.c.h.b16 %v298
        %v1259 = vunpack.c.l.b16 %v299
        %v1260 = vunpack.c.h.b16 %v299
        %v1261 = vunpack.c.l.b16 %v300
        %v1262 = vunpack.c.h.b16 %v300
        %v1263 = vunpack.c.l.b16 %v301
        %v1264 = vunpack.c.h.b16 %v301
        %v1265 = vunpack.c.l.b16 %v302
        %v1266 = vunpack.c.h.b16 %v302
        %v1267 = vunpack.c.l.b16 %v303
        %v1268 = vunpack.c.h.b16 %v303
        %v1269 = vunpack.c.l.b16 %v304
        %v1270 = vunpack.c.h.b16 %v304
        %v1271 = vunpack.c.l.b16 %v305
        %v1272 = vunpack.c.h.b16 %v305
        %v1273 = vunpack.c.l.b16 %v306
        %v1274 = vunpack.c.h.b16 %v306
        %v1275 = vunpack.c.l.b16 %v307
        %v1276 = vunpack.c.h.b16 %v307
        %v1277 = vunpack.c.l.b16 %v308
        %v1278 = vunpack.c.h.b16 %v308
        %v1279 = vunpack.c.l.b16 %v309
        %v1280 = vunpack.c.h.b16 %v309
        %v1281 = vunpack.c.l.b16 %v310
        %v1282 = vunpack.c.h.b16 %v310
        %v1283 = vunpack.c.l.b16 %v311
        %v1284 = vunpack.c.h.b16 %v311
        %v1285 = vunpack.c.l.b16 %v312
        %v1286 = vunpack.c.h.b16 %v312
        %v1287 = vunpack.c.l.b16 %v313
        %v1288 = vunpack.c.h.b16 %v313
        %v1289 = vunpack.c.l.b16 %v314
        %v1290 = vunpack.c.h.b16 %v314
        %v1291 = vunpack.c.l.b16 %v315
        %v1292 = vunpack.c.h.b16 %v315
        %v1293 = vunpack.c.l.b16 %v316
        %v1294 = vunpack.c.h.b16 %v316
        %v1295 = vunpack.c.l.b16 %v317
        %v1296 = vunpack.c.h.b16 %v317
        %v1297 = vunpack.c.l.b16 %v318
        %v1298 = vunpack.c.h.b16 %v318
        %v1299 = vunpack.c.l.b16 %v319
        %v1300 = vunpack.c.h.b16 %v319
        %v1301 = vunpack.c.l.b16 %v320
        %v1302 = vunpack.c.h.b16 %v320
        %v1303 = vunpack.c.l.b16 %v321
        %v1304 = vunpack.c.h.b16 %v321
        %v1305 = vunpack.c.l.b16 %v322
        %v1306 = vunpack.c.h.b16 %v322
        %v1307 = vunpack.c.l.b16 %v323
        %v1308 = vunpack.c.h.b16 %v323
        %v1309 = vunpack.c.l.b16 %v324
        %v1310 = vunpack.c.h.b16 %v324
        %v1311 = vunpack.c.l.b16 %v325
        %v1312 = vunpack.c.h.b16 %v325
        %v1313 = vunpack.c.l.b16 %v326
        %v1314 = vunpack.c.h.b16 %v326
        %v1315 = vunpack.c.l.b16 %v327
        %v1316 = vunpack.c.h.b16 %v327
        %v1317 = vunpack.c.l.b16 %v328
        %v1318 = vunpack.c.h.b16 %v328
        %v1319 = vunpack.c.l.b16 %v329
        %v1320 = vunpack.c.h.b16 %v329
        %v1321 = vunpack.c.l.b16 %v330
        %v1322 = vunpack.c.h.b16 %v330
        %v1323 = vunpack.c.l.b16 %v331
        %v1324 = vunpack.c.h.b16 %v331
        %v1325 = vunpack.c.l.b16 %v332
        %v1326 = vunpack.c.h.b16 %v332
        %v1327 = vunpack.c.l.b16 %v333
        %v1328 = vunpack.c.h.b16 %v333
        %v1329 = vunpack.c.l.b16 %v334
        %v1330 = vunpack.c.h.b16 %v334
        %v1331 = vunpack.c.l.b16 %v335
        %v1332 = vunpack.c.h.b16 %v335
        %v1333 = vunpack.c.l.b16 %v336
        %v1334 = vunpack.c.h.b16 %v336
        %v1335 = vunpack.c.l.b16 %v337
        %v1336 = vunpack.c.h.b16 %v337
        %v1337 = vunpack.c.l.b16 %v338
        %v1338 = vunpack.c.h.b16 %v338
        %v1339 = vunpack.c.l.b16 %v339
        %v1340 = vunpack.c.h.b16 %v339
        %v1341 = vunpack.c.l.b16 %v340
        %v1342 = vunpack.c.h.b16 %v340
        %v1343 = vunpack.c.l.b16 %v341
        %v1344 = vunpack.c.h.b16 %v341
        %v1345 = vunpack.c.l.b16 %v342
        %v1346 = vunpack.c.h.b16 %v342
        %v1347 = vunpack.c.l.b16 %v343
        %v1348 = vunpack.c.h.b16 %v343
        %v1349 = vunpack.c.l.b16 %v344
        %v1350 = vunpack.c.h.b16 %v344
        %v1351 = vunpack.c.l.b16 %v345
        %v1352 = vunpack.c.h.b16 %v345
        %v1353 = vunpack.c.l.b16 %v346
        %v1354 = vunpack.c.h.b16 %v346
        %v1355 = vunpack.c.l.b16 %v347
        %v1356 = vunpack.c.h.b16 %v347
        %v1357 = vunpack.c.l.b16 %v348
        %v1358 = vunpack.c.h.b16 %v348
        %v1359 = vunpack.c.l.b16 %v349
        %v1360 = vunpack.c.h.b16 %v349
        %v1361 = vunpack.c.l.b16 %v350
        %v1362 = vunpack.c.h.b16 %v350
        %v1363 = vunpack.c.l.b16 %v351
        %v1364 = vunpack.c.h.b16 %v351
        %v1365 = vunpack.c.l.b16 %v352
        %v1366 = vunpack.c.h.b16 %v352
        %v1367 = vunpack.c.l.b16 %v353
        %v1368 = vunpack.c.h.b16 %v353
        %v1369 = vunpack.c.l.b16 %v354
        %v1370 = vunpack.c.h.b16 %v354
        %v1371 = vunpack.c.l.b16 %v355
        %v1372 = vunpack.c.h.b16 %v355
        %v1373 = vunpack.c.l.b16 %v356
        %v1374 = vunpack.c.h.b16 %v356
        %v1375 = vunpack.c.l.b16 %v357
        %v1376 = vunpack.c.h.b16 %v357
        %v1377 = vunpack.c.l.b16 %v358
        %v1378 = vunpack.c.h.b16 %v358
        %v1379 = vunpack.c.l.b16 %v359
        %v1380 = vunpack.c.h.b16 %v359
        %v1381 = vunpack.c.l.b16 %v360
        %v1382 = vunpack.c.h.b16 %v360
        %v1383 = vunpack.c.l.b16 %v361
        %v1384 = vunpack.c.h.b16 %v361
        %v1385 = vunpack.c.l.b16 %v362
        %v1386 = vunpack.c.h.b16 %v362
        %v1387 = vunpack.c.l.b16 %v363
        %v1388 = vunpack.c.h.b16 %v363
        %v1389 = vunpack.c.l.b16 %v364
        %v1390 = vunpack.c.h.b16 %v364
        %v1391 = vunpack.c.l.b16 %v365
        %v1392 = vunpack.c.h.b16 %v365
        %v1393 = vunpack.c.l.b16 %v366
        %v1394 = vunpack.c.h.b16 %v366
        %v1395 = vunpack.c.l.b16 %v367
        %v1396 = vunpack.c.h.b16 %v367
        %v1397 = vunpack.c.l.b16 %v368
        %v1398 = vunpack.c.h.b16 %v368
        %v1399 = vunpack.c.l.b16 %v369
        %v1400 = vunpack.c.h.b16 %v369
        %v1401 = vunpack.c.l.b16 %v370
        %v1402 = vunpack.c.h.b16 %v370
        %v1403 = vunpack.c.l.b16 %v371
        %v1404 = vunpack.c.h.b16 %v371
        %v1405 = vunpack.c.l.b16 %v372
        %v1406 = vunpack.c.h.b16 %v372
        %v1407 = vunpack.c.l.b16 %v373
        %v1408 = vunpack.c.h.b16 %v373
        %v1409 = vunpack.c.l.b16 %v374
        %v1410 = vunpack.c.h.b16 %v374
        %v1411 = vunpack.c.l.b16 %v375
        %v1412 = vunpack.c.h.b16 %v375
        %v1413 = vunpack.c.l.b16 %v376
        %v1414 = vunpack.c.h.b16 %v376
        %v1415 = vunpack.c.l.b16 %v377
        %v1416 = vunpack.c.h.b16 %v377
        %v1417 = vunpack.c.l.b16 %v378
        %v1418 = vunpack.c.h.b16 %v378
        %v1419 = vunpack.c.l.b16 %v379
        %v1420 = vunpack.c.h.b16 %v379
        %v1421 = vunpack.c.l.b16 %v380
        %v1422 = vunpack.c.h.b16 %v380
        %v1423 = vunpack.c.l.b16 %v381
        %v1424 = vunpack.c.h.b16 %v381
        %v1425 = vunpack.c.l.b16 %v382
        %v1426 = vunpack.c.h.b16 %v382
        %v1427 = vunpack.c.l.b16 %v383
        %v1428 = vunpack.c.h.b16 %v383
        %v1429 = vunpack.c.l.b16 %v384
        %v1430 = vunpack.c.h.b16 %v384
        %v1431 = vunpack.c.l.b16 %v385
        %v1432 = vunpack.c.h.b16 %v385
        %v1433 = vunpack.c.l.b16 %v386
        %v1434 = vunpack.c.h.b16 %v386
        %v1435 = vunpack.c.l.b16 %v387
        %v1436 = vunpack.c.h.b16 %v387
        %v1437 = vunpack.c.l.b16 %v388
        %v1438 = vunpack.c.h.b16 %v388
        %v1439 = vunpack.c.l.b16 %v389
        %v1440 = vunpack.c.h.b16 %v389
        %v1441 = vunpack.c.l.b16 %v390
        %v1442 = vunpack.c.h.b16 %v390
        %v1443 = vunpack.c.l.b16 %v391
        %v1444 = vunpack.c.h.b16 %v391
        %v1445 = vunpack.c.l.b16 %v392
        %v1446 = vunpack.c.h.b16 %v392
        %v1447 = vunpack.c.l.b16 %v393
        %v1448 = vunpack.c.h.b16 %v393
        %v1449 = vunpack.c.l.b16 %v394
        %v1450 = vunpack.c.h.b16 %v394
        %v1451 = vunpack.c.l.b16 %v395
        %v1452 = vunpack.c.h.b16 %v395
        %v1453 = vunpack.c.l.b16 %v396
        %v1454 = vunpack.c.h.b16 %v396
        %v1455 = vunpack.c.l.b16 %v397
        %v1456 = vunpack.c.h.b16 %v397
        %v1457 = vunpack.c.l.b16 %v398
        %v1458 = vunpack.c.h.b16 %v398
        %v1459 = vunpack.c.l.b16 %v399
        %v1460 = vunpack.c.h.b16 %v399
        %v1461 = vunpack.c.l.b16 %v400
        %v1462 = vunpack.c.h.b16 %v400
        %v1463 = vunpack.c.l.b16 %v401
        %v1464 = vunpack.c.h.b16 %v401
        %v1465 = vunpack.c.l.b16 %v402
        %v1466 = vunpack.c.h.b16 %v402
        %v1467 = vunpack.c.l.b16 %v403
        %v1468 = vunpack.c.h.b16 %v403
        %v1469 = vunpack.c.l.b16 %v404
        %v1470 = vunpack.c.h.b16 %v404
        %v1471 = vunpack.c.l.b16 %v405
        %v1472 = vunpack.c.h.b16 %v405
        %v1473 = vunpack.c.l.b16 %v406
        %v1474 = vunpack.c.h.b16 %v406
        %v1475 = vunpack.c.l.b16 %v407
        %v1476 = vunpack.c.h.b16 %v407
        %v1477 = vunpack.c.l.b16 %v408
        %v1478 = vunpack.c.h.b16 %v408
        %v1479 = vunpack.c.l.b16 %v409
        %v1480 = vunpack.c.h.b16 %v409
        %v1481 = vunpack.c.l.b16 %v410
        %v1482 = vunpack.c.h.b16 %v410
        %v1483 = vunpack.c.l.b16 %v411
        %v1484 = vunpack.c.h.b16 %v411
        %v1485 = vunpack.c.l.b16 %v412
        %v1486 = vunpack.c.h.b16 %v412
        %v1487 = vunpack.c.l.b16 %v413
        %v1488 = vunpack.c.h.b16 %v413
        %v1489 = vunpack.c.l.b16 %v414
        %v1490 = vunpack.c.h.b16 %v414
        %v1491 = vunpack.c.l.b16 %v415
        %v1492 = vunpack.c.h.b16 %v415
        %v1493 = vunpack.c.l.b16 %v416
        %v1494 = vunpack.c.h.b16 %v416
        %v1495 = vunpack.c.l.b16 %v417
        %v1496 = vunpack.c.h.b16 %v417
        %v1497 = vunpack.c.l.b16 %v418
        %v1498 = vunpack.c.h.b16 %v418
        %v1499 = vunpack.c.l.b16 %v419
        %v1500 = vunpack.c.h.b16 %v419
        %v1501 = vunpack.c.l.b16 %v420
        %v1502 = vunpack.c.h.b16 %v420
        %v1503 = vunpack.c.l.b16 %v421
        %v1504 = vunpack.c.h.b16 %v421
        %v1505 = vunpack.c.l.b16 %v422
        %v1506 = vunpack.c.h.b16 %v422
        %v1507 = vunpack.c.l.b16 %v423
        %v1508 = vunpack.c.h.b16 %v423
        %v1509 = vunpack.c.l.b16 %v424
        %v1510 = vunpack.c.h.b16 %v424
        %v1511 = vunpack.c.l.b16 %v425
        %v1512 = vunpack.c.h.b16 %v425
        %v1513 = vunpack.c.l.b16 %v426
        %v1514 = vunpack.c.h.b16 %v426
        %v1515 = vunpack.c.l.b16 %v427
        %v1516 = vunpack.c.h.b16 %v427
        %v1517 = vunpack.c.l.b16 %v428
        %v1518 = vunpack.c.h.b16 %v428
        %v1519 = vunpack.c.l.b16 %v429
        %v1520 = vunpack.c.h.b16 %v429
        %v1521 = vunpack.c.l.b16 %v430
        %v1522 = vunpack.c.h.b16 %v430
        %v1523 = vunpack.c.l.b16 %v431
        %v1524 = vunpack.c.h.b16 %v431
        %v1525 = vunpack.c.l.b16 %v432
        %v1526 = vunpack.c.h.b16 %v432
        %v1527 = vunpack.c.l.b16 %v433
        %v1528 = vunpack.c.h.b16 %v433
        %v1529 = vunpack.c.l.b16 %v434
        %v1530 = vunpack.c.h.b16 %v434
        %v1531 = vunpack.c.l.b16 %v435
        %v1532 = vunpack.c.h.b16 %v435
        %v1533 = vunpack.c.l.b16 %v436
        %v1534 = vunpack.c.h.b16 %v436
        %v1535 = vunpack.c.l.b16 %v437
        %v1536 = vunpack.c.h.b16 %v437
        %v1537 = vunpack.c.l.b16 %v438
        %v1538 = vunpack.c.h.b16 %v438
        %v1539 = vunpack.c.l.b16 %v439
        %v1540 = vunpack.c.h.b16 %v439
        %v1541 = vunpack.c.l.b16 %v440
        %v1542 = vunpack.c.h.b16 %v440
        %v1543 = vunpack.c.l.b16 %v441
        %v1544 = vunpack.c.h.b16 %v441
        %v1545 = vunpack.c.l.b16 %v442
        %v1546 = vunpack.c.h.b16 %v442
        %v1547 = vunpack.c.l.b16 %v443
        %v1548 = vunpack.c.h.b16 %v443
        %v1549 = vunpack.c.l.b16 %v444
        %v1550 = vunpack.c.h.b16 %v444
        %v1551 = vunpack.c.l.b16 %v445
        %v1552 = vunpack.c.h.b16 %v445
        %v1553 = vunpack.c.l.b16 %v446
        %v1554 = vunpack.c.h.b16 %v446
        %v1555 = vunpack.c.l.b16 %v447
        %v1556 = vunpack.c.h.b16 %v447
        %v1557 = vunpack.c.l.b16 %v448
        %v1558 = vunpack.c.h.b16 %v448
        %v1559 = vunpack.c.l.b16 %v449
        %v1560 = vunpack.c.h.b16 %v449
        %v1561 = vunpack.c.l.b16 %v450
        %v1562 = vunpack.c.h.b16 %v450
        %v1563 = vunpack.c.l.b16 %v451
        %v1564 = vunpack.c.h.b16 %v451
        %v1565 = vunpack.c.l.b16 %v452
        %v1566 = vunpack.c.h.b16 %v452
        %v1567 = vunpack.c.l.b16 %v453
        %v1568 = vunpack.c.h.b16 %v453
        %v1569 = vunpack.c.l.b16 %v454
        %v1570 = vunpack.c.h.b16 %v454
        %v1571 = vunpack.c.l.b16 %v455
        %v1572 = vunpack.c.h.b16 %v455
        %v1573 = vunpack.c.l.b16 %v456
        %v1574 = vunpack.c.h.b16 %v456
        %v1575 = vunpack.c.l.b16 %v457
        %v1576 = vunpack.c.h.b16 %v457
        %v1577 = vunpack.c.l.b16 %v458
        %v1578 = vunpack.c.h.b16 %v458
        %v1579 = vunpack.c.l.b16 %v459
        %v1580 = vunpack.c.h.b16 %v459
        %v1581 = vunpack.c.l.b16 %v460
        %v1582 = vunpack.c.h.b16 %v460
        %v1583 = vunpack.c.l.b16 %v461
        %v1584 = vunpack.c.h.b16 %v461
        %v1585 = vunpack.c.l.b16 %v462
        %v1586 = vunpack.c.h.b16 %v462
        %v1587 = vunpack.c.l.b16 %v463
        %v1588 = vunpack.c.h.b16 %v463
        %v1589 = vunpack.c.l.b16 %v464
        %v1590 = vunpack.c.h.b16 %v464
        %v1591 = vunpack.c.l.b16 %v465
        %v1592 = vunpack.c.h.b16 %v465
        %v1593 = vunpack.c.l.b16 %v466
        %v1594 = vunpack.c.h.b16 %v466
        %v1595 = vunpack.c.l.b16 %v467
        %v1596 = vunpack.c.h.b16 %v467
        %v1597 = vunpack.c.l.b16 %v468
        %v1598 = vunpack.c.h.b16 %v468
        %v1599 = vunpack.c.l.b16 %v469
        %v1600 = vunpack.c.h.b16 %v469
        %v1601 = vunpack.c.l.b16 %v470
        %v1602 = vunpack.c.h.b16 %v470
        %v1603 = vunpack.c.l.b16 %v471
        %v1604 = vunpack.c.h.b16 %v471
        %v1605 = vunpack.c.l.b16 %v472
        %v1606 = vunpack.c.h.b16 %v472
        %v1607 = vunpack.c.l.b16 %v473
        %v1608 = vunpack.c.h.b16 %v473
        %v1609 = vunpack.c.l.b16 %v474
        %v1610 = vunpack.c.h.b16 %v474
        %v1611 = vunpack.c.l.b16 %v475
        %v1612 = vunpack.c.h.b16 %v475
        %v1613 = vunpack.c.l.b16 %v476
        %v1614 = vunpack.c.h.b16 %v476
        %v1615 = vunpack.c.l.b16 %v477
        %v1616 = vunpack.c.h.b16 %v477
        %v1617 = vunpack.c.l.b16 %v478
        %v1618 = vunpack.c.h.b16 %v478
        %v1619 = vunpack.c.l.b16 %v479
        %v1620 = vunpack.c.h.b16 %v479
        %v1621 = vunpack.c.l.b16 %v480
        %v1622 = vunpack.c.h.b16 %v480
        %v1623 = vunpack.c.l.b16 %v481
        %v1624 = vunpack.c.h.b16 %v481
        %v1625 = vunpack.c.l.b16 %v482
        %v1626 = vunpack.c.h.b16 %v482
        %v1627 = vunpack.c.l.b16 %v483
        %v1628 = vunpack.c.h.b16 %v483
        %v1629 = vunpack.c.l.b16 %v484
        %v1630 = vunpack.c.h.b16 %v484
        %v1631 = vunpack.c.l.b16 %v485
        %v1632 = vunpack.c.h.b16 %v485
        %v1633 = vunpack.c.l.b16 %v486
        %v1634 = vunpack.c.h.b16 %v486
        %v1635 = vunpack.c.l.b16 %v487
        %v1636 = vunpack.c.h.b16 %v487
        %v1637 = vunpack.c.l.b16 %v488
        %v1638 = vunpack.c.h.b16 %v488
        %v1639 = vunpack.c.l.b16 %v489
        %v1640 = vunpack.c.h.b16 %v489
        %v1641 = vunpack.c.l.b16 %v490
        %v1642 = vunpack.c.h.b16 %v490
        %v1643 = vunpack.c.l.b16 %v491
        %v1644 = vunpack.c.h.b16 %v491
        %v1645 = vunpack.c.l.b16 %v492
        %v1646 = vunpack.c.h.b16 %v492
        %v1647 = vunpack.c.l.b16 %v493
        %v1648 = vunpack.c.h.b16 %v493
        %v1649 = vunpack.c.l.b16 %v494
        %v1650 = vunpack.c.h.b16 %v494
        %v1651 = vunpack.c.l.b16 %v495
        %v1652 = vunpack.c.h.b16 %v495
        %v1653 = vunpack.c.l.b16 %v496
        %v1654 = vunpack.c.h.b16 %v496
        %v1655 = vunpack.c.l.b16 %v497
        %v1656 = vunpack.c.h.b16 %v497
        %v1657 = vunpack.c.l.b16 %v498
        %v1658 = vunpack.c.h.b16 %v498
        %v1659 = vunpack.c.l.b16 %v499
        %v1660 = vunpack.c.h.b16 %v499
        %v1661 = vunpack.c.l.b16 %v500
        %v1662 = vunpack.c.h.b16 %v500
        %v1663 = vunpack.c.l.b16 %v501
        %v1664 = vunpack.c.h.b16 %v501
        %v1665 = vunpack.c.l.b16 %v502
        %v1666 = vunpack.c.h.b16 %v502
        %v1667 = vunpack.c.l.b16 %v503
        %v1668 = vunpack.c.h.b16 %v503
        %v1669 = vunpack.c.l.b16 %v504
        %v1670 = vunpack.c.h.b16 %v504
        %v1671 = vunpack.c.l.b16 %v505
        %v1672 = vunpack.c.h.b16 %v505
        %v1673 = vunpack.c.l.b16 %v506
        %v1674 = vunpack.c.h.b16 %v506
        %v1675 = vunpack.c.l.b16 %v507
        %v1676 = vunpack.c.h.b16 %v507
        %v1677 = vunpack.c.l.b16 %v508
        %v1678 = vunpack.c.h.b16 %v508
        %v1679 = vunpack.c.l.b16 %v509
        %v1680 = vunpack.c.h.b16 %v509
        %v1681 = vunpack.c.l.b16 %v510
        %v1682 = vunpack.c.h.b16 %v510
        %v1683 = vunpack.c.l.b16 %v511
        %v1684 = vunpack.c.h.b16 %v511
        %v1685 = vunpack.c.l.b16 %v512
        %v1686 = vunpack.c.h.b16 %v512
        %v1687 = vunpack.c.l.b16 %v513
        %v1688 = vunpack.c.h.b16 %v513
        %v1689 = vunpack.c.l.b16 %v514
        %v1690 = vunpack.c.h.b16 %v514
        %v1691 = vunpack.c.l.b16 %v515
        %v1692 = vunpack.c.h.b16 %v515
        %v1693 = vunpack.c.l.b16 %v516
        %v1694 = vunpack.c.h.b16 %v516
        %v1695 = vunpack.c.l.b16 %v517
        %v1696 = vunpack.c.h.b16 %v517
        %v1697 = vunpack.c.l.b16 %v518
        %v1698 = vunpack.c.h.b16 %v518
        %v1699 = vunpack.c.l.b16 %v519
        %v1700 = vunpack.c.h.b16 %v519
        %v1701 = vunpack.c.l.b16 %v520
        %v1702 = vunpack.c.h.b16 %v520
        %v1703 = vunpack.c.l.b16 %v521
        %v1704 = vunpack.c.h.b16 %v521
        %v1705 = vunpack.c.l.b16 %v522
        %v1706 = vunpack.c.h.b16 %v522
        %v1707 = vunpack.c.l.b16 %v523
        %v1708 = vunpack.c.h.b16 %v523
        %v1709 = vunpack.c.l.b16 %v524
        %v1710 = vunpack.c.h.b16 %v524
        %v1711 = vunpack.c.l.b16 %v525
        %v1712 = vunpack.c.h.b16 %v525
        %v1713 = vunpack.c.l.b16 %v526
        %v1714 = vunpack.c.h.b16 %v526
        %v1715 = vunpack.c.l.b16 %v527
        %v1716 = vunpack.c.h.b16 %v527
        %v1717 = vunpack.c.l.b16 %v528
        %v1718 = vunpack.c.h.b16 %v528
        %v1719 = vunpack.c.l.b16 %v529
        %v1720 = vunpack.c.h.b16 %v529
        %v1721 = vunpack.c.l.b16 %v530
        %v1722 = vunpack.c.h.b16 %v530
        %v1723 = vunpack.c.l.b16 %v531
        %v1724 = vunpack.c.h.b16 %v531
        %v1725 = vunpack.c.l.b16 %v532
        %v1726 = vunpack.c.h.b16 %v532
        %v1727 = vunpack.c.l.b16 %v533
        %v1728 = vunpack.c.h.b16 %v533
        %v1729 = vunpack.c.l.b16 %v534
        %v1730 = vunpack.c.h.b16 %v534
        %v1731 = vunpack.c.l.b16 %v535
        %v1732 = vunpack.c.h.b16 %v535
        %v1733 = vunpack.c.l.b16 %v536
        %v1734 = vunpack.c.h.b16 %v536
        %v1735 = vunpack.c.l.b16 %v537
        %v1736 = vunpack.c.h.b16 %v537
        %v1737 = vunpack.c.l.b16 %v538
        %v1738 = vunpack.c.h.b16 %v538
        %v1739 = vunpack.c.l.b16 %v539
        %v1740 = vunpack.c.h.b16 %v539
        %v1741 = vunpack.c.l.b16 %v540
        %v1742 = vunpack.c.h.b16 %v540
        %v1743 = vunpack.c.l.b16 %v541
        %v1744 = vunpack.c.h.b16 %v541
        %v1745 = vunpack.c.l.b16 %v542
        %v1746 = vunpack.c.h.b16 %v542
        %v1747 = vunpack.c.l.b16 %v543
        %v1748 = vunpack.c.h.b16 %v543
        %v1749 = vunpack.c.l.b16 %v544
        %v1750 = vunpack.c.h.b16 %v544
        %v1751 = vunpack.c.l.b16 %v545
        %v1752 = vunpack.c.h.b16 %v545
        %v1753 = vunpack.c.l.b16 %v546
        %v1754 = vunpack.c.h.b16 %v546
        %v1755 = vunpack.c.l.b16 %v547
        %v1756 = vunpack.c.h.b16 %v547
        %v1757 = vunpack.c.l.b16 %v548
        %v1758 = vunpack.c.h.b16 %v548
        %v1759 = vunpack.c.l.b16 %v549
        %v1760 = vunpack.c.h.b16 %v549
        %v1761 = vunpack.c.l.b16 %v550
        %v1762 = vunpack.c.h.b16 %v550
        %v1763 = vunpack.c.l.b16 %v551
        %v1764 = vunpack.c.h.b16 %v551
        %v1765 = vunpack.c.l.b16 %v552
        %v1766 = vunpack.c.h.b16 %v552
        %v1767 = vunpack.c.l.b16 %v553
        %v1768 = vunpack.c.h.b16 %v553
        %v1769 = vunpack.c.l.b16 %v554
        %v1770 = vunpack.c.h.b16 %v554
        %v1771 = vunpack.c.l.b16 %v555
        %v1772 = vunpack.c.h.b16 %v555
        %v1773 = vunpack.c.l.b16 %v556
        %v1774 = vunpack.c.h.b16 %v556
        %v1775 = vunpack.c.l.b16 %v557
        %v1776 = vunpack.c.h.b16 %v557
        %v1777 = vunpack.c.l.b16 %v558
        %v1778 = vunpack.c.h.b16 %v558
        %v1779 = vunpack.c.l.b16 %v559
        %v1780 = vunpack.c.h.b16 %v559
        %v1781 = vunpack.c.l.b16 %v560
        %v1782 = vunpack.c.h.b16 %v560
        %v1783 = vunpack.c.l.b16 %v561
        %v1784 = vunpack.c.h.b16 %v561
        %v1785 = vunpack.c.l.b16 %v562
        %v1786 = vunpack.c.h.b16 %v562
        %v1787 = vunpack.c.l.b16 %v563
        %v1788 = vunpack.c.h.b16 %v563
        %v1789 = vunpack.c.l.b16 %v564
        %v1790 = vunpack.c.h.b16 %v564
        %v1791 = vunpack.c.l.b16 %v565
        %v1792 = vunpack.c.h.b16 %v565
        %v1793 = vunpack.c.l.b16 %v566
        %v1794 = vunpack.c.h.b16 %v566
        %v1795 = vunpack.c.l.b16 %v567
        %v1796 = vunpack.c.h.b16 %v567
        %v1797 = vunpack.c.l.b16 %v568
        %v1798 = vunpack.c.h.b16 %v568
        %v1799 = vunpack.c.l.b16 %v569
        %v1800 = vunpack.c.h.b16 %v569
        %v1801 = vunpack.c.l.b16 %v570
        %v1802 = vunpack.c.h.b16 %v570
        %v1803 = vunpack.c.l.b16 %v571
        %v1804 = vunpack.c.h.b16 %v571
        %v1805 = vunpack.c.l.b16 %v572
        %v1806 = vunpack.c.h.b16 %v572
        %v1807 = vunpack.c.l.b16 %v573
        %v1808 = vunpack.c.h.b16 %v573
        %v1809 = vunpack.c.l.b16 %v574
        %v1810 = vunpack.c.h.b16 %v574
        %v1811 = vunpack.c.l.b16 %v575
        %v1812 = vunpack.c.h.b16 %v575
        %v1813 = vunpack.c.l.b16 %v576
        %v1814 = vunpack.c.h.b16 %v576
        %v1815 = vunpack.c.l.b16 %v577
        %v1816 = vunpack.c.h.b16 %v577
        %v1817 = vunpack.c.l.b16 %v578
        %v1818 = vunpack.c.h.b16 %v578
        %v1819 = vunpack.c.l.b16 %v579
        %v1820 = vunpack.c.h.b16 %v579
        %v1821 = vunpack.c.l.b16 %v580
        %v1822 = vunpack.c.h.b16 %v580
        %v1823 = vunpack.c.l.b16 %v581
        %v1824 = vunpack.c.h.b16 %v581
        %v1825 = vunpack.c.l.b16 %v582
        %v1826 = vunpack.c.h.b16 %v582
        %v1827 = vunpack.c.l.b16 %v583
        %v1828 = vunpack.c.h.b16 %v583
        %v1829 = vunpack.c.l.b16 %v584
        %v1830 = vunpack.c.h.b16 %v584
        %v1831 = vunpack.c.l.b16 %v585
        %v1832 = vunpack.c.h.b16 %v585
        %v1833 = vunpack.c.l.b16 %v586
        %v1834 = vunpack.c.h.b16 %v586
        %v1835 = vunpack.c.l.b16 %v587
        %v1836 = vunpack.c.h.b16 %v587
        %v1837 = vunpack.c.l.b16 %v588
        %v1838 = vunpack.c.h.b16 %v588
        %v1839 = vunpack.c.l.b16 %v589
        %v1840 = vunpack.c.h.b16 %v589
        %v1841 = vunpack.c.l.b16 %v590
        %v1842 = vunpack.c.h.b16 %v590
        %v1843 = vunpack.c.l.b16 %v591
        %v1844 = vunpack.c.h.b16 %v591
        %v1845 = vunpack.c.l.b16 %v592
        %v1846 = vunpack.c.h.b16 %v592
        %v1847 = vunpack.c.l.b16 %v593
        %v1848 = vunpack.c.h.b16 %v593
        %v1849 = vunpack.c.l.b16 %v594
        %v1850 = vunpack.c.h.b16 %v594
        %v1851 = vunpack.c.l.b16 %v595
        %v1852 = vunpack.c.h.b16 %v595
        %v1853 = vunpack.c.l.b16 %v596
        %v1854 = vunpack.c.h.b16 %v596
        %v1855 = vunpack.c.l.b16 %v597
        %v1856 = vunpack.c.h.b16 %v597
        %v1857 = vunpack.c.l.b16 %v598
        %v1858 = vunpack.c.h.b16 %v598
        %v1859 = vunpack.c.l.b16 %v599
        %v1860 = vunpack.c.h.b16 %v599
        %v1861 = vunpack.c.l.b16 %v600
        %v1862 = vunpack.c.h.b16 %v600
        %v1863 = vunpack.c.l.b16 %v601
        %v1864 = vunpack.c.h.b16 %v601
        %v1865 = vunpack.c.l.b16 %v602
        %v1866 = vunpack.c.h.b16 %v602
        %v1867 = vunpack.c.l.b16 %v603
        %v1868 = vunpack.c.h.b16 %v603
        %v1869 = vunpack.c.l.b16 %v604
        %v1870 = vunpack.c.h.b16 %v604
        %v1871 = vunpack.c.l.b16 %v605
        %v1872 = vunpack.c.h.b16 %v605
        %v1873 = vunpack.c.l.b16 %v606
        %v1874 = vunpack.c.h.b16 %v606
        %v1875 = vunpack.c.l.b16 %v607
        %v1876 = vunpack.c.h.b16 %v607
        %v1877 = vunpack.c.l.b16 %v608
        %v1878 = vunpack.c.h.b16 %v608
        %v1879 = vunpack.c.l.b16 %v609
        %v1880 = vunpack.c.h.b16 %v609
        %v1881 = vunpack.c.l.b16 %v610
        %v1882 = vunpack.c.h.b16 %v610
        %v1883 = vunpack.c.l.b16 %v611
        %v1884 = vunpack.c.h.b16 %v611
        %v1885 = vunpack.c.l.b16 %v612
        %v1886 = vunpack.c.h.b16 %v612
        %v1887 = vunpack.c.l.b16 %v613
        %v1888 = vunpack.c.h.b16 %v613
        %v1889 = vunpack.c.l.b16 %v614
        %v1890 = vunpack.c.h.b16 %v614
        %v1891 = vunpack.c.l.b16 %v615
        %v1892 = vunpack.c.h.b16 %v615
        %v1893 = vunpack.c.l.b16 %v616
        %v1894 = vunpack.c.h.b16 %v616
        %v1895 = vunpack.c.l.b16 %v617
        %v1896 = vunpack.c.h.b16 %v617
        %v1897 = vunpack.c.l.b16 %v618
        %v1898 = vunpack.c.h.b16 %v618
        %v1899 = vunpack.c.l.b16 %v619
        %v1900 = vunpack.c.h.b16 %v619
        %v1901 = vunpack.c.l.b16 %v620
        %v1902 = vunpack.c.h.b16 %v620
        %v1903 = vunpack.c.l.b16 %v621
        %v1904 = vunpack.c.h.b16 %v621
        %v1905 = vunpack.c.l.b16 %v622
        %v1906 = vunpack.c.h.b16 %v622
        %v1907 = vunpack.c.l.b16 %v623
        %v1908 = vunpack.c.h.b16 %v623
        %v1909 = vunpack.c.l.b16 %v624
        %v1910 = vunpack.c.h.b16 %v624
        %v1911 = vunpack.c.l.b16 %v625
        %v1912 = vunpack.c.h.b16 %v625
        %v1913 = vunpack.c.l.b16 %v626
        %v1914 = vunpack.c.h.b16 %v626
        %v1915 = vunpack.c.l.b16 %v627
        %v1916 = vunpack.c.h.b16 %v627
        %v1917 = vunpack.c.l.b16 %v628
        %v1918 = vunpack.c.h.b16 %v628
        %v1919 = vunpack.c.l.b16 %v629
        %v1920 = vunpack.c.h.b16 %v629
        %v1921 = vunpack.c.l.b16 %v630
        %v1922 = vunpack.c.h.b16 %v630
        %v1923 = vunpack.c.l.b16 %v631
        %v1924 = vunpack.c.h.b16 %v631
        %v1925 = vunpack.c.l.b16 %v632
        %v1926 = vunpack.c.h.b16 %v632
        %v1927 = vunpack.c.l.b16 %v633
        %v1928 = vunpack.c.h.b16 %v633
        %v1929 = vunpack.c.l.b16 %v634
        %v1930 = vunpack.c.h.b16 %v634
        %v1931 = vunpack.c.l.b16 %v635
        %v1932 = vunpack.c.h.b16 %v635
        %v1933 = vunpack.c.l.b16 %v636
        %v1934 = vunpack.c.h.b16 %v636
        %v1935 = vunpack.c.l.b16 %v637
        %v1936 = vunpack.c.h.b16 %v637
        %v1937 = vunpack.c.l.b16 %v638
        %v1938 = vunpack.c.h.b16 %v638
        %v1939 = vunpack.c.l.b16 %v639
        %v1940 = vunpack.c.h.b16 %v639
        %v1941 = vunpack.c.l.b16 %v640
        %v1942 = vunpack.c.h.b16 %v640
        %v1943 = vunpack.c.l.b16 %v641
        %v1944 = vunpack.c.h.b16 %v641
        %v1945 = vunpack.c.l.b16 %v642
        %v1946 = vunpack.c.h.b16 %v642
        %v1947 = vunpack.c.l.b16 %v643
        %v1948 = vunpack.c.h.b16 %v643
        %v1949 = vunpack.c.l.b16 %v644
        %v1950 = vunpack.c.h.b16 %v644
        %v1951 = vunpack.c.l.b16 %v645
        %v1952 = vunpack.c.h.b16 %v645
        %v1953 = vunpack.c.l.b16 %v646
        %v1954 = vunpack.c.h.b16 %v646
        %v1955 = vunpack.c.l.b16 %v647
        %v1956 = vunpack.c.h.b16 %v647
        %v1957 = vunpack.c.l.b16 %v648
        %v1958 = vunpack.c.h.b16 %v648
        %v1959 = vunpack.c.l.b16 %v649
        %v1960 = vunpack.c.h.b16 %v649
        %v1961 = vunpack.c.l.b16 %v650
        %v1962 = vunpack.c.h.b16 %v650
        %v1963 = vunpack.c.l.b16 %v651
        %v1964 = vunpack.c.h.b16 %v651
        %v1965 = vunpack.c.l.b16 %v652
        %v1966 = vunpack.c.h.b16 %v652
        %v1967 = vunpack.c.l.b16 %v653
        %v1968 = vunpack.c.h.b16 %v653
        %v1969 = vpack.c.b16 %v1121, %v1105
        %v1970 = vpack.c.b16 %v1122, %v1106
        %v1971 = vpack.c.b16 %v1123, %v1107
        %v1972 = vpack.c.b16 %v1124, %v1108
        %v1973 = vpack.c.b16 %v1125, %v1109
        %v1974 = vpack.c.b16 %v1126, %v1110
        %v1975 = vpack.c.b16 %v1127, %v1111
        %v1976 = vpack.c.b16 %v1128, %v1112
        %v1977 = vpack.c.b16 %v1129, %v1113
        %v1978 = vpack.c.b16 %v1130, %v1114
        %v1979 = vpack.c.b16 %v1131, %v1115
        %v1980 = vpack.c.b16 %v1132, %v1116
        %v1981 = vpack.c.b16 %v1133, %v1117
        %v1982 = vpack.c.b16 %v1134, %v1118
        %v1983 = vpack.c.b16 %v1135, %v1119
        %v1984 = vpack.c.b16 %v1136, %v1120
        %v1985 = vpack.c.b16 %v1153, %v1137
        %v1986 = vpack.c.b16 %v1154, %v1138
        %v1987 = vpack.c.b16 %v1155, %v1139
        %v1988 = vpack.c.b16 %v1156, %v1140
        %v1989 = vpack.c.b16 %v1157, %v1141
        %v1990 = vpack.c.b16 %v1158, %v1142
        %v1991 = vpack.c.b16 %v1159, %v1143
        %v1992 = vpack.c.b16 %v1160, %v1144
        %v1993 = vpack.c.b16 %v1161, %v1145
        %v1994 = vpack.c.b16 %v1162, %v1146
        %v1995 = vpack.c.b16 %v1163, %v1147
        %v1996 = vpack.c.b16 %v1164, %v1148
        %v1997 = vpack.c.b16 %v1165, %v1149
        %v1998 = vpack.c.b16 %v1166, %v1150
        %v1999 = vpack.c.b16 %v1167, %v1151
        %v2000 = vpack.c.b16 %v1168, %v1152
        %v2001 = vpack.c.b16 %v1185, %v1169
        %v2002 = vpack.c.b16 %v1186, %v1170
        %v2003 = vpack.c.b16 %v1187, %v1171
        %v2004 = vpack.c.b16 %v1188, %v1172
        %v2005 = vpack.c.b16 %v1189, %v1173
        %v2006 = vpack.c.b16 %v1190, %v1174
        %v2007 = vpack.c.b16 %v1191, %v1175
        %v2008 = vpack.c.b16 %v1192, %v1176
        %v2009 = vpack.c.b16 %v1193, %v1177
        %v2010 = vpack.c.b16 %v1194, %v1178
        %v2011 = vpack.c.b16 %v1195, %v1179
        %v2012 = vpack.c.b16 %v1196, %v1180
        %v2013 = vpack.c.b16 %v1197, %v1181
        %v2014 = vpack.c.b16 %v1198, %v1182
        %v2015 = vpack.c.b16 %v1199, %v1183
        %v2016 = vpack.c.b16 %v1200, %v1184
        %v2017 = vpack.c.b16 %v1217, %v1201
        %v2018 = vpack.c.b16 %v1218, %v1202
        %v2019 = vpack.c.b16 %v1219, %v1203
        %v2020 = vpack.c.b16 %v1220, %v1204
        %v2021 = vpack.c.b16 %v1221, %v1205
        %v2022 = vpack.c.b16 %v1222, %v1206
        %v2023 = vpack.c.b16 %v1223, %v1207
        %v2024 = vpack.c.b16 %v1224, %v1208
        %v2025 = vpack.c.b16 %v1225, %v1209
        %v2026 = vpack.c.b16 %v1226, %v1210
        %v2027 = vpack.c.b16 %v1227, %v1211
        %v2028 = vpack.c.b16 %v1228, %v1212
        %v2029 = vpack.c.b16 %v1229, %v1213
        %v2030 = vpack.c.b16 %v1230, %v1214
        %v2031 = vpack.c.b16 %v1231, %v1215
        %v2032 = vpack.c.b16 %v1232, %v1216
        %v2033 = vpack.c.b16 %v1249, %v1233
        %v2034 = vpack.c.b16 %v1250, %v1234
        %v2035 = vpack.c.b16 %v1251, %v1235
        %v2036 = vpack.c.b16 %v1252, %v1236
        %v2037 = vpack.c.b16 %v1253, %v1237
        %v2038 = vpack.c.b16 %v1254, %v1238
        %v2039 = vpack.c.b16 %v1255, %v1239
        %v2040 = vpack.c.b16 %v1256, %v1240
        %v2041 = vpack.c.b16 %v1257, %v1241
        %v2042 = vpack.c.b16 %v1258, %v1242
        %v2043 = vpack.c.b16 %v1259, %v1243
        %v2044 = vpack.c.b16 %v1260, %v1244
        %v2045 = vpack.c.b16 %v1261, %v1245
        %v2046 = vpack.c.b16 %v1262, %v1246
        %v2047 = vpack.c.b16 %v1263, %v1247
        %v2048 = vpack.c.b16 %v1264, %v1248
        %v2049 = vpack.c.b16 %v1281, %v1265
        %v2050 = vpack.c.b16 %v1282, %v1266
        %v2051 = vpack.c.b16 %v1283, %v1267
        %v2052 = vpack.c.b16 %v1284, %v1268
        %v2053 = vpack.c.b16 %v1285, %v1269
        %v2054 = vpack.c.b16 %v1286, %v1270
        %v2055 = vpack.c.b16 %v1287, %v1271
        %v2056 = vpack.c.b16 %v1288, %v1272
        %v2057 = vpack.c.b16 %v1289, %v1273
        %v2058 = vpack.c.b16 %v1290, %v1274
        %v2059 = vpack.c.b16 %v1291, %v1275
        %v2060 = vpack.c.b16 %v1292, %v1276
        %v2061 = vpack.c.b16 %v1293, %v1277
        %v2062 = vpack.c.b16 %v1294, %v1278
        %v2063 = vpack.c.b16 %v1295, %v1279
        %v2064 = vpack.c.b16 %v1296, %v1280
        %v2065 = vpack.c.b16 %v1313, %v1297
        %v2066 = vpack.c.b16 %v1314, %v1298
        %v2067 = vpack.c.b16 %v1315, %v1299
        %v2068 = vpack.c.b16 %v1316, %v1300
        %v2069 = vpack.c.b16 %v1317, %v1301
        %v2070 = vpack.c.b16 %v1318, %v1302
        %v2071 = vpack.c.b16 %v1319, %v1303
        %v2072 = vpack.c.b16 %v1320, %v1304
        %v2073 = vpack.c.b16 %v1321, %v1305
        %v2074 = vpack.c.b16 %v1322, %v1306
        %v2075 = vpack.c.b16 %v1323, %v1307
        %v2076 = vpack.c.b16 %v1324, %v1308
        %v2077 = vpack.c.b16 %v1325, %v1309
        %v2078 = vpack.c.b16 %v1326, %v1310
        %v2079 = vpack.c.b16 %v1327, %v1311
        %v2080 = vpack.c.b16 %v1328, %v1312
        %v2081 = vpack.c.b16 %v1345, %v1329
        %v2082 = vpack.c.b16 %v1346, %v1330
        %v2083 = vpack.c.b16 %v1347, %v1331
        %v2084 = vpack.c.b16 %v1348, %v1332
        %v2085 = vpack.c.b16 %v1349, %v1333
        %v2086 = vpack.c.b16 %v1350, %v1334
        %v2087 = vpack.c.b16 %v1351, %v1335
        %v2088 = vpack.c.b16 %v1352, %v1336
        %v2089 = vpack.c.b16 %v1353, %v1337
        %v2090 = vpack.c.b16 %v1354, %v1338
        %v2091 = vpack.c.b16 %v1355, %v1339
        %v2092 = vpack.c.b16 %v1356, %v1340
        %v2093 = vpack.c.b16 %v1357, %v1341
        %v2094 = vpack.c.b16 %v1358, %v1342
        %v2095 = vpack.c.b16 %v1359, %v1343
        %v2096 = vpack.c.b16 %v1360, %v1344
        %v2097 = vpack.c.b16 %v1377, %v1361
        %v2098 = vpack.c.b16 %v1378, %v1362
        %v2099 = vpack.c.b16 %v1379, %v1363
        %v2100 = vpack.c.b16 %v1380, %v1364
        %v2101 = vpack.c.b16 %v1381, %v1365
        %v2102 = vpack.c.b16 %v1382, %v1366
        %v2103 = vpack.c.b16 %v1383, %v1367
        %v2104 = vpack.c.b16 %v1384, %v1368
        %v2105 = vpack.c.b16 %v1385, %v1369
        %v2106 = vpack.c.b16 %v1386, %v1370
        %v2107 = vpack.c.b16 %v1387, %v1371
        %v2108 = vpack.c.b16 %v1388, %v1372
        %v2109 = vpack.c.b16 %v1389, %v1373
        %v2110 = vpack.c.b16 %v1390, %v1374
        %v2111 = vpack.c.b16 %v1391, %v1375
        %v2112 = vpack.c.b16 %v1392, %v1376
        %v2113 = vpack.c.b16 %v1409, %v1393
        %v2114 = vpack.c.b16 %v1410, %v1394
        %v2115 = vpack.c.b16 %v1411, %v1395
        %v2116 = vpack.c.b16 %v1412, %v1396
        %v2117 = vpack.c.b16 %v1413, %v1397
        %v2118 = vpack.c.b16 %v1414, %v1398
        %v2119 = vpack.c.b16 %v1415, %v1399
        %v2120 = vpack.c.b16 %v1416, %v1400
        %v2121 = vpack.c.b16 %v1417, %v1401
        %v2122 = vpack.c.b16 %v1418, %v1402
        %v2123 = vpack.c.b16 %v1419, %v1403
        %v2124 = vpack.c.b16 %v1420, %v1404
        %v2125 = vpack.c.b16 %v1421, %v1405
        %v2126 = vpack.c.b16 %v1422, %v1406
        %v2127 = vpack.c.b16 %v1423, %v1407
        %v2128 = vpack.c.b16 %v1424, %v1408
        %v2129 = vpack.c.b16 %v1441, %v1425
        %v2130 = vpack.c.b16 %v1442, %v1426
        %v2131 = vpack.c.b16 %v1443, %v1427
        %v2132 = vpack.c.b16 %v1444, %v1428
        %v2133 = vpack.c.b16 %v1445, %v1429
        %v2134 = vpack.c.b16 %v1446, %v1430
        %v2135 = vpack.c.b16 %v1447, %v1431
        %v2136 = vpack.c.b16 %v1448, %v1432
        %v2137 = vpack.c.b16 %v1449, %v1433
        %v2138 = vpack.c.b16 %v1450, %v1434
        %v2139 = vpack.c.b16 %v1451, %v1435
        %v2140 = vpack.c.b16 %v1452, %v1436
        %v2141 = vpack.c.b16 %v1453, %v1437
        %v2142 = vpack.c.b16 %v1454, %v1438
        %v2143 = vpack.c.b16 %v1455, %v1439
        %v2144 = vpack.c.b16 %v1456, %v1440
        %v2145 = vpack.c.b16 %v1473, %v1457
        %v2146 = vpack.c.b16 %v1474, %v1458
        %v2147 = vpack.c.b16 %v1475, %v1459
        %v2148 = vpack.c.b16 %v1476, %v1460
        %v2149 = vpack.c.b16 %v1477, %v1461
        %v2150 = vpack.c.b16 %v1478, %v1462
        %v2151 = vpack.c.b16 %v1479, %v1463
        %v2152 = vpack.c.b16 %v1480, %v1464
        %v2153 = vpack.c.b16 %v1481, %v1465
        %v2154 = vpack.c.b16 %v1482, %v1466
        %v2155 = vpack.c.b16 %v1483, %v1467
        %v2156 = vpack.c.b16 %v1484, %v1468
        %v2157 = vpack.c.b16 %v1485, %v1469
        %v2158 = vpack.c.b16 %v1486, %v1470
        %v2159 = vpack.c.b16 %v1487, %v1471
        %v2160 = vpack.c.b16 %v1488, %v1472
        %v2161 = vpack.c.b16 %v1505, %v1489
        %v2162 = vpack.c.b16 %v1506, %v1490
        %v2163 = vpack.c.b16 %v1507, %v1491
        %v2164 = vpack.c.b16 %v1508, %v1492
        %v2165 = vpack.c.b16 %v1509, %v1493
        %v2166 = vpack.c.b16 %v1510, %v1494
        %v2167 = vpack.c.b16 %v1511, %v1495
        %v2168 = vpack.c.b16 %v1512, %v1496
        %v2169 = vpack.c.b16 %v1513, %v1497
        %v2170 = vpack.c.b16 %v1514, %v1498
        %v2171 = vpack.c.b16 %v1515, %v1499
        %v2172 = vpack.c.b16 %v1516, %v1500
        %v2173 = vpack.c.b16 %v1517, %v1501
        %v2174 = vpack.c.b16 %v1518, %v1502
        %v2175 = vpack.c.b16 %v1519, %v1503
        %v2176 = vpack.c.b16 %v1520, %v1504
        %v2177 = vpack.c.b16 %v1537, %v1521
        %v2178 = vpack.c.b16 %v1538, %v1522
        %v2179 = vpack.c.b16 %v1539, %v1523
        %v2180 = vpack.c.b16 %v1540, %v1524
        %v2181 = vpack.c.b16 %v1541, %v1525
        %v2182 = vpack.c.b16 %v1542, %v1526
        %v2183 = vpack.c.b16 %v1543, %v1527
        %v2184 = vpack.c.b16 %v1544, %v1528
        %v2185 = vpack.c.b16 %v1545, %v1529
        %v2186 = vpack.c.b16 %v1546, %v1530
        %v2187 = vpack.c.b16 %v1547, %v1531
        %v2188 = vpack.c.b16 %v1548, %v1532
        %v2189 = vpack.c.b16 %v1549, %v1533
        %v2190 = vpack.c.b16 %v1550, %v1534
        %v2191 = vpack.c.b16 %v1551, %v1535
        %v2192 = vpack.c.b16 %v1552, %v1536
        %v2193 = vpack.c.b16 %v1569, %v1553
        %v2194 = vpack.c.b16 %v1570, %v1554
        %v2195 = vpack.c.b16 %v1571, %v1555
        %v2196 = vpack.c.b16 %v1572, %v1556
        %v2197 = vpack.c.b16 %v1573, %v1557
        %v2198 = vpack.c.b16 %v1574, %v1558
        %v2199 = vpack.c.b16 %v1575, %v1559
        %v2200 = vpack.c.b16 %v1576, %v1560
        %v2201 = vpack.c.b16 %v1577, %v1561
        %v2202 = vpack.c.b16 %v1578, %v1562
        %v2203 = vpack.c.b16 %v1579, %v1563
        %v2204 = vpack.c.b16 %v1580, %v1564
        %v2205 = vpack.c.b16 %v1581, %v1565
        %v2206 = vpack.c.b16 %v1582, %v1566
        %v2207 = vpack.c.b16 %v1583, %v1567
        %v2208 = vpack.c.b16 %v1584, %v1568
        %v2209 = vpack.c.b16 %v1601, %v1585
        %v2210 = vpack.c.b16 %v1602, %v1586
        %v2211 = vpack.c.b16 %v1603, %v1587
        %v2212 = vpack.c.b16 %v1604, %v1588
        %v2213 = vpack.c.b16 %v1605, %v1589
        %v2214 = vpack.c.b16 %v1606, %v1590
        %v2215 = vpack.c.b16 %v1607, %v1591
        %v2216 = vpack.c.b16 %v1608, %v1592
        %v2217 = vpack.c.b16 %v1609, %v1593
        %v2218 = vpack.c.b16 %v1610, %v1594
        %v2219 = vpack.c.b16 %v1611, %v1595
        %v2220 = vpack.c.b16 %v1612, %v1596
        %v2221 = vpack.c.b16 %v1613, %v1597
        %v2222 = vpack.c.b16 %v1614, %v1598
        %v2223 = vpack.c.b16 %v1615, %v1599
        %v2224 = vpack.c.b16 %v1616, %v1600
        %v2225 = vpack.c.b16 %v1633, %v1617
        %v2226 = vpack.c.b16 %v1634, %v1618
        %v2227 = vpack.c.b16 %v1635, %v1619
        %v2228 = vpack.c.b16 %v1636, %v1620
        %v2229 = vpack.c.b16 %v1637, %v1621
        %v2230 = vpack.c.b16 %v1638, %v1622
        %v2231 = vpack.c.b16 %v1639, %v1623
        %v2232 = vpack.c.b16 %v1640, %v1624
        %v2233 = vpack.c.b16 %v1641, %v1625
        %v2234 = vpack.c.b16 %v1642, %v1626
        %v2235 = vpack.c.b16 %v1643, %v1627
        %v2236 = vpack.c.b16 %v1644, %v1628
        %v2237 = vpack.c.b16 %v1645, %v1629
        %v2238 = vpack.c.b16 %v1646, %v1630
        %v2239 = vpack.c.b16 %v1647, %v1631
        %v2240 = vpack.c.b16 %v1648, %v1632
        %v2241 = vpack.c.b16 %v1665, %v1649
        %v2242 = vpack.c.b16 %v1666, %v1650
        %v2243 = vpack.c.b16 %v1667, %v1651
        %v2244 = vpack.c.b16 %v1668, %v1652
        %v2245 = vpack.c.b16 %v1669, %v1653
        %v2246 = vpack.c.b16 %v1670, %v1654
        %v2247 = vpack.c.b16 %v1671, %v1655
        %v2248 = vpack.c.b16 %v1672, %v1656
        %v2249 = vpack.c.b16 %v1673, %v1657
        %v2250 = vpack.c.b16 %v1674, %v1658
        %v2251 = vpack.c.b16 %v1675, %v1659
        %v2252 = vpack.c.b16 %v1676, %v1660
        %v2253 = vpack.c.b16 %v1677, %v1661
        %v2254 = vpack.c.b16 %v1678, %v1662
        %v2255 = vpack.c.b16 %v1679, %v1663
        %v2256 = vpack.c.b16 %v1680, %v1664
        %v2257 = vpack.c.b16 %v1697, %v1681
        %v2258 = vpack.c.b16 %v1698, %v1682
        %v2259 = vpack.c.b16 %v1699, %v1683
        %v2260 = vpack.c.b16 %v1700, %v1684
        %v2261 = vpack.c.b16 %v1701, %v1685
        %v2262 = vpack.c.b16 %v1702, %v1686
        %v2263 = vpack.c.b16 %v1703, %v1687
        %v2264 = vpack.c.b16 %v1704, %v1688
        %v2265 = vpack.c.b16 %v1705, %v1689
        %v2266 = vpack.c.b16 %v1706, %v1690
        %v2267 = vpack.c.b16 %v1707, %v1691
        %v2268 = vpack.c.b16 %v1708, %v1692
        %v2269 = vpack.c.b16 %v1709, %v1693
        %v2270 = vpack.c.b16 %v1710, %v1694
        %v2271 = vpack.c.b16 %v1711, %v1695
        %v2272 = vpack.c.b16 %v1712, %v1696
        %v2273 = vpack.c.b16 %v1729, %v1713
        %v2274 = vpack.c.b16 %v1730, %v1714
        %v2275 = vpack.c.b16 %v1731, %v1715
        %v2276 = vpack.c.b16 %v1732, %v1716
        %v2277 = vpack.c.b16 %v1733, %v1717
        %v2278 = vpack.c.b16 %v1734, %v1718
        %v2279 = vpack.c.b16 %v1735, %v1719
        %v2280 = vpack.c.b16 %v1736, %v1720
        %v2281 = vpack.c.b16 %v1737, %v1721
        %v2282 = vpack.c.b16 %v1738, %v1722
        %v2283 = vpack.c.b16 %v1739, %v1723
        %v2284 = vpack.c.b16 %v1740, %v1724
        %v2285 = vpack.c.b16 %v1741, %v1725
        %v2286 = vpack.c.b16 %v1742, %v1726
        %v2287 = vpack.c.b16 %v1743, %v1727
        %v2288 = vpack.c.b16 %v1744, %v1728
        %v2289 = vpack.c.b16 %v1761, %v1745
        %v2290 = vpack.c.b16 %v1762, %v1746
        %v2291 = vpack.c.b16 %v1763, %v1747
        %v2292 = vpack.c.b16 %v1764, %v1748
        %v2293 = vpack.c.b16 %v1765, %v1749
        %v2294 = vpack.c.b16 %v1766, %v1750
        %v2295 = vpack.c.b16 %v1767, %v1751
        %v2296 = vpack.c.b16 %v1768, %v1752
        %v2297 = vpack.c.b16 %v1769, %v1753
        %v2298 = vpack.c.b16 %v1770, %v1754
        %v2299 = vpack.c.b16 %v1771, %v1755
        %v2300 = vpack.c.b16 %v1772, %v1756
        %v2301 = vpack.c.b16 %v1773, %v1757
        %v2302 = vpack.c.b16 %v1774, %v1758
        %v2303 = vpack.c.b16 %v1775, %v1759
        %v2304 = vpack.c.b16 %v1776, %v1760
        %v2305 = vpack.c.b16 %v1793, %v1777
        %v2306 = vpack.c.b16 %v1794, %v1778
        %v2307 = vpack.c.b16 %v1795, %v1779
        %v2308 = vpack.c.b16 %v1796, %v1780
        %v2309 = vpack.c.b16 %v1797, %v1781
        %v2310 = vpack.c.b16 %v1798, %v1782
        %v2311 = vpack.c.b16 %v1799, %v1783
        %v2312 = vpack.c.b16 %v1800, %v1784
        %v2313 = vpack.c.b16 %v1801, %v1785
        %v2314 = vpack.c.b16 %v1802, %v1786
        %v2315 = vpack.c.b16 %v1803, %v1787
        %v2316 = vpack.c.b16 %v1804, %v1788
        %v2317 = vpack.c.b16 %v1805, %v1789
        %v2318 = vpack.c.b16 %v1806, %v1790
        %v2319 = vpack.c.b16 %v1807, %v1791
        %v2320 = vpack.c.b16 %v1808, %v1792
        %v2321 = vpack.c.b16 %v1825, %v1809
        %v2322 = vpack.c.b16 %v1826, %v1810
        %v2323 = vpack.c.b16 %v1827, %v1811
        %v2324 = vpack.c.b16 %v1828, %v1812
        %v2325 = vpack.c.b16 %v1829, %v1813
        %v2326 = vpack.c.b16 %v1830, %v1814
        %v2327 = vpack.c.b16 %v1831, %v1815
        %v2328 = vpack.c.b16 %v1832, %v1816
        %v2329 = vpack.c.b16 %v1833, %v1817
        %v2330 = vpack.c.b16 %v1834, %v1818
        %v2331 = vpack.c.b16 %v1835, %v1819
        %v2332 = vpack.c.b16 %v1836, %v1820
        %v2333 = vpack.c.b16 %v1837, %v1821
        %v2334 = vpack.c.b16 %v1838, %v1822
        %v2335 = vpack.c.b16 %v1839, %v1823
        %v2336 = vpack.c.b16 %v1840, %v1824
        %v2337 = vpack.c.b16 %v1857, %v1841
        %v2338 = vpack.c.b16 %v1858, %v1842
        %v2339 = vpack.c.b16 %v1859, %v1843
        %v2340 = vpack.c.b16 %v1860, %v1844
        %v2341 = vpack.c.b16 %v1861, %v1845
        %v2342 = vpack.c.b16 %v1862, %v1846
        %v2343 = vpack.c.b16 %v1863, %v1847
        %v2344 = vpack.c.b16 %v1864, %v1848
        %v2345 = vpack.c.b16 %v1865, %v1849
        %v2346 = vpack.c.b16 %v1866, %v1850
        %v2347 = vpack.c.b16 %v1867, %v1851
        %v2348 = vpack.c.b16 %v1868, %v1852
        %v2349 = vpack.c.b16 %v1869, %v1853
        %v2350 = vpack.c.b16 %v1870, %v1854
        %v2351 = vpack.c.b16 %v1871, %v1855
        %v2352 = vpack.c.b16 %v1872, %v1856
        %v2353 = vpack.c.b16 %v1889, %v1873
        %v2354 = vpack.c.b16 %v1890, %v1874
        %v2355 = vpack.c.b16 %v1891, %v1875
        %v2356 = vpack.c.b16 %v1892, %v1876
        %v2357 = vpack.c.b16 %v1893, %v1877
        %v2358 = vpack.c.b16 %v1894, %v1878
        %v2359 = vpack.c.b16 %v1895, %v1879
        %v2360 = vpack.c.b16 %v1896, %v1880
        %v2361 = vpack.c.b16 %v1897, %v1881
        %v2362 = vpack.c.b16 %v1898, %v1882
        %v2363 = vpack.c.b16 %v1899, %v1883
        %v2364 = vpack.c.b16 %v1900, %v1884
        %v2365 = vpack.c.b16 %v1901, %v1885
        %v2366 = vpack.c.b16 %v1902, %v1886
        %v2367 = vpack.c.b16 %v1903, %v1887
        %v2368 = vpack.c.b16 %v1904, %v1888
        %v2369 = vpack.c.b16 %v1921, %v1905
        %v2370 = vpack.c.b16 %v1922, %v1906
        %v2371 = vpack.c.b16 %v1923, %v1907
        %v2372 = vpack.c.b16 %v1924, %v1908
        %v2373 = vpack.c.b16 %v1925, %v1909
        %v2374 = vpack.c.b16 %v1926, %v1910
        %v2375 = vpack.c.b16 %v1927, %v1911
        %v2376 = vpack.c.b16 %v1928, %v1912
        %v2377 = vpack.c.b16 %v1929, %v1913
        %v2378 = vpack.c.b16 %v1930, %v1914
        %v2379 = vpack.c.b16 %v1931, %v1915
        %v2380 = vpack.c.b16 %v1932, %v1916
        %v2381 = vpack.c.b16 %v1933, %v1917
        %v2382 = vpack.c.b16 %v1934, %v1918
        %v2383 = vpack.c.b16 %v1935, %v1919
        %v2384 = vpack.c.b16 %v1936, %v1920
        %v2385 = vpack.c.b16 %v1953, %v1937
        %v2386 = vpack.c.b16 %v1954, %v1938
        %v2387 = vpack.c.b16 %v1955, %v1939
        %v2388 = vpack.c.b16 %v1956, %v1940
        %v2389 = vpack.c.b16 %v1957, %v1941
        %v2390 = vpack.c.b16 %v1958, %v1942
        %v2391 = vpack.c.b16 %v1959, %v1943
        %v2392 = vpack.c.b16 %v1960, %v1944
        %v2393 = vpack.c.b16 %v1961, %v1945
        %v2394 = vpack.c.b16 %v1962, %v1946
        %v2395 = vpack.c.b16 %v1963, %v1947
        %v2396 = vpack.c.b16 %v1964, %v1948
        %v2397 = vpack.c.b16 %v1965, %v1949
        %v2398 = vpack.c.b16 %v1966, %v1950
        %v2399 = vpack.c.b16 %v1967, %v1951
        %v2400 = vpack.c.b16 %v1968, %v1952
        %vm2833 = vcmask 392192
        %v2835 = vsel %vm2833, %v669, 0
        %2837 = vmatprep.subr.bf16.mxu0 %v1970
        %2838 = vmatpush1.bf16.msra.mxu0 %v1969
        %2839 = vmatprep.subr.bf16.mxu0 %v1986
        %2840 = vmatpush1.bf16.msra.mxu0 %v1985
        %2841 = vmatprep.subr.bf16.mxu0 %v2002
        %2842 = vmatpush1.bf16.msra.mxu0 %v2001
        %2843 = vmatprep.subr.bf16.mxu0 %v2018
        %2844 = vmatpush1.bf16.msra.mxu0 %v2017
        %2845 = vmatprep.subr.bf16.mxu0 %v2034
        %2846 = vmatpush1.bf16.msra.mxu0 %v2033
        %2847 = vmatprep.subr.bf16.mxu0 %v2050
        %2848 = vmatpush1.bf16.msra.mxu0 %v2049
        %2849 = vmatprep.subr.bf16.mxu0 %v2066
        %2850 = vmatpush1.bf16.msra.mxu0 %v2065
        %2851 = vmatprep.subr.bf16.mxu0 %v2082
        %2852 = vmatpush1.bf16.msra.mxu0 %v2081
        %2853 = vmatprep.subr.bf16.mxu0 %v2098
        %2854 = vmatpush1.bf16.msra.mxu0 %v2097
        %2855 = vmatprep.subr.bf16.mxu0 %v2114
        %2856 = vmatpush1.bf16.msra.mxu0 %v2113
        %2857 = vmatprep.subr.bf16.mxu0 %v2130
        %2858 = vmatpush1.bf16.msra.mxu0 %v2129
        %2859 = vmatprep.subr.bf16.mxu0 %v2146
        %2860 = vmatpush1.bf16.msra.mxu0 %v2145
        %2861 = vmatprep.subr.bf16.mxu0 %v2162
        %2862 = vmatpush1.bf16.msra.mxu0 %v2161
        %2863 = vmatprep.subr.bf16.mxu0 %v2178
        %2864 = vmatpush1.bf16.msra.mxu0 %v2177
        %2865 = vmatprep.subr.bf16.mxu0 %v2194
        %2866 = vmatpush1.bf16.msra.mxu0 %v2193
        %2867 = vmatprep.subr.bf16.mxu0 %v2210
        %2868 = vmatpush1.bf16.msra.mxu0 %v2209
        %2869 = vmatprep.mubr.bf16.mxu0 %v667
        %2870 = vmatmul.mubr.bf16.gmra.mrb[0].mxu0 %v666
        %v2871 = vpop.f32.mrb[0].mxu0
        %v2872 = vadd.f32 %v658, %v2871
        %v2873 = vpop.f32.mrb[0].mxu0
        %v2874 = vadd.f32 %v658, %v2873
        %v2875 = vpop.f32.mrb[0].mxu0
        %v2876 = vpop.f32.mrb[0].mxu0
        %2877 = vdwg.mxu0
        %2878 = vmatprep.subr.bf16.mxu0 %v2226
        %2879 = vmatpush1.bf16.msra.mxu0 %v2225
        %2880 = vmatprep.subr.bf16.mxu0 %v2242
        %2881 = vmatpush1.bf16.msra.mxu0 %v2241
        %2882 = vmatprep.subr.bf16.mxu0 %v2258
        %2883 = vmatpush1.bf16.msra.mxu0 %v2257
        %2884 = vmatprep.subr.bf16.mxu0 %v2274
        %2885 = vmatpush1.bf16.msra.mxu0 %v2273
        %2886 = vmatprep.subr.bf16.mxu0 %v2290
        %2887 = vmatpush1.bf16.msra.mxu0 %v2289
        %2888 = vmatprep.subr.bf16.mxu0 %v2306
        %2889 = vmatpush1.bf16.msra.mxu0 %v2305
        %2890 = vmatprep.subr.bf16.mxu0 %v2322
        %2891 = vmatpush1.bf16.msra.mxu0 %v2321
        %2892 = vmatprep.subr.bf16.mxu0 %v2338
        %2893 = vmatpush1.bf16.msra.mxu0 %v2337
        %2894 = vmatprep.subr.bf16.mxu0 %v2354
        %2895 = vmatpush1.bf16.msra.mxu0 %v2353
        %2896 = vmatprep.subr.bf16.mxu0 %v2370
        %2897 = vmatpush1.bf16.msra.mxu0 %v2369
        %2898 = vmatprep.subr.bf16.mxu0 %v2386
        %2899 = vmatpush1.bf16.msra.mxu0 %v2385
        %2900 = vmatprep.subr.bf16.mxu0 0
        %2901 = vmatpush1.bf16.msra.mxu0 0
        %2902 = vmatprep.subr.bf16.mxu0 0
        %2903 = vmatpush1.bf16.msra.mxu0 0
        %2904 = vmatprep.subr.bf16.mxu0 0
        %2905 = vmatpush1.bf16.msra.mxu0 0
        %2906 = vmatprep.subr.bf16.mxu0 0
        %2907 = vmatpush1.bf16.msra.mxu0 0
        %2908 = vmatprep.subr.bf16.mxu0 0
        %2909 = vmatpush1.bf16.msra.mxu0 0
        %2910 = vmatprep.mubr.bf16.mxu0 %v2835
        %2911 = vmatmul.mubr.bf16.gmra.mrb[0].mxu0 %v668
        %v2912 = vpop.f32.mrb[0].mxu0
        %v2913 = vadd.f32 %v2872, %v2912
        %v2914 = vpop.f32.mrb[0].mxu0
        %v2915 = vadd.f32 %v2874, %v2914
        %v2916 = vpop.f32.mrb[0].mxu0
        %v2917 = vpop.f32.mrb[0].mxu0
        %2918 = vdwg.mxu0
        %2919 = vmatprep.subr.bf16.mxu0 %v1972
        %2920 = vmatpush1.bf16.msra.mxu0 %v1971
        %2921 = vmatprep.subr.bf16.mxu0 %v1988
        %2922 = vmatpush1.bf16.msra.mxu0 %v1987
        %2923 = vmatprep.subr.bf16.mxu0 %v2004
        %2924 = vmatpush1.bf16.msra.mxu0 %v2003
        %2925 = vmatprep.subr.bf16.mxu0 %v2020
        %2926 = vmatpush1.bf16.msra.mxu0 %v2019
        %2927 = vmatprep.subr.bf16.mxu0 %v2036
        %2928 = vmatpush1.bf16.msra.mxu0 %v2035
        %2929 = vmatprep.subr.bf16.mxu0 %v2052
        %2930 = vmatpush1.bf16.msra.mxu0 %v2051
        %2931 = vmatprep.subr.bf16.mxu0 %v2068
        %2932 = vmatpush1.bf16.msra.mxu0 %v2067
        %2933 = vmatprep.subr.bf16.mxu0 %v2084
        %2934 = vmatpush1.bf16.msra.mxu0 %v2083
        %2935 = vmatprep.subr.bf16.mxu0 %v2100
        %2936 = vmatpush1.bf16.msra.mxu0 %v2099
        %2937 = vmatprep.subr.bf16.mxu0 %v2116
        %2938 = vmatpush1.bf16.msra.mxu0 %v2115
        %2939 = vmatprep.subr.bf16.mxu0 %v2132
        %2940 = vmatpush1.bf16.msra.mxu0 %v2131
        %2941 = vmatprep.subr.bf16.mxu0 %v2148
        %2942 = vmatpush1.bf16.msra.mxu0 %v2147
        %2943 = vmatprep.subr.bf16.mxu0 %v2164
        %2944 = vmatpush1.bf16.msra.mxu0 %v2163
        %2945 = vmatprep.subr.bf16.mxu0 %v2180
        %2946 = vmatpush1.bf16.msra.mxu0 %v2179
        %2947 = vmatprep.subr.bf16.mxu0 %v2196
        %2948 = vmatpush1.bf16.msra.mxu0 %v2195
        %2949 = vmatprep.subr.bf16.mxu0 %v2212
        %2950 = vmatpush1.bf16.msra.mxu0 %v2211
        %2951 = vmatprep.mubr.bf16.mxu0 %v667
        %2952 = vmatmul.mubr.bf16.gmra.mrb[0].mxu0 %v666
        %v2953 = vpop.f32.mrb[0].mxu0
        %v2954 = vadd.f32 %v658, %v2953
        %v2955 = vpop.f32.mrb[0].mxu0
        %v2956 = vadd.f32 %v658, %v2955
        %v2957 = vpop.f32.mrb[0].mxu0
        %v2958 = vpop.f32.mrb[0].mxu0
        %2959 = vdwg.mxu0
        %2960 = vmatprep.subr.bf16.mxu0 %v2228
        %2961 = vmatpush1.bf16.msra.mxu0 %v2227
        %2962 = vmatprep.subr.bf16.mxu0 %v2244
        %2963 = vmatpush1.bf16.msra.mxu0 %v2243
        %2964 = vmatprep.subr.bf16.mxu0 %v2260
        %2965 = vmatpush1.bf16.msra.mxu0 %v2259
        %2966 = vmatprep.subr.bf16.mxu0 %v2276
        %2967 = vmatpush1.bf16.msra.mxu0 %v2275
        %2968 = vmatprep.subr.bf16.mxu0 %v2292
        %2969 = vmatpush1.bf16.msra.mxu0 %v2291
        %2970 = vmatprep.subr.bf16.mxu0 %v2308
        %2971 = vmatpush1.bf16.msra.mxu0 %v2307
        %2972 = vmatprep.subr.bf16.mxu0 %v2324
        %2973 = vmatpush1.bf16.msra.mxu0 %v2323
        %2974 = vmatprep.subr.bf16.mxu0 %v2340
        %2975 = vmatpush1.bf16.msra.mxu0 %v2339
        %2976 = vmatprep.subr.bf16.mxu0 %v2356
        %2977 = vmatpush1.bf16.msra.mxu0 %v2355
        %2978 = vmatprep.subr.bf16.mxu0 %v2372
        %2979 = vmatpush1.bf16.msra.mxu0 %v2371
        %2980 = vmatprep.subr.bf16.mxu0 %v2388
        %2981 = vmatpush1.bf16.msra.mxu0 %v2387
        %2982 = vmatprep.subr.bf16.mxu0 0
        %2983 = vmatpush1.bf16.msra.mxu0 0
        %2984 = vmatprep.subr.bf16.mxu0 0
        %2985 = vmatpush1.bf16.msra.mxu0 0
        %2986 = vmatprep.subr.bf16.mxu0 0
        %2987 = vmatpush1.bf16.msra.mxu0 0
        %2988 = vmatprep.subr.bf16.mxu0 0
        %2989 = vmatpush1.bf16.msra.mxu0 0
        %2990 = vmatprep.subr.bf16.mxu0 0
        %2991 = vmatpush1.bf16.msra.mxu0 0
        %2992 = vmatprep.mubr.bf16.mxu0 %v2835
        %2993 = vmatmul.mubr.bf16.gmra.mrb[0].mxu0 %v668
        %v2994 = vpop.f32.mrb[0].mxu0
        %v2995 = vadd.f32 %v2954, %v2994
        %v2996 = vpop.f32.mrb[0].mxu0
        %v2997 = vadd.f32 %v2956, %v2996
        %v2998 = vpop.f32.mrb[0].mxu0
        %v2999 = vpop.f32.mrb[0].mxu0
        %3000 = vdwg.mxu0
        %3001 = vmatprep.subr.bf16.mxu0 %v1974
        %3002 = vmatpush1.bf16.msra.mxu0 %v1973
        %3003 = vmatprep.subr.bf16.mxu0 %v1990
        %3004 = vmatpush1.bf16.msra.mxu0 %v1989
        %3005 = vmatprep.subr.bf16.mxu0 %v2006
        %3006 = vmatpush1.bf16.msra.mxu0 %v2005
        %3007 = vmatprep.subr.bf16.mxu0 %v2022
        %3008 = vmatpush1.bf16.msra.mxu0 %v2021
        %3009 = vmatprep.subr.bf16.mxu0 %v2038
        %3010 = vmatpush1.bf16.msra.mxu0 %v2037
        %3011 = vmatprep.subr.bf16.mxu0 %v2054
        %3012 = vmatpush1.bf16.msra.mxu0 %v2053
        %3013 = vmatprep.subr.bf16.mxu0 %v2070
        %3014 = vmatpush1.bf16.msra.mxu0 %v2069
        %3015 = vmatprep.subr.bf16.mxu0 %v2086
        %3016 = vmatpush1.bf16.msra.mxu0 %v2085
        %3017 = vmatprep.subr.bf16.mxu0 %v2102
        %3018 = vmatpush1.bf16.msra.mxu0 %v2101
        %3019 = vmatprep.subr.bf16.mxu0 %v2118
        %3020 = vmatpush1.bf16.msra.mxu0 %v2117
        %3021 = vmatprep.subr.bf16.mxu0 %v2134
        %3022 = vmatpush1.bf16.msra.mxu0 %v2133
        %3023 = vmatprep.subr.bf16.mxu0 %v2150
        %3024 = vmatpush1.bf16.msra.mxu0 %v2149
        %3025 = vmatprep.subr.bf16.mxu0 %v2166
        %3026 = vmatpush1.bf16.msra.mxu0 %v2165
        %3027 = vmatprep.subr.bf16.mxu0 %v2182
        %3028 = vmatpush1.bf16.msra.mxu0 %v2181
        %3029 = vmatprep.subr.bf16.mxu0 %v2198
        %3030 = vmatpush1.bf16.msra.mxu0 %v2197
        %3031 = vmatprep.subr.bf16.mxu0 %v2214
        %3032 = vmatpush1.bf16.msra.mxu0 %v2213
        %3033 = vmatprep.mubr.bf16.mxu0 %v667
        %3034 = vmatmul.mubr.bf16.gmra.mrb[0].mxu0 %v666
        %v3035 = vpop.f32.mrb[0].mxu0
        %v3036 = vadd.f32 %v658, %v3035
        %v3037 = vpop.f32.mrb[0].mxu0
        %v3038 = vadd.f32 %v658, %v3037
        %v3039 = vpop.f32.mrb[0].mxu0
        %v3040 = vpop.f32.mrb[0].mxu0
        %3041 = vdwg.mxu0
        %3042 = vmatprep.subr.bf16.mxu0 %v2230
        %3043 = vmatpush1.bf16.msra.mxu0 %v2229
        %3044 = vmatprep.subr.bf16.mxu0 %v2246
        %3045 = vmatpush1.bf16.msra.mxu0 %v2245
        %3046 = vmatprep.subr.bf16.mxu0 %v2262
        %3047 = vmatpush1.bf16.msra.mxu0 %v2261
        %3048 = vmatprep.subr.bf16.mxu0 %v2278
        %3049 = vmatpush1.bf16.msra.mxu0 %v2277
        %3050 = vmatprep.subr.bf16.mxu0 %v2294
        %3051 = vmatpush1.bf16.msra.mxu0 %v2293
        %3052 = vmatprep.subr.bf16.mxu0 %v2310
        %3053 = vmatpush1.bf16.msra.mxu0 %v2309
        %3054 = vmatprep.subr.bf16.mxu0 %v2326
        %3055 = vmatpush1.bf16.msra.mxu0 %v2325
        %3056 = vmatprep.subr.bf16.mxu0 %v2342
        %3057 = vmatpush1.bf16.msra.mxu0 %v2341
        %3058 = vmatprep.subr.bf16.mxu0 %v2358
        %3059 = vmatpush1.bf16.msra.mxu0 %v2357
        %3060 = vmatprep.subr.bf16.mxu0 %v2374
        %3061 = vmatpush1.bf16.msra.mxu0 %v2373
        %3062 = vmatprep.subr.bf16.mxu0 %v2390
        %3063 = vmatpush1.bf16.msra.mxu0 %v2389
        %3064 = vmatprep.subr.bf16.mxu0 0
        %3065 = vmatpush1.bf16.msra.mxu0 0
        %3066 = vmatprep.subr.bf16.mxu0 0
        %3067 = vmatpush1.bf16.msra.mxu0 0
        %3068 = vmatprep.subr.bf16.mxu0 0
        %3069 = vmatpush1.bf16.msra.mxu0 0
        %3070 = vmatprep.subr.bf16.mxu0 0
        %3071 = vmatpush1.bf16.msra.mxu0 0
        %3072 = vmatprep.subr.bf16.mxu0 0
        %3073 = vmatpush1.bf16.msra.mxu0 0
        %3074 = vmatprep.mubr.bf16.mxu0 %v2835
        %3075 = vmatmul.mubr.bf16.gmra.mrb[0].mxu0 %v668
        %v3076 = vpop.f32.mrb[0].mxu0
        %v3077 = vadd.f32 %v3036, %v3076
        %v3078 = vpop.f32.mrb[0].mxu0
        %v3079 = vadd.f32 %v3038, %v3078
        %v3080 = vpop.f32.mrb[0].mxu0
        %v3081 = vpop.f32.mrb[0].mxu0
        %3082 = vdwg.mxu0
        %3083 = vmatprep.subr.bf16.mxu0 %v1976
        %3084 = vmatpush1.bf16.msra.mxu0 %v1975
        %3085 = vmatprep.subr.bf16.mxu0 %v1992
        %3086 = vmatpush1.bf16.msra.mxu0 %v1991
        %3087 = vmatprep.subr.bf16.mxu0 %v2008
        %3088 = vmatpush1.bf16.msra.mxu0 %v2007
        %3089 = vmatprep.subr.bf16.mxu0 %v2024
        %3090 = vmatpush1.bf16.msra.mxu0 %v2023
        %3091 = vmatprep.subr.bf16.mxu0 %v2040
        %3092 = vmatpush1.bf16.msra.mxu0 %v2039
        %3093 = vmatprep.subr.bf16.mxu0 %v2056
        %3094 = vmatpush1.bf16.msra.mxu0 %v2055
        %3095 = vmatprep.subr.bf16.mxu0 %v2072
        %3096 = vmatpush1.bf16.msra.mxu0 %v2071
        %3097 = vmatprep.subr.bf16.mxu0 %v2088
        %3098 = vmatpush1.bf16.msra.mxu0 %v2087
        %3099 = vmatprep.subr.bf16.mxu0 %v2104
        %3100 = vmatpush1.bf16.msra.mxu0 %v2103
        %3101 = vmatprep.subr.bf16.mxu0 %v2120
        %3102 = vmatpush1.bf16.msra.mxu0 %v2119
        %3103 = vmatprep.subr.bf16.mxu0 %v2136
        %3104 = vmatpush1.bf16.msra.mxu0 %v2135
        %3105 = vmatprep.subr.bf16.mxu0 %v2152
        %3106 = vmatpush1.bf16.msra.mxu0 %v2151
        %3107 = vmatprep.subr.bf16.mxu0 %v2168
        %3108 = vmatpush1.bf16.msra.mxu0 %v2167
        %3109 = vmatprep.subr.bf16.mxu0 %v2184
        %3110 = vmatpush1.bf16.msra.mxu0 %v2183
        %3111 = vmatprep.subr.bf16.mxu0 %v2200
        %3112 = vmatpush1.bf16.msra.mxu0 %v2199
        %3113 = vmatprep.subr.bf16.mxu0 %v2216
        %3114 = vmatpush1.bf16.msra.mxu0 %v2215
        %3115 = vmatprep.mubr.bf16.mxu0 %v667
        %3116 = vmatmul.mubr.bf16.gmra.mrb[0].mxu0 %v666
        %v3117 = vpop.f32.mrb[0].mxu0
        %v3118 = vadd.f32 %v658, %v3117
        %v3119 = vpop.f32.mrb[0].mxu0
        %v3120 = vadd.f32 %v658, %v3119
        %v3121 = vpop.f32.mrb[0].mxu0
        %v3122 = vpop.f32.mrb[0].mxu0
        %3123 = vdwg.mxu0
        %3124 = vmatprep.subr.bf16.mxu0 %v2232
        %3125 = vmatpush1.bf16.msra.mxu0 %v2231
        %3126 = vmatprep.subr.bf16.mxu0 %v2248
        %3127 = vmatpush1.bf16.msra.mxu0 %v2247
        %3128 = vmatprep.subr.bf16.mxu0 %v2264
        %3129 = vmatpush1.bf16.msra.mxu0 %v2263
        %3130 = vmatprep.subr.bf16.mxu0 %v2280
        %3131 = vmatpush1.bf16.msra.mxu0 %v2279
        %3132 = vmatprep.subr.bf16.mxu0 %v2296
        %3133 = vmatpush1.bf16.msra.mxu0 %v2295
        %3134 = vmatprep.subr.bf16.mxu0 %v2312
        %3135 = vmatpush1.bf16.msra.mxu0 %v2311
        %3136 = vmatprep.subr.bf16.mxu0 %v2328
        %3137 = vmatpush1.bf16.msra.mxu0 %v2327
        %3138 = vmatprep.subr.bf16.mxu0 %v2344
        %3139 = vmatpush1.bf16.msra.mxu0 %v2343
        %3140 = vmatprep.subr.bf16.mxu0 %v2360
        %3141 = vmatpush1.bf16.msra.mxu0 %v2359
        %3142 = vmatprep.subr.bf16.mxu0 %v2376
        %3143 = vmatpush1.bf16.msra.mxu0 %v2375
        %3144 = vmatprep.subr.bf16.mxu0 %v2392
        %3145 = vmatpush1.bf16.msra.mxu0 %v2391
        %3146 = vmatprep.subr.bf16.mxu0 0
        %3147 = vmatpush1.bf16.msra.mxu0 0
        %3148 = vmatprep.subr.bf16.mxu0 0
        %3149 = vmatpush1.bf16.msra.mxu0 0
        %3150 = vmatprep.subr.bf16.mxu0 0
        %3151 = vmatpush1.bf16.msra.mxu0 0
        %3152 = vmatprep.subr.bf16.mxu0 0
        %3153 = vmatpush1.bf16.msra.mxu0 0
        %3154 = vmatprep.subr.bf16.mxu0 0
        %3155 = vmatpush1.bf16.msra.mxu0 0
        %3156 = vmatprep.mubr.bf16.mxu0 %v2835
        %3157 = vmatmul.mubr.bf16.gmra.mrb[0].mxu0 %v668
        %v3158 = vpop.f32.mrb[0].mxu0
        %v3159 = vadd.f32 %v3118, %v3158
        %v3160 = vpop.f32.mrb[0].mxu0
        %v3161 = vadd.f32 %v3120, %v3160
        %v3162 = vpop.f32.mrb[0].mxu0
        %v3163 = vpop.f32.mrb[0].mxu0
        %3164 = vdwg.mxu0
        %3165 = vmatprep.subr.bf16.mxu0 %v1978
        %3166 = vmatpush1.bf16.msra.mxu0 %v1977
        %3167 = vmatprep.subr.bf16.mxu0 %v1994
        %3168 = vmatpush1.bf16.msra.mxu0 %v1993
        %3169 = vmatprep.subr.bf16.mxu0 %v2010
        %3170 = vmatpush1.bf16.msra.mxu0 %v2009
        %3171 = vmatprep.subr.bf16.mxu0 %v2026
        %3172 = vmatpush1.bf16.msra.mxu0 %v2025
        %3173 = vmatprep.subr.bf16.mxu0 %v2042
        %3174 = vmatpush1.bf16.msra.mxu0 %v2041
        %3175 = vmatprep.subr.bf16.mxu0 %v2058
        %3176 = vmatpush1.bf16.msra.mxu0 %v2057
        %3177 = vmatprep.subr.bf16.mxu0 %v2074
        %3178 = vmatpush1.bf16.msra.mxu0 %v2073
        %3179 = vmatprep.subr.bf16.mxu0 %v2090
        %3180 = vmatpush1.bf16.msra.mxu0 %v2089
        %3181 = vmatprep.subr.bf16.mxu0 %v2106
        %3182 = vmatpush1.bf16.msra.mxu0 %v2105
        %3183 = vmatprep.subr.bf16.mxu0 %v2122
        %3184 = vmatpush1.bf16.msra.mxu0 %v2121
        %3185 = vmatprep.subr.bf16.mxu0 %v2138
        %3186 = vmatpush1.bf16.msra.mxu0 %v2137
        %3187 = vmatprep.subr.bf16.mxu0 %v2154
        %3188 = vmatpush1.bf16.msra.mxu0 %v2153
        %3189 = vmatprep.subr.bf16.mxu0 %v2170
        %3190 = vmatpush1.bf16.msra.mxu0 %v2169
        %3191 = vmatprep.subr.bf16.mxu0 %v2186
        %3192 = vmatpush1.bf16.msra.mxu0 %v2185
        %3193 = vmatprep.subr.bf16.mxu0 %v2202
        %3194 = vmatpush1.bf16.msra.mxu0 %v2201
        %3195 = vmatprep.subr.bf16.mxu0 %v2218
        %3196 = vmatpush1.bf16.msra.mxu0 %v2217
        %3197 = vmatprep.mubr.bf16.mxu0 %v667
        %3198 = vmatmul.mubr.bf16.gmra.mrb[0].mxu0 %v666
        %v3199 = vpop.f32.mrb[0].mxu0
        %v3200 = vadd.f32 %v658, %v3199
        %v3201 = vpop.f32.mrb[0].mxu0
        %v3202 = vadd.f32 %v658, %v3201
        %v3203 = vpop.f32.mrb[0].mxu0
        %v3204 = vpop.f32.mrb[0].mxu0
        %3205 = vdwg.mxu0
        %3206 = vmatprep.subr.bf16.mxu0 %v2234
        %3207 = vmatpush1.bf16.msra.mxu0 %v2233
        %3208 = vmatprep.subr.bf16.mxu0 %v2250
        %3209 = vmatpush1.bf16.msra.mxu0 %v2249
        %3210 = vmatprep.subr.bf16.mxu0 %v2266
        %3211 = vmatpush1.bf16.msra.mxu0 %v2265
        %3212 = vmatprep.subr.bf16.mxu0 %v2282
        %3213 = vmatpush1.bf16.msra.mxu0 %v2281
        %3214 = vmatprep.subr.bf16.mxu0 %v2298
        %3215 = vmatpush1.bf16.msra.mxu0 %v2297
        %3216 = vmatprep.subr.bf16.mxu0 %v2314
        %3217 = vmatpush1.bf16.msra.mxu0 %v2313
        %3218 = vmatprep.subr.bf16.mxu0 %v2330
        %3219 = vmatpush1.bf16.msra.mxu0 %v2329
        %3220 = vmatprep.subr.bf16.mxu0 %v2346
        %3221 = vmatpush1.bf16.msra.mxu0 %v2345
        %3222 = vmatprep.subr.bf16.mxu0 %v2362
        %3223 = vmatpush1.bf16.msra.mxu0 %v2361
        %3224 = vmatprep.subr.bf16.mxu0 %v2378
        %3225 = vmatpush1.bf16.msra.mxu0 %v2377
        %3226 = vmatprep.subr.bf16.mxu0 %v2394
        %3227 = vmatpush1.bf16.msra.mxu0 %v2393
        %3228 = vmatprep.subr.bf16.mxu0 0
        %3229 = vmatpush1.bf16.msra.mxu0 0
        %3230 = vmatprep.subr.bf16.mxu0 0
        %3231 = vmatpush1.bf16.msra.mxu0 0
        %3232 = vmatprep.subr.bf16.mxu0 0
        %3233 = vmatpush1.bf16.msra.mxu0 0
        %3234 = vmatprep.subr.bf16.mxu0 0
        %3235 = vmatpush1.bf16.msra.mxu0 0
        %3236 = vmatprep.subr.bf16.mxu0 0
        %3237 = vmatpush1.bf16.msra.mxu0 0
        %3238 = vmatprep.mubr.bf16.mxu0 %v2835
        %3239 = vmatmul.mubr.bf16.gmra.mrb[0].mxu0 %v668
        %v3240 = vpop.f32.mrb[0].mxu0
        %v3241 = vadd.f32 %v3200, %v3240
        %v3242 = vpop.f32.mrb[0].mxu0
        %v3243 = vadd.f32 %v3202, %v3242
        %v3244 = vpop.f32.mrb[0].mxu0
        %v3245 = vpop.f32.mrb[0].mxu0
        %3246 = vdwg.mxu0
        %3247 = vmatprep.subr.bf16.mxu0 %v1980
        %3248 = vmatpush1.bf16.msra.mxu0 %v1979
        %3249 = vmatprep.subr.bf16.mxu0 %v1996
        %3250 = vmatpush1.bf16.msra.mxu0 %v1995
        %3251 = vmatprep.subr.bf16.mxu0 %v2012
        %3252 = vmatpush1.bf16.msra.mxu0 %v2011
        %3253 = vmatprep.subr.bf16.mxu0 %v2028
        %3254 = vmatpush1.bf16.msra.mxu0 %v2027
        %3255 = vmatprep.subr.bf16.mxu0 %v2044
        %3256 = vmatpush1.bf16.msra.mxu0 %v2043
        %3257 = vmatprep.subr.bf16.mxu0 %v2060
        %3258 = vmatpush1.bf16.msra.mxu0 %v2059
        %3259 = vmatprep.subr.bf16.mxu0 %v2076
        %3260 = vmatpush1.bf16.msra.mxu0 %v2075
        %3261 = vmatprep.subr.bf16.mxu0 %v2092
        %3262 = vmatpush1.bf16.msra.mxu0 %v2091
        %3263 = vmatprep.subr.bf16.mxu0 %v2108
        %3264 = vmatpush1.bf16.msra.mxu0 %v2107
        %3265 = vmatprep.subr.bf16.mxu0 %v2124
        %3266 = vmatpush1.bf16.msra.mxu0 %v2123
        %3267 = vmatprep.subr.bf16.mxu0 %v2140
        %3268 = vmatpush1.bf16.msra.mxu0 %v2139
        %3269 = vmatprep.subr.bf16.mxu0 %v2156
        %3270 = vmatpush1.bf16.msra.mxu0 %v2155
        %3271 = vmatprep.subr.bf16.mxu0 %v2172
        %3272 = vmatpush1.bf16.msra.mxu0 %v2171
        %3273 = vmatprep.subr.bf16.mxu0 %v2188
        %3274 = vmatpush1.bf16.msra.mxu0 %v2187
        %3275 = vmatprep.subr.bf16.mxu0 %v2204
        %3276 = vmatpush1.bf16.msra.mxu0 %v2203
        %3277 = vmatprep.subr.bf16.mxu0 %v2220
        %3278 = vmatpush1.bf16.msra.mxu0 %v2219
        %3279 = vmatprep.mubr.bf16.mxu0 %v667
        %3280 = vmatmul.mubr.bf16.gmra.mrb[0].mxu0 %v666
        %v3281 = vpop.f32.mrb[0].mxu0
        %v3282 = vadd.f32 %v658, %v3281
        %v3283 = vpop.f32.mrb[0].mxu0
        %v3284 = vadd.f32 %v658, %v3283
        %v3285 = vpop.f32.mrb[0].mxu0
        %v3286 = vpop.f32.mrb[0].mxu0
        %3287 = vdwg.mxu0
        %3288 = vmatprep.subr.bf16.mxu0 %v2236
        %3289 = vmatpush1.bf16.msra.mxu0 %v2235
        %3290 = vmatprep.subr.bf16.mxu0 %v2252
        %3291 = vmatpush1.bf16.msra.mxu0 %v2251
        %3292 = vmatprep.subr.bf16.mxu0 %v2268
        %3293 = vmatpush1.bf16.msra.mxu0 %v2267
        %3294 = vmatprep.subr.bf16.mxu0 %v2284
        %3295 = vmatpush1.bf16.msra.mxu0 %v2283
        %3296 = vmatprep.subr.bf16.mxu0 %v2300
        %3297 = vmatpush1.bf16.msra.mxu0 %v2299
        %3298 = vmatprep.subr.bf16.mxu0 %v2316
        %3299 = vmatpush1.bf16.msra.mxu0 %v2315
        %3300 = vmatprep.subr.bf16.mxu0 %v2332
        %3301 = vmatpush1.bf16.msra.mxu0 %v2331
        %3302 = vmatprep.subr.bf16.mxu0 %v2348
        %3303 = vmatpush1.bf16.msra.mxu0 %v2347
        %3304 = vmatprep.subr.bf16.mxu0 %v2364
        %3305 = vmatpush1.bf16.msra.mxu0 %v2363
        %3306 = vmatprep.subr.bf16.mxu0 %v2380
        %3307 = vmatpush1.bf16.msra.mxu0 %v2379
        %3308 = vmatprep.subr.bf16.mxu0 %v2396
        %3309 = vmatpush1.bf16.msra.mxu0 %v2395
        %3310 = vmatprep.subr.bf16.mxu0 0
        %3311 = vmatpush1.bf16.msra.mxu0 0
        %3312 = vmatprep.subr.bf16.mxu0 0
        %3313 = vmatpush1.bf16.msra.mxu0 0
        %3314 = vmatprep.subr.bf16.mxu0 0
        %3315 = vmatpush1.bf16.msra.mxu0 0
        %3316 = vmatprep.subr.bf16.mxu0 0
        %3317 = vmatpush1.bf16.msra.mxu0 0
        %3318 = vmatprep.subr.bf16.mxu0 0
        %3319 = vmatpush1.bf16.msra.mxu0 0
        %3320 = vmatprep.mubr.bf16.mxu0 %v2835
        %3321 = vmatmul.mubr.bf16.gmra.mrb[0].mxu0 %v668
        %v3322 = vpop.f32.mrb[0].mxu0
        %v3323 = vadd.f32 %v3282, %v3322
        %v3324 = vpop.f32.mrb[0].mxu0
        %v3325 = vadd.f32 %v3284, %v3324
        %v3326 = vpop.f32.mrb[0].mxu0
        %v3327 = vpop.f32.mrb[0].mxu0
        %3328 = vdwg.mxu0
        %3329 = vmatprep.subr.bf16.mxu0 %v1982
        %3330 = vmatpush1.bf16.msra.mxu0 %v1981
        %3331 = vmatprep.subr.bf16.mxu0 %v1998
        %3332 = vmatpush1.bf16.msra.mxu0 %v1997
        %3333 = vmatprep.subr.bf16.mxu0 %v2014
        %3334 = vmatpush1.bf16.msra.mxu0 %v2013
        %3335 = vmatprep.subr.bf16.mxu0 %v2030
        %3336 = vmatpush1.bf16.msra.mxu0 %v2029
        %3337 = vmatprep.subr.bf16.mxu0 %v2046
        %3338 = vmatpush1.bf16.msra.mxu0 %v2045
        %3339 = vmatprep.subr.bf16.mxu0 %v2062
        %3340 = vmatpush1.bf16.msra.mxu0 %v2061
        %3341 = vmatprep.subr.bf16.mxu0 %v2078
        %3342 = vmatpush1.bf16.msra.mxu0 %v2077
        %3343 = vmatprep.subr.bf16.mxu0 %v2094
        %3344 = vmatpush1.bf16.msra.mxu0 %v2093
        %3345 = vmatprep.subr.bf16.mxu0 %v2110
        %3346 = vmatpush1.bf16.msra.mxu0 %v2109
        %3347 = vmatprep.subr.bf16.mxu0 %v2126
        %3348 = vmatpush1.bf16.msra.mxu0 %v2125
        %3349 = vmatprep.subr.bf16.mxu0 %v2142
        %3350 = vmatpush1.bf16.msra.mxu0 %v2141
        %3351 = vmatprep.subr.bf16.mxu0 %v2158
        %3352 = vmatpush1.bf16.msra.mxu0 %v2157
        %3353 = vmatprep.subr.bf16.mxu0 %v2174
        %3354 = vmatpush1.bf16.msra.mxu0 %v2173
        %3355 = vmatprep.subr.bf16.mxu0 %v2190
        %3356 = vmatpush1.bf16.msra.mxu0 %v2189
        %3357 = vmatprep.subr.bf16.mxu0 %v2206
        %3358 = vmatpush1.bf16.msra.mxu0 %v2205
        %3359 = vmatprep.subr.bf16.mxu0 %v2222
        %3360 = vmatpush1.bf16.msra.mxu0 %v2221
        %3361 = vmatprep.mubr.bf16.mxu0 %v667
        %3362 = vmatmul.mubr.bf16.gmra.mrb[0].mxu0 %v666
        %v3363 = vpop.f32.mrb[0].mxu0
        %v3364 = vadd.f32 %v658, %v3363
        %v3365 = vpop.f32.mrb[0].mxu0
        %v3366 = vadd.f32 %v658, %v3365
        %v3367 = vpop.f32.mrb[0].mxu0
        %v3368 = vpop.f32.mrb[0].mxu0
        %3369 = vdwg.mxu0
        %3370 = vmatprep.subr.bf16.mxu0 %v2238
        %3371 = vmatpush1.bf16.msra.mxu0 %v2237
        %3372 = vmatprep.subr.bf16.mxu0 %v2254
        %3373 = vmatpush1.bf16.msra.mxu0 %v2253
        %3374 = vmatprep.subr.bf16.mxu0 %v2270
        %3375 = vmatpush1.bf16.msra.mxu0 %v2269
        %3376 = vmatprep.subr.bf16.mxu0 %v2286
        %3377 = vmatpush1.bf16.msra.mxu0 %v2285
        %3378 = vmatprep.subr.bf16.mxu0 %v2302
        %3379 = vmatpush1.bf16.msra.mxu0 %v2301
        %3380 = vmatprep.subr.bf16.mxu0 %v2318
        %3381 = vmatpush1.bf16.msra.mxu0 %v2317
        %3382 = vmatprep.subr.bf16.mxu0 %v2334
        %3383 = vmatpush1.bf16.msra.mxu0 %v2333
        %3384 = vmatprep.subr.bf16.mxu0 %v2350
        %3385 = vmatpush1.bf16.msra.mxu0 %v2349
        %3386 = vmatprep.subr.bf16.mxu0 %v2366
        %3387 = vmatpush1.bf16.msra.mxu0 %v2365
        %3388 = vmatprep.subr.bf16.mxu0 %v2382
        %3389 = vmatpush1.bf16.msra.mxu0 %v2381
        %3390 = vmatprep.subr.bf16.mxu0 %v2398
        %3391 = vmatpush1.bf16.msra.mxu0 %v2397
        %3392 = vmatprep.subr.bf16.mxu0 0
        %3393 = vmatpush1.bf16.msra.mxu0 0
        %3394 = vmatprep.subr.bf16.mxu0 0
        %3395 = vmatpush1.bf16.msra.mxu0 0
        %3396 = vmatprep.subr.bf16.mxu0 0
        %3397 = vmatpush1.bf16.msra.mxu0 0
        %3398 = vmatprep.subr.bf16.mxu0 0
        %3399 = vmatpush1.bf16.msra.mxu0 0
        %3400 = vmatprep.subr.bf16.mxu0 0
        %3401 = vmatpush1.bf16.msra.mxu0 0
        %3402 = vmatprep.mubr.bf16.mxu0 %v2835
        %3403 = vmatmul.mubr.bf16.gmra.mrb[0].mxu0 %v668
        %v3404 = vpop.f32.mrb[0].mxu0
        %v3405 = vadd.f32 %v3364, %v3404
        %v3406 = vpop.f32.mrb[0].mxu0
        %v3407 = vadd.f32 %v3366, %v3406
        %v3408 = vpop.f32.mrb[0].mxu0
        %v3409 = vpop.f32.mrb[0].mxu0
        %3410 = vdwg.mxu0
        %3411 = vmatprep.subr.bf16.mxu0 %v1984
        %3412 = vmatpush1.bf16.msra.mxu0 %v1983
        %3413 = vmatprep.subr.bf16.mxu0 %v2000
        %3414 = vmatpush1.bf16.msra.mxu0 %v1999
        %3415 = vmatprep.subr.bf16.mxu0 %v2016
        %3416 = vmatpush1.bf16.msra.mxu0 %v2015
        %3417 = vmatprep.subr.bf16.mxu0 %v2032
        %3418 = vmatpush1.bf16.msra.mxu0 %v2031
        %3419 = vmatprep.subr.bf16.mxu0 %v2048
        %3420 = vmatpush1.bf16.msra.mxu0 %v2047
        %3421 = vmatprep.subr.bf16.mxu0 %v2064
        %3422 = vmatpush1.bf16.msra.mxu0 %v2063
        %3423 = vmatprep.subr.bf16.mxu0 %v2080
        %3424 = vmatpush1.bf16.msra.mxu0 %v2079
        %3425 = vmatprep.subr.bf16.mxu0 %v2096
        %3426 = vmatpush1.bf16.msra.mxu0 %v2095
        %3427 = vmatprep.subr.bf16.mxu0 %v2112
        %3428 = vmatpush1.bf16.msra.mxu0 %v2111
        %3429 = vmatprep.subr.bf16.mxu0 %v2128
        %3430 = vmatpush1.bf16.msra.mxu0 %v2127
        %3431 = vmatprep.subr.bf16.mxu0 %v2144
        %3432 = vmatpush1.bf16.msra.mxu0 %v2143
        %3433 = vmatprep.subr.bf16.mxu0 %v2160
        %3434 = vmatpush1.bf16.msra.mxu0 %v2159
        %3435 = vmatprep.subr.bf16.mxu0 %v2176
        %3436 = vmatpush1.bf16.msra.mxu0 %v2175
        %3437 = vmatprep.subr.bf16.mxu0 %v2192
        %3438 = vmatpush1.bf16.msra.mxu0 %v2191
        %3439 = vmatprep.subr.bf16.mxu0 %v2208
        %3440 = vmatpush1.bf16.msra.mxu0 %v2207
        %3441 = vmatprep.subr.bf16.mxu0 %v2224
        %3442 = vmatpush1.bf16.msra.mxu0 %v2223
        %3443 = vmatprep.mubr.bf16.mxu0 %v667
        %3444 = vmatmul.mubr.bf16.gmra.mrb[0].mxu0 %v666
        %v3445 = vpop.f32.mrb[0].mxu0
        %v3446 = vadd.f32 %v658, %v3445
        %v3447 = vpop.f32.mrb[0].mxu0
        %v3448 = vadd.f32 %v658, %v3447
        %v3449 = vpop.f32.mrb[0].mxu0
        %v3450 = vpop.f32.mrb[0].mxu0
        %3451 = vdwg.mxu0
        %3452 = vmatprep.subr.bf16.mxu0 %v2240
        %3453 = vmatpush1.bf16.msra.mxu0 %v2239
        %3454 = vmatprep.subr.bf16.mxu0 %v2256
        %3455 = vmatpush1.bf16.msra.mxu0 %v2255
        %3456 = vmatprep.subr.bf16.mxu0 %v2272
        %3457 = vmatpush1.bf16.msra.mxu0 %v2271
        %3458 = vmatprep.subr.bf16.mxu0 %v2288
        %3459 = vmatpush1.bf16.msra.mxu0 %v2287
        %3460 = vmatprep.subr.bf16.mxu0 %v2304
        %3461 = vmatpush1.bf16.msra.mxu0 %v2303
        %3462 = vmatprep.subr.bf16.mxu0 %v2320
        %3463 = vmatpush1.bf16.msra.mxu0 %v2319
        %3464 = vmatprep.subr.bf16.mxu0 %v2336
        %3465 = vmatpush1.bf16.msra.mxu0 %v2335
        %3466 = vmatprep.subr.bf16.mxu0 %v2352
        %3467 = vmatpush1.bf16.msra.mxu0 %v2351
        %3468 = vmatprep.subr.bf16.mxu0 %v2368
        %3469 = vmatpush1.bf16.msra.mxu0 %v2367
        %3470 = vmatprep.subr.bf16.mxu0 %v2384
        %3471 = vmatpush1.bf16.msra.mxu0 %v2383
        %3472 = vmatprep.subr.bf16.mxu0 %v2400
        %3473 = vmatpush1.bf16.msra.mxu0 %v2399
        %3474 = vmatprep.subr.bf16.mxu0 0
        %3475 = vmatpush1.bf16.msra.mxu0 0
        %3476 = vmatprep.subr.bf16.mxu0 0
        %3477 = vmatpush1.bf16.msra.mxu0 0
        %3478 = vmatprep.subr.bf16.mxu0 0
        %3479 = vmatpush1.bf16.msra.mxu0 0
        %3480 = vmatprep.subr.bf16.mxu0 0
        %3481 = vmatpush1.bf16.msra.mxu0 0
        %3482 = vmatprep.subr.bf16.mxu0 0
        %3483 = vmatpush1.bf16.msra.mxu0 0
        %3484 = vmatprep.mubr.bf16.mxu0 %v2835
        %3485 = vmatmul.mubr.bf16.gmra.mrb[0].mxu0 %v668
        %v3486 = vpop.f32.mrb[0].mxu0
        %v3487 = vadd.f32 %v3446, %v3486
        %v3488 = vpop.f32.mrb[0].mxu0
        %v3489 = vadd.f32 %v3448, %v3488
        %v3490 = vpop.f32.mrb[0].mxu0
        %v3491 = vpop.f32.mrb[0].mxu0
        %3492 = vdwg.mxu0
        %v3493 = vmax.f32 %v2913, 0.0
        %v3494 = vmax.f32 %v2915, 0.0
        %v3495 = vmax.f32 %v2995, 0.0
        %v3496 = vmax.f32 %v2997, 0.0
        %v3497 = vmax.f32 %v3077, 0.0
        %v3498 = vmax.f32 %v3079, 0.0
        %v3499 = vmax.f32 %v3159, 0.0
        %v3500 = vmax.f32 %v3161, 0.0
        %v3501 = vmax.f32 %v3241, 0.0
        %v3502 = vmax.f32 %v3243, 0.0
        %v3503 = vmax.f32 %v3323, 0.0
        %v3504 = vmax.f32 %v3325, 0.0
        %v3505 = vmax.f32 %v3405, 0.0
        %v3506 = vmax.f32 %v3407, 0.0
        %v3507 = vmax.f32 %v3487, 0.0
        %v3508 = vmax.f32 %v3489, 0.0
        %v3509 = vpack.c.bf16 %v3493, %v3493
        %v3510 = vpack.c.bf16 %v3494, %v3494
        %v3511 = vpack.c.bf16 %v3495, %v3495
        %v3512 = vpack.c.bf16 %v3496, %v3496
        %v3513 = vpack.c.bf16 %v3497, %v3497
        %v3514 = vpack.c.bf16 %v3498, %v3498
        %v3515 = vpack.c.bf16 %v3499, %v3499
        %v3516 = vpack.c.bf16 %v3500, %v3500
        %v3517 = vpack.c.bf16 %v3501, %v3501
        %v3518 = vpack.c.bf16 %v3502, %v3502
        %v3519 = vpack.c.bf16 %v3503, %v3503
        %v3520 = vpack.c.bf16 %v3504, %v3504
        %v3521 = vpack.c.bf16 %v3505, %v3505
        %v3522 = vpack.c.bf16 %v3506, %v3506
        %v3523 = vpack.c.bf16 %v3507, %v3507
        %v3524 = vpack.c.bf16 %v3508, %v3508
        %v3541 = vunpack.c.l.b16 %v3509
        %v3542 = vunpack.c.l.b16 %v3510
        %v3543 = vunpack.c.l.b16 %v3511
        %v3544 = vunpack.c.l.b16 %v3512
        %v3545 = vunpack.c.l.b16 %v3513
        %v3546 = vunpack.c.l.b16 %v3514
        %v3547 = vunpack.c.l.b16 %v3515
        %v3548 = vunpack.c.l.b16 %v3516
        %v3549 = vunpack.c.l.b16 %v3517
        %v3550 = vunpack.c.l.b16 %v3518
        %v3551 = vunpack.c.l.b16 %v3519
        %v3552 = vunpack.c.l.b16 %v3520
        %v3553 = vunpack.c.l.b16 %v3521
        %v3554 = vunpack.c.l.b16 %v3522
        %v3555 = vunpack.c.l.b16 %v3523
        %v3556 = vunpack.c.l.b16 %v3524
        %v3557 = vpack.c.b16 %v3542, %v3541
        %v3558 = vpack.c.b16 %v3544, %v3543
        %v3559 = vpack.c.b16 %v3546, %v3545
        %v3560 = vpack.c.b16 %v3548, %v3547
        %v3561 = vpack.c.b16 %v3550, %v3549
        %v3562 = vpack.c.b16 %v3552, %v3551
        %v3563 = vpack.c.b16 %v3554, %v3553
        %v3564 = vpack.c.b16 %v3556, %v3555
        %3573 = vst [vmem:[%s217] sm:$0xff] %v3557
        %3574 = vst [vmem:[%s217 + $0x8] sm:$0xff] %v3558
        %3575 = vst [vmem:[%s217 + $0x10] sm:$0xff] %v3559
        %3576 = vst [vmem:[%s217 + $0x18] sm:$0xff] %v3560
        %3577 = vst [vmem:[%s217 + $0x20] sm:$0xff] %v3561
        %3578 = vst [vmem:[%s217 + $0x28] sm:$0xff] %v3562
        %3579 = vst [vmem:[%s217 + $0x30] sm:$0xff] %v3563
        %3580 = vst [vmem:[%s217 + $0x38] sm:$0xff] %v3564
        %s3581 = smul.u32 16, %s22
        %p3582 = scmp.lt.s32.totalorder %s21, 1
        %s3583 = scalar_select %p3582, %s21, 1
        %p3584 = scmp.lt.s32.totalorder %s3581, 31
        %s3585 = scalar_select %p3584, %s3581, 31
        %s3586 = smul.addr %s3583, 32
        %s3587 = sadd.s32 %s3585, %s3586
        %s3588 = smul.addr %s3587, 4
        %s3589 = scalar_lea.vmem %s3, %s3588
        // Predicated region
        $region37: #{decoder_forward.20} parent=31 // pred_check
          %p3590 = pneg %p119
        $region38: #{decoder_forward.20} parent=31 // pred_check_branch
          %3592 = sbr.rel (%p3590) target = $region40
        $region39: #{decoder_forward.20} parent=31 // pred_region
          %s3593 = smul.u32 16, %s22
        $region40: #{decoder_forward.20} parent=31 // pred_fallthru
          _
      $region32: #{decoder_forward.20} parent=5 // pred_fallthru
        _
      %p3594 = scmp.le.s32.totalorder 2, %s12
      // Predicated region
      $region41: #{decoder_forward.20} parent=5 // pred_check
        %p3595 = pneg %p3594
      $region42: #{decoder_forward.20} parent=5 // pred_check_branch
        %3597 = sbr.rel (%p3595) target = $region44
      $region43: #{decoder_forward.20} parent=5 // pred_region
        %s3598 = ssub.s32 %s12, 2
        // Predicated region
        $region45: #{decoder_forward.20} parent=43 // pred_check
          %p3599 = pneg %p125
        $region46: #{decoder_forward.20} parent=43 // pred_check_branch
          %3601 = sbr.rel (%p3599) target = $region48
        $region47: #{decoder_forward.20} parent=43 // pred_region
          %s3602 = smul.u32 16, %s24
          %p3603 = scmp.lt.s32.totalorder %s23, 1
          %s3604 = scalar_select %p3603, %s23, 1
          %p3605 = scmp.lt.s32.totalorder %s3602, 31
          %s3606 = scalar_select %p3605, %s3602, 31
          %s3607 = smul.addr %s3604, 32
          %s3608 = sadd.s32 %s3606, %s3607
          %s3609 = smul.addr %s3608, 4
          %s3610 = scalar_lea.vmem %s3, %s3609
        $region48: #{decoder_forward.20} parent=43 // pred_fallthru
          _
      $region44: #{decoder_forward.20} parent=5 // pred_fallthru
        _
    $region6: #{decoder_forward.20} parent=1 // loop_footer
      %s16 = sadd.s32 1, %s12
    $region7: #{decoder_forward.20} parent=1 // loop_footer_branch
      %11 = sbr.rel target = $region3
    $region8: #{decoder_forward.20} parent=1 // loop_exit
      _
    %3611 = vsyncpa [#allocation3], 1
    %s3612 = scalar_lea.sflag [#allocation3], 1
    %3613 = vsyncpa %s3612, 1

// kernel: decoder_forward.21
$region0: #{decoder_forward.21}
  #allocation0 [shape = 'u32[]', space=smem, size = 0x4, offset = 0x4, fixed_abs, tag = 'smem constant byte address 0x4 - core index']
  #allocation1 [shape = 'u32[144,128]{1,0:T(1,128)}', space=vmem, size = 0x12000, scoped, tag = 'internal scratch']
  %s0 = inlined_call_operand.vmem [shape: bf16[2,216,4096], index: 0, kind: input, shape index: {}]
  %s1 = inlined_call_operand.vmem [shape: bf16[8,216], index: 1, kind: input, shape index: {}]
  %s2 = inlined_call_operand.vmem [shape: f32[8,1], index: 2, kind: input, shape index: {}]
  %s3 = inlined_call_operand.vmem [shape: f32[2,8,4096], index: 3, kind: output, shape index: {}]
  %s4 = sld [smem:[#allocation0]]
  $region68: #{decoder_forward.21} parent=0
    _
  %s6 = ssub.s32 1, %s4
  %s7 = scalar_select 0, %s6, %s4
  $region1: #{decoder_forward.21} parent=0
    #allocation2 [shape = 'u8[1769472]{0}', space=vmem, size = 0x1b0000, scoped, tag = 'input window, operand 0']
    loop: start=0, step=1, limit=6
    $region2: #{decoder_forward.21} parent=1 // loop_pre_header
      _
    $region3: #{decoder_forward.21} parent=1 // loop_header
      %s9 = sphi 0, %s13
      %p10 = scmp.ge.s32.totalorder %s9, 6
      %s16 = sphi 0, %s28
      %s17 = sphi 0, %s24
      %s18 = sphi 0, %s16
      %s19 = sphi 0, %s17
      %s20 = sphi 0, %s18
      %s21 = sphi 0, %s19
      %s33 = sphi 0, %s35
      %s36 = sphi 0, %s33
      %s37 = sphi 0, %s36
      %s53 = sphi 0, %s37
      %s57 = sphi 0, %s57
      %s59 = sphi 0, %s57
      %s60 = sphi 0, %s59
      %s74 = sphi 0, %s60
      %s78 = sphi 0, %s78
      %s80 = sphi 0, %s78
      %s81 = sphi 0, %s80
      %s95 = sphi 0, %s81
      %s103 = sphi 0, %s105
      %s106 = sphi 0, %s103
      %s107 = sphi 0, %s106
      %s123 = sphi 0, %s107
    $region4: #{decoder_forward.21} parent=1 // loop_header_branch
      %12 = sbr.rel (%p10) target = $region8
    $region5: #{decoder_forward.21} parent=1 // loop_body
      %s14 = ssub.s32 %s9, 1
      %s15 = ssub.s32 %s9, 2
      %s22 = sadd.s32 1, %s17
      %p23 = scmp.ge.s32.totalorder %s22, 2
      %s24 = scalar_select %p23, 0, %s22
      %s25 = sadd.s32 1, %s16
      %s26 = scalar_select %p23, %s25, %s16
      %p27 = scmp.ge.s32.totalorder %s26, 2
      %s28 = scalar_select %p27, 0, %s26
      %s29 = ssub.s32 %s16, %s28
      %s30 = ssub.s32 %s17, %s24
      %s31 = sor.u32 %s29, %s30
      %p32 = scmp.eq.s32.totalorder %s31, 0
      %s34 = sadd.s32 %s33, 1
      %s35 = scalar_select %p32, %s33, %s34
      %p38 = pneg %p32
      %p39 = scmp.eq.s32.totalorder %s9, 3
      %p40 = por %p38, %p39
      %p41 = scmp.ne.s32.totalorder %s33, %s36
      %p42 = scmp.eq.s32.totalorder %s9, 0
      %p43 = por %p41, %p42
      %p44 = scmp.ne.s32.totalorder %s33, %s36
      %p45 = scmp.eq.s32.totalorder %s14, 3
      %p46 = por %p44, %p45
      %p47 = scmp.ne.s32.totalorder %s36, %s37
      %p48 = scmp.eq.s32.totalorder %s14, 0
      %p49 = por %p47, %p48
      %p50 = scmp.ne.s32.totalorder %s36, %s37
      %p51 = scmp.eq.s32.totalorder %s15, 3
      %p52 = por %p50, %p51
      %p54 = scmp.ne.s32.totalorder %s37, %s53
      %p55 = scmp.eq.s32.totalorder %s15, 0
      %p56 = por %p54, %p55
      %s58 = sadd.s32 %s57, 1
      %p61 = scmp.eq.s32.totalorder %s9, 3
      %p62 = scmp.ne.s32.totalorder %s57, %s59
      %p63 = scmp.eq.s32.totalorder %s9, 0
      %p64 = por %p62, %p63
      %p65 = scmp.ne.s32.totalorder %s57, %s59
      %p66 = scmp.eq.s32.totalorder %s14, 3
      %p67 = por %p65, %p66
      %p68 = scmp.ne.s32.totalorder %s59, %s60
      %p69 = scmp.eq.s32.totalorder %s14, 0
      %p70 = por %p68, %p69
      %p71 = scmp.ne.s32.totalorder %s59, %s60
      %p72 = scmp.eq.s32.totalorder %s15, 3
      %p73 = por %p71, %p72
      %p75 = scmp.ne.s32.totalorder %s60, %s74
      %p76 = scmp.eq.s32.totalorder %s15, 0
      %p77 = por %p75, %p76
      %s79 = sadd.s32 %s78, 1
      %p82 = scmp.eq.s32.totalorder %s9, 3
      %p83 = scmp.ne.s32.totalorder %s78, %s80
      %p84 = scmp.eq.s32.totalorder %s9, 0
      %p85 = por %p83, %p84
      %p86 = scmp.ne.s32.totalorder %s78, %s80
      %p87 = scmp.eq.s32.totalorder %s14, 3
      %p88 = por %p86, %p87
      %p89 = scmp.ne.s32.totalorder %s80, %s81
      %p90 = scmp.eq.s32.totalorder %s14, 0
      %p91 = por %p89, %p90
      %p92 = scmp.ne.s32.totalorder %s80, %s81
      %p93 = scmp.eq.s32.totalorder %s15, 3
      %p94 = por %p92, %p93
      %p96 = scmp.ne.s32.totalorder %s81, %s95
      %p97 = scmp.eq.s32.totalorder %s15, 0
      %p98 = por %p96, %p97
      %s99 = ssub.s32 %s16, %s28
      %s100 = ssub.s32 %s17, %s24
      %s101 = sor.u32 %s99, %s100
      %p102 = scmp.eq.s32.totalorder %s101, 0
      %s104 = sadd.s32 %s103, 1
      %s105 = scalar_select %p102, %s103, %s104
      %p108 = pneg %p102
      %p109 = scmp.eq.s32.totalorder %s9, 3
      %p110 = por %p108, %p109
      %p111 = scmp.ne.s32.totalorder %s103, %s106
      %p112 = scmp.eq.s32.totalorder %s9, 0
      %p113 = por %p111, %p112
      %p114 = scmp.ne.s32.totalorder %s103, %s106
      %p115 = scmp.eq.s32.totalorder %s14, 3
      %p116 = por %p114, %p115
      %p117 = scmp.ne.s32.totalorder %s106, %s107
      %p118 = scmp.eq.s32.totalorder %s14, 0
      %p119 = por %p117, %p118
      %p120 = scmp.ne.s32.totalorder %s106, %s107
      %p121 = scmp.eq.s32.totalorder %s15, 3
      %p122 = por %p120, %p121
      %p124 = scmp.ne.s32.totalorder %s107, %s123
      %p125 = scmp.eq.s32.totalorder %s15, 0
      %p126 = por %p124, %p125
      %p127 = scmp.le.s32.totalorder 1, %s9
      %p128 = scmp.lt.s32.totalorder %s9, 5
      %p129 = pnand %p127, %p128
      %p130 = pneg %p129
      // Predicated region
      $region9: #{decoder_forward.21} parent=5 // pred_check
        _
      $region10: #{decoder_forward.21} parent=5 // pred_check_branch
        %132 = sbr.rel (%p129) target = $region12
      $region11: #{decoder_forward.21} parent=5 // pred_region
        %s133 = ssub.s32 %s9, 1
        // Predicated region
        $region13: #{decoder_forward.21} parent=11 // pred_check
          %p134 = pneg %p70
        $region14: #{decoder_forward.21} parent=11 // pred_check_branch
          %136 = sbr.rel (%p134) target = $region16
        $region15: #{decoder_forward.21} parent=11 // pred_region
          _
        $region16: #{decoder_forward.21} parent=11 // pred_fallthru
          _
        // Predicated region
        $region17: #{decoder_forward.21} parent=11 // pred_check
          %p137 = pneg %p91
        $region18: #{decoder_forward.21} parent=11 // pred_check_branch
          %139 = sbr.rel (%p137) target = $region20
        $region19: #{decoder_forward.21} parent=11 // pred_region
          _
        $region20: #{decoder_forward.21} parent=11 // pred_fallthru
          _
      $region12: #{decoder_forward.21} parent=5 // pred_fallthru
        _
      %p140 = scmp.lt.s32.totalorder %s9, 4
      // Predicated region
      $region21: #{decoder_forward.21} parent=5 // pred_check
        %p141 = pneg %p140
      $region22: #{decoder_forward.21} parent=5 // pred_check_branch
        %143 = sbr.rel (%p141) target = $region24
      $region23: #{decoder_forward.21} parent=5 // pred_region
        // Predicated region
        $region25: #{decoder_forward.21} parent=23 // pred_check
          %p144 = pneg %p43
        $region26: #{decoder_forward.21} parent=23 // pred_check_branch
          %146 = sbr.rel (%p144) target = $region28
        $region27: #{decoder_forward.21} parent=23 // pred_region
          %s147 = sand.u32 %s33, 1
          %s148 = sand.u32 %s33, 1
          %s149 = smul.addr %s148, 1728
          %s150 = scalar_lea.vmem [#allocation2], %s149
          %s151 = smul.u32 16, %s17
          %s152 = smul.addr %s16, 864
          %s153 = sadd.s32 %s151, %s152
          %s154 = smul.addr %s153, 4
          %s155 = scalar_lea.vmem %s0, %s154
          // Predicated region
          $region29: #{decoder_forward.21} parent=27 // pred_check
            _
          $region30: #{decoder_forward.21} parent=27 // pred_check_branch
            %157 = sbr.rel (0) target = $region32
          $region31: #{decoder_forward.21} parent=27 // pred_region
            // Predicated region
            $region33: #{decoder_forward.21} parent=31 // pred_check
              _
            $region34: #{decoder_forward.21} parent=31 // pred_check_branch
              %159 = sbr.rel (0) target = $region36
            $region35: #{decoder_forward.21} parent=31 // pred_region
              loop: start=0, step=1, limit=1
              $region37: #{decoder_forward.21} parent=35 // loop_pre_header
                _
              $region38: #{decoder_forward.21} parent=35 // loop_header
                %s161 = sphi 0, %s165
                %p162 = scmp.ge.s32.totalorder %s161, 1
                %s166 = sphi %s155, %s155
                %s167 = sphi %s150, %s150
              $region39: #{decoder_forward.21} parent=35 // loop_header_branch
                %164 = sbr.rel (%p162) target = $region43
              $region40: #{decoder_forward.21} parent=35 // loop_body
                %v168 = vld [vmem:[%s166] sm:$0xff]
                %169 = vst [vmem:[%s167] sm:$0xff] %v168
                %v170 = vld [vmem:[%s166 + $0x8] sm:$0xff]
                %171 = vst [vmem:[%s167 + $0x8] sm:$0xff] %v170
                %v172 = vld [vmem:[%s166 + $0x10] sm:$0xff]
                %173 = vst [vmem:[%s167 + $0x10] sm:$0xff] %v172
                %v174 = vld [vmem:[%s166 + $0x18] sm:$0xff]
                %175 = vst [vmem:[%s167 + $0x18] sm:$0xff] %v174
                %v176 = vld [vmem:[%s166 + $0x20] sm:$0xff]
                %177 = vst [vmem:[%s167 + $0x20] sm:$0xff] %v176
                %v178 = vld [vmem:[%s166 + $0x28] sm:$0xff]
                %179 = vst [vmem:[%s167 + $0x28] sm:$0xff] %v178
                %v180 = vld [vmem:[%s166 + $0x30] sm:$0xff]
                %181 = vst [vmem:[%s167 + $0x30] sm:$0xff] %v180
                %v182 = vld [vmem:[%s166 + $0x38] sm:$0xff]
                %183 = vst [vmem:[%s167 + $0x38] sm:$0xff] %v182
                %v184 = vld [vmem:[%s166 + $0x80] sm:$0xff]
                %185 = vst [vmem:[%s167 + $0x40] sm:$0xff] %v184
                %v186 = vld [vmem:[%s166 + $0x88] sm:$0xff]
                %187 = vst [vmem:[%s167 + $0x48] sm:$0xff] %v186
                %v188 = vld [vmem:[%s166 + $0x90] sm:$0xff]
                %189 = vst [vmem:[%s167 + $0x50] sm:$0xff] %v188
                %v190 = vld [vmem:[%s166 + $0x98] sm:$0xff]
                %191 = vst [vmem:[%s167 + $0x58] sm:$0xff] %v190
                %v192 = vld [vmem:[%s166 + $0xa0] sm:$0xff]
                %193 = vst [vmem:[%s167 + $0x60] sm:$0xff] %v192
                %v194 = vld [vmem:[%s166 + $0xa8] sm:$0xff]
                %195 = vst [vmem:[%s167 + $0x68] sm:$0xff] %v194
                %v196 = vld [vmem:[%s166 + $0xb0] sm:$0xff]
                %197 = vst [vmem:[%s167 + $0x70] sm:$0xff] %v196
                %v198 = vld [vmem:[%s166 + $0xb8] sm:$0xff]
                %199 = vst [vmem:[%s167 + $0x78] sm:$0xff] %v198
                %v200 = vld [vmem:[%s166 + $0x100] sm:$0xff]
                %201 = vst [vmem:[%s167 + $0x80] sm:$0xff] %v200
                %v202 = vld [vmem:[%s166 + $0x108] sm:$0xff]
                %203 = vst [vmem:[%s167 + $0x88] sm:$0xff] %v202
                %v204 = vld [vmem:[%s166 + $0x110] sm:$0xff]
                %205 = vst [vmem:[%s167 + $0x90] sm:$0xff] %v204
                %v206 = vld [vmem:[%s166 + $0x118] sm:$0xff]
                %207 = vst [vmem:[%s167 + $0x98] sm:$0xff] %v206
                %v208 = vld [vmem:[%s166 + $0x120] sm:$0xff]
                %209 = vst [vmem:[%s167 + $0xa0] sm:$0xff] %v208
                %v210 = vld [vmem:[%s166 + $0x128] sm:$0xff]
                %211 = vst [vmem:[%s167 + $0xa8] sm:$0xff] %v210
                %v212 = vld [vmem:[%s166 + $0x130] sm:$0xff]
                %213 = vst [vmem:[%s167 + $0xb0] sm:$0xff] %v212
                %v214 = vld [vmem:[%s166 + $0x138] sm:$0xff]
                %215 = vst [vmem:[%s167 + $0xb8] sm:$0xff] %v214
                %v216 = vld [vmem:[%s166 + $0x180] sm:$0xff]
                %217 = vst [vmem:[%s167 + $0xc0] sm:$0xff] %v216
                %v218 = vld [vmem:[%s166 + $0x188] sm:$0xff]
                %219 = vst [vmem:[%s167 + $0xc8] sm:$0xff] %v218
                %v220 = vld [vmem:[%s166 + $0x190] sm:$0xff]
                %221 = vst [vmem:[%s167 + $0xd0] sm:$0xff] %v220
                %v222 = vld [vmem:[%s166 + $0x198] sm:$0xff]
                %223 = vst [vmem:[%s167 + $0xd8] sm:$0xff] %v222
                %v224 = vld [vmem:[%s166 + $0x1a0] sm:$0xff]
                %225 = vst [vmem:[%s167 + $0xe0] sm:$0xff] %v224
                %v226 = vld [vmem:[%s166 + $0x1a8] sm:$0xff]
                %227 = vst [vmem:[%s167 + $0xe8] sm:$0xff] %v226
                %v228 = vld [vmem:[%s166 + $0x1b0] sm:$0xff]
                %229 = vst [vmem:[%s167 + $0xf0] sm:$0xff] %v228
                %v230 = vld [vmem:[%s166 + $0x1b8] sm:$0xff]
                %231 = vst [vmem:[%s167 + $0xf8] sm:$0xff] %v230
                %v232 = vld [vmem:[%s166 + $0x200] sm:$0xff]
                %233 = vst [vmem:[%s167 + $0x100] sm:$0xff] %v232
                %v234 = vld [vmem:[%s166 + $0x208] sm:$0xff]
                %235 = vst [vmem:[%s167 + $0x108] sm:$0xff] %v234
                %v236 = vld [vmem:[%s166 + $0x210] sm:$0xff]
                %237 = vst [vmem:[%s167 + $0x110] sm:$0xff] %v236
                %v238 = vld [vmem:[%s166 + $0x218] sm:$0xff]
                %239 = vst [vmem:[%s167 + $0x118] sm:$0xff] %v238
                %v240 = vld [vmem:[%s166 + $0x220] sm:$0xff]
                %241 = vst [vmem:[%s167 + $0x120] sm:$0xff] %v240
                %v242 = vld [vmem:[%s166 + $0x228] sm:$0xff]
                %243 = vst [vmem:[%s167 + $0x128] sm:$0xff] %v242
                %v244 = vld [vmem:[%s166 + $0x230] sm:$0xff]
                %245 = vst [vmem:[%s167 + $0x130] sm:$0xff] %v244
                %v246 = vld [vmem:[%s166 + $0x238] sm:$0xff]
                %247 = vst [vmem:[%s167 + $0x138] sm:$0xff] %v246
                %v248 = vld [vmem:[%s166 + $0x280] sm:$0xff]
                %249 = vst [vmem:[%s167 + $0x140] sm:$0xff] %v248
                %v250 = vld [vmem:[%s166 + $0x288] sm:$0xff]
                %251 = vst [vmem:[%s167 + $0x148] sm:$0xff] %v250
                %v252 = vld [vmem:[%s166 + $0x290] sm:$0xff]
                %253 = vst [vmem:[%s167 + $0x150] sm:$0xff] %v252
                %v254 = vld [vmem:[%s166 + $0x298] sm:$0xff]
                %255 = vst [vmem:[%s167 + $0x158] sm:$0xff] %v254
                %v256 = vld [vmem:[%s166 + $0x2a0] sm:$0xff]
                %257 = vst [vmem:[%s167 + $0x160] sm:$0xff] %v256
                %v258 = vld [vmem:[%s166 + $0x2a8] sm:$0xff]
                %259 = vst [vmem:[%s167 + $0x168] sm:$0xff] %v258
                %v260 = vld [vmem:[%s166 + $0x2b0] sm:$0xff]
                %261 = vst [vmem:[%s167 + $0x170] sm:$0xff] %v260
                %v262 = vld [vmem:[%s166 + $0x2b8] sm:$0xff]
                %263 = vst [vmem:[%s167 + $0x178] sm:$0xff] %v262
                %v264 = vld [vmem:[%s166 + $0x300] sm:$0xff]
                %265 = vst [vmem:[%s167 + $0x180] sm:$0xff] %v264
                %v266 = vld [vmem:[%s166 + $0x308] sm:$0xff]
                %267 = vst [vmem:[%s167 + $0x188] sm:$0xff] %v266
                %v268 = vld [vmem:[%s166 + $0x310] sm:$0xff]
                %269 = vst [vmem:[%s167 + $0x190] sm:$0xff] %v268
                %v270 = vld [vmem:[%s166 + $0x318] sm:$0xff]
                %271 = vst [vmem:[%s167 + $0x198] sm:$0xff] %v270
                %v272 = vld [vmem:[%s166 + $0x320] sm:$0xff]
                %273 = vst [vmem:[%s167 + $0x1a0] sm:$0xff] %v272
                %v274 = vld [vmem:[%s166 + $0x328] sm:$0xff]
                %275 = vst [vmem:[%s167 + $0x1a8] sm:$0xff] %v274
                %v276 = vld [vmem:[%s166 + $0x330] sm:$0xff]
                %277 = vst [vmem:[%s167 + $0x1b0] sm:$0xff] %v276
                %v278 = vld [vmem:[%s166 + $0x338] sm:$0xff]
                %279 = vst [vmem:[%s167 + $0x1b8] sm:$0xff] %v278
                %v280 = vld [vmem:[%s166 + $0x380] sm:$0xff]
                %281 = vst [vmem:[%s167 + $0x1c0] sm:$0xff] %v280
                %v282 = vld [vmem:[%s166 + $0x388] sm:$0xff]
                %283 = vst [vmem:[%s167 + $0x1c8] sm:$0xff] %v282
                %v284 = vld [vmem:[%s166 + $0x390] sm:$0xff]
                %285 = vst [vmem:[%s167 + $0x1d0] sm:$0xff] %v284
                %v286 = vld [vmem:[%s166 + $0x398] sm:$0xff]
                %287 = vst [vmem:[%s167 + $0x1d8] sm:$0xff] %v286
                %v288 = vld [vmem:[%s166 + $0x3a0] sm:$0xff]
                %289 = vst [vmem:[%s167 + $0x1e0] sm:$0xff] %v288
                %v290 = vld [vmem:[%s166 + $0x3a8] sm:$0xff]
                %291 = vst [vmem:[%s167 + $0x1e8] sm:$0xff] %v290
                %v292 = vld [vmem:[%s166 + $0x3b0] sm:$0xff]
                %293 = vst [vmem:[%s167 + $0x1f0] sm:$0xff] %v292
                %v294 = vld [vmem:[%s166 + $0x3b8] sm:$0xff]
                %295 = vst [vmem:[%s167 + $0x1f8] sm:$0xff] %v294
                %v296 = vld [vmem:[%s166 + $0x400] sm:$0xff]
                %297 = vst [vmem:[%s167 + $0x200] sm:$0xff] %v296
                %v298 = vld [vmem:[%s166 + $0x408] sm:$0xff]
                %299 = vst [vmem:[%s167 + $0x208] sm:$0xff] %v298
                %v300 = vld [vmem:[%s166 + $0x410] sm:$0xff]
                %301 = vst [vmem:[%s167 + $0x210] sm:$0xff] %v300
                %v302 = vld [vmem:[%s166 + $0x418] sm:$0xff]
                %303 = vst [vmem:[%s167 + $0x218] sm:$0xff] %v302
                %v304 = vld [vmem:[%s166 + $0x420] sm:$0xff]
                %305 = vst [vmem:[%s167 + $0x220] sm:$0xff] %v304
                %v306 = vld [vmem:[%s166 + $0x428] sm:$0xff]
                %307 = vst [vmem:[%s167 + $0x228] sm:$0xff] %v306
                %v308 = vld [vmem:[%s166 + $0x430] sm:$0xff]
                %309 = vst [vmem:[%s167 + $0x230] sm:$0xff] %v308
                %v310 = vld [vmem:[%s166 + $0x438] sm:$0xff]
                %311 = vst [vmem:[%s167 + $0x238] sm:$0xff] %v310
                %v312 = vld [vmem:[%s166 + $0x480] sm:$0xff]
                %313 = vst [vmem:[%s167 + $0x240] sm:$0xff] %v312
                %v314 = vld [vmem:[%s166 + $0x488] sm:$0xff]
                %315 = vst [vmem:[%s167 + $0x248] sm:$0xff] %v314
                %v316 = vld [vmem:[%s166 + $0x490] sm:$0xff]
                %317 = vst [vmem:[%s167 + $0x250] sm:$0xff] %v316
                %v318 = vld [vmem:[%s166 + $0x498] sm:$0xff]
                %319 = vst [vmem:[%s167 + $0x258] sm:$0xff] %v318
                %v320 = vld [vmem:[%s166 + $0x4a0] sm:$0xff]
                %321 = vst [vmem:[%s167 + $0x260] sm:$0xff] %v320
                %v322 = vld [vmem:[%s166 + $0x4a8] sm:$0xff]
                %323 = vst [vmem:[%s167 + $0x268] sm:$0xff] %v322
                %v324 = vld [vmem:[%s166 + $0x4b0] sm:$0xff]
                %325 = vst [vmem:[%s167 + $0x270] sm:$0xff] %v324
                %v326 = vld [vmem:[%s166 + $0x4b8] sm:$0xff]
                %327 = vst [vmem:[%s167 + $0x278] sm:$0xff] %v326
                %v328 = vld [vmem:[%s166 + $0x500] sm:$0xff]
                %329 = vst [vmem:[%s167 + $0x280] sm:$0xff] %v328
                %v330 = vld [vmem:[%s166 + $0x508] sm:$0xff]
                %331 = vst [vmem:[%s167 + $0x288] sm:$0xff] %v330
                %v332 = vld [vmem:[%s166 + $0x510] sm:$0xff]
                %333 = vst [vmem:[%s167 + $0x290] sm:$0xff] %v332
                %v334 = vld [vmem:[%s166 + $0x518] sm:$0xff]
                %335 = vst [vmem:[%s167 + $0x298] sm:$0xff] %v334
                %v336 = vld [vmem:[%s166 + $0x520] sm:$0xff]
                %337 = vst [vmem:[%s167 + $0x2a0] sm:$0xff] %v336
                %v338 = vld [vmem:[%s166 + $0x528] sm:$0xff]
                %339 = vst [vmem:[%s167 + $0x2a8] sm:$0xff] %v338
                %v340 = vld [vmem:[%s166 + $0x530] sm:$0xff]
                %341 = vst [vmem:[%s167 + $0x2b0] sm:$0xff] %v340
                %v342 = vld [vmem:[%s166 + $0x538] sm:$0xff]
                %343 = vst [vmem:[%s167 + $0x2b8] sm:$0xff] %v342
                %v344 = vld [vmem:[%s166 + $0x580] sm:$0xff]
                %345 = vst [vmem:[%s167 + $0x2c0] sm:$0xff] %v344
                %v346 = vld [vmem:[%s166 + $0x588] sm:$0xff]
                %347 = vst [vmem:[%s167 + $0x2c8] sm:$0xff] %v346
                %v348 = vld [vmem:[%s166 + $0x590] sm:$0xff]
                %349 = vst [vmem:[%s167 + $0x2d0] sm:$0xff] %v348
                %v350 = vld [vmem:[%s166 + $0x598] sm:$0xff]
                %351 = vst [vmem:[%s167 + $0x2d8] sm:$0xff] %v350
                %v352 = vld [vmem:[%s166 + $0x5a0] sm:$0xff]
                %353 = vst [vmem:[%s167 + $0x2e0] sm:$0xff] %v352
                %v354 = vld [vmem:[%s166 + $0x5a8] sm:$0xff]
                %355 = vst [vmem:[%s167 + $0x2e8] sm:$0xff] %v354
                %v356 = vld [vmem:[%s166 + $0x5b0] sm:$0xff]
                %357 = vst [vmem:[%s167 + $0x2f0] sm:$0xff] %v356
                %v358 = vld [vmem:[%s166 + $0x5b8] sm:$0xff]
                %359 = vst [vmem:[%s167 + $0x2f8] sm:$0xff] %v358
                %v360 = vld [vmem:[%s166 + $0x600] sm:$0xff]
                %361 = vst [vmem:[%s167 + $0x300] sm:$0xff] %v360
                %v362 = vld [vmem:[%s166 + $0x608] sm:$0xff]
                %363 = vst [vmem:[%s167 + $0x308] sm:$0xff] %v362
                %v364 = vld [vmem:[%s166 + $0x610] sm:$0xff]
                %365 = vst [vmem:[%s167 + $0x310] sm:$0xff] %v364
                %v366 = vld [vmem:[%s166 + $0x618] sm:$0xff]
                %367 = vst [vmem:[%s167 + $0x318] sm:$0xff] %v366
                %v368 = vld [vmem:[%s166 + $0x620] sm:$0xff]
                %369 = vst [vmem:[%s167 + $0x320] sm:$0xff] %v368
                %v370 = vld [vmem:[%s166 + $0x628] sm:$0xff]
                %371 = vst [vmem:[%s167 + $0x328] sm:$0xff] %v370
                %v372 = vld [vmem:[%s166 + $0x630] sm:$0xff]
                %373 = vst [vmem:[%s167 + $0x330] sm:$0xff] %v372
                %v374 = vld [vmem:[%s166 + $0x638] sm:$0xff]
                %375 = vst [vmem:[%s167 + $0x338] sm:$0xff] %v374
                %v376 = vld [vmem:[%s166 + $0x680] sm:$0xff]
                %377 = vst [vmem:[%s167 + $0x340] sm:$0xff] %v376
                %v378 = vld [vmem:[%s166 + $0x688] sm:$0xff]
                %379 = vst [vmem:[%s167 + $0x348] sm:$0xff] %v378
                %v380 = vld [vmem:[%s166 + $0x690] sm:$0xff]
                %381 = vst [vmem:[%s167 + $0x350] sm:$0xff] %v380
                %v382 = vld [vmem:[%s166 + $0x698] sm:$0xff]
                %383 = vst [vmem:[%s167 + $0x358] sm:$0xff] %v382
                %v384 = vld [vmem:[%s166 + $0x6a0] sm:$0xff]
                %385 = vst [vmem:[%s167 + $0x360] sm:$0xff] %v384
                %v386 = vld [vmem:[%s166 + $0x6a8] sm:$0xff]
                %387 = vst [vmem:[%s167 + $0x368] sm:$0xff] %v386
                %v388 = vld [vmem:[%s166 + $0x6b0] sm:$0xff]
                %389 = vst [vmem:[%s167 + $0x370] sm:$0xff] %v388
                %v390 = vld [vmem:[%s166 + $0x6b8] sm:$0xff]
                %391 = vst [vmem:[%s167 + $0x378] sm:$0xff] %v390
                %v392 = vld [vmem:[%s166 + $0x700] sm:$0xff]
                %393 = vst [vmem:[%s167 + $0x380] sm:$0xff] %v392
                %v394 = vld [vmem:[%s166 + $0x708] sm:$0xff]
                %395 = vst [vmem:[%s167 + $0x388] sm:$0xff] %v394
                %v396 = vld [vmem:[%s166 + $0x710] sm:$0xff]
                %397 = vst [vmem:[%s167 + $0x390] sm:$0xff] %v396
                %v398 = vld [vmem:[%s166 + $0x718] sm:$0xff]
                %399 = vst [vmem:[%s167 + $0x398] sm:$0xff] %v398
                %v400 = vld [vmem:[%s166 + $0x720] sm:$0xff]
                %401 = vst [vmem:[%s167 + $0x3a0] sm:$0xff] %v400
                %v402 = vld [vmem:[%s166 + $0x728] sm:$0xff]
                %403 = vst [vmem:[%s167 + $0x3a8] sm:$0xff] %v402
                %v404 = vld [vmem:[%s166 + $0x730] sm:$0xff]
                %405 = vst [vmem:[%s167 + $0x3b0] sm:$0xff] %v404
                %v406 = vld [vmem:[%s166 + $0x738] sm:$0xff]
                %407 = vst [vmem:[%s167 + $0x3b8] sm:$0xff] %v406
                %v408 = vld [vmem:[%s166 + $0x780] sm:$0xff]
                %409 = vst [vmem:[%s167 + $0x3c0] sm:$0xff] %v408
                %v410 = vld [vmem:[%s166 + $0x788] sm:$0xff]
                %411 = vst [vmem:[%s167 + $0x3c8] sm:$0xff] %v410
                %v412 = vld [vmem:[%s166 + $0x790] sm:$0xff]
                %413 = vst [vmem:[%s167 + $0x3d0] sm:$0xff] %v412
                %v414 = vld [vmem:[%s166 + $0x798] sm:$0xff]
                %415 = vst [vmem:[%s167 + $0x3d8] sm:$0xff] %v414
                %v416 = vld [vmem:[%s166 + $0x7a0] sm:$0xff]
                %417 = vst [vmem:[%s167 + $0x3e0] sm:$0xff] %v416
                %v418 = vld [vmem:[%s166 + $0x7a8] sm:$0xff]
                %419 = vst [vmem:[%s167 + $0x3e8] sm:$0xff] %v418
                %v420 = vld [vmem:[%s166 + $0x7b0] sm:$0xff]
                %421 = vst [vmem:[%s167 + $0x3f0] sm:$0xff] %v420
                %v422 = vld [vmem:[%s166 + $0x7b8] sm:$0xff]
                %423 = vst [vmem:[%s167 + $0x3f8] sm:$0xff] %v422
                %v424 = vld [vmem:[%s166 + $0x800] sm:$0xff]
                %425 = vst [vmem:[%s167 + $0x400] sm:$0xff] %v424
                %v426 = vld [vmem:[%s166 + $0x808] sm:$0xff]
                %427 = vst [vmem:[%s167 + $0x408] sm:$0xff] %v426
                %v428 = vld [vmem:[%s166 + $0x810] sm:$0xff]
                %429 = vst [vmem:[%s167 + $0x410] sm:$0xff] %v428
                %v430 = vld [vmem:[%s166 + $0x818] sm:$0xff]
                %431 = vst [vmem:[%s167 + $0x418] sm:$0xff] %v430
                %v432 = vld [vmem:[%s166 + $0x820] sm:$0xff]
                %433 = vst [vmem:[%s167 + $0x420] sm:$0xff] %v432
                %v434 = vld [vmem:[%s166 + $0x828] sm:$0xff]
                %435 = vst [vmem:[%s167 + $0x428] sm:$0xff] %v434
                %v436 = vld [vmem:[%s166 + $0x830] sm:$0xff]
                %437 = vst [vmem:[%s167 + $0x430] sm:$0xff] %v436
                %v438 = vld [vmem:[%s166 + $0x838] sm:$0xff]
                %439 = vst [vmem:[%s167 + $0x438] sm:$0xff] %v438
                %v440 = vld [vmem:[%s166 + $0x880] sm:$0xff]
                %441 = vst [vmem:[%s167 + $0x440] sm:$0xff] %v440
                %v442 = vld [vmem:[%s166 + $0x888] sm:$0xff]
                %443 = vst [vmem:[%s167 + $0x448] sm:$0xff] %v442
                %v444 = vld [vmem:[%s166 + $0x890] sm:$0xff]
                %445 = vst [vmem:[%s167 + $0x450] sm:$0xff] %v444
                %v446 = vld [vmem:[%s166 + $0x898] sm:$0xff]
                %447 = vst [vmem:[%s167 + $0x458] sm:$0xff] %v446
                %v448 = vld [vmem:[%s166 + $0x8a0] sm:$0xff]
                %449 = vst [vmem:[%s167 + $0x460] sm:$0xff] %v448
                %v450 = vld [vmem:[%s166 + $0x8a8] sm:$0xff]
                %451 = vst [vmem:[%s167 + $0x468] sm:$0xff] %v450
                %v452 = vld [vmem:[%s166 + $0x8b0] sm:$0xff]
                %453 = vst [vmem:[%s167 + $0x470] sm:$0xff] %v452
                %v454 = vld [vmem:[%s166 + $0x8b8] sm:$0xff]
                %455 = vst [vmem:[%s167 + $0x478] sm:$0xff] %v454
                %v456 = vld [vmem:[%s166 + $0x900] sm:$0xff]
                %457 = vst [vmem:[%s167 + $0x480] sm:$0xff] %v456
                %v458 = vld [vmem:[%s166 + $0x908] sm:$0xff]
                %459 = vst [vmem:[%s167 + $0x488] sm:$0xff] %v458
                %v460 = vld [vmem:[%s166 + $0x910] sm:$0xff]
                %461 = vst [vmem:[%s167 + $0x490] sm:$0xff] %v460
                %v462 = vld [vmem:[%s166 + $0x918] sm:$0xff]
                %463 = vst [vmem:[%s167 + $0x498] sm:$0xff] %v462
                %v464 = vld [vmem:[%s166 + $0x920] sm:$0xff]
                %465 = vst [vmem:[%s167 + $0x4a0] sm:$0xff] %v464
                %v466 = vld [vmem:[%s166 + $0x928] sm:$0xff]
                %467 = vst [vmem:[%s167 + $0x4a8] sm:$0xff] %v466
                %v468 = vld [vmem:[%s166 + $0x930] sm:$0xff]
                %469 = vst [vmem:[%s167 + $0x4b0] sm:$0xff] %v468
                %v470 = vld [vmem:[%s166 + $0x938] sm:$0xff]
                %471 = vst [vmem:[%s167 + $0x4b8] sm:$0xff] %v470
                %v472 = vld [vmem:[%s166 + $0x980] sm:$0xff]
                %473 = vst [vmem:[%s167 + $0x4c0] sm:$0xff] %v472
                %v474 = vld [vmem:[%s166 + $0x988] sm:$0xff]
                %475 = vst [vmem:[%s167 + $0x4c8] sm:$0xff] %v474
                %v476 = vld [vmem:[%s166 + $0x990] sm:$0xff]
                %477 = vst [vmem:[%s167 + $0x4d0] sm:$0xff] %v476
                %v478 = vld [vmem:[%s166 + $0x998] sm:$0xff]
                %479 = vst [vmem:[%s167 + $0x4d8] sm:$0xff] %v478
                %v480 = vld [vmem:[%s166 + $0x9a0] sm:$0xff]
                %481 = vst [vmem:[%s167 + $0x4e0] sm:$0xff] %v480
                %v482 = vld [vmem:[%s166 + $0x9a8] sm:$0xff]
                %483 = vst [vmem:[%s167 + $0x4e8] sm:$0xff] %v482
                %v484 = vld [vmem:[%s166 + $0x9b0] sm:$0xff]
                %485 = vst [vmem:[%s167 + $0x4f0] sm:$0xff] %v484
                %v486 = vld [vmem:[%s166 + $0x9b8] sm:$0xff]
                %487 = vst [vmem:[%s167 + $0x4f8] sm:$0xff] %v486
                %v488 = vld [vmem:[%s166 + $0xa00] sm:$0xff]
                %489 = vst [vmem:[%s167 + $0x500] sm:$0xff] %v488
                %v490 = vld [vmem:[%s166 + $0xa08] sm:$0xff]
                %491 = vst [vmem:[%s167 + $0x508] sm:$0xff] %v490
                %v492 = vld [vmem:[%s166 + $0xa10] sm:$0xff]
                %493 = vst [vmem:[%s167 + $0x510] sm:$0xff] %v492
                %v494 = vld [vmem:[%s166 + $0xa18] sm:$0xff]
                %495 = vst [vmem:[%s167 + $0x518] sm:$0xff] %v494
                %v496 = vld [vmem:[%s166 + $0xa20] sm:$0xff]
                %497 = vst [vmem:[%s167 + $0x520] sm:$0xff] %v496
                %v498 = vld [vmem:[%s166 + $0xa28] sm:$0xff]
                %499 = vst [vmem:[%s167 + $0x528] sm:$0xff] %v498
                %v500 = vld [vmem:[%s166 + $0xa30] sm:$0xff]
                %501 = vst [vmem:[%s167 + $0x530] sm:$0xff] %v500
                %v502 = vld [vmem:[%s166 + $0xa38] sm:$0xff]
                %503 = vst [vmem:[%s167 + $0x538] sm:$0xff] %v502
                %v504 = vld [vmem:[%s166 + $0xa80] sm:$0xff]
                %505 = vst [vmem:[%s167 + $0x540] sm:$0xff] %v504
                %v506 = vld [vmem:[%s166 + $0xa88] sm:$0xff]
                %507 = vst [vmem:[%s167 + $0x548] sm:$0xff] %v506
                %v508 = vld [vmem:[%s166 + $0xa90] sm:$0xff]
                %509 = vst [vmem:[%s167 + $0x550] sm:$0xff] %v508
                %v510 = vld [vmem:[%s166 + $0xa98] sm:$0xff]
                %511 = vst [vmem:[%s167 + $0x558] sm:$0xff] %v510
                %v512 = vld [vmem:[%s166 + $0xaa0] sm:$0xff]
                %513 = vst [vmem:[%s167 + $0x560] sm:$0xff] %v512
                %v514 = vld [vmem:[%s166 + $0xaa8] sm:$0xff]
                %515 = vst [vmem:[%s167 + $0x568] sm:$0xff] %v514
                %v516 = vld [vmem:[%s166 + $0xab0] sm:$0xff]
                %517 = vst [vmem:[%s167 + $0x570] sm:$0xff] %v516
                %v518 = vld [vmem:[%s166 + $0xab8] sm:$0xff]
                %519 = vst [vmem:[%s167 + $0x578] sm:$0xff] %v518
                %v520 = vld [vmem:[%s166 + $0xb00] sm:$0xff]
                %521 = vst [vmem:[%s167 + $0x580] sm:$0xff] %v520
                %v522 = vld [vmem:[%s166 + $0xb08] sm:$0xff]
                %523 = vst [vmem:[%s167 + $0x588] sm:$0xff] %v522
                %v524 = vld [vmem:[%s166 + $0xb10] sm:$0xff]
                %525 = vst [vmem:[%s167 + $0x590] sm:$0xff] %v524
                %v526 = vld [vmem:[%s166 + $0xb18] sm:$0xff]
                %527 = vst [vmem:[%s167 + $0x598] sm:$0xff] %v526
                %v528 = vld [vmem:[%s166 + $0xb20] sm:$0xff]
                %529 = vst [vmem:[%s167 + $0x5a0] sm:$0xff] %v528
                %v530 = vld [vmem:[%s166 + $0xb28] sm:$0xff]
                %531 = vst [vmem:[%s167 + $0x5a8] sm:$0xff] %v530
                %v532 = vld [vmem:[%s166 + $0xb30] sm:$0xff]
                %533 = vst [vmem:[%s167 + $0x5b0] sm:$0xff] %v532
                %v534 = vld [vmem:[%s166 + $0xb38] sm:$0xff]
                %535 = vst [vmem:[%s167 + $0x5b8] sm:$0xff] %v534
                %v536 = vld [vmem:[%s166 + $0xb80] sm:$0xff]
                %537 = vst [vmem:[%s167 + $0x5c0] sm:$0xff] %v536
                %v538 = vld [vmem:[%s166 + $0xb88] sm:$0xff]
                %539 = vst [vmem:[%s167 + $0x5c8] sm:$0xff] %v538
                %v540 = vld [vmem:[%s166 + $0xb90] sm:$0xff]
                %541 = vst [vmem:[%s167 + $0x5d0] sm:$0xff] %v540
                %v542 = vld [vmem:[%s166 + $0xb98] sm:$0xff]
                %543 = vst [vmem:[%s167 + $0x5d8] sm:$0xff] %v542
                %v544 = vld [vmem:[%s166 + $0xba0] sm:$0xff]
                %545 = vst [vmem:[%s167 + $0x5e0] sm:$0xff] %v544
                %v546 = vld [vmem:[%s166 + $0xba8] sm:$0xff]
                %547 = vst [vmem:[%s167 + $0x5e8] sm:$0xff] %v546
                %v548 = vld [vmem:[%s166 + $0xbb0] sm:$0xff]
                %549 = vst [vmem:[%s167 + $0x5f0] sm:$0xff] %v548
                %v550 = vld [vmem:[%s166 + $0xbb8] sm:$0xff]
                %551 = vst [vmem:[%s167 + $0x5f8] sm:$0xff] %v550
                %v552 = vld [vmem:[%s166 + $0xc00] sm:$0xff]
                %553 = vst [vmem:[%s167 + $0x600] sm:$0xff] %v552
                %v554 = vld [vmem:[%s166 + $0xc08] sm:$0xff]
                %555 = vst [vmem:[%s167 + $0x608] sm:$0xff] %v554
                %v556 = vld [vmem:[%s166 + $0xc10] sm:$0xff]
                %557 = vst [vmem:[%s167 + $0x610] sm:$0xff] %v556
                %v558 = vld [vmem:[%s166 + $0xc18] sm:$0xff]
                %559 = vst [vmem:[%s167 + $0x618] sm:$0xff] %v558
                %v560 = vld [vmem:[%s166 + $0xc20] sm:$0xff]
                %561 = vst [vmem:[%s167 + $0x620] sm:$0xff] %v560
                %v562 = vld [vmem:[%s166 + $0xc28] sm:$0xff]
                %563 = vst [vmem:[%s167 + $0x628] sm:$0xff] %v562
                %v564 = vld [vmem:[%s166 + $0xc30] sm:$0xff]
                %565 = vst [vmem:[%s167 + $0x630] sm:$0xff] %v564
                %v566 = vld [vmem:[%s166 + $0xc38] sm:$0xff]
                %567 = vst [vmem:[%s167 + $0x638] sm:$0xff] %v566
                %v568 = vld [vmem:[%s166 + $0xc80] sm:$0xff]
                %569 = vst [vmem:[%s167 + $0x640] sm:$0xff] %v568
                %v570 = vld [vmem:[%s166 + $0xc88] sm:$0xff]
                %571 = vst [vmem:[%s167 + $0x648] sm:$0xff] %v570
                %v572 = vld [vmem:[%s166 + $0xc90] sm:$0xff]
                %573 = vst [vmem:[%s167 + $0x650] sm:$0xff] %v572
                %v574 = vld [vmem:[%s166 + $0xc98] sm:$0xff]
                %575 = vst [vmem:[%s167 + $0x658] sm:$0xff] %v574
                %v576 = vld [vmem:[%s166 + $0xca0] sm:$0xff]
                %577 = vst [vmem:[%s167 + $0x660] sm:$0xff] %v576
                %v578 = vld [vmem:[%s166 + $0xca8] sm:$0xff]
                %579 = vst [vmem:[%s167 + $0x668] sm:$0xff] %v578
                %v580 = vld [vmem:[%s166 + $0xcb0] sm:$0xff]
                %581 = vst [vmem:[%s167 + $0x670] sm:$0xff] %v580
                %v582 = vld [vmem:[%s166 + $0xcb8] sm:$0xff]
                %583 = vst [vmem:[%s167 + $0x678] sm:$0xff] %v582
                %v584 = vld [vmem:[%s166 + $0xd00] sm:$0xff]
                %585 = vst [vmem:[%s167 + $0x680] sm:$0xff] %v584
                %v586 = vld [vmem:[%s166 + $0xd08] sm:$0xff]
                %587 = vst [vmem:[%s167 + $0x688] sm:$0xff] %v586
                %v588 = vld [vmem:[%s166 + $0xd10] sm:$0xff]
                %589 = vst [vmem:[%s167 + $0x690] sm:$0xff] %v588
                %v590 = vld [vmem:[%s166 + $0xd18] sm:$0xff]
                %591 = vst [vmem:[%s167 + $0x698] sm:$0xff] %v590
                %v592 = vld [vmem:[%s166 + $0xd20] sm:$0xff]
                %593 = vst [vmem:[%s167 + $0x6a0] sm:$0xff] %v592
                %v594 = vld [vmem:[%s166 + $0xd28] sm:$0xff]
                %595 = vst [vmem:[%s167 + $0x6a8] sm:$0xff] %v594
                %v596 = vld [vmem:[%s166 + $0xd30] sm:$0xff]
                %597 = vst [vmem:[%s167 + $0x6b0] sm:$0xff] %v596
                %v598 = vld [vmem:[%s166 + $0xd38] sm:$0xff]
                %599 = vst [vmem:[%s167 + $0x6b8] sm:$0xff] %v598
              $region41: #{decoder_forward.21} parent=35 // loop_footer
                %s165 = sadd.s32 1, %s161
              $region42: #{decoder_forward.21} parent=35 // loop_footer_branch
                %160 = sbr.rel target = $region38
              $region43: #{decoder_forward.21} parent=35 // loop_exit
                _
            $region36: #{decoder_forward.21} parent=31 // pred_fallthru
              _
            // Predicated region
            $region44: #{decoder_forward.21} parent=31 // pred_check
              _
            $region45: #{decoder_forward.21} parent=31 // pred_check_branch
              %601 = sbr.rel target = $region47
            $region46: #{decoder_forward.21} parent=31 // pred_region
              _
            $region47: #{decoder_forward.21} parent=31 // pred_fallthru
              _
          $region32: #{decoder_forward.21} parent=27 // pred_fallthru
            _
          %602 = vnop
        $region28: #{decoder_forward.21} parent=23 // pred_fallthru
          _
      $region24: #{decoder_forward.21} parent=5 // pred_fallthru
        _
      %p603 = scmp.le.s32.totalorder 1, %s9
      %p604 = scmp.lt.s32.totalorder %s9, 5
      %p605 = pnand %p603, %p604
      %p606 = pneg %p605
      // Predicated region
      $region48: #{decoder_forward.21} parent=5 // pred_check
        _
      $region49: #{decoder_forward.21} parent=5 // pred_check_branch
        %608 = sbr.rel (%p605) target = $region51
      $region50: #{decoder_forward.21} parent=5 // pred_region
        %s609 = ssub.s32 %s9, 1
        %s610 = sand.u32 %s36, 1
        %s611 = sand.u32 %s36, 1
        %s612 = smul.addr %s611, 1728
        %s613 = scalar_lea.vmem [#allocation2], %s612
        // Predicated region
        $region52: #{decoder_forward.21} parent=50 // pred_check
          %p614 = pneg %p49
        $region53: #{decoder_forward.21} parent=50 // pred_check_branch
          %616 = sbr.rel (%p614) target = $region55
        $region54: #{decoder_forward.21} parent=50 // pred_region
          _
        $region55: #{decoder_forward.21} parent=50 // pred_fallthru
          _
        %s617 = sand.u32 %s36, 1
        %s618 = sand.u32 %s36, 1
        %s619 = smul.addr %s618, 1728
        %s620 = scalar_lea.vmem [#allocation2], %s619
        %p621 = pneg %p49
        %p622 = pneg %p46
        %p623 = pneg %p70
        %p624 = pneg %p67
        %p625 = pneg %p91
        %p626 = pneg %p88
        %p627 = pneg %p119
        %p628 = pneg %p116
        %s629 = smul.u32 16, %s19
        %p630 = scmp.lt.s32.totalorder %s18, 1
        %s631 = scalar_select %p630, %s18, 1
        %p632 = scmp.lt.s32.totalorder %s629, 31
        %s633 = scalar_select %p632, %s629, 31
        %s634 = smul.addr %s631, 32
        %s635 = sadd.s32 %s633, %s634
        %s636 = smul.addr %s635, 8
        %s637 = scalar_lea.vmem %s3, %s636
        %s638 = smul.u32 16, %s19
        %s639 = smul.u32 16, %s19
        %p640 = scmp.lt.s32.totalorder %s18, 1
        %s641 = scalar_select %p640, %s18, 1
        %p642 = scmp.lt.s32.totalorder %s639, 31
        %s643 = scalar_select %p642, %s639, 31
        %s644 = smul.addr %s641, 32
        %s645 = sadd.s32 %s643, %s644
        %s646 = smul.addr %s645, 8
        %s647 = scalar_lea.vmem %s3, %s646
        %s648 = smul.u32 16, %s19
        %v650 = vld [vmem:[%s1] sm:$0xff]
        %v651 = vld [vmem:[%s613] sm:$0xff]
        %v652 = vld [vmem:[%s613 + $0x8] sm:$0xff]
        %v653 = vld [vmem:[%s613 + $0x10] sm:$0xff]
        %v654 = vld [vmem:[%s613 + $0x18] sm:$0xff]
        %v655 = vld [vmem:[%s613 + $0x20] sm:$0xff]
        %v656 = vld [vmem:[%s613 + $0x28] sm:$0xff]
        %v657 = vld [vmem:[%s613 + $0x30] sm:$0xff]
        %v658 = vld [vmem:[%s613 + $0x38] sm:$0xff]
        %v659 = vld [vmem:[%s613 + $0x40] sm:$0xff]
        %v660 = vld [vmem:[%s613 + $0x48] sm:$0xff]
        %v661 = vld [vmem:[%s613 + $0x50] sm:$0xff]
        %v662 = vld [vmem:[%s613 + $0x58] sm:$0xff]
        %v663 = vld [vmem:[%s613 + $0x60] sm:$0xff]
        %v664 = vld [vmem:[%s613 + $0x68] sm:$0xff]
        %v665 = vld [vmem:[%s613 + $0x70] sm:$0xff]
        %v666 = vld [vmem:[%s613 + $0x78] sm:$0xff]
        %v667 = vld [vmem:[%s613 + $0x80] sm:$0xff]
        %v668 = vld [vmem:[%s613 + $0x88] sm:$0xff]
        %v669 = vld [vmem:[%s613 + $0x90] sm:$0xff]
        %v670 = vld [vmem:[%s613 + $0x98] sm:$0xff]
        %v671 = vld [vmem:[%s613 + $0xa0] sm:$0xff]
        %v672 = vld [vmem:[%s613 + $0xa8] sm:$0xff]
        %v673 = vld [vmem:[%s613 + $0xb0] sm:$0xff]
        %v674 = vld [vmem:[%s613 + $0xb8] sm:$0xff]
        %v675 = vld [vmem:[%s613 + $0xc0] sm:$0xff]
        %v676 = vld [vmem:[%s613 + $0xc8] sm:$0xff]
        %v677 = vld [vmem:[%s613 + $0xd0] sm:$0xff]
        %v678 = vld [vmem:[%s613 + $0xd8] sm:$0xff]
        %v679 = vld [vmem:[%s613 + $0xe0] sm:$0xff]
        %v680 = vld [vmem:[%s613 + $0xe8] sm:$0xff]
        %v681 = vld [vmem:[%s613 + $0xf0] sm:$0xff]
        %v682 = vld [vmem:[%s613 + $0xf8] sm:$0xff]
        %v683 = vld [vmem:[%s613 + $0x100] sm:$0xff]
        %v684 = vld [vmem:[%s613 + $0x108] sm:$0xff]
        %v685 = vld [vmem:[%s613 + $0x110] sm:$0xff]
        %v686 = vld [vmem:[%s613 + $0x118] sm:$0xff]
        %v687 = vld [vmem:[%s613 + $0x120] sm:$0xff]
        %v688 = vld [vmem:[%s613 + $0x128] sm:$0xff]
        %v689 = vld [vmem:[%s613 + $0x130] sm:$0xff]
        %v690 = vld [vmem:[%s613 + $0x138] sm:$0xff]
        %v691 = vld [vmem:[%s613 + $0x140] sm:$0xff]
        %v692 = vld [vmem:[%s613 + $0x148] sm:$0xff]
        %v693 = vld [vmem:[%s613 + $0x150] sm:$0xff]
        %v694 = vld [vmem:[%s613 + $0x158] sm:$0xff]
        %v695 = vld [vmem:[%s613 + $0x160] sm:$0xff]
        %v696 = vld [vmem:[%s613 + $0x168] sm:$0xff]
        %v697 = vld [vmem:[%s613 + $0x170] sm:$0xff]
        %v698 = vld [vmem:[%s613 + $0x178] sm:$0xff]
        %v699 = vld [vmem:[%s613 + $0x180] sm:$0xff]
        %v700 = vld [vmem:[%s613 + $0x188] sm:$0xff]
        %v701 = vld [vmem:[%s613 + $0x190] sm:$0xff]
        %v702 = vld [vmem:[%s613 + $0x198] sm:$0xff]
        %v703 = vld [vmem:[%s613 + $0x1a0] sm:$0xff]
        %v704 = vld [vmem:[%s613 + $0x1a8] sm:$0xff]
        %v705 = vld [vmem:[%s613 + $0x1b0] sm:$0xff]
        %v706 = vld [vmem:[%s613 + $0x1b8] sm:$0xff]
        %v707 = vld [vmem:[%s613 + $0x1c0] sm:$0xff]
        %v708 = vld [vmem:[%s613 + $0x1c8] sm:$0xff]
        %v709 = vld [vmem:[%s613 + $0x1d0] sm:$0xff]
        %v710 = vld [vmem:[%s613 + $0x1d8] sm:$0xff]
        %v711 = vld [vmem:[%s613 + $0x1e0] sm:$0xff]
        %v712 = vld [vmem:[%s613 + $0x1e8] sm:$0xff]
        %v713 = vld [vmem:[%s613 + $0x1f0] sm:$0xff]
        %v714 = vld [vmem:[%s613 + $0x1f8] sm:$0xff]
        %v715 = vld [vmem:[%s613 + $0x200] sm:$0xff]
        %v716 = vld [vmem:[%s613 + $0x208] sm:$0xff]
        %v717 = vld [vmem:[%s613 + $0x210] sm:$0xff]
        %v718 = vld [vmem:[%s613 + $0x218] sm:$0xff]
        %v719 = vld [vmem:[%s613 + $0x220] sm:$0xff]
        %v720 = vld [vmem:[%s613 + $0x228] sm:$0xff]
        %v721 = vld [vmem:[%s613 + $0x230] sm:$0xff]
        %v722 = vld [vmem:[%s613 + $0x238] sm:$0xff]
        %v723 = vld [vmem:[%s613 + $0x240] sm:$0xff]
        %v724 = vld [vmem:[%s613 + $0x248] sm:$0xff]
        %v725 = vld [vmem:[%s613 + $0x250] sm:$0xff]
        %v726 = vld [vmem:[%s613 + $0x258] sm:$0xff]
        %v727 = vld [vmem:[%s613 + $0x260] sm:$0xff]
        %v728 = vld [vmem:[%s613 + $0x268] sm:$0xff]
        %v729 = vld [vmem:[%s613 + $0x270] sm:$0xff]
        %v730 = vld [vmem:[%s613 + $0x278] sm:$0xff]
        %v731 = vld [vmem:[%s613 + $0x280] sm:$0xff]
        %v732 = vld [vmem:[%s613 + $0x288] sm:$0xff]
        %v733 = vld [vmem:[%s613 + $0x290] sm:$0xff]
        %v734 = vld [vmem:[%s613 + $0x298] sm:$0xff]
        %v735 = vld [vmem:[%s613 + $0x2a0] sm:$0xff]
        %v736 = vld [vmem:[%s613 + $0x2a8] sm:$0xff]
        %v737 = vld [vmem:[%s613 + $0x2b0] sm:$0xff]
        %v738 = vld [vmem:[%s613 + $0x2b8] sm:$0xff]
        %v739 = vld [vmem:[%s613 + $0x2c0] sm:$0xff]
        %v740 = vld [vmem:[%s613 + $0x2c8] sm:$0xff]
        %v741 = vld [vmem:[%s613 + $0x2d0] sm:$0xff]
        %v742 = vld [vmem:[%s613 + $0x2d8] sm:$0xff]
        %v743 = vld [vmem:[%s613 + $0x2e0] sm:$0xff]
        %v744 = vld [vmem:[%s613 + $0x2e8] sm:$0xff]
        %v745 = vld [vmem:[%s613 + $0x2f0] sm:$0xff]
        %v746 = vld [vmem:[%s613 + $0x2f8] sm:$0xff]
        %v747 = vld [vmem:[%s613 + $0x300] sm:$0xff]
        %v748 = vld [vmem:[%s613 + $0x308] sm:$0xff]
        %v749 = vld [vmem:[%s613 + $0x310] sm:$0xff]
        %v750 = vld [vmem:[%s613 + $0x318] sm:$0xff]
        %v751 = vld [vmem:[%s613 + $0x320] sm:$0xff]
        %v752 = vld [vmem:[%s613 + $0x328] sm:$0xff]
        %v753 = vld [vmem:[%s613 + $0x330] sm:$0xff]
        %v754 = vld [vmem:[%s613 + $0x338] sm:$0xff]
        %v755 = vld [vmem:[%s613 + $0x340] sm:$0xff]
        %v756 = vld [vmem:[%s613 + $0x348] sm:$0xff]
        %v757 = vld [vmem:[%s613 + $0x350] sm:$0xff]
        %v758 = vld [vmem:[%s613 + $0x358] sm:$0xff]
        %v759 = vld [vmem:[%s613 + $0x360] sm:$0xff]
        %v760 = vld [vmem:[%s613 + $0x368] sm:$0xff]
        %v761 = vld [vmem:[%s613 + $0x370] sm:$0xff]
        %v762 = vld [vmem:[%s613 + $0x378] sm:$0xff]
        %v763 = vld [vmem:[%s613 + $0x380] sm:$0xff]
        %v764 = vld [vmem:[%s613 + $0x388] sm:$0xff]
        %v765 = vld [vmem:[%s613 + $0x390] sm:$0xff]
        %v766 = vld [vmem:[%s613 + $0x398] sm:$0xff]
        %v767 = vld [vmem:[%s613 + $0x3a0] sm:$0xff]
        %v768 = vld [vmem:[%s613 + $0x3a8] sm:$0xff]
        %v769 = vld [vmem:[%s613 + $0x3b0] sm:$0xff]
        %v770 = vld [vmem:[%s613 + $0x3b8] sm:$0xff]
        %v771 = vld [vmem:[%s613 + $0x3c0] sm:$0xff]
        %v772 = vld [vmem:[%s613 + $0x3c8] sm:$0xff]
        %v773 = vld [vmem:[%s613 + $0x3d0] sm:$0xff]
        %v774 = vld [vmem:[%s613 + $0x3d8] sm:$0xff]
        %v775 = vld [vmem:[%s613 + $0x3e0] sm:$0xff]
        %v776 = vld [vmem:[%s613 + $0x3e8] sm:$0xff]
        %v777 = vld [vmem:[%s613 + $0x3f0] sm:$0xff]
        %v778 = vld [vmem:[%s613 + $0x3f8] sm:$0xff]
        %v779 = vld [vmem:[%s613 + $0x400] sm:$0xff]
        %v780 = vld [vmem:[%s613 + $0x408] sm:$0xff]
        %v781 = vld [vmem:[%s613 + $0x410] sm:$0xff]
        %v782 = vld [vmem:[%s613 + $0x418] sm:$0xff]
        %v783 = vld [vmem:[%s613 + $0x420] sm:$0xff]
        %v784 = vld [vmem:[%s613 + $0x428] sm:$0xff]
        %v785 = vld [vmem:[%s613 + $0x430] sm:$0xff]
        %v786 = vld [vmem:[%s613 + $0x438] sm:$0xff]
        %v787 = vld [vmem:[%s613 + $0x440] sm:$0xff]
        %v788 = vld [vmem:[%s613 + $0x448] sm:$0xff]
        %v789 = vld [vmem:[%s613 + $0x450] sm:$0xff]
        %v790 = vld [vmem:[%s613 + $0x458] sm:$0xff]
        %v791 = vld [vmem:[%s613 + $0x460] sm:$0xff]
        %v792 = vld [vmem:[%s613 + $0x468] sm:$0xff]
        %v793 = vld [vmem:[%s613 + $0x470] sm:$0xff]
        %v794 = vld [vmem:[%s613 + $0x478] sm:$0xff]
        %v795 = vld [vmem:[%s613 + $0x480] sm:$0xff]
        %v796 = vld [vmem:[%s613 + $0x488] sm:$0xff]
        %v797 = vld [vmem:[%s613 + $0x490] sm:$0xff]
        %v798 = vld [vmem:[%s613 + $0x498] sm:$0xff]
        %v799 = vld [vmem:[%s613 + $0x4a0] sm:$0xff]
        %v800 = vld [vmem:[%s613 + $0x4a8] sm:$0xff]
        %v801 = vld [vmem:[%s613 + $0x4b0] sm:$0xff]
        %v802 = vld [vmem:[%s613 + $0x4b8] sm:$0xff]
        %v803 = vld [vmem:[%s613 + $0x4c0] sm:$0xff]
        %v804 = vld [vmem:[%s613 + $0x4c8] sm:$0xff]
        %v805 = vld [vmem:[%s613 + $0x4d0] sm:$0xff]
        %v806 = vld [vmem:[%s613 + $0x4d8] sm:$0xff]
        %v807 = vld [vmem:[%s613 + $0x4e0] sm:$0xff]
        %v808 = vld [vmem:[%s613 + $0x4e8] sm:$0xff]
        %v809 = vld [vmem:[%s613 + $0x4f0] sm:$0xff]
        %v810 = vld [vmem:[%s613 + $0x4f8] sm:$0xff]
        %v811 = vld [vmem:[%s613 + $0x500] sm:$0xff]
        %v812 = vld [vmem:[%s613 + $0x508] sm:$0xff]
        %v813 = vld [vmem:[%s613 + $0x510] sm:$0xff]
        %v814 = vld [vmem:[%s613 + $0x518] sm:$0xff]
        %v815 = vld [vmem:[%s613 + $0x520] sm:$0xff]
        %v816 = vld [vmem:[%s613 + $0x528] sm:$0xff]
        %v817 = vld [vmem:[%s613 + $0x530] sm:$0xff]
        %v818 = vld [vmem:[%s613 + $0x538] sm:$0xff]
        %v819 = vld [vmem:[%s613 + $0x540] sm:$0xff]
        %v820 = vld [vmem:[%s613 + $0x548] sm:$0xff]
        %v821 = vld [vmem:[%s613 + $0x550] sm:$0xff]
        %v822 = vld [vmem:[%s613 + $0x558] sm:$0xff]
        %v823 = vld [vmem:[%s613 + $0x560] sm:$0xff]
        %v824 = vld [vmem:[%s613 + $0x568] sm:$0xff]
        %v825 = vld [vmem:[%s613 + $0x570] sm:$0xff]
        %v826 = vld [vmem:[%s613 + $0x578] sm:$0xff]
        %v827 = vld [vmem:[%s613 + $0x580] sm:$0xff]
        %v828 = vld [vmem:[%s613 + $0x588] sm:$0xff]
        %v829 = vld [vmem:[%s613 + $0x590] sm:$0xff]
        %v830 = vld [vmem:[%s613 + $0x598] sm:$0xff]
        %v831 = vld [vmem:[%s613 + $0x5a0] sm:$0xff]
        %v832 = vld [vmem:[%s613 + $0x5a8] sm:$0xff]
        %v833 = vld [vmem:[%s613 + $0x5b0] sm:$0xff]
        %v834 = vld [vmem:[%s613 + $0x5b8] sm:$0xff]
        %v835 = vld [vmem:[%s613 + $0x5c0] sm:$0xff]
        %v836 = vld [vmem:[%s613 + $0x5c8] sm:$0xff]
        %v837 = vld [vmem:[%s613 + $0x5d0] sm:$0xff]
        %v838 = vld [vmem:[%s613 + $0x5d8] sm:$0xff]
        %v839 = vld [vmem:[%s613 + $0x5e0] sm:$0xff]
        %v840 = vld [vmem:[%s613 + $0x5e8] sm:$0xff]
        %v841 = vld [vmem:[%s613 + $0x5f0] sm:$0xff]
        %v842 = vld [vmem:[%s613 + $0x5f8] sm:$0xff]
        %v843 = vld [vmem:[%s613 + $0x600] sm:$0xff]
        %v844 = vld [vmem:[%s613 + $0x608] sm:$0xff]
        %v845 = vld [vmem:[%s613 + $0x610] sm:$0xff]
        %v846 = vld [vmem:[%s613 + $0x618] sm:$0xff]
        %v847 = vld [vmem:[%s613 + $0x620] sm:$0xff]
        %v848 = vld [vmem:[%s613 + $0x628] sm:$0xff]
        %v849 = vld [vmem:[%s613 + $0x630] sm:$0xff]
        %v850 = vld [vmem:[%s613 + $0x638] sm:$0xff]
        %v851 = vld [vmem:[%s613 + $0x640] sm:$0xff]
        %v852 = vld [vmem:[%s613 + $0x648] sm:$0xff]
        %v853 = vld [vmem:[%s613 + $0x650] sm:$0xff]
        %v854 = vld [vmem:[%s613 + $0x658] sm:$0xff]
        %v855 = vld [vmem:[%s613 + $0x660] sm:$0xff]
        %v856 = vld [vmem:[%s613 + $0x668] sm:$0xff]
        %v857 = vld [vmem:[%s613 + $0x670] sm:$0xff]
        %v858 = vld [vmem:[%s613 + $0x678] sm:$0xff]
        %v859 = vld [vmem:[%s613 + $0x680] sm:$0xff]
        %v860 = vld [vmem:[%s613 + $0x688] sm:$0xff]
        %v861 = vld [vmem:[%s613 + $0x690] sm:$0xff]
        %v862 = vld [vmem:[%s613 + $0x698] sm:$0xff]
        %v863 = vld [vmem:[%s613 + $0x6a0] sm:$0xff]
        %v864 = vld [vmem:[%s613 + $0x6a8] sm:$0xff]
        %v865 = vld [vmem:[%s613 + $0x6b0] sm:$0xff]
        %v866 = vld [vmem:[%s613 + $0x6b8] sm:$0xff]
        %v867 = vld [vmem:[%s2] sm:$0xff]
        %869 = vset.pattern.permute.xlu0 0
        %870 = vperm.xlu0 %869, %v867
        %v871 = vpop.permute.xlu0 %870
        %v874 = vunpack.c.l.b16 %v650
        %v875 = vunpack.c.h.b16 %v650
        %v876 = vpack.c.b16 %v874, %v874
        %v877 = vpack.c.b16 %v875, %v875
        %v1095 = vunpack.c.l.b16 %v651
        %v1096 = vunpack.c.h.b16 %v651
        %v1097 = vunpack.c.l.b16 %v652
        %v1098 = vunpack.c.h.b16 %v652
        %v1099 = vunpack.c.l.b16 %v653
        %v1100 = vunpack.c.h.b16 %v653
        %v1101 = vunpack.c.l.b16 %v654
        %v1102 = vunpack.c.h.b16 %v654
        %v1103 = vunpack.c.l.b16 %v655
        %v1104 = vunpack.c.h.b16 %v655
        %v1105 = vunpack.c.l.b16 %v656
        %v1106 = vunpack.c.h.b16 %v656
        %v1107 = vunpack.c.l.b16 %v657
        %v1108 = vunpack.c.h.b16 %v657
        %v1109 = vunpack.c.l.b16 %v658
        %v1110 = vunpack.c.h.b16 %v658
        %v1111 = vunpack.c.l.b16 %v659
        %v1112 = vunpack.c.h.b16 %v659
        %v1113 = vunpack.c.l.b16 %v660
        %v1114 = vunpack.c.h.b16 %v660
        %v1115 = vunpack.c.l.b16 %v661
        %v1116 = vunpack.c.h.b16 %v661
        %v1117 = vunpack.c.l.b16 %v662
        %v1118 = vunpack.c.h.b16 %v662
        %v1119 = vunpack.c.l.b16 %v663
        %v1120 = vunpack.c.h.b16 %v663
        %v1121 = vunpack.c.l.b16 %v664
        %v1122 = vunpack.c.h.b16 %v664
        %v1123 = vunpack.c.l.b16 %v665
        %v1124 = vunpack.c.h.b16 %v665
        %v1125 = vunpack.c.l.b16 %v666
        %v1126 = vunpack.c.h.b16 %v666
        %v1127 = vunpack.c.l.b16 %v667
        %v1128 = vunpack.c.h.b16 %v667
        %v1129 = vunpack.c.l.b16 %v668
        %v1130 = vunpack.c.h.b16 %v668
        %v1131 = vunpack.c.l.b16 %v669
        %v1132 = vunpack.c.h.b16 %v669
        %v1133 = vunpack.c.l.b16 %v670
        %v1134 = vunpack.c.h.b16 %v670
        %v1135 = vunpack.c.l.b16 %v671
        %v1136 = vunpack.c.h.b16 %v671
        %v1137 = vunpack.c.l.b16 %v672
        %v1138 = vunpack.c.h.b16 %v672
        %v1139 = vunpack.c.l.b16 %v673
        %v1140 = vunpack.c.h.b16 %v673
        %v1141 = vunpack.c.l.b16 %v674
        %v1142 = vunpack.c.h.b16 %v674
        %v1143 = vunpack.c.l.b16 %v675
        %v1144 = vunpack.c.h.b16 %v675
        %v1145 = vunpack.c.l.b16 %v676
        %v1146 = vunpack.c.h.b16 %v676
        %v1147 = vunpack.c.l.b16 %v677
        %v1148 = vunpack.c.h.b16 %v677
        %v1149 = vunpack.c.l.b16 %v678
        %v1150 = vunpack.c.h.b16 %v678
        %v1151 = vunpack.c.l.b16 %v679
        %v1152 = vunpack.c.h.b16 %v679
        %v1153 = vunpack.c.l.b16 %v680
        %v1154 = vunpack.c.h.b16 %v680
        %v1155 = vunpack.c.l.b16 %v681
        %v1156 = vunpack.c.h.b16 %v681
        %v1157 = vunpack.c.l.b16 %v682
        %v1158 = vunpack.c.h.b16 %v682
        %v1159 = vunpack.c.l.b16 %v683
        %v1160 = vunpack.c.h.b16 %v683
        %v1161 = vunpack.c.l.b16 %v684
        %v1162 = vunpack.c.h.b16 %v684
        %v1163 = vunpack.c.l.b16 %v685
        %v1164 = vunpack.c.h.b16 %v685
        %v1165 = vunpack.c.l.b16 %v686
        %v1166 = vunpack.c.h.b16 %v686
        %v1167 = vunpack.c.l.b16 %v687
        %v1168 = vunpack.c.h.b16 %v687
        %v1169 = vunpack.c.l.b16 %v688
        %v1170 = vunpack.c.h.b16 %v688
        %v1171 = vunpack.c.l.b16 %v689
        %v1172 = vunpack.c.h.b16 %v689
        %v1173 = vunpack.c.l.b16 %v690
        %v1174 = vunpack.c.h.b16 %v690
        %v1175 = vunpack.c.l.b16 %v691
        %v1176 = vunpack.c.h.b16 %v691
        %v1177 = vunpack.c.l.b16 %v692
        %v1178 = vunpack.c.h.b16 %v692
        %v1179 = vunpack.c.l.b16 %v693
        %v1180 = vunpack.c.h.b16 %v693
        %v1181 = vunpack.c.l.b16 %v694
        %v1182 = vunpack.c.h.b16 %v694
        %v1183 = vunpack.c.l.b16 %v695
        %v1184 = vunpack.c.h.b16 %v695
        %v1185 = vunpack.c.l.b16 %v696
        %v1186 = vunpack.c.h.b16 %v696
        %v1187 = vunpack.c.l.b16 %v697
        %v1188 = vunpack.c.h.b16 %v697
        %v1189 = vunpack.c.l.b16 %v698
        %v1190 = vunpack.c.h.b16 %v698
        %v1191 = vunpack.c.l.b16 %v699
        %v1192 = vunpack.c.h.b16 %v699
        %v1193 = vunpack.c.l.b16 %v700
        %v1194 = vunpack.c.h.b16 %v700
        %v1195 = vunpack.c.l.b16 %v701
        %v1196 = vunpack.c.h.b16 %v701
        %v1197 = vunpack.c.l.b16 %v702
        %v1198 = vunpack.c.h.b16 %v702
        %v1199 = vunpack.c.l.b16 %v703
        %v1200 = vunpack.c.h.b16 %v703
        %v1201 = vunpack.c.l.b16 %v704
        %v1202 = vunpack.c.h.b16 %v704
        %v1203 = vunpack.c.l.b16 %v705
        %v1204 = vunpack.c.h.b16 %v705
        %v1205 = vunpack.c.l.b16 %v706
        %v1206 = vunpack.c.h.b16 %v706
        %v1207 = vunpack.c.l.b16 %v707
        %v1208 = vunpack.c.h.b16 %v707
        %v1209 = vunpack.c.l.b16 %v708
        %v1210 = vunpack.c.h.b16 %v708
        %v1211 = vunpack.c.l.b16 %v709
        %v1212 = vunpack.c.h.b16 %v709
        %v1213 = vunpack.c.l.b16 %v710
        %v1214 = vunpack.c.h.b16 %v710
        %v1215 = vunpack.c.l.b16 %v711
        %v1216 = vunpack.c.h.b16 %v711
        %v1217 = vunpack.c.l.b16 %v712
        %v1218 = vunpack.c.h.b16 %v712
        %v1219 = vunpack.c.l.b16 %v713
        %v1220 = vunpack.c.h.b16 %v713
        %v1221 = vunpack.c.l.b16 %v714
        %v1222 = vunpack.c.h.b16 %v714
        %v1223 = vunpack.c.l.b16 %v715
        %v1224 = vunpack.c.h.b16 %v715
        %v1225 = vunpack.c.l.b16 %v716
        %v1226 = vunpack.c.h.b16 %v716
        %v1227 = vunpack.c.l.b16 %v717
        %v1228 = vunpack.c.h.b16 %v717
        %v1229 = vunpack.c.l.b16 %v718
        %v1230 = vunpack.c.h.b16 %v718
        %v1231 = vunpack.c.l.b16 %v719
        %v1232 = vunpack.c.h.b16 %v719
        %v1233 = vunpack.c.l.b16 %v720
        %v1234 = vunpack.c.h.b16 %v720
        %v1235 = vunpack.c.l.b16 %v721
        %v1236 = vunpack.c.h.b16 %v721
        %v1237 = vunpack.c.l.b16 %v722
        %v1238 = vunpack.c.h.b16 %v722
        %v1239 = vunpack.c.l.b16 %v723
        %v1240 = vunpack.c.h.b16 %v723
        %v1241 = vunpack.c.l.b16 %v724
        %v1242 = vunpack.c.h.b16 %v724
        %v1243 = vunpack.c.l.b16 %v725
        %v1244 = vunpack.c.h.b16 %v725
        %v1245 = vunpack.c.l.b16 %v726
        %v1246 = vunpack.c.h.b16 %v726
        %v1247 = vunpack.c.l.b16 %v727
        %v1248 = vunpack.c.h.b16 %v727
        %v1249 = vunpack.c.l.b16 %v728
        %v1250 = vunpack.c.h.b16 %v728
        %v1251 = vunpack.c.l.b16 %v729
        %v1252 = vunpack.c.h.b16 %v729
        %v1253 = vunpack.c.l.b16 %v730
        %v1254 = vunpack.c.h.b16 %v730
        %v1255 = vunpack.c.l.b16 %v731
        %v1256 = vunpack.c.h.b16 %v731
        %v1257 = vunpack.c.l.b16 %v732
        %v1258 = vunpack.c.h.b16 %v732
        %v1259 = vunpack.c.l.b16 %v733
        %v1260 = vunpack.c.h.b16 %v733
        %v1261 = vunpack.c.l.b16 %v734
        %v1262 = vunpack.c.h.b16 %v734
        %v1263 = vunpack.c.l.b16 %v735
        %v1264 = vunpack.c.h.b16 %v735
        %v1265 = vunpack.c.l.b16 %v736
        %v1266 = vunpack.c.h.b16 %v736
        %v1267 = vunpack.c.l.b16 %v737
        %v1268 = vunpack.c.h.b16 %v737
        %v1269 = vunpack.c.l.b16 %v738
        %v1270 = vunpack.c.h.b16 %v738
        %v1271 = vunpack.c.l.b16 %v739
        %v1272 = vunpack.c.h.b16 %v739
        %v1273 = vunpack.c.l.b16 %v740
        %v1274 = vunpack.c.h.b16 %v740
        %v1275 = vunpack.c.l.b16 %v741
        %v1276 = vunpack.c.h.b16 %v741
        %v1277 = vunpack.c.l.b16 %v742
        %v1278 = vunpack.c.h.b16 %v742
        %v1279 = vunpack.c.l.b16 %v743
        %v1280 = vunpack.c.h.b16 %v743
        %v1281 = vunpack.c.l.b16 %v744
        %v1282 = vunpack.c.h.b16 %v744
        %v1283 = vunpack.c.l.b16 %v745
        %v1284 = vunpack.c.h.b16 %v745
        %v1285 = vunpack.c.l.b16 %v746
        %v1286 = vunpack.c.h.b16 %v746
        %v1287 = vunpack.c.l.b16 %v747
        %v1288 = vunpack.c.h.b16 %v747
        %v1289 = vunpack.c.l.b16 %v748
        %v1290 = vunpack.c.h.b16 %v748
        %v1291 = vunpack.c.l.b16 %v749
        %v1292 = vunpack.c.h.b16 %v749
        %v1293 = vunpack.c.l.b16 %v750
        %v1294 = vunpack.c.h.b16 %v750
        %v1295 = vunpack.c.l.b16 %v751
        %v1296 = vunpack.c.h.b16 %v751
        %v1297 = vunpack.c.l.b16 %v752
        %v1298 = vunpack.c.h.b16 %v752
        %v1299 = vunpack.c.l.b16 %v753
        %v1300 = vunpack.c.h.b16 %v753
        %v1301 = vunpack.c.l.b16 %v754
        %v1302 = vunpack.c.h.b16 %v754
        %v1303 = vunpack.c.l.b16 %v755
        %v1304 = vunpack.c.h.b16 %v755
        %v1305 = vunpack.c.l.b16 %v756
        %v1306 = vunpack.c.h.b16 %v756
        %v1307 = vunpack.c.l.b16 %v757
        %v1308 = vunpack.c.h.b16 %v757
        %v1309 = vunpack.c.l.b16 %v758
        %v1310 = vunpack.c.h.b16 %v758
        %v1311 = vunpack.c.l.b16 %v759
        %v1312 = vunpack.c.h.b16 %v759
        %v1313 = vunpack.c.l.b16 %v760
        %v1314 = vunpack.c.h.b16 %v760
        %v1315 = vunpack.c.l.b16 %v761
        %v1316 = vunpack.c.h.b16 %v761
        %v1317 = vunpack.c.l.b16 %v762
        %v1318 = vunpack.c.h.b16 %v762
        %v1319 = vunpack.c.l.b16 %v763
        %v1320 = vunpack.c.h.b16 %v763
        %v1321 = vunpack.c.l.b16 %v764
        %v1322 = vunpack.c.h.b16 %v764
        %v1323 = vunpack.c.l.b16 %v765
        %v1324 = vunpack.c.h.b16 %v765
        %v1325 = vunpack.c.l.b16 %v766
        %v1326 = vunpack.c.h.b16 %v766
        %v1327 = vunpack.c.l.b16 %v767
        %v1328 = vunpack.c.h.b16 %v767
        %v1329 = vunpack.c.l.b16 %v768
        %v1330 = vunpack.c.h.b16 %v768
        %v1331 = vunpack.c.l.b16 %v769
        %v1332 = vunpack.c.h.b16 %v769
        %v1333 = vunpack.c.l.b16 %v770
        %v1334 = vunpack.c.h.b16 %v770
        %v1335 = vunpack.c.l.b16 %v771
        %v1336 = vunpack.c.h.b16 %v771
        %v1337 = vunpack.c.l.b16 %v772
        %v1338 = vunpack.c.h.b16 %v772
        %v1339 = vunpack.c.l.b16 %v773
        %v1340 = vunpack.c.h.b16 %v773
        %v1341 = vunpack.c.l.b16 %v774
        %v1342 = vunpack.c.h.b16 %v774
        %v1343 = vunpack.c.l.b16 %v775
        %v1344 = vunpack.c.h.b16 %v775
        %v1345 = vunpack.c.l.b16 %v776
        %v1346 = vunpack.c.h.b16 %v776
        %v1347 = vunpack.c.l.b16 %v777
        %v1348 = vunpack.c.h.b16 %v777
        %v1349 = vunpack.c.l.b16 %v778
        %v1350 = vunpack.c.h.b16 %v778
        %v1351 = vunpack.c.l.b16 %v779
        %v1352 = vunpack.c.h.b16 %v779
        %v1353 = vunpack.c.l.b16 %v780
        %v1354 = vunpack.c.h.b16 %v780
        %v1355 = vunpack.c.l.b16 %v781
        %v1356 = vunpack.c.h.b16 %v781
        %v1357 = vunpack.c.l.b16 %v782
        %v1358 = vunpack.c.h.b16 %v782
        %v1359 = vunpack.c.l.b16 %v783
        %v1360 = vunpack.c.h.b16 %v783
        %v1361 = vunpack.c.l.b16 %v784
        %v1362 = vunpack.c.h.b16 %v784
        %v1363 = vunpack.c.l.b16 %v785
        %v1364 = vunpack.c.h.b16 %v785
        %v1365 = vunpack.c.l.b16 %v786
        %v1366 = vunpack.c.h.b16 %v786
        %v1367 = vunpack.c.l.b16 %v787
        %v1368 = vunpack.c.h.b16 %v787
        %v1369 = vunpack.c.l.b16 %v788
        %v1370 = vunpack.c.h.b16 %v788
        %v1371 = vunpack.c.l.b16 %v789
        %v1372 = vunpack.c.h.b16 %v789
        %v1373 = vunpack.c.l.b16 %v790
        %v1374 = vunpack.c.h.b16 %v790
        %v1375 = vunpack.c.l.b16 %v791
        %v1376 = vunpack.c.h.b16 %v791
        %v1377 = vunpack.c.l.b16 %v792
        %v1378 = vunpack.c.h.b16 %v792
        %v1379 = vunpack.c.l.b16 %v793
        %v1380 = vunpack.c.h.b16 %v793
        %v1381 = vunpack.c.l.b16 %v794
        %v1382 = vunpack.c.h.b16 %v794
        %v1383 = vunpack.c.l.b16 %v795
        %v1384 = vunpack.c.h.b16 %v795
        %v1385 = vunpack.c.l.b16 %v796
        %v1386 = vunpack.c.h.b16 %v796
        %v1387 = vunpack.c.l.b16 %v797
        %v1388 = vunpack.c.h.b16 %v797
        %v1389 = vunpack.c.l.b16 %v798
        %v1390 = vunpack.c.h.b16 %v798
        %v1391 = vunpack.c.l.b16 %v799
        %v1392 = vunpack.c.h.b16 %v799
        %v1393 = vunpack.c.l.b16 %v800
        %v1394 = vunpack.c.h.b16 %v800
        %v1395 = vunpack.c.l.b16 %v801
        %v1396 = vunpack.c.h.b16 %v801
        %v1397 = vunpack.c.l.b16 %v802
        %v1398 = vunpack.c.h.b16 %v802
        %v1399 = vunpack.c.l.b16 %v803
        %v1400 = vunpack.c.h.b16 %v803
        %v1401 = vunpack.c.l.b16 %v804
        %v1402 = vunpack.c.h.b16 %v804
        %v1403 = vunpack.c.l.b16 %v805
        %v1404 = vunpack.c.h.b16 %v805
        %v1405 = vunpack.c.l.b16 %v806
        %v1406 = vunpack.c.h.b16 %v806
        %v1407 = vunpack.c.l.b16 %v807
        %v1408 = vunpack.c.h.b16 %v807
        %v1409 = vunpack.c.l.b16 %v808
        %v1410 = vunpack.c.h.b16 %v808
        %v1411 = vunpack.c.l.b16 %v809
        %v1412 = vunpack.c.h.b16 %v809
        %v1413 = vunpack.c.l.b16 %v810
        %v1414 = vunpack.c.h.b16 %v810
        %v1415 = vunpack.c.l.b16 %v811
        %v1416 = vunpack.c.h.b16 %v811
        %v1417 = vunpack.c.l.b16 %v812
        %v1418 = vunpack.c.h.b16 %v812
        %v1419 = vunpack.c.l.b16 %v813
        %v1420 = vunpack.c.h.b16 %v813
        %v1421 = vunpack.c.l.b16 %v814
        %v1422 = vunpack.c.h.b16 %v814
        %v1423 = vunpack.c.l.b16 %v815
        %v1424 = vunpack.c.h.b16 %v815
        %v1425 = vunpack.c.l.b16 %v816
        %v1426 = vunpack.c.h.b16 %v816
        %v1427 = vunpack.c.l.b16 %v817
        %v1428 = vunpack.c.h.b16 %v817
        %v1429 = vunpack.c.l.b16 %v818
        %v1430 = vunpack.c.h.b16 %v818
        %v1431 = vunpack.c.l.b16 %v819
        %v1432 = vunpack.c.h.b16 %v819
        %v1433 = vunpack.c.l.b16 %v820
        %v1434 = vunpack.c.h.b16 %v820
        %v1435 = vunpack.c.l.b16 %v821
        %v1436 = vunpack.c.h.b16 %v821
        %v1437 = vunpack.c.l.b16 %v822
        %v1438 = vunpack.c.h.b16 %v822
        %v1439 = vunpack.c.l.b16 %v823
        %v1440 = vunpack.c.h.b16 %v823
        %v1441 = vunpack.c.l.b16 %v824
        %v1442 = vunpack.c.h.b16 %v824
        %v1443 = vunpack.c.l.b16 %v825
        %v1444 = vunpack.c.h.b16 %v825
        %v1445 = vunpack.c.l.b16 %v826
        %v1446 = vunpack.c.h.b16 %v826
        %v1447 = vunpack.c.l.b16 %v827
        %v1448 = vunpack.c.h.b16 %v827
        %v1449 = vunpack.c.l.b16 %v828
        %v1450 = vunpack.c.h.b16 %v828
        %v1451 = vunpack.c.l.b16 %v829
        %v1452 = vunpack.c.h.b16 %v829
        %v1453 = vunpack.c.l.b16 %v830
        %v1454 = vunpack.c.h.b16 %v830
        %v1455 = vunpack.c.l.b16 %v831
        %v1456 = vunpack.c.h.b16 %v831
        %v1457 = vunpack.c.l.b16 %v832
        %v1458 = vunpack.c.h.b16 %v832
        %v1459 = vunpack.c.l.b16 %v833
        %v1460 = vunpack.c.h.b16 %v833
        %v1461 = vunpack.c.l.b16 %v834
        %v1462 = vunpack.c.h.b16 %v834
        %v1463 = vunpack.c.l.b16 %v835
        %v1464 = vunpack.c.h.b16 %v835
        %v1465 = vunpack.c.l.b16 %v836
        %v1466 = vunpack.c.h.b16 %v836
        %v1467 = vunpack.c.l.b16 %v837
        %v1468 = vunpack.c.h.b16 %v837
        %v1469 = vunpack.c.l.b16 %v838
        %v1470 = vunpack.c.h.b16 %v838
        %v1471 = vunpack.c.l.b16 %v839
        %v1472 = vunpack.c.h.b16 %v839
        %v1473 = vunpack.c.l.b16 %v840
        %v1474 = vunpack.c.h.b16 %v840
        %v1475 = vunpack.c.l.b16 %v841
        %v1476 = vunpack.c.h.b16 %v841
        %v1477 = vunpack.c.l.b16 %v842
        %v1478 = vunpack.c.h.b16 %v842
        %v1479 = vunpack.c.l.b16 %v843
        %v1480 = vunpack.c.h.b16 %v843
        %v1481 = vunpack.c.l.b16 %v844
        %v1482 = vunpack.c.h.b16 %v844
        %v1483 = vunpack.c.l.b16 %v845
        %v1484 = vunpack.c.h.b16 %v845
        %v1485 = vunpack.c.l.b16 %v846
        %v1486 = vunpack.c.h.b16 %v846
        %v1487 = vunpack.c.l.b16 %v847
        %v1488 = vunpack.c.h.b16 %v847
        %v1489 = vunpack.c.l.b16 %v848
        %v1490 = vunpack.c.h.b16 %v848
        %v1491 = vunpack.c.l.b16 %v849
        %v1492 = vunpack.c.h.b16 %v849
        %v1493 = vunpack.c.l.b16 %v850
        %v1494 = vunpack.c.h.b16 %v850
        %v1495 = vunpack.c.l.b16 %v851
        %v1496 = vunpack.c.h.b16 %v851
        %v1497 = vunpack.c.l.b16 %v852
        %v1498 = vunpack.c.h.b16 %v852
        %v1499 = vunpack.c.l.b16 %v853
        %v1500 = vunpack.c.h.b16 %v853
        %v1501 = vunpack.c.l.b16 %v854
        %v1502 = vunpack.c.h.b16 %v854
        %v1503 = vunpack.c.l.b16 %v855
        %v1504 = vunpack.c.h.b16 %v855
        %v1505 = vunpack.c.l.b16 %v856
        %v1506 = vunpack.c.h.b16 %v856
        %v1507 = vunpack.c.l.b16 %v857
        %v1508 = vunpack.c.h.b16 %v857
        %v1509 = vunpack.c.l.b16 %v858
        %v1510 = vunpack.c.h.b16 %v858
        %v1511 = vunpack.c.l.b16 %v859
        %v1512 = vunpack.c.h.b16 %v859
        %v1513 = vunpack.c.l.b16 %v860
        %v1514 = vunpack.c.h.b16 %v860
        %v1515 = vunpack.c.l.b16 %v861
        %v1516 = vunpack.c.h.b16 %v861
        %v1517 = vunpack.c.l.b16 %v862
        %v1518 = vunpack.c.h.b16 %v862
        %v1519 = vunpack.c.l.b16 %v863
        %v1520 = vunpack.c.h.b16 %v863
        %v1521 = vunpack.c.l.b16 %v864
        %v1522 = vunpack.c.h.b16 %v864
        %v1523 = vunpack.c.l.b16 %v865
        %v1524 = vunpack.c.h.b16 %v865
        %v1525 = vunpack.c.l.b16 %v866
        %v1526 = vunpack.c.h.b16 %v866
        %v1527 = vpack.c.b16 %v1111, %v1095
        %v1528 = vpack.c.b16 %v1112, %v1096
        %v1529 = vpack.c.b16 %v1113, %v1097
        %v1530 = vpack.c.b16 %v1114, %v1098
        %v1531 = vpack.c.b16 %v1115, %v1099
        %v1532 = vpack.c.b16 %v1116, %v1100
        %v1533 = vpack.c.b16 %v1117, %v1101
        %v1534 = vpack.c.b16 %v1118, %v1102
        %v1535 = vpack.c.b16 %v1119, %v1103
        %v1536 = vpack.c.b16 %v1120, %v1104
        %v1537 = vpack.c.b16 %v1121, %v1105
        %v1538 = vpack.c.b16 %v1122, %v1106
        %v1539 = vpack.c.b16 %v1123, %v1107
        %v1540 = vpack.c.b16 %v1124, %v1108
        %v1541 = vpack.c.b16 %v1125, %v1109
        %v1542 = vpack.c.b16 %v1126, %v1110
        %v1543 = vpack.c.b16 %v1143, %v1127
        %v1544 = vpack.c.b16 %v1144, %v1128
        %v1545 = vpack.c.b16 %v1145, %v1129
        %v1546 = vpack.c.b16 %v1146, %v1130
        %v1547 = vpack.c.b16 %v1147, %v1131
        %v1548 = vpack.c.b16 %v1148, %v1132
        %v1549 = vpack.c.b16 %v1149, %v1133
        %v1550 = vpack.c.b16 %v1150, %v1134
        %v1551 = vpack.c.b16 %v1151, %v1135
        %v1552 = vpack.c.b16 %v1152, %v1136
        %v1553 = vpack.c.b16 %v1153, %v1137
        %v1554 = vpack.c.b16 %v1154, %v1138
        %v1555 = vpack.c.b16 %v1155, %v1139
        %v1556 = vpack.c.b16 %v1156, %v1140
        %v1557 = vpack.c.b16 %v1157, %v1141
        %v1558 = vpack.c.b16 %v1158, %v1142
        %v1559 = vpack.c.b16 %v1175, %v1159
        %v1560 = vpack.c.b16 %v1176, %v1160
        %v1561 = vpack.c.b16 %v1177, %v1161
        %v1562 = vpack.c.b16 %v1178, %v1162
        %v1563 = vpack.c.b16 %v1179, %v1163
        %v1564 = vpack.c.b16 %v1180, %v1164
        %v1565 = vpack.c.b16 %v1181, %v1165
        %v1566 = vpack.c.b16 %v1182, %v1166
        %v1567 = vpack.c.b16 %v1183, %v1167
        %v1568 = vpack.c.b16 %v1184, %v1168
        %v1569 = vpack.c.b16 %v1185, %v1169
        %v1570 = vpack.c.b16 %v1186, %v1170
        %v1571 = vpack.c.b16 %v1187, %v1171
        %v1572 = vpack.c.b16 %v1188, %v1172
        %v1573 = vpack.c.b16 %v1189, %v1173
        %v1574 = vpack.c.b16 %v1190, %v1174
        %v1575 = vpack.c.b16 %v1207, %v1191
        %v1576 = vpack.c.b16 %v1208, %v1192
        %v1577 = vpack.c.b16 %v1209, %v1193
        %v1578 = vpack.c.b16 %v1210, %v1194
        %v1579 = vpack.c.b16 %v1211, %v1195
        %v1580 = vpack.c.b16 %v1212, %v1196
        %v1581 = vpack.c.b16 %v1213, %v1197
        %v1582 = vpack.c.b16 %v1214, %v1198
        %v1583 = vpack.c.b16 %v1215, %v1199
        %v1584 = vpack.c.b16 %v1216, %v1200
        %v1585 = vpack.c.b16 %v1217, %v1201
        %v1586 = vpack.c.b16 %v1218, %v1202
        %v1587 = vpack.c.b16 %v1219, %v1203
        %v1588 = vpack.c.b16 %v1220, %v1204
        %v1589 = vpack.c.b16 %v1221, %v1205
        %v1590 = vpack.c.b16 %v1222, %v1206
        %v1591 = vpack.c.b16 %v1239, %v1223
        %v1592 = vpack.c.b16 %v1240, %v1224
        %v1593 = vpack.c.b16 %v1241, %v1225
        %v1594 = vpack.c.b16 %v1242, %v1226
        %v1595 = vpack.c.b16 %v1243, %v1227
        %v1596 = vpack.c.b16 %v1244, %v1228
        %v1597 = vpack.c.b16 %v1245, %v1229
        %v1598 = vpack.c.b16 %v1246, %v1230
        %v1599 = vpack.c.b16 %v1247, %v1231
        %v1600 = vpack.c.b16 %v1248, %v1232
        %v1601 = vpack.c.b16 %v1249, %v1233
        %v1602 = vpack.c.b16 %v1250, %v1234
        %v1603 = vpack.c.b16 %v1251, %v1235
        %v1604 = vpack.c.b16 %v1252, %v1236
        %v1605 = vpack.c.b16 %v1253, %v1237
        %v1606 = vpack.c.b16 %v1254, %v1238
        %v1607 = vpack.c.b16 %v1271, %v1255
        %v1608 = vpack.c.b16 %v1272, %v1256
        %v1609 = vpack.c.b16 %v1273, %v1257
        %v1610 = vpack.c.b16 %v1274, %v1258
        %v1611 = vpack.c.b16 %v1275, %v1259
        %v1612 = vpack.c.b16 %v1276, %v1260
        %v1613 = vpack.c.b16 %v1277, %v1261
        %v1614 = vpack.c.b16 %v1278, %v1262
        %v1615 = vpack.c.b16 %v1279, %v1263
        %v1616 = vpack.c.b16 %v1280, %v1264
        %v1617 = vpack.c.b16 %v1281, %v1265
        %v1618 = vpack.c.b16 %v1282, %v1266
        %v1619 = vpack.c.b16 %v1283, %v1267
        %v1620 = vpack.c.b16 %v1284, %v1268
        %v1621 = vpack.c.b16 %v1285, %v1269
        %v1622 = vpack.c.b16 %v1286, %v1270
        %v1623 = vpack.c.b16 %v1303, %v1287
        %v1624 = vpack.c.b16 %v1304, %v1288
        %v1625 = vpack.c.b16 %v1305, %v1289
        %v1626 = vpack.c.b16 %v1306, %v1290
        %v1627 = vpack.c.b16 %v1307, %v1291
        %v1628 = vpack.c.b16 %v1308, %v1292
        %v1629 = vpack.c.b16 %v1309, %v1293
        %v1630 = vpack.c.b16 %v1310, %v1294
        %v1631 = vpack.c.b16 %v1311, %v1295
        %v1632 = vpack.c.b16 %v1312, %v1296
        %v1633 = vpack.c.b16 %v1313, %v1297
        %v1634 = vpack.c.b16 %v1314, %v1298
        %v1635 = vpack.c.b16 %v1315, %v1299
        %v1636 = vpack.c.b16 %v1316, %v1300
        %v1637 = vpack.c.b16 %v1317, %v1301
        %v1638 = vpack.c.b16 %v1318, %v1302
        %v1639 = vpack.c.b16 %v1335, %v1319
        %v1640 = vpack.c.b16 %v1336, %v1320
        %v1641 = vpack.c.b16 %v1337, %v1321
        %v1642 = vpack.c.b16 %v1338, %v1322
        %v1643 = vpack.c.b16 %v1339, %v1323
        %v1644 = vpack.c.b16 %v1340, %v1324
        %v1645 = vpack.c.b16 %v1341, %v1325
        %v1646 = vpack.c.b16 %v1342, %v1326
        %v1647 = vpack.c.b16 %v1343, %v1327
        %v1648 = vpack.c.b16 %v1344, %v1328
        %v1649 = vpack.c.b16 %v1345, %v1329
        %v1650 = vpack.c.b16 %v1346, %v1330
        %v1651 = vpack.c.b16 %v1347, %v1331
        %v1652 = vpack.c.b16 %v1348, %v1332
        %v1653 = vpack.c.b16 %v1349, %v1333
        %v1654 = vpack.c.b16 %v1350, %v1334
        %v1655 = vpack.c.b16 %v1367, %v1351
        %v1656 = vpack.c.b16 %v1368, %v1352
        %v1657 = vpack.c.b16 %v1369, %v1353
        %v1658 = vpack.c.b16 %v1370, %v1354
        %v1659 = vpack.c.b16 %v1371, %v1355
        %v1660 = vpack.c.b16 %v1372, %v1356
        %v1661 = vpack.c.b16 %v1373, %v1357
        %v1662 = vpack.c.b16 %v1374, %v1358
        %v1663 = vpack.c.b16 %v1375, %v1359
        %v1664 = vpack.c.b16 %v1376, %v1360
        %v1665 = vpack.c.b16 %v1377, %v1361
        %v1666 = vpack.c.b16 %v1378, %v1362
        %v1667 = vpack.c.b16 %v1379, %v1363
        %v1668 = vpack.c.b16 %v1380, %v1364
        %v1669 = vpack.c.b16 %v1381, %v1365
        %v1670 = vpack.c.b16 %v1382, %v1366
        %v1671 = vpack.c.b16 %v1399, %v1383
        %v1672 = vpack.c.b16 %v1400, %v1384
        %v1673 = vpack.c.b16 %v1401, %v1385
        %v1674 = vpack.c.b16 %v1402, %v1386
        %v1675 = vpack.c.b16 %v1403, %v1387
        %v1676 = vpack.c.b16 %v1404, %v1388
        %v1677 = vpack.c.b16 %v1405, %v1389
        %v1678 = vpack.c.b16 %v1406, %v1390
        %v1679 = vpack.c.b16 %v1407, %v1391
        %v1680 = vpack.c.b16 %v1408, %v1392
        %v1681 = vpack.c.b16 %v1409, %v1393
        %v1682 = vpack.c.b16 %v1410, %v1394
        %v1683 = vpack.c.b16 %v1411, %v1395
        %v1684 = vpack.c.b16 %v1412, %v1396
        %v1685 = vpack.c.b16 %v1413, %v1397
        %v1686 = vpack.c.b16 %v1414, %v1398
        %v1687 = vpack.c.b16 %v1431, %v1415
        %v1688 = vpack.c.b16 %v1432, %v1416
        %v1689 = vpack.c.b16 %v1433, %v1417
        %v1690 = vpack.c.b16 %v1434, %v1418
        %v1691 = vpack.c.b16 %v1435, %v1419
        %v1692 = vpack.c.b16 %v1436, %v1420
        %v1693 = vpack.c.b16 %v1437, %v1421
        %v1694 = vpack.c.b16 %v1438, %v1422
        %v1695 = vpack.c.b16 %v1439, %v1423
        %v1696 = vpack.c.b16 %v1440, %v1424
        %v1697 = vpack.c.b16 %v1441, %v1425
        %v1698 = vpack.c.b16 %v1442, %v1426
        %v1699 = vpack.c.b16 %v1443, %v1427
        %v1700 = vpack.c.b16 %v1444, %v1428
        %v1701 = vpack.c.b16 %v1445, %v1429
        %v1702 = vpack.c.b16 %v1446, %v1430
        %v1703 = vpack.c.b16 %v1463, %v1447
        %v1704 = vpack.c.b16 %v1464, %v1448
        %v1705 = vpack.c.b16 %v1465, %v1449
        %v1706 = vpack.c.b16 %v1466, %v1450
        %v1707 = vpack.c.b16 %v1467, %v1451
        %v1708 = vpack.c.b16 %v1468, %v1452
        %v1709 = vpack.c.b16 %v1469, %v1453
        %v1710 = vpack.c.b16 %v1470, %v1454
        %v1711 = vpack.c.b16 %v1471, %v1455
        %v1712 = vpack.c.b16 %v1472, %v1456
        %v1713 = vpack.c.b16 %v1473, %v1457
        %v1714 = vpack.c.b16 %v1474, %v1458
        %v1715 = vpack.c.b16 %v1475, %v1459
        %v1716 = vpack.c.b16 %v1476, %v1460
        %v1717 = vpack.c.b16 %v1477, %v1461
        %v1718 = vpack.c.b16 %v1478, %v1462
        %v1719 = vpack.c.b16 %v1495, %v1479
        %v1720 = vpack.c.b16 %v1496, %v1480
        %v1721 = vpack.c.b16 %v1497, %v1481
        %v1722 = vpack.c.b16 %v1498, %v1482
        %v1723 = vpack.c.b16 %v1499, %v1483
        %v1724 = vpack.c.b16 %v1500, %v1484
        %v1725 = vpack.c.b16 %v1501, %v1485
        %v1726 = vpack.c.b16 %v1502, %v1486
        %v1727 = vpack.c.b16 %v1503, %v1487
        %v1728 = vpack.c.b16 %v1504, %v1488
        %v1729 = vpack.c.b16 %v1505, %v1489
        %v1730 = vpack.c.b16 %v1506, %v1490
        %v1731 = vpack.c.b16 %v1507, %v1491
        %v1732 = vpack.c.b16 %v1508, %v1492
        %v1733 = vpack.c.b16 %v1509, %v1493
        %v1734 = vpack.c.b16 %v1510, %v1494
        %v1735 = vpack.c.b16 %v1511, %v1511
        %v1736 = vpack.c.b16 %v1512, %v1512
        %v1737 = vpack.c.b16 %v1513, %v1513
        %v1738 = vpack.c.b16 %v1514, %v1514
        %v1739 = vpack.c.b16 %v1515, %v1515
        %v1740 = vpack.c.b16 %v1516, %v1516
        %v1741 = vpack.c.b16 %v1517, %v1517
        %v1742 = vpack.c.b16 %v1518, %v1518
        %v1743 = vpack.c.b16 %v1519, %v1519
        %v1744 = vpack.c.b16 %v1520, %v1520
        %v1745 = vpack.c.b16 %v1521, %v1521
        %v1746 = vpack.c.b16 %v1522, %v1522
        %v1747 = vpack.c.b16 %v1523, %v1523
        %v1748 = vpack.c.b16 %v1524, %v1524
        %v1749 = vpack.c.b16 %v1525, %v1525
        %v1750 = vpack.c.b16 %v1526, %v1526
        %vm1959 = vcmask 719872
        %v1961 = vsel %vm1959, %v877, 0
        %vm1963 = vcmask 1043456
        %v1965 = vsel %vm1963, %v1735, 0
        %v1968 = vsel %vm1963, %v1736, 0
        %v1971 = vsel %vm1963, %v1737, 0
        %v1974 = vsel %vm1963, %v1738, 0
        %v1977 = vsel %vm1963, %v1739, 0
        %v1980 = vsel %vm1963, %v1740, 0
        %v1983 = vsel %vm1963, %v1741, 0
        %v1986 = vsel %vm1963, %v1742, 0
        %v1989 = vsel %vm1963, %v1743, 0
        %v1992 = vsel %vm1963, %v1744, 0
        %v1995 = vsel %vm1963, %v1745, 0
        %v1998 = vsel %vm1963, %v1746, 0
        %v2001 = vsel %vm1963, %v1747, 0
        %v2004 = vsel %vm1963, %v1748, 0
        %v2007 = vsel %vm1963, %v1749, 0
        %v2010 = vsel %vm1963, %v1750, 0
        %2012 = vmatprep.subr.bf16.mxu0 %v1528
        %2013 = vmatpush1.bf16.msra.mxu0 %v1527
        %2014 = vmatprep.subr.bf16.mxu0 %v1544
        %2015 = vmatpush1.bf16.msra.mxu0 %v1543
        %2016 = vmatprep.subr.bf16.mxu0 %v1560
        %2017 = vmatpush1.bf16.msra.mxu0 %v1559
        %2018 = vmatprep.subr.bf16.mxu0 %v1576
        %2019 = vmatpush1.bf16.msra.mxu0 %v1575
        %2020 = vmatprep.subr.bf16.mxu0 %v1592
        %2021 = vmatpush1.bf16.msra.mxu0 %v1591
        %2022 = vmatprep.subr.bf16.mxu0 %v1608
        %2023 = vmatpush1.bf16.msra.mxu0 %v1607
        %2024 = vmatprep.subr.bf16.mxu0 %v1624
        %2025 = vmatpush1.bf16.msra.mxu0 %v1623
        %2026 = vmatprep.subr.bf16.mxu0 %v1640
        %2027 = vmatpush1.bf16.msra.mxu0 %v1639
        %2028 = vmatprep.subr.bf16.mxu0 %v1656
        %2029 = vmatpush1.bf16.msra.mxu0 %v1655
        %2030 = vmatprep.subr.bf16.mxu0 %v1672
        %2031 = vmatpush1.bf16.msra.mxu0 %v1671
        %2032 = vmatprep.subr.bf16.mxu0 %v1688
        %2033 = vmatpush1.bf16.msra.mxu0 %v1687
        %2034 = vmatprep.subr.bf16.mxu0 %v1704
        %2035 = vmatpush1.bf16.msra.mxu0 %v1703
        %2036 = vmatprep.subr.bf16.mxu0 %v1720
        %2037 = vmatpush1.bf16.msra.mxu0 %v1719
        %2038 = vmatprep.subr.bf16.mxu0 %v1968
        %2039 = vmatpush1.bf16.msra.mxu0 %v1965
        %2040 = vmatprep.subr.bf16.mxu0 0
        %2041 = vmatpush1.bf16.msra.mxu0 0
        %2042 = vmatprep.subr.bf16.mxu0 0
        %2043 = vmatpush1.bf16.msra.mxu0 0
        %2044 = vmatprep.mubr.bf16.mxu0 %v1961
        %2045 = vmatmul.mubr.bf16.gmra.mrb[0].mxu0 %v876
        %v2046 = vpop.f32.mrb[0].mxu0
        %v2047 = vadd.f32 %v871, %v2046
        %v2048 = vpop.f32.mrb[0].mxu0
        %v2049 = vadd.f32 %v871, %v2048
        %v2050 = vpop.f32.mrb[0].mxu0
        %v2051 = vpop.f32.mrb[0].mxu0
        %2052 = vdwg.mxu0
        %2053 = vmatprep.subr.bf16.mxu0 %v1530
        %2054 = vmatpush1.bf16.msra.mxu0 %v1529
        %2055 = vmatprep.subr.bf16.mxu0 %v1546
        %2056 = vmatpush1.bf16.msra.mxu0 %v1545
        %2057 = vmatprep.subr.bf16.mxu0 %v1562
        %2058 = vmatpush1.bf16.msra.mxu0 %v1561
        %2059 = vmatprep.subr.bf16.mxu0 %v1578
        %2060 = vmatpush1.bf16.msra.mxu0 %v1577
        %2061 = vmatprep.subr.bf16.mxu0 %v1594
        %2062 = vmatpush1.bf16.msra.mxu0 %v1593
        %2063 = vmatprep.subr.bf16.mxu0 %v1610
        %2064 = vmatpush1.bf16.msra.mxu0 %v1609
        %2065 = vmatprep.subr.bf16.mxu0 %v1626
        %2066 = vmatpush1.bf16.msra.mxu0 %v1625
        %2067 = vmatprep.subr.bf16.mxu0 %v1642
        %2068 = vmatpush1.bf16.msra.mxu0 %v1641
        %2069 = vmatprep.subr.bf16.mxu0 %v1658
        %2070 = vmatpush1.bf16.msra.mxu0 %v1657
        %2071 = vmatprep.subr.bf16.mxu0 %v1674
        %2072 = vmatpush1.bf16.msra.mxu0 %v1673
        %2073 = vmatprep.subr.bf16.mxu0 %v1690
        %2074 = vmatpush1.bf16.msra.mxu0 %v1689
        %2075 = vmatprep.subr.bf16.mxu0 %v1706
        %2076 = vmatpush1.bf16.msra.mxu0 %v1705
        %2077 = vmatprep.subr.bf16.mxu0 %v1722
        %2078 = vmatpush1.bf16.msra.mxu0 %v1721
        %2079 = vmatprep.subr.bf16.mxu0 %v1974
        %2080 = vmatpush1.bf16.msra.mxu0 %v1971
        %2081 = vmatprep.subr.bf16.mxu0 0
        %2082 = vmatpush1.bf16.msra.mxu0 0
        %2083 = vmatprep.subr.bf16.mxu0 0
        %2084 = vmatpush1.bf16.msra.mxu0 0
        %2085 = vmatprep.mubr.bf16.mxu0 %v1961
        %2086 = vmatmul.mubr.bf16.gmra.mrb[0].mxu0 %v876
        %v2087 = vpop.f32.mrb[0].mxu0
        %v2088 = vadd.f32 %v871, %v2087
        %v2089 = vpop.f32.mrb[0].mxu0
        %v2090 = vadd.f32 %v871, %v2089
        %v2091 = vpop.f32.mrb[0].mxu0
        %v2092 = vpop.f32.mrb[0].mxu0
        %2093 = vdwg.mxu0
        %2094 = vmatprep.subr.bf16.mxu0 %v1532
        %2095 = vmatpush1.bf16.msra.mxu0 %v1531
        %2096 = vmatprep.subr.bf16.mxu0 %v1548
        %2097 = vmatpush1.bf16.msra.mxu0 %v1547
        %2098 = vmatprep.subr.bf16.mxu0 %v1564
        %2099 = vmatpush1.bf16.msra.mxu0 %v1563
        %2100 = vmatprep.subr.bf16.mxu0 %v1580
        %2101 = vmatpush1.bf16.msra.mxu0 %v1579
        %2102 = vmatprep.subr.bf16.mxu0 %v1596
        %2103 = vmatpush1.bf16.msra.mxu0 %v1595
        %2104 = vmatprep.subr.bf16.mxu0 %v1612
        %2105 = vmatpush1.bf16.msra.mxu0 %v1611
        %2106 = vmatprep.subr.bf16.mxu0 %v1628
        %2107 = vmatpush1.bf16.msra.mxu0 %v1627
        %2108 = vmatprep.subr.bf16.mxu0 %v1644
        %2109 = vmatpush1.bf16.msra.mxu0 %v1643
        %2110 = vmatprep.subr.bf16.mxu0 %v1660
        %2111 = vmatpush1.bf16.msra.mxu0 %v1659
        %2112 = vmatprep.subr.bf16.mxu0 %v1676
        %2113 = vmatpush1.bf16.msra.mxu0 %v1675
        %2114 = vmatprep.subr.bf16.mxu0 %v1692
        %2115 = vmatpush1.bf16.msra.mxu0 %v1691
        %2116 = vmatprep.subr.bf16.mxu0 %v1708
        %2117 = vmatpush1.bf16.msra.mxu0 %v1707
        %2118 = vmatprep.subr.bf16.mxu0 %v1724
        %2119 = vmatpush1.bf16.msra.mxu0 %v1723
        %2120 = vmatprep.subr.bf16.mxu0 %v1980
        %2121 = vmatpush1.bf16.msra.mxu0 %v1977
        %2122 = vmatprep.subr.bf16.mxu0 0
        %2123 = vmatpush1.bf16.msra.mxu0 0
        %2124 = vmatprep.subr.bf16.mxu0 0
        %2125 = vmatpush1.bf16.msra.mxu0 0
        %2126 = vmatprep.mubr.bf16.mxu0 %v1961
        %2127 = vmatmul.mubr.bf16.gmra.mrb[0].mxu0 %v876
        %v2128 = vpop.f32.mrb[0].mxu0
        %v2129 = vadd.f32 %v871, %v2128
        %v2130 = vpop.f32.mrb[0].mxu0
        %v2131 = vadd.f32 %v871, %v2130
        %v2132 = vpop.f32.mrb[0].mxu0
        %v2133 = vpop.f32.mrb[0].mxu0
        %2134 = vdwg.mxu0
        %2135 = vmatprep.subr.bf16.mxu0 %v1534
        %2136 = vmatpush1.bf16.msra.mxu0 %v1533
        %2137 = vmatprep.subr.bf16.mxu0 %v1550
        %2138 = vmatpush1.bf16.msra.mxu0 %v1549
        %2139 = vmatprep.subr.bf16.mxu0 %v1566
        %2140 = vmatpush1.bf16.msra.mxu0 %v1565
        %2141 = vmatprep.subr.bf16.mxu0 %v1582
        %2142 = vmatpush1.bf16.msra.mxu0 %v1581
        %2143 = vmatprep.subr.bf16.mxu0 %v1598
        %2144 = vmatpush1.bf16.msra.mxu0 %v1597
        %2145 = vmatprep.subr.bf16.mxu0 %v1614
        %2146 = vmatpush1.bf16.msra.mxu0 %v1613
        %2147 = vmatprep.subr.bf16.mxu0 %v1630
        %2148 = vmatpush1.bf16.msra.mxu0 %v1629
        %2149 = vmatprep.subr.bf16.mxu0 %v1646
        %2150 = vmatpush1.bf16.msra.mxu0 %v1645
        %2151 = vmatprep.subr.bf16.mxu0 %v1662
        %2152 = vmatpush1.bf16.msra.mxu0 %v1661
        %2153 = vmatprep.subr.bf16.mxu0 %v1678
        %2154 = vmatpush1.bf16.msra.mxu0 %v1677
        %2155 = vmatprep.subr.bf16.mxu0 %v1694
        %2156 = vmatpush1.bf16.msra.mxu0 %v1693
        %2157 = vmatprep.subr.bf16.mxu0 %v1710
        %2158 = vmatpush1.bf16.msra.mxu0 %v1709
        %2159 = vmatprep.subr.bf16.mxu0 %v1726
        %2160 = vmatpush1.bf16.msra.mxu0 %v1725
        %2161 = vmatprep.subr.bf16.mxu0 %v1986
        %2162 = vmatpush1.bf16.msra.mxu0 %v1983
        %2163 = vmatprep.subr.bf16.mxu0 0
        %2164 = vmatpush1.bf16.msra.mxu0 0
        %2165 = vmatprep.subr.bf16.mxu0 0
        %2166 = vmatpush1.bf16.msra.mxu0 0
        %2167 = vmatprep.mubr.bf16.mxu0 %v1961
        %2168 = vmatmul.mubr.bf16.gmra.mrb[0].mxu0 %v876
        %v2169 = vpop.f32.mrb[0].mxu0
        %v2170 = vadd.f32 %v871, %v2169
        %v2171 = vpop.f32.mrb[0].mxu0
        %v2172 = vadd.f32 %v871, %v2171
        %v2173 = vpop.f32.mrb[0].mxu0
        %v2174 = vpop.f32.mrb[0].mxu0
        %2175 = vdwg.mxu0
        %2176 = vmatprep.subr.bf16.mxu0 %v1536
        %2177 = vmatpush1.bf16.msra.mxu0 %v1535
        %2178 = vmatprep.subr.bf16.mxu0 %v1552
        %2179 = vmatpush1.bf16.msra.mxu0 %v1551
        %2180 = vmatprep.subr.bf16.mxu0 %v1568
        %2181 = vmatpush1.bf16.msra.mxu0 %v1567
        %2182 = vmatprep.subr.bf16.mxu0 %v1584
        %2183 = vmatpush1.bf16.msra.mxu0 %v1583
        %2184 = vmatprep.subr.bf16.mxu0 %v1600
        %2185 = vmatpush1.bf16.msra.mxu0 %v1599
        %2186 = vmatprep.subr.bf16.mxu0 %v1616
        %2187 = vmatpush1.bf16.msra.mxu0 %v1615
        %2188 = vmatprep.subr.bf16.mxu0 %v1632
        %2189 = vmatpush1.bf16.msra.mxu0 %v1631
        %2190 = vmatprep.subr.bf16.mxu0 %v1648
        %2191 = vmatpush1.bf16.msra.mxu0 %v1647
        %2192 = vmatprep.subr.bf16.mxu0 %v1664
        %2193 = vmatpush1.bf16.msra.mxu0 %v1663
        %2194 = vmatprep.subr.bf16.mxu0 %v1680
        %2195 = vmatpush1.bf16.msra.mxu0 %v1679
        %2196 = vmatprep.subr.bf16.mxu0 %v1696
        %2197 = vmatpush1.bf16.msra.mxu0 %v1695
        %2198 = vmatprep.subr.bf16.mxu0 %v1712
        %2199 = vmatpush1.bf16.msra.mxu0 %v1711
        %2200 = vmatprep.subr.bf16.mxu0 %v1728
        %2201 = vmatpush1.bf16.msra.mxu0 %v1727
        %2202 = vmatprep.subr.bf16.mxu0 %v1992
        %2203 = vmatpush1.bf16.msra.mxu0 %v1989
        %2204 = vmatprep.subr.bf16.mxu0 0
        %2205 = vmatpush1.bf16.msra.mxu0 0
        %2206 = vmatprep.subr.bf16.mxu0 0
        %2207 = vmatpush1.bf16.msra.mxu0 0
        %2208 = vmatprep.mubr.bf16.mxu0 %v1961
        %2209 = vmatmul.mubr.bf16.gmra.mrb[0].mxu0 %v876
        %v2210 = vpop.f32.mrb[0].mxu0
        %v2211 = vadd.f32 %v871, %v2210
        %v2212 = vpop.f32.mrb[0].mxu0
        %v2213 = vadd.f32 %v871, %v2212
        %v2214 = vpop.f32.mrb[0].mxu0
        %v2215 = vpop.f32.mrb[0].mxu0
        %2216 = vdwg.mxu0
        %2217 = vmatprep.subr.bf16.mxu0 %v1538
        %2218 = vmatpush1.bf16.msra.mxu0 %v1537
        %2219 = vmatprep.subr.bf16.mxu0 %v1554
        %2220 = vmatpush1.bf16.msra.mxu0 %v1553
        %2221 = vmatprep.subr.bf16.mxu0 %v1570
        %2222 = vmatpush1.bf16.msra.mxu0 %v1569
        %2223 = vmatprep.subr.bf16.mxu0 %v1586
        %2224 = vmatpush1.bf16.msra.mxu0 %v1585
        %2225 = vmatprep.subr.bf16.mxu0 %v1602
        %2226 = vmatpush1.bf16.msra.mxu0 %v1601
        %2227 = vmatprep.subr.bf16.mxu0 %v1618
        %2228 = vmatpush1.bf16.msra.mxu0 %v1617
        %2229 = vmatprep.subr.bf16.mxu0 %v1634
        %2230 = vmatpush1.bf16.msra.mxu0 %v1633
        %2231 = vmatprep.subr.bf16.mxu0 %v1650
        %2232 = vmatpush1.bf16.msra.mxu0 %v1649
        %2233 = vmatprep.subr.bf16.mxu0 %v1666
        %2234 = vmatpush1.bf16.msra.mxu0 %v1665
        %2235 = vmatprep.subr.bf16.mxu0 %v1682
        %2236 = vmatpush1.bf16.msra.mxu0 %v1681
        %2237 = vmatprep.subr.bf16.mxu0 %v1698
        %2238 = vmatpush1.bf16.msra.mxu0 %v1697
        %2239 = vmatprep.subr.bf16.mxu0 %v1714
        %2240 = vmatpush1.bf16.msra.mxu0 %v1713
        %2241 = vmatprep.subr.bf16.mxu0 %v1730
        %2242 = vmatpush1.bf16.msra.mxu0 %v1729
        %2243 = vmatprep.subr.bf16.mxu0 %v1998
        %2244 = vmatpush1.bf16.msra.mxu0 %v1995
        %2245 = vmatprep.subr.bf16.mxu0 0
        %2246 = vmatpush1.bf16.msra.mxu0 0
        %2247 = vmatprep.subr.bf16.mxu0 0
        %2248 = vmatpush1.bf16.msra.mxu0 0
        %2249 = vmatprep.mubr.bf16.mxu0 %v1961
        %2250 = vmatmul.mubr.bf16.gmra.mrb[0].mxu0 %v876
        %v2251 = vpop.f32.mrb[0].mxu0
        %v2252 = vadd.f32 %v871, %v2251
        %v2253 = vpop.f32.mrb[0].mxu0
        %v2254 = vadd.f32 %v871, %v2253
        %v2255 = vpop.f32.mrb[0].mxu0
        %v2256 = vpop.f32.mrb[0].mxu0
        %2257 = vdwg.mxu0
        %2258 = vmatprep.subr.bf16.mxu0 %v1540
        %2259 = vmatpush1.bf16.msra.mxu0 %v1539
        %2260 = vmatprep.subr.bf16.mxu0 %v1556
        %2261 = vmatpush1.bf16.msra.mxu0 %v1555
        %2262 = vmatprep.subr.bf16.mxu0 %v1572
        %2263 = vmatpush1.bf16.msra.mxu0 %v1571
        %2264 = vmatprep.subr.bf16.mxu0 %v1588
        %2265 = vmatpush1.bf16.msra.mxu0 %v1587
        %2266 = vmatprep.subr.bf16.mxu0 %v1604
        %2267 = vmatpush1.bf16.msra.mxu0 %v1603
        %2268 = vmatprep.subr.bf16.mxu0 %v1620
        %2269 = vmatpush1.bf16.msra.mxu0 %v1619
        %2270 = vmatprep.subr.bf16.mxu0 %v1636
        %2271 = vmatpush1.bf16.msra.mxu0 %v1635
        %2272 = vmatprep.subr.bf16.mxu0 %v1652
        %2273 = vmatpush1.bf16.msra.mxu0 %v1651
        %2274 = vmatprep.subr.bf16.mxu0 %v1668
        %2275 = vmatpush1.bf16.msra.mxu0 %v1667
        %2276 = vmatprep.subr.bf16.mxu0 %v1684
        %2277 = vmatpush1.bf16.msra.mxu0 %v1683
        %2278 = vmatprep.subr.bf16.mxu0 %v1700
        %2279 = vmatpush1.bf16.msra.mxu0 %v1699
        %2280 = vmatprep.subr.bf16.mxu0 %v1716
        %2281 = vmatpush1.bf16.msra.mxu0 %v1715
        %2282 = vmatprep.subr.bf16.mxu0 %v1732
        %2283 = vmatpush1.bf16.msra.mxu0 %v1731
        %2284 = vmatprep.subr.bf16.mxu0 %v2004
        %2285 = vmatpush1.bf16.msra.mxu0 %v2001
        %2286 = vmatprep.subr.bf16.mxu0 0
        %2287 = vmatpush1.bf16.msra.mxu0 0
        %2288 = vmatprep.subr.bf16.mxu0 0
        %2289 = vmatpush1.bf16.msra.mxu0 0
        %2290 = vmatprep.mubr.bf16.mxu0 %v1961
        %2291 = vmatmul.mubr.bf16.gmra.mrb[0].mxu0 %v876
        %v2292 = vpop.f32.mrb[0].mxu0
        %v2293 = vadd.f32 %v871, %v2292
        %v2294 = vpop.f32.mrb[0].mxu0
        %v2295 = vadd.f32 %v871, %v2294
        %v2296 = vpop.f32.mrb[0].mxu0
        %v2297 = vpop.f32.mrb[0].mxu0
        %2298 = vdwg.mxu0
        %2299 = vmatprep.subr.bf16.mxu0 %v1542
        %2300 = vmatpush1.bf16.msra.mxu0 %v1541
        %2301 = vmatprep.subr.bf16.mxu0 %v1558
        %2302 = vmatpush1.bf16.msra.mxu0 %v1557
        %2303 = vmatprep.subr.bf16.mxu0 %v1574
        %2304 = vmatpush1.bf16.msra.mxu0 %v1573
        %2305 = vmatprep.subr.bf16.mxu0 %v1590
        %2306 = vmatpush1.bf16.msra.mxu0 %v1589
        %2307 = vmatprep.subr.bf16.mxu0 %v1606
        %2308 = vmatpush1.bf16.msra.mxu0 %v1605
        %2309 = vmatprep.subr.bf16.mxu0 %v1622
        %2310 = vmatpush1.bf16.msra.mxu0 %v1621
        %2311 = vmatprep.subr.bf16.mxu0 %v1638
        %2312 = vmatpush1.bf16.msra.mxu0 %v1637
        %2313 = vmatprep.subr.bf16.mxu0 %v1654
        %2314 = vmatpush1.bf16.msra.mxu0 %v1653
        %2315 = vmatprep.subr.bf16.mxu0 %v1670
        %2316 = vmatpush1.bf16.msra.mxu0 %v1669
        %2317 = vmatprep.subr.bf16.mxu0 %v1686
        %2318 = vmatpush1.bf16.msra.mxu0 %v1685
        %2319 = vmatprep.subr.bf16.mxu0 %v1702
        %2320 = vmatpush1.bf16.msra.mxu0 %v1701
        %2321 = vmatprep.subr.bf16.mxu0 %v1718
        %2322 = vmatpush1.bf16.msra.mxu0 %v1717
        %2323 = vmatprep.subr.bf16.mxu0 %v1734
        %2324 = vmatpush1.bf16.msra.mxu0 %v1733
        %2325 = vmatprep.subr.bf16.mxu0 %v2010
        %2326 = vmatpush1.bf16.msra.mxu0 %v2007
        %2327 = vmatprep.subr.bf16.mxu0 0
        %2328 = vmatpush1.bf16.msra.mxu0 0
        %2329 = vmatprep.subr.bf16.mxu0 0
        %2330 = vmatpush1.bf16.msra.mxu0 0
        %2331 = vmatprep.mubr.bf16.mxu0 %v1961
        %2332 = vmatmul.mubr.bf16.gmra.mrb[0].mxu0 %v876
        %v2333 = vpop.f32.mrb[0].mxu0
        %v2334 = vadd.f32 %v871, %v2333
        %v2335 = vpop.f32.mrb[0].mxu0
        %v2336 = vadd.f32 %v871, %v2335
        %v2337 = vpop.f32.mrb[0].mxu0
        %v2338 = vpop.f32.mrb[0].mxu0
        %2339 = vdwg.mxu0
        %v2340 = vmax.f32 %v2047, 0.0
        %v2341 = vmax.f32 %v2049, 0.0
        %v2342 = vmax.f32 %v2088, 0.0
        %v2343 = vmax.f32 %v2090, 0.0
        %v2344 = vmax.f32 %v2129, 0.0
        %v2345 = vmax.f32 %v2131, 0.0
        %v2346 = vmax.f32 %v2170, 0.0
        %v2347 = vmax.f32 %v2172, 0.0
        %v2348 = vmax.f32 %v2211, 0.0
        %v2349 = vmax.f32 %v2213, 0.0
        %v2350 = vmax.f32 %v2252, 0.0
        %v2351 = vmax.f32 %v2254, 0.0
        %v2352 = vmax.f32 %v2293, 0.0
        %v2353 = vmax.f32 %v2295, 0.0
        %v2354 = vmax.f32 %v2334, 0.0
        %v2355 = vmax.f32 %v2336, 0.0
        %2356 = vst [vmem:[%s647] sm:$0xff] %v2340
        %2357 = vst [vmem:[%s647 + $0x8] sm:$0xff] %v2341
        %2358 = vst [vmem:[%s647 + $0x10] sm:$0xff] %v2342
        %2359 = vst [vmem:[%s647 + $0x18] sm:$0xff] %v2343
        %2360 = vst [vmem:[%s647 + $0x20] sm:$0xff] %v2344
        %2361 = vst [vmem:[%s647 + $0x28] sm:$0xff] %v2345
        %2362 = vst [vmem:[%s647 + $0x30] sm:$0xff] %v2346
        %2363 = vst [vmem:[%s647 + $0x38] sm:$0xff] %v2347
        %2364 = vst [vmem:[%s647 + $0x40] sm:$0xff] %v2348
        %2365 = vst [vmem:[%s647 + $0x48] sm:$0xff] %v2349
        %2366 = vst [vmem:[%s647 + $0x50] sm:$0xff] %v2350
        %2367 = vst [vmem:[%s647 + $0x58] sm:$0xff] %v2351
        %2368 = vst [vmem:[%s647 + $0x60] sm:$0xff] %v2352
        %2369 = vst [vmem:[%s647 + $0x68] sm:$0xff] %v2353
        %2370 = vst [vmem:[%s647 + $0x70] sm:$0xff] %v2354
        %2371 = vst [vmem:[%s647 + $0x78] sm:$0xff] %v2355
        %s2372 = smul.u32 16, %s19
        %p2373 = scmp.lt.s32.totalorder %s18, 1
        %s2374 = scalar_select %p2373, %s18, 1
        %p2375 = scmp.lt.s32.totalorder %s2372, 31
        %s2376 = scalar_select %p2375, %s2372, 31
        %s2377 = smul.addr %s2374, 32
        %s2378 = sadd.s32 %s2376, %s2377
        %s2379 = smul.addr %s2378, 8
        %s2380 = scalar_lea.vmem %s3, %s2379
        // Predicated region
        $region56: #{decoder_forward.21} parent=50 // pred_check
          %p2381 = pneg %p116
        $region57: #{decoder_forward.21} parent=50 // pred_check_branch
          %2383 = sbr.rel (%p2381) target = $region59
        $region58: #{decoder_forward.21} parent=50 // pred_region
          %s2384 = smul.u32 16, %s19
        $region59: #{decoder_forward.21} parent=50 // pred_fallthru
          _
      $region51: #{decoder_forward.21} parent=5 // pred_fallthru
        _
      %p2385 = scmp.le.s32.totalorder 2, %s9
      // Predicated region
      $region60: #{decoder_forward.21} parent=5 // pred_check
        %p2386 = pneg %p2385
      $region61: #{decoder_forward.21} parent=5 // pred_check_branch
        %2388 = sbr.rel (%p2386) target = $region63
      $region62: #{decoder_forward.21} parent=5 // pred_region
        %s2389 = ssub.s32 %s9, 2
        // Predicated region
        $region64: #{decoder_forward.21} parent=62 // pred_check
          %p2390 = pneg %p122
        $region65: #{decoder_forward.21} parent=62 // pred_check_branch
          %2392 = sbr.rel (%p2390) target = $region67
        $region66: #{decoder_forward.21} parent=62 // pred_region
          %s2393 = smul.u32 16, %s21
          %p2394 = scmp.lt.s32.totalorder %s20, 1
          %s2395 = scalar_select %p2394, %s20, 1
          %p2396 = scmp.lt.s32.totalorder %s2393, 31
          %s2397 = scalar_select %p2396, %s2393, 31
          %s2398 = smul.addr %s2395, 32
          %s2399 = sadd.s32 %s2397, %s2398
          %s2400 = smul.addr %s2399, 8
          %s2401 = scalar_lea.vmem %s3, %s2400
        $region67: #{decoder_forward.21} parent=62 // pred_fallthru
          _
      $region63: #{decoder_forward.21} parent=5 // pred_fallthru
        _
    $region6: #{decoder_forward.21} parent=1 // loop_footer
      %s13 = sadd.s32 1, %s9
    $region7: #{decoder_forward.21} parent=1 // loop_footer_branch
      %8 = sbr.rel target = $region3
    $region8: #{decoder_forward.21} parent=1 // loop_exit
      _

</llo_original>
